<compile_context>
chip_gen: v6e
topology: v6e:2x2x1
jax: 0.10.0
libtpu: 0.0.40
codegen_flags: <defaults>
</compile_context>

<pallas_src>
import math

import jax
import jax.numpy as jnp
from jax import lax
from jax.experimental import pallas as pl
from jax.experimental.pallas import tpu as pltpu

LN_EPS = 1e-5                        # PyTorch nn.LayerNorm default
_HIGHEST = lax.Precision.HIGHEST     # keep f32 accuracy on the MXU


def _round_up(x, m):
    return ((x + m - 1) // m) * m


def _cdiv(a, b):
    return (a + b - 1) // b


# ---------------------------------------------------------------------------
# Kernel
# ---------------------------------------------------------------------------
def _proj_ln_kernel(xp_ref, wc_ref, bc_ref, pdn_ref, pupg_ref, beta_ref, o_ref):
    # xp:    (block_p, G*C)   G packed input rows per sublane row (lane-dense)
    # wc:    (G*C, G*D)       block-diagonal, mean-centered Linear weight
    # bc:    (1, G*D)         mean-centered bias, tiled G times (f32)
    # pdn:   (G*D, G)         segment-mean pooling (1/D in each diag block)
    # pupg:  (G, G*D)         segment broadcast with LN gamma folded in
    # beta:  (1, G*D)         LayerNorm bias, tiled G times (f32)
    x = xp_ref[...]
    w = wc_ref[...]

    if w.dtype == jnp.bfloat16:
        # bf16 fast path (v6e/v7x): native single-pass MXU matmul, halves the
        # streamed input + resident weight bytes.  Accumulation stays f32.
        c = jnp.dot(x.astype(jnp.bfloat16), w,
                    preferred_element_type=jnp.float32)
    else:
        # f32 path: Precision.HIGHEST is load-bearing for matching PyTorch at
        # 1e-4 and for the E[c^2] variance; the MXU is idle here so it's free.
        c = jnp.dot(x.astype(jnp.float32), w,
                    preferred_element_type=jnp.float32, precision=_HIGHEST)
    c = c + bc_ref[...]                                    # zero-mean per D-group

    # Per-original-row (biased) variance: segment-mean of c^2 over each D-lane
    # group via a skinny pooling matmul (lane-dense, on the idle MXU).
    var_g = jnp.dot(c * c, pdn_ref[...],
                    preferred_element_type=jnp.float32, precision=_HIGHEST)
    # rsqrt stays on the narrow (block_p, G) tensor -- do NOT widen to G*D:
    # the EUP has a single VLIW slot and would become the binder.
    rstd_g = lax.rsqrt(var_g + LN_EPS)                     # (block_p, G)
    # Broadcast back to G*D lanes with gamma already folded into the operator.
    scale = jnp.dot(rstd_g, pupg_ref[...],
                    preferred_element_type=jnp.float32, precision=_HIGHEST)

    o_ref[...] = (c * scale + beta_ref[...]).astype(o_ref.dtype)


# ---------------------------------------------------------------------------
# Parameter preparation (run once at module init / constant-folds under jit)
# ---------------------------------------------------------------------------
def _prepare_params(weight, bias, ln_weight, ln_bias, group,
                    w_dtype=jnp.float32):
    """Packed, pre-centered kernel operands.

    weight: (D, C) PyTorch Linear layout.  Centering is done in f32 so that
    mean_d(x @ w_c + b_c) == 0 for any x (lets the kernel skip the LN mean
    pass); only the final w_big storage dtype is `w_dtype`.
    """
    d_out, _ = weight.shape
    w_t = weight.astype(jnp.float32).T                      # (C, D)
    b = bias.astype(jnp.float32)
    w_c = w_t - jnp.mean(w_t, axis=1, keepdims=True)
    b_c = b - jnp.mean(b)

    eye_g = jnp.eye(group, dtype=jnp.float32)
    w_big = jnp.kron(eye_g, w_c).astype(w_dtype)            # (G*C, G*D) block-diag
    b_big = jnp.tile(b_c, group)[None, :]                   # (1, G*D) f32
    beta_big = jnp.tile(ln_bias.astype(jnp.float32), group)[None, :]
    gamma_big = jnp.tile(ln_weight.astype(jnp.float32), group)[None, :]
    # Segment-mean (down) and gamma-weighted segment-broadcast (up) operators.
    p_down = jnp.kron(eye_g, jnp.full((d_out, 1), 1.0 / d_out, jnp.float32))
    p_up_gamma = jnp.kron(eye_g, jnp.ones((1, d_out), jnp.float32)) * gamma_big
    return w_big, b_big, beta_big, p_down, p_up_gamma


def _pick_group(cont_num, proj_dim):
    """Pack factor so BOTH the packed input (G*C) and output (G*D) rows are
    multiples of 128 lanes.  Capped so the resident block-diag weight stays a
    few MiB at most (only triggers for unusually wide layers)."""
    g = math.lcm(128 // math.gcd(128, cont_num), 128 // math.gcd(128, proj_dim))
    g = max(1, min(g, 128))
    while g > 1 and (g * cont_num) * (g * proj_dim) * 4 > (4 << 20):
        g //= 2
    return max(g, 1)


# ---------------------------------------------------------------------------
# Public entry point
# ---------------------------------------------------------------------------
def cont_embedding_projector(cont_x, weight, bias, ln_weight, ln_bias,
                             *, out_dtype=None, block_p=1024):
    """LayerNorm(Linear(cont_x)): (..., cont_num) -> (..., cont_proj_dim).

    weight: (cont_proj_dim, cont_num)  -- PyTorch Linear layout (out, in)
    bias / ln_weight / ln_bias: (cont_proj_dim,)

    out_dtype: STRONGLY RECOMMENDED jnp.bfloat16 when the consumer tolerates
               it -- the kernel is HBM-bound, the output stream is ~8x the
               input bytes, and bf16 also halves vector-store slot pressure.
               Default keeps the input dtype (exact PyTorch semantics).
               Internal math is always accumulated in f32.
    block_p:   packed rows per grid step (auto-clamped to the VMEM budget).
    """
    cont_num = cont_x.shape[-1]
    proj_dim = weight.shape[0]
    lead_shape = cont_x.shape[:-1]
    out_dtype = cont_x.dtype if out_dtype is None else out_dtype

    group = _pick_group(cont_num, proj_dim)
    gc, gd = group * cont_num, group * proj_dim

    x2d = cont_x.reshape(-1, cont_num)
    rows = x2d.shape[0]

    # Pad ONLY to a multiple of `group` (< group rows).  The last partial row
    # *tile* is handled by the grid (cdiv + masked OOB writeback), so there is
    # no padding to a tile multiple.  Callers that arrange batch*seq % group
    # == 0 avoid even this small copy.
    rem = rows % group
    if rem:
        x2d = jnp.pad(x2d, ((0, group - rem), (0, 0)))
    rows_g = x2d.shape[0]
    rows_p = rows_g // group
    xp = x2d.reshape(rows_p, gc)            # contiguous => free reshape

    # bf16 inputs -> bf16 resident weight + native bf16 MXU pass in-kernel.
    w_dtype = jnp.bfloat16 if cont_x.dtype == jnp.bfloat16 else jnp.float32
    w_big, b_big, beta_big, p_down, p_up_gamma = _prepare_params(
        weight, bias, ln_weight, ln_bias, group, w_dtype=w_dtype)

    # ---- row-tile sizing -------------------------------------------------
    in_row_b = gc * x2d.dtype.itemsize
    out_row_b = gd * jnp.dtype(out_dtype).itemsize
    param_b = 2 * (gc * gd * jnp.dtype(w_dtype).itemsize
                   + 2 * gd * 4 + gd * group * 4 + group * gd * 4)
    # Double-buffered footprint <= ~12 MiB: fits v5e's 16 MiB scoped-VMEM
    # default and leaves ample headroom on v6e/v7x (32 MiB default).
    vmem_budget = 12 << 20
    max_bp = max(8, (vmem_budget - param_b) // (2 * (in_row_b + out_row_b)))
    bp = max(8, min(block_p, max_bp))
    # v7x megacore: when there are plenty of rows, prefer >= ~8 tiles so the
    # "parallel" axis splits across both TensorCores -- but never shrink the
    # output tile below ~1 MiB (per-step overhead ~0.35us dominates below).
    if rows_p >= 8 * 256:
        bp = min(bp, max(256, _round_up(_cdiv(rows_p, 8), 8)))
    bp = _round_up(bp, 8)
    if bp >= rows_p:
        bp = rows_p            # single tile; "equals full dim" satisfies 8-row rule
    num_blocks = _cdiv(rows_p, bp)

    out_p = pl.pallas_call(
        _proj_ln_kernel,
        out_shape=jax.ShapeDtypeStruct((rows_p, gd), out_dtype),
        grid=(num_blocks,),
        in_specs=[
            pl.BlockSpec((bp, gc), lambda i: (i, 0)),        # streamed row tiles
            pl.BlockSpec((gc, gd), lambda i: (0, 0)),        # resident params
            pl.BlockSpec((1, gd), lambda i: (0, 0)),
            pl.BlockSpec((gd, group), lambda i: (0, 0)),
            pl.BlockSpec((group, gd), lambda i: (0, 0)),
            pl.BlockSpec((1, gd), lambda i: (0, 0)),
        ],
        out_specs=pl.BlockSpec((bp, gd), lambda i: (i, 0)),
        compiler_params=pltpu.CompilerParams(
            dimension_semantics=("parallel",)),   # v7x: shard tiles over 2 TCs
    )(xp, w_big, b_big, p_down, p_up_gamma, beta_big)

    out2d = out_p.reshape(rows_g, proj_dim)[:rows]   # free unpack + drop pad
    return out2d.reshape(*lead_shape, proj_dim)


# ---------------------------------------------------------------------------
# Pure-JAX reference (PyTorch semantics)
# ---------------------------------------------------------------------------
def _reference(cont_x, weight, bias, ln_weight, ln_bias):
    y = jnp.einsum("...c,dc->...d", cont_x.astype(jnp.float32),
                   weight.astype(jnp.float32), precision=_HIGHEST) + bias
    mean = jnp.mean(y, axis=-1, keepdims=True)
    var = jnp.mean((y - mean) ** 2, axis=-1, keepdims=True)
    return (y - mean) / jnp.sqrt(var + LN_EPS) * ln_weight + ln_bias


if __name__ == "__main__":
    # args.cont_num = 4, args.cont_proj_dim = 32
    cont_num, cont_proj_dim = 4, 32

    key = jax.random.PRNGKey(0)
    k_x, k_w, k_b, k_x2 = jax.random.split(key, 4)

    # Deterministic synthetic parameters (not a checkpoint load).
    weight = jax.random.normal(k_w, (cont_proj_dim, cont_num), jnp.float32) * 0.1
    bias = jax.random.normal(k_b, (cont_proj_dim,), jnp.float32) * 0.01
    ln_weight = jnp.ones((cont_proj_dim,), jnp.float32)    # PyTorch LN init
    ln_bias = jnp.zeros((cont_proj_dim,), jnp.float32)

    # --- check 1: small shape from the module spec (batch=2, seq=8) ---------
    batch, seq = 2, 8
    cont_x = jax.random.normal(k_x, (batch, seq, cont_num), dtype=jnp.float32)
    out = jax.block_until_ready(
        cont_embedding_projector(cont_x, weight, bias, ln_weight, ln_bias))
    ref = _reference(cont_x, weight, bias, ln_weight, ln_bias)
    assert out.shape == (batch, seq, cont_proj_dim)
    assert jnp.allclose(out, ref, atol=1e-4, rtol=1e-4), "mismatch (f32 small)"

    # --- check 2: multi-block grid with a partial last tile + group pad -----
    cont_x2 = jax.random.normal(k_x2, (4, 257, cont_num), dtype=jnp.float32)
    out2 = jax.block_until_ready(
        cont_embedding_projector(cont_x2, weight, bias, ln_weight, ln_bias,
                                 block_p=16))
    ref2 = _reference(cont_x2, weight, bias, ln_weight, ln_bias)
    assert out2.shape == (4, 257, cont_proj_dim)
    assert jnp.allclose(out2, ref2, atol=1e-4, rtol=1e-4), "mismatch (multi-tile)"

    # --- check 3: recommended bf16 output stream ----------------------------
    out_bf16 = jax.block_until_ready(
        cont_embedding_projector(cont_x, weight, bias, ln_weight, ln_bias,
                                 out_dtype=jnp.bfloat16))
    assert out_bf16.dtype == jnp.bfloat16
    assert jnp.allclose(out_bf16.astype(jnp.float32), ref, atol=5e-2), \
        "mismatch (bf16 output)"

    print("KERNEL_OK")
</pallas_src>

<mosaic_0001>
module attributes {stable_mosaic.version = 11 : i64} {
  func.func @_proj_ln_kernel(%arg0: i32, %arg1: memref<1x128xf32, #tpu.memory_space<vmem>>, %arg2: memref<128x1024xf32, #tpu.memory_space<vmem>>, %arg3: memref<1x1024xf32, #tpu.memory_space<vmem>>, %arg4: memref<1024x32xf32, #tpu.memory_space<vmem>>, %arg5: memref<32x1024xf32, #tpu.memory_space<vmem>>, %arg6: memref<1x1024xf32, #tpu.memory_space<vmem>>, %arg7: memref<1x1024xf32, #tpu.memory_space<vmem>>) attributes {dimension_semantics = [#tpu.dimension_semantics<parallel>], iteration_bounds = array<i64: 1>, scalar_prefetch = 0 : i64, scratch_operands = 0 : i64, tpu.core_type = #tpu.core_type<tc>, window_params = [{transform_indices = @transform_0, window_bounds = array<i64: 1, 128>}, {pipeline_mode = #tpu.pipeline_mode<synchronous>, transform_indices = @transform_1, window_bounds = array<i64: 128, 1024>}, {pipeline_mode = #tpu.pipeline_mode<synchronous>, transform_indices = @transform_2, window_bounds = array<i64: 1, 1024>}, {pipeline_mode = #tpu.pipeline_mode<synchronous>, transform_indices = @transform_3, window_bounds = array<i64: 1024, 32>}, {pipeline_mode = #tpu.pipeline_mode<synchronous>, transform_indices = @transform_4, window_bounds = array<i64: 32, 1024>}, {pipeline_mode = #tpu.pipeline_mode<synchronous>, transform_indices = @transform_5, window_bounds = array<i64: 1, 1024>}, {transform_indices = @transform_6, window_bounds = array<i64: 1, 1024>}]} {
    %c0 = arith.constant 0 : index
    %c0_0 = arith.constant 0 : index
    %0 = vector.load %arg1[%c0, %c0_0] : memref<1x128xf32, #tpu.memory_space<vmem>>, vector<1x128xf32>
    %c0_1 = arith.constant 0 : index
    %c0_2 = arith.constant 0 : index
    %1 = vector.load %arg2[%c0_1, %c0_2] : memref<128x1024xf32, #tpu.memory_space<vmem>>, vector<128x1024xf32>
    %cst = arith.constant dense<0.000000e+00> : vector<1x1024xf32>
    %2 = tpu.matmul %0, %1, %cst {dimension_numbers = #tpu.dot_dimension_numbers<[1], [0], [0], [1], [0, 0, 1, 1], [], []>, precision = #tpu.contract_precision<fp32>} : vector<1x128xf32>, vector<128x1024xf32>, vector<1x1024xf32> -> vector<1x1024xf32>
    %c0_3 = arith.constant 0 : index
    %c0_4 = arith.constant 0 : index
    %3 = vector.load %arg3[%c0_3, %c0_4] : memref<1x1024xf32, #tpu.memory_space<vmem>>, vector<1x1024xf32>
    %4 = arith.addf %2, %3 : vector<1x1024xf32>
    %5 = arith.mulf %4, %4 : vector<1x1024xf32>
    %c0_5 = arith.constant 0 : index
    %c0_6 = arith.constant 0 : index
    %6 = vector.load %arg4[%c0_5, %c0_6] : memref<1024x32xf32, #tpu.memory_space<vmem>>, vector<1024x32xf32>
    %cst_7 = arith.constant dense<0.000000e+00> : vector<1x32xf32>
    %7 = tpu.matmul %5, %6, %cst_7 {dimension_numbers = #tpu.dot_dimension_numbers<[1], [0], [0], [1], [0, 0, 1, 1], [], []>, precision = #tpu.contract_precision<fp32>} : vector<1x1024xf32>, vector<1024x32xf32>, vector<1x32xf32> -> vector<1x32xf32>
    %cst_8 = arith.constant 9.99999974E-6 : f32
    %8 = vector.broadcast %cst_8 : f32 to vector<1x32xf32>
    %9 = arith.addf %7, %8 : vector<1x32xf32>
    %10 = math.rsqrt %9 : vector<1x32xf32>
    %c0_9 = arith.constant 0 : index
    %c0_10 = arith.constant 0 : index
    %11 = vector.load %arg5[%c0_9, %c0_10] : memref<32x1024xf32, #tpu.memory_space<vmem>>, vector<32x1024xf32>
    %cst_11 = arith.constant dense<0.000000e+00> : vector<1x1024xf32>
    %12 = tpu.matmul %10, %11, %cst_11 {dimension_numbers = #tpu.dot_dimension_numbers<[1], [0], [0], [1], [0, 0, 1, 1], [], []>, precision = #tpu.contract_precision<fp32>} : vector<1x32xf32>, vector<32x1024xf32>, vector<1x1024xf32> -> vector<1x1024xf32>
    %13 = arith.mulf %4, %12 : vector<1x1024xf32>
    %c0_12 = arith.constant 0 : index
    %c0_13 = arith.constant 0 : index
    %14 = vector.load %arg6[%c0_12, %c0_13] : memref<1x1024xf32, #tpu.memory_space<vmem>>, vector<1x1024xf32>
    %15 = arith.addf %13, %14 : vector<1x1024xf32>
    %c0_14 = arith.constant 0 : index
    %c0_15 = arith.constant 0 : index
    %16 = vector.load %arg7[%c0_14, %c0_15] : memref<1x1024xf32, #tpu.memory_space<vmem>>, vector<1x1024xf32>
    tpu.vector_store %arg7[%c0_14, %c0_15], %15 {strides = array<i32>} : memref<1x1024xf32, #tpu.memory_space<vmem>>, vector<1x1024xf32>,
    return
  }
  func.func @transform_0(%arg0: i32) -> (i32, i32) {
    %c0_i32 = arith.constant 0 : i32
    %c0_i32_0 = arith.constant 0 : i32
    return %arg0, %c0_i32 : i32, i32
  }
  func.func @transform_1(%arg0: i32) -> (i32, i32) {
    %c0_i32 = arith.constant 0 : i32
    %c0_i32_0 = arith.constant 0 : i32
    %c0_i32_1 = arith.constant 0 : i32
    return %c0_i32, %c0_i32_0 : i32, i32
  }
  func.func @transform_2(%arg0: i32) -> (i32, i32) {
    %c0_i32 = arith.constant 0 : i32
    %c0_i32_0 = arith.constant 0 : i32
    %c0_i32_1 = arith.constant 0 : i32
    return %c0_i32, %c0_i32_0 : i32, i32
  }
  func.func @transform_3(%arg0: i32) -> (i32, i32) {
    %c0_i32 = arith.constant 0 : i32
    %c0_i32_0 = arith.constant 0 : i32
    %c0_i32_1 = arith.constant 0 : i32
    return %c0_i32, %c0_i32_0 : i32, i32
  }
  func.func @transform_4(%arg0: i32) -> (i32, i32) {
    %c0_i32 = arith.constant 0 : i32
    %c0_i32_0 = arith.constant 0 : i32
    %c0_i32_1 = arith.constant 0 : i32
    return %c0_i32, %c0_i32_0 : i32, i32
  }
  func.func @transform_5(%arg0: i32) -> (i32, i32) {
    %c0_i32 = arith.constant 0 : i32
    %c0_i32_0 = arith.constant 0 : i32
    %c0_i32_1 = arith.constant 0 : i32
    return %c0_i32, %c0_i32_0 : i32, i32
  }
  func.func @transform_6(%arg0: i32) -> (i32, i32) {
    %c0_i32 = arith.constant 0 : i32
    %c0_i32_0 = arith.constant 0 : i32
    return %arg0, %c0_i32 : i32, i32
  }
}

</mosaic_0001>

<llo_original>
// kernel: tpu_custom_call.1
$region0: #{tpu_custom_call.1}
  #allocation0 [shape = 'u32[]', space=smem, size = 0x4, offset = 0x4, fixed_abs, tag = 'smem constant byte address 0x4 - core index']
  #allocation1 [shape = 'u32[144,128]{1,0:T(1,128)}', space=vmem, size = 0x12000, scoped, tag = 'internal scratch']
  %s0 = inlined_call_operand.vmem [shape: f32[1,128], index: 0, kind: input, shape index: {}]
  %s1 = inlined_call_operand.vmem [shape: f32[128,1024], index: 1, kind: input, shape index: {}]
  %s2 = inlined_call_operand.hbm [shape: f32[1,1024], index: 2, kind: input, shape index: {}]
  %s3 = inlined_call_operand.vmem [shape: f32[1024,32], index: 3, kind: input, shape index: {}]
  %s4 = inlined_call_operand.vmem [shape: f32[32,1024], index: 4, kind: input, shape index: {}]
  %s5 = inlined_call_operand.hbm [shape: f32[1,1024], index: 5, kind: input, shape index: {}]
  %s6 = inlined_call_operand.hbm [shape: f32[1,1024], index: 6, kind: output, shape index: {}]
  %s7 = sld [smem:[#allocation0]]
  $region42: #{tpu_custom_call.1} parent=0
    _
  %s9 = ssub.s32 1, %s7
  %s10 = scalar_select 0, %s9, %s7
  $region1: #{tpu_custom_call.1} parent=0
    #allocation2 [shape = 'u8[4096]{0}', space=vmem, size = 0x1000, scoped, tag = 'input window, operand 2, single buffered']
    #allocation3 [shape = 's32[1]{0}', space=sflag, size = 0x4, scoped, tag = 'scoped memory for tpu_custom_call.1']
    #allocation4 [shape = 's32[1]{0}', space=sflag, size = 0x4, scoped, tag = 'scoped memory for tpu_custom_call.1']
    #allocation5 [shape = 'u8[4096]{0}', space=vmem, size = 0x1000, scoped, tag = 'input window, operand 5, single buffered']
    #allocation6 [shape = 's32[1]{0}', space=sflag, size = 0x4, scoped, tag = 'scoped memory for tpu_custom_call.1']
    #allocation7 [shape = 'u8[4096]{0}', space=vmem, size = 0x1000, scoped, tag = 'output window, operand 0, single buffered']
    %11 = vsyncpa [#allocation3], 0
    %12 = vsyncpa [#allocation6], 0
    %13 = vsyncpa [#allocation4], 0
    // Predicated region
    $region2: #{tpu_custom_call.1} parent=1 // pred_check
      _
    $region3: #{tpu_custom_call.1} parent=1 // pred_check_branch
      %15 = sbr.rel (0) target = $region5
    $region4: #{tpu_custom_call.1} parent=1 // pred_region
      _
    $region5: #{tpu_custom_call.1} parent=1 // pred_fallthru
      _
    // Predicated region
    $region6: #{tpu_custom_call.1} parent=1 // pred_check
      _
    $region7: #{tpu_custom_call.1} parent=1 // pred_check_branch
      %17 = sbr.rel (0) target = $region9
    $region8: #{tpu_custom_call.1} parent=1 // pred_region
      _
    $region9: #{tpu_custom_call.1} parent=1 // pred_fallthru
      _
    // Predicated region
    $region10: #{tpu_custom_call.1} parent=1 // pred_check
      _
    $region11: #{tpu_custom_call.1} parent=1 // pred_check_branch
      %19 = sbr.rel (0) target = $region13
    $region12: #{tpu_custom_call.1} parent=1 // pred_region
      %s21 = ssub.s32 128, 128
      %22 = vsyncadd [#allocation3], %s21
      %s24 = sshll.u32 [#allocation2], 4
      %s25 = int_to_ptr.vmem [resolvable:$true] %s24
      %27 = dma.hbm_to_vmem [thread:$0]  %s2, 128, %s25, [#allocation3]
    $region13: #{tpu_custom_call.1} parent=1 // pred_fallthru
      _
    // Predicated region
    $region14: #{tpu_custom_call.1} parent=1 // pred_check
      _
    $region15: #{tpu_custom_call.1} parent=1 // pred_check_branch
      %29 = sbr.rel (0) target = $region17
    $region16: #{tpu_custom_call.1} parent=1 // pred_region
      _
    $region17: #{tpu_custom_call.1} parent=1 // pred_fallthru
      _
    // Predicated region
    $region18: #{tpu_custom_call.1} parent=1 // pred_check
      _
    $region19: #{tpu_custom_call.1} parent=1 // pred_check_branch
      %31 = sbr.rel (0) target = $region21
    $region20: #{tpu_custom_call.1} parent=1 // pred_region
      _
    $region21: #{tpu_custom_call.1} parent=1 // pred_fallthru
      _
    // Predicated region
    $region22: #{tpu_custom_call.1} parent=1 // pred_check
      _
    $region23: #{tpu_custom_call.1} parent=1 // pred_check_branch
      %33 = sbr.rel (0) target = $region25
    $region24: #{tpu_custom_call.1} parent=1 // pred_region
      %s35 = ssub.s32 128, 128
      %36 = vsyncadd [#allocation6], %s35
      %s38 = sshll.u32 [#allocation5], 4
      %s39 = int_to_ptr.vmem [resolvable:$true] %s38
      %41 = dma.hbm_to_vmem [thread:$0]  %s5, 128, %s39, [#allocation6]
    $region25: #{tpu_custom_call.1} parent=1 // pred_fallthru
      _
    // Predicated region
    $region26: #{tpu_custom_call.1} parent=1 // pred_check
      _
    $region27: #{tpu_custom_call.1} parent=1 // pred_check_branch
      %43 = sbr.rel (0) target = $region29
    $region28: #{tpu_custom_call.1} parent=1 // pred_region
      %44 = dma.done [#allocation3], 128
    $region29: #{tpu_custom_call.1} parent=1 // pred_fallthru
      _
    // Predicated region
    $region30: #{tpu_custom_call.1} parent=1 // pred_check
      _
    $region31: #{tpu_custom_call.1} parent=1 // pred_check_branch
      %46 = sbr.rel (0) target = $region33
    $region32: #{tpu_custom_call.1} parent=1 // pred_region
      %47 = dma.done [#allocation6], 128
    $region33: #{tpu_custom_call.1} parent=1 // pred_fallthru
      _
    %v48 = vld [vmem:[%s0] sm:$0x1]
    %v49 = vld [vmem:[%s1] sm:$0xff]
    %v50 = vld [vmem:[%s1 + $0x8] sm:$0xff]
    %v51 = vld [vmem:[%s1 + $0x10] sm:$0xff]
    %v52 = vld [vmem:[%s1 + $0x18] sm:$0xff]
    %v53 = vld [vmem:[%s1 + $0x20] sm:$0xff]
    %v54 = vld [vmem:[%s1 + $0x28] sm:$0xff]
    %v55 = vld [vmem:[%s1 + $0x30] sm:$0xff]
    %v56 = vld [vmem:[%s1 + $0x38] sm:$0xff]
    %v57 = vld [vmem:[%s1 + $0x40] sm:$0xff]
    %v58 = vld [vmem:[%s1 + $0x48] sm:$0xff]
    %v59 = vld [vmem:[%s1 + $0x50] sm:$0xff]
    %v60 = vld [vmem:[%s1 + $0x58] sm:$0xff]
    %v61 = vld [vmem:[%s1 + $0x60] sm:$0xff]
    %v62 = vld [vmem:[%s1 + $0x68] sm:$0xff]
    %v63 = vld [vmem:[%s1 + $0x70] sm:$0xff]
    %v64 = vld [vmem:[%s1 + $0x78] sm:$0xff]
    %v65 = vld [vmem:[%s1 + $0x80] sm:$0xff]
    %v66 = vld [vmem:[%s1 + $0x88] sm:$0xff]
    %v67 = vld [vmem:[%s1 + $0x90] sm:$0xff]
    %v68 = vld [vmem:[%s1 + $0x98] sm:$0xff]
    %v69 = vld [vmem:[%s1 + $0xa0] sm:$0xff]
    %v70 = vld [vmem:[%s1 + $0xa8] sm:$0xff]
    %v71 = vld [vmem:[%s1 + $0xb0] sm:$0xff]
    %v72 = vld [vmem:[%s1 + $0xb8] sm:$0xff]
    %v73 = vld [vmem:[%s1 + $0xc0] sm:$0xff]
    %v74 = vld [vmem:[%s1 + $0xc8] sm:$0xff]
    %v75 = vld [vmem:[%s1 + $0xd0] sm:$0xff]
    %v76 = vld [vmem:[%s1 + $0xd8] sm:$0xff]
    %v77 = vld [vmem:[%s1 + $0xe0] sm:$0xff]
    %v78 = vld [vmem:[%s1 + $0xe8] sm:$0xff]
    %v79 = vld [vmem:[%s1 + $0xf0] sm:$0xff]
    %v80 = vld [vmem:[%s1 + $0xf8] sm:$0xff]
    %v81 = vld [vmem:[%s1 + $0x100] sm:$0xff]
    %v82 = vld [vmem:[%s1 + $0x108] sm:$0xff]
    %v83 = vld [vmem:[%s1 + $0x110] sm:$0xff]
    %v84 = vld [vmem:[%s1 + $0x118] sm:$0xff]
    %v85 = vld [vmem:[%s1 + $0x120] sm:$0xff]
    %v86 = vld [vmem:[%s1 + $0x128] sm:$0xff]
    %v87 = vld [vmem:[%s1 + $0x130] sm:$0xff]
    %v88 = vld [vmem:[%s1 + $0x138] sm:$0xff]
    %v89 = vld [vmem:[%s1 + $0x140] sm:$0xff]
    %v90 = vld [vmem:[%s1 + $0x148] sm:$0xff]
    %v91 = vld [vmem:[%s1 + $0x150] sm:$0xff]
    %v92 = vld [vmem:[%s1 + $0x158] sm:$0xff]
    %v93 = vld [vmem:[%s1 + $0x160] sm:$0xff]
    %v94 = vld [vmem:[%s1 + $0x168] sm:$0xff]
    %v95 = vld [vmem:[%s1 + $0x170] sm:$0xff]
    %v96 = vld [vmem:[%s1 + $0x178] sm:$0xff]
    %v97 = vld [vmem:[%s1 + $0x180] sm:$0xff]
    %v98 = vld [vmem:[%s1 + $0x188] sm:$0xff]
    %v99 = vld [vmem:[%s1 + $0x190] sm:$0xff]
    %v100 = vld [vmem:[%s1 + $0x198] sm:$0xff]
    %v101 = vld [vmem:[%s1 + $0x1a0] sm:$0xff]
    %v102 = vld [vmem:[%s1 + $0x1a8] sm:$0xff]
    %v103 = vld [vmem:[%s1 + $0x1b0] sm:$0xff]
    %v104 = vld [vmem:[%s1 + $0x1b8] sm:$0xff]
    %v105 = vld [vmem:[%s1 + $0x1c0] sm:$0xff]
    %v106 = vld [vmem:[%s1 + $0x1c8] sm:$0xff]
    %v107 = vld [vmem:[%s1 + $0x1d0] sm:$0xff]
    %v108 = vld [vmem:[%s1 + $0x1d8] sm:$0xff]
    %v109 = vld [vmem:[%s1 + $0x1e0] sm:$0xff]
    %v110 = vld [vmem:[%s1 + $0x1e8] sm:$0xff]
    %v111 = vld [vmem:[%s1 + $0x1f0] sm:$0xff]
    %v112 = vld [vmem:[%s1 + $0x1f8] sm:$0xff]
    %v113 = vld [vmem:[%s1 + $0x200] sm:$0xff]
    %v114 = vld [vmem:[%s1 + $0x208] sm:$0xff]
    %v115 = vld [vmem:[%s1 + $0x210] sm:$0xff]
    %v116 = vld [vmem:[%s1 + $0x218] sm:$0xff]
    %v117 = vld [vmem:[%s1 + $0x220] sm:$0xff]
    %v118 = vld [vmem:[%s1 + $0x228] sm:$0xff]
    %v119 = vld [vmem:[%s1 + $0x230] sm:$0xff]
    %v120 = vld [vmem:[%s1 + $0x238] sm:$0xff]
    %v121 = vld [vmem:[%s1 + $0x240] sm:$0xff]
    %v122 = vld [vmem:[%s1 + $0x248] sm:$0xff]
    %v123 = vld [vmem:[%s1 + $0x250] sm:$0xff]
    %v124 = vld [vmem:[%s1 + $0x258] sm:$0xff]
    %v125 = vld [vmem:[%s1 + $0x260] sm:$0xff]
    %v126 = vld [vmem:[%s1 + $0x268] sm:$0xff]
    %v127 = vld [vmem:[%s1 + $0x270] sm:$0xff]
    %v128 = vld [vmem:[%s1 + $0x278] sm:$0xff]
    %v129 = vld [vmem:[%s1 + $0x280] sm:$0xff]
    %v130 = vld [vmem:[%s1 + $0x288] sm:$0xff]
    %v131 = vld [vmem:[%s1 + $0x290] sm:$0xff]
    %v132 = vld [vmem:[%s1 + $0x298] sm:$0xff]
    %v133 = vld [vmem:[%s1 + $0x2a0] sm:$0xff]
    %v134 = vld [vmem:[%s1 + $0x2a8] sm:$0xff]
    %v135 = vld [vmem:[%s1 + $0x2b0] sm:$0xff]
    %v136 = vld [vmem:[%s1 + $0x2b8] sm:$0xff]
    %v137 = vld [vmem:[%s1 + $0x2c0] sm:$0xff]
    %v138 = vld [vmem:[%s1 + $0x2c8] sm:$0xff]
    %v139 = vld [vmem:[%s1 + $0x2d0] sm:$0xff]
    %v140 = vld [vmem:[%s1 + $0x2d8] sm:$0xff]
    %v141 = vld [vmem:[%s1 + $0x2e0] sm:$0xff]
    %v142 = vld [vmem:[%s1 + $0x2e8] sm:$0xff]
    %v143 = vld [vmem:[%s1 + $0x2f0] sm:$0xff]
    %v144 = vld [vmem:[%s1 + $0x2f8] sm:$0xff]
    %v145 = vld [vmem:[%s1 + $0x300] sm:$0xff]
    %v146 = vld [vmem:[%s1 + $0x308] sm:$0xff]
    %v147 = vld [vmem:[%s1 + $0x310] sm:$0xff]
    %v148 = vld [vmem:[%s1 + $0x318] sm:$0xff]
    %v149 = vld [vmem:[%s1 + $0x320] sm:$0xff]
    %v150 = vld [vmem:[%s1 + $0x328] sm:$0xff]
    %v151 = vld [vmem:[%s1 + $0x330] sm:$0xff]
    %v152 = vld [vmem:[%s1 + $0x338] sm:$0xff]
    %v153 = vld [vmem:[%s1 + $0x340] sm:$0xff]
    %v154 = vld [vmem:[%s1 + $0x348] sm:$0xff]
    %v155 = vld [vmem:[%s1 + $0x350] sm:$0xff]
    %v156 = vld [vmem:[%s1 + $0x358] sm:$0xff]
    %v157 = vld [vmem:[%s1 + $0x360] sm:$0xff]
    %v158 = vld [vmem:[%s1 + $0x368] sm:$0xff]
    %v159 = vld [vmem:[%s1 + $0x370] sm:$0xff]
    %v160 = vld [vmem:[%s1 + $0x378] sm:$0xff]
    %v161 = vld [vmem:[%s1 + $0x380] sm:$0xff]
    %v162 = vld [vmem:[%s1 + $0x388] sm:$0xff]
    %v163 = vld [vmem:[%s1 + $0x390] sm:$0xff]
    %v164 = vld [vmem:[%s1 + $0x398] sm:$0xff]
    %v165 = vld [vmem:[%s1 + $0x3a0] sm:$0xff]
    %v166 = vld [vmem:[%s1 + $0x3a8] sm:$0xff]
    %v167 = vld [vmem:[%s1 + $0x3b0] sm:$0xff]
    %v168 = vld [vmem:[%s1 + $0x3b8] sm:$0xff]
    %v169 = vld [vmem:[%s1 + $0x3c0] sm:$0xff]
    %v170 = vld [vmem:[%s1 + $0x3c8] sm:$0xff]
    %v171 = vld [vmem:[%s1 + $0x3d0] sm:$0xff]
    %v172 = vld [vmem:[%s1 + $0x3d8] sm:$0xff]
    %v173 = vld [vmem:[%s1 + $0x3e0] sm:$0xff]
    %v174 = vld [vmem:[%s1 + $0x3e8] sm:$0xff]
    %v175 = vld [vmem:[%s1 + $0x3f0] sm:$0xff]
    %v176 = vld [vmem:[%s1 + $0x3f8] sm:$0xff]
    %v177 = vld [vmem:[#allocation2] sm:$0xff]
    %v179 = vlaneseq
    %v180 = vshrl.u32 %v179, 7
    %v181 = vsub.s32 0, %v180
    %v182 = vrot.slane %v177, %v181
    %v183 = vlaneseq
    %v184 = vshrl.u32 %v183, 7
    %v185 = vsub.s32 1, %v184
    %v186 = vrot.slane %v177, %v185
    %v187 = vlaneseq
    %v188 = vshrl.u32 %v187, 7
    %v189 = vsub.s32 2, %v188
    %v190 = vrot.slane %v177, %v189
    %v191 = vlaneseq
    %v192 = vshrl.u32 %v191, 7
    %v193 = vsub.s32 3, %v192
    %v194 = vrot.slane %v177, %v193
    %v195 = vlaneseq
    %v196 = vshrl.u32 %v195, 7
    %v197 = vsub.s32 4, %v196
    %v198 = vrot.slane %v177, %v197
    %v199 = vlaneseq
    %v200 = vshrl.u32 %v199, 7
    %v201 = vsub.s32 5, %v200
    %v202 = vrot.slane %v177, %v201
    %v203 = vlaneseq
    %v204 = vshrl.u32 %v203, 7
    %v205 = vsub.s32 6, %v204
    %v206 = vrot.slane %v177, %v205
    %v207 = vlaneseq
    %v208 = vshrl.u32 %v207, 7
    %v209 = vsub.s32 7, %v208
    %v210 = vrot.slane %v177, %v209
    %v219 = vand.u32 %v170, 4294901760
    %220 = vmatprep.subr.mxu0 %v219
    %v221 = vand.u32 %v169, 4294901760
    %222 = vmatpush1.msra.mxu0 %v221
    %v223 = vand.u32 %v162, 4294901760
    %224 = vmatprep.subr.mxu0 %v223
    %v225 = vand.u32 %v161, 4294901760
    %226 = vmatpush1.msra.mxu0 %v225
    %v227 = vand.u32 %v154, 4294901760
    %228 = vmatprep.subr.mxu0 %v227
    %v229 = vand.u32 %v153, 4294901760
    %230 = vmatpush1.msra.mxu0 %v229
    %v231 = vand.u32 %v146, 4294901760
    %232 = vmatprep.subr.mxu0 %v231
    %v233 = vand.u32 %v145, 4294901760
    %234 = vmatpush1.msra.mxu0 %v233
    %v235 = vand.u32 %v138, 4294901760
    %236 = vmatprep.subr.mxu0 %v235
    %v237 = vand.u32 %v137, 4294901760
    %238 = vmatpush1.msra.mxu0 %v237
    %v239 = vand.u32 %v130, 4294901760
    %240 = vmatprep.subr.mxu0 %v239
    %v241 = vand.u32 %v129, 4294901760
    %242 = vmatpush1.msra.mxu0 %v241
    %v243 = vand.u32 %v122, 4294901760
    %244 = vmatprep.subr.mxu0 %v243
    %v245 = vand.u32 %v121, 4294901760
    %246 = vmatpush1.msra.mxu0 %v245
    %v247 = vand.u32 %v114, 4294901760
    %248 = vmatprep.subr.mxu0 %v247
    %v249 = vand.u32 %v113, 4294901760
    %250 = vmatpush1.msra.mxu0 %v249
    %v251 = vand.u32 %v106, 4294901760
    %252 = vmatprep.subr.mxu0 %v251
    %v253 = vand.u32 %v105, 4294901760
    %254 = vmatpush1.msra.mxu0 %v253
    %v255 = vand.u32 %v98, 4294901760
    %256 = vmatprep.subr.mxu0 %v255
    %v257 = vand.u32 %v97, 4294901760
    %258 = vmatpush1.msra.mxu0 %v257
    %v259 = vand.u32 %v90, 4294901760
    %260 = vmatprep.subr.mxu0 %v259
    %v261 = vand.u32 %v89, 4294901760
    %262 = vmatpush1.msra.mxu0 %v261
    %v263 = vand.u32 %v82, 4294901760
    %264 = vmatprep.subr.mxu0 %v263
    %v265 = vand.u32 %v81, 4294901760
    %266 = vmatpush1.msra.mxu0 %v265
    %v267 = vand.u32 %v74, 4294901760
    %268 = vmatprep.subr.mxu0 %v267
    %v269 = vand.u32 %v73, 4294901760
    %270 = vmatpush1.msra.mxu0 %v269
    %v271 = vand.u32 %v66, 4294901760
    %272 = vmatprep.subr.mxu0 %v271
    %v273 = vand.u32 %v65, 4294901760
    %274 = vmatpush1.msra.mxu0 %v273
    %v275 = vand.u32 %v58, 4294901760
    %276 = vmatprep.subr.mxu0 %v275
    %v277 = vand.u32 %v57, 4294901760
    %278 = vmatpush1.msra.mxu0 %v277
    %v279 = vand.u32 %v50, 4294901760
    %280 = vmatprep.subr.mxu0 %v279
    %v281 = vand.u32 %v49, 4294901760
    %282 = vmatpush1.msra.mxu0 %v281
    %283 = vmatprep.subr.mxu0 0.0
    %284 = vmatpush2.msra.mxu0 0.0
    %285 = vmatprep.subr.mxu0 0.0
    %286 = vmatpush2.msra.mxu0 0.0
    %287 = vmatprep.subr.mxu0 0.0
    %288 = vmatpush2.msra.mxu0 0.0
    %289 = vmatprep.subr.mxu0 0.0
    %290 = vmatpush2.msra.mxu0 0.0
    %291 = vmatprep.subr.mxu0 0.0
    %292 = vmatpush2.msra.mxu0 0.0
    %293 = vmatprep.subr.mxu0 0.0
    %294 = vmatpush2.msra.mxu0 0.0
    %295 = vmatprep.subr.mxu0 0.0
    %296 = vmatpush2.msra.mxu0 0.0
    %297 = vmatprep.subr.mxu0 0.0
    %298 = vmatpush2.msra.mxu0 0.0
    %299 = vmatprep.subr.mxu0 0.0
    %300 = vmatpush2.msra.mxu0 0.0
    %301 = vmatprep.subr.mxu0 0.0
    %302 = vmatpush2.msra.mxu0 0.0
    %303 = vmatprep.subr.mxu0 0.0
    %304 = vmatpush2.msra.mxu0 0.0
    %305 = vmatprep.subr.mxu0 0.0
    %306 = vmatpush2.msra.mxu0 0.0
    %307 = vmatprep.subr.mxu0 0.0
    %308 = vmatpush2.msra.mxu0 0.0
    %309 = vmatprep.subr.mxu0 0.0
    %310 = vmatpush2.msra.mxu0 0.0
    %311 = vmatprep.subr.mxu0 0.0
    %312 = vmatpush2.msra.mxu0 0.0
    %313 = vmatprep.subr.mxu0 0.0
    %314 = vmatpush2.msra.mxu0 0.0
    %315 = vmatprep.mubr.f32.mxu0 0.0
    %v316 = vand.u32 %v48, 4294901760
    %v317 = vsub.f32 %v48, %v316
    %v318 = vand.u32 %v317, 4294901760
    %v319 = vsub.f32 %v317, %v318
    %v320 = vand.u32 %v319, 4294901760
    %321 = vmatmul.mubr.f32.gmra.mxu0 %v320
    %v322 = vpop.f32.mrf.mxu0
    %v323 = vadd.f32 %v182, %v322
    %v324 = vpop.f32.mrf.mxu0
    %v325 = vadd.f32 %v186, %v324
    %326 = vdwg.mxu0
    %v327 = vand.u32 %v170, 4294901760
    %v328 = vsub.f32 %v170, %v327
    %v329 = vand.u32 %v328, 4294901760
    %v330 = vsub.f32 %v328, %v329
    %v331 = vand.u32 %v330, 4294901760
    %332 = vmatprep.subr.mxu0 %v331
    %v333 = vand.u32 %v169, 4294901760
    %v334 = vsub.f32 %v169, %v333
    %v335 = vand.u32 %v334, 4294901760
    %v336 = vsub.f32 %v334, %v335
    %v337 = vand.u32 %v336, 4294901760
    %338 = vmatpush1.msra.mxu0 %v337
    %v339 = vand.u32 %v162, 4294901760
    %v340 = vsub.f32 %v162, %v339
    %v341 = vand.u32 %v340, 4294901760
    %v342 = vsub.f32 %v340, %v341
    %v343 = vand.u32 %v342, 4294901760
    %344 = vmatprep.subr.mxu0 %v343
    %v345 = vand.u32 %v161, 4294901760
    %v346 = vsub.f32 %v161, %v345
    %v347 = vand.u32 %v346, 4294901760
    %v348 = vsub.f32 %v346, %v347
    %v349 = vand.u32 %v348, 4294901760
    %350 = vmatpush1.msra.mxu0 %v349
    %v351 = vand.u32 %v154, 4294901760
    %v352 = vsub.f32 %v154, %v351
    %v353 = vand.u32 %v352, 4294901760
    %v354 = vsub.f32 %v352, %v353
    %v355 = vand.u32 %v354, 4294901760
    %356 = vmatprep.subr.mxu0 %v355
    %v357 = vand.u32 %v153, 4294901760
    %v358 = vsub.f32 %v153, %v357
    %v359 = vand.u32 %v358, 4294901760
    %v360 = vsub.f32 %v358, %v359
    %v361 = vand.u32 %v360, 4294901760
    %362 = vmatpush1.msra.mxu0 %v361
    %v363 = vand.u32 %v146, 4294901760
    %v364 = vsub.f32 %v146, %v363
    %v365 = vand.u32 %v364, 4294901760
    %v366 = vsub.f32 %v364, %v365
    %v367 = vand.u32 %v366, 4294901760
    %368 = vmatprep.subr.mxu0 %v367
    %v369 = vand.u32 %v145, 4294901760
    %v370 = vsub.f32 %v145, %v369
    %v371 = vand.u32 %v370, 4294901760
    %v372 = vsub.f32 %v370, %v371
    %v373 = vand.u32 %v372, 4294901760
    %374 = vmatpush1.msra.mxu0 %v373
    %v375 = vand.u32 %v138, 4294901760
    %v376 = vsub.f32 %v138, %v375
    %v377 = vand.u32 %v376, 4294901760
    %v378 = vsub.f32 %v376, %v377
    %v379 = vand.u32 %v378, 4294901760
    %380 = vmatprep.subr.mxu0 %v379
    %v381 = vand.u32 %v137, 4294901760
    %v382 = vsub.f32 %v137, %v381
    %v383 = vand.u32 %v382, 4294901760
    %v384 = vsub.f32 %v382, %v383
    %v385 = vand.u32 %v384, 4294901760
    %386 = vmatpush1.msra.mxu0 %v385
    %v387 = vand.u32 %v130, 4294901760
    %v388 = vsub.f32 %v130, %v387
    %v389 = vand.u32 %v388, 4294901760
    %v390 = vsub.f32 %v388, %v389
    %v391 = vand.u32 %v390, 4294901760
    %392 = vmatprep.subr.mxu0 %v391
    %v393 = vand.u32 %v129, 4294901760
    %v394 = vsub.f32 %v129, %v393
    %v395 = vand.u32 %v394, 4294901760
    %v396 = vsub.f32 %v394, %v395
    %v397 = vand.u32 %v396, 4294901760
    %398 = vmatpush1.msra.mxu0 %v397
    %v399 = vand.u32 %v122, 4294901760
    %v400 = vsub.f32 %v122, %v399
    %v401 = vand.u32 %v400, 4294901760
    %v402 = vsub.f32 %v400, %v401
    %v403 = vand.u32 %v402, 4294901760
    %404 = vmatprep.subr.mxu0 %v403
    %v405 = vand.u32 %v121, 4294901760
    %v406 = vsub.f32 %v121, %v405
    %v407 = vand.u32 %v406, 4294901760
    %v408 = vsub.f32 %v406, %v407
    %v409 = vand.u32 %v408, 4294901760
    %410 = vmatpush1.msra.mxu0 %v409
    %v411 = vand.u32 %v114, 4294901760
    %v412 = vsub.f32 %v114, %v411
    %v413 = vand.u32 %v412, 4294901760
    %v414 = vsub.f32 %v412, %v413
    %v415 = vand.u32 %v414, 4294901760
    %416 = vmatprep.subr.mxu0 %v415
    %v417 = vand.u32 %v113, 4294901760
    %v418 = vsub.f32 %v113, %v417
    %v419 = vand.u32 %v418, 4294901760
    %v420 = vsub.f32 %v418, %v419
    %v421 = vand.u32 %v420, 4294901760
    %422 = vmatpush1.msra.mxu0 %v421
    %v423 = vand.u32 %v106, 4294901760
    %v424 = vsub.f32 %v106, %v423
    %v425 = vand.u32 %v424, 4294901760
    %v426 = vsub.f32 %v424, %v425
    %v427 = vand.u32 %v426, 4294901760
    %428 = vmatprep.subr.mxu0 %v427
    %v429 = vand.u32 %v105, 4294901760
    %v430 = vsub.f32 %v105, %v429
    %v431 = vand.u32 %v430, 4294901760
    %v432 = vsub.f32 %v430, %v431
    %v433 = vand.u32 %v432, 4294901760
    %434 = vmatpush1.msra.mxu0 %v433
    %v435 = vand.u32 %v98, 4294901760
    %v436 = vsub.f32 %v98, %v435
    %v437 = vand.u32 %v436, 4294901760
    %v438 = vsub.f32 %v436, %v437
    %v439 = vand.u32 %v438, 4294901760
    %440 = vmatprep.subr.mxu0 %v439
    %v441 = vand.u32 %v97, 4294901760
    %v442 = vsub.f32 %v97, %v441
    %v443 = vand.u32 %v442, 4294901760
    %v444 = vsub.f32 %v442, %v443
    %v445 = vand.u32 %v444, 4294901760
    %446 = vmatpush1.msra.mxu0 %v445
    %v447 = vand.u32 %v90, 4294901760
    %v448 = vsub.f32 %v90, %v447
    %v449 = vand.u32 %v448, 4294901760
    %v450 = vsub.f32 %v448, %v449
    %v451 = vand.u32 %v450, 4294901760
    %452 = vmatprep.subr.mxu0 %v451
    %v453 = vand.u32 %v89, 4294901760
    %v454 = vsub.f32 %v89, %v453
    %v455 = vand.u32 %v454, 4294901760
    %v456 = vsub.f32 %v454, %v455
    %v457 = vand.u32 %v456, 4294901760
    %458 = vmatpush1.msra.mxu0 %v457
    %v459 = vand.u32 %v82, 4294901760
    %v460 = vsub.f32 %v82, %v459
    %v461 = vand.u32 %v460, 4294901760
    %v462 = vsub.f32 %v460, %v461
    %v463 = vand.u32 %v462, 4294901760
    %464 = vmatprep.subr.mxu0 %v463
    %v465 = vand.u32 %v81, 4294901760
    %v466 = vsub.f32 %v81, %v465
    %v467 = vand.u32 %v466, 4294901760
    %v468 = vsub.f32 %v466, %v467
    %v469 = vand.u32 %v468, 4294901760
    %470 = vmatpush1.msra.mxu0 %v469
    %v471 = vand.u32 %v74, 4294901760
    %v472 = vsub.f32 %v74, %v471
    %v473 = vand.u32 %v472, 4294901760
    %v474 = vsub.f32 %v472, %v473
    %v475 = vand.u32 %v474, 4294901760
    %476 = vmatprep.subr.mxu0 %v475
    %v477 = vand.u32 %v73, 4294901760
    %v478 = vsub.f32 %v73, %v477
    %v479 = vand.u32 %v478, 4294901760
    %v480 = vsub.f32 %v478, %v479
    %v481 = vand.u32 %v480, 4294901760
    %482 = vmatpush1.msra.mxu0 %v481
    %v483 = vand.u32 %v66, 4294901760
    %v484 = vsub.f32 %v66, %v483
    %v485 = vand.u32 %v484, 4294901760
    %v486 = vsub.f32 %v484, %v485
    %v487 = vand.u32 %v486, 4294901760
    %488 = vmatprep.subr.mxu0 %v487
    %v489 = vand.u32 %v65, 4294901760
    %v490 = vsub.f32 %v65, %v489
    %v491 = vand.u32 %v490, 4294901760
    %v492 = vsub.f32 %v490, %v491
    %v493 = vand.u32 %v492, 4294901760
    %494 = vmatpush1.msra.mxu0 %v493
    %v495 = vand.u32 %v58, 4294901760
    %v496 = vsub.f32 %v58, %v495
    %v497 = vand.u32 %v496, 4294901760
    %v498 = vsub.f32 %v496, %v497
    %v499 = vand.u32 %v498, 4294901760
    %500 = vmatprep.subr.mxu0 %v499
    %v501 = vand.u32 %v57, 4294901760
    %v502 = vsub.f32 %v57, %v501
    %v503 = vand.u32 %v502, 4294901760
    %v504 = vsub.f32 %v502, %v503
    %v505 = vand.u32 %v504, 4294901760
    %506 = vmatpush1.msra.mxu0 %v505
    %v507 = vand.u32 %v50, 4294901760
    %v508 = vsub.f32 %v50, %v507
    %v509 = vand.u32 %v508, 4294901760
    %v510 = vsub.f32 %v508, %v509
    %v511 = vand.u32 %v510, 4294901760
    %512 = vmatprep.subr.mxu0 %v511
    %v513 = vand.u32 %v49, 4294901760
    %v514 = vsub.f32 %v49, %v513
    %v515 = vand.u32 %v514, 4294901760
    %v516 = vsub.f32 %v514, %v515
    %v517 = vand.u32 %v516, 4294901760
    %518 = vmatpush1.msra.mxu0 %v517
    %519 = vmatprep.subr.mxu0 0.0
    %520 = vmatpush2.msra.mxu0 0.0
    %521 = vmatprep.subr.mxu0 0.0
    %522 = vmatpush2.msra.mxu0 0.0
    %523 = vmatprep.subr.mxu0 0.0
    %524 = vmatpush2.msra.mxu0 0.0
    %525 = vmatprep.subr.mxu0 0.0
    %526 = vmatpush2.msra.mxu0 0.0
    %527 = vmatprep.subr.mxu0 0.0
    %528 = vmatpush2.msra.mxu0 0.0
    %529 = vmatprep.subr.mxu0 0.0
    %530 = vmatpush2.msra.mxu0 0.0
    %531 = vmatprep.subr.mxu0 0.0
    %532 = vmatpush2.msra.mxu0 0.0
    %533 = vmatprep.subr.mxu0 0.0
    %534 = vmatpush2.msra.mxu0 0.0
    %535 = vmatprep.subr.mxu0 0.0
    %536 = vmatpush2.msra.mxu0 0.0
    %537 = vmatprep.subr.mxu0 0.0
    %538 = vmatpush2.msra.mxu0 0.0
    %539 = vmatprep.subr.mxu0 0.0
    %540 = vmatpush2.msra.mxu0 0.0
    %541 = vmatprep.subr.mxu0 0.0
    %542 = vmatpush2.msra.mxu0 0.0
    %543 = vmatprep.subr.mxu0 0.0
    %544 = vmatpush2.msra.mxu0 0.0
    %545 = vmatprep.subr.mxu0 0.0
    %546 = vmatpush2.msra.mxu0 0.0
    %547 = vmatprep.subr.mxu0 0.0
    %548 = vmatpush2.msra.mxu0 0.0
    %549 = vmatprep.subr.mxu0 0.0
    %550 = vmatpush2.msra.mxu0 0.0
    %551 = vmatprep.mubr.f32.mxu0 0.0
    %v552 = vand.u32 %v48, 4294901760
    %553 = vmatmul.mubr.f32.gmra.mxu0 %v552
    %v554 = vpop.f32.mrf.mxu0
    %v555 = vadd.f32 %v323, %v554
    %v556 = vpop.f32.mrf.mxu0
    %v557 = vadd.f32 %v325, %v556
    %558 = vdwg.mxu0
    %v559 = vand.u32 %v170, 4294901760
    %v560 = vsub.f32 %v170, %v559
    %561 = vmatprep.subr.mxu0 %v560
    %v562 = vand.u32 %v169, 4294901760
    %v563 = vsub.f32 %v169, %v562
    %564 = vmatpush1.msra.mxu0 %v563
    %v565 = vand.u32 %v162, 4294901760
    %v566 = vsub.f32 %v162, %v565
    %567 = vmatprep.subr.mxu0 %v566
    %v568 = vand.u32 %v161, 4294901760
    %v569 = vsub.f32 %v161, %v568
    %570 = vmatpush1.msra.mxu0 %v569
    %v571 = vand.u32 %v154, 4294901760
    %v572 = vsub.f32 %v154, %v571
    %573 = vmatprep.subr.mxu0 %v572
    %v574 = vand.u32 %v153, 4294901760
    %v575 = vsub.f32 %v153, %v574
    %576 = vmatpush1.msra.mxu0 %v575
    %v577 = vand.u32 %v146, 4294901760
    %v578 = vsub.f32 %v146, %v577
    %579 = vmatprep.subr.mxu0 %v578
    %v580 = vand.u32 %v145, 4294901760
    %v581 = vsub.f32 %v145, %v580
    %582 = vmatpush1.msra.mxu0 %v581
    %v583 = vand.u32 %v138, 4294901760
    %v584 = vsub.f32 %v138, %v583
    %585 = vmatprep.subr.mxu0 %v584
    %v586 = vand.u32 %v137, 4294901760
    %v587 = vsub.f32 %v137, %v586
    %588 = vmatpush1.msra.mxu0 %v587
    %v589 = vand.u32 %v130, 4294901760
    %v590 = vsub.f32 %v130, %v589
    %591 = vmatprep.subr.mxu0 %v590
    %v592 = vand.u32 %v129, 4294901760
    %v593 = vsub.f32 %v129, %v592
    %594 = vmatpush1.msra.mxu0 %v593
    %v595 = vand.u32 %v122, 4294901760
    %v596 = vsub.f32 %v122, %v595
    %597 = vmatprep.subr.mxu0 %v596
    %v598 = vand.u32 %v121, 4294901760
    %v599 = vsub.f32 %v121, %v598
    %600 = vmatpush1.msra.mxu0 %v599
    %v601 = vand.u32 %v114, 4294901760
    %v602 = vsub.f32 %v114, %v601
    %603 = vmatprep.subr.mxu0 %v602
    %v604 = vand.u32 %v113, 4294901760
    %v605 = vsub.f32 %v113, %v604
    %606 = vmatpush1.msra.mxu0 %v605
    %v607 = vand.u32 %v106, 4294901760
    %v608 = vsub.f32 %v106, %v607
    %609 = vmatprep.subr.mxu0 %v608
    %v610 = vand.u32 %v105, 4294901760
    %v611 = vsub.f32 %v105, %v610
    %612 = vmatpush1.msra.mxu0 %v611
    %v613 = vand.u32 %v98, 4294901760
    %v614 = vsub.f32 %v98, %v613
    %615 = vmatprep.subr.mxu0 %v614
    %v616 = vand.u32 %v97, 4294901760
    %v617 = vsub.f32 %v97, %v616
    %618 = vmatpush1.msra.mxu0 %v617
    %v619 = vand.u32 %v90, 4294901760
    %v620 = vsub.f32 %v90, %v619
    %621 = vmatprep.subr.mxu0 %v620
    %v622 = vand.u32 %v89, 4294901760
    %v623 = vsub.f32 %v89, %v622
    %624 = vmatpush1.msra.mxu0 %v623
    %v625 = vand.u32 %v82, 4294901760
    %v626 = vsub.f32 %v82, %v625
    %627 = vmatprep.subr.mxu0 %v626
    %v628 = vand.u32 %v81, 4294901760
    %v629 = vsub.f32 %v81, %v628
    %630 = vmatpush1.msra.mxu0 %v629
    %v631 = vand.u32 %v74, 4294901760
    %v632 = vsub.f32 %v74, %v631
    %633 = vmatprep.subr.mxu0 %v632
    %v634 = vand.u32 %v73, 4294901760
    %v635 = vsub.f32 %v73, %v634
    %636 = vmatpush1.msra.mxu0 %v635
    %v637 = vand.u32 %v66, 4294901760
    %v638 = vsub.f32 %v66, %v637
    %639 = vmatprep.subr.mxu0 %v638
    %v640 = vand.u32 %v65, 4294901760
    %v641 = vsub.f32 %v65, %v640
    %642 = vmatpush1.msra.mxu0 %v641
    %v643 = vand.u32 %v58, 4294901760
    %v644 = vsub.f32 %v58, %v643
    %645 = vmatprep.subr.mxu0 %v644
    %v646 = vand.u32 %v57, 4294901760
    %v647 = vsub.f32 %v57, %v646
    %648 = vmatpush1.msra.mxu0 %v647
    %v649 = vand.u32 %v50, 4294901760
    %v650 = vsub.f32 %v50, %v649
    %651 = vmatprep.subr.mxu0 %v650
    %v652 = vand.u32 %v49, 4294901760
    %v653 = vsub.f32 %v49, %v652
    %654 = vmatpush1.msra.mxu0 %v653
    %655 = vmatprep.subr.mxu0 0.0
    %656 = vmatpush2.msra.mxu0 0.0
    %657 = vmatprep.subr.mxu0 0.0
    %658 = vmatpush2.msra.mxu0 0.0
    %659 = vmatprep.subr.mxu0 0.0
    %660 = vmatpush2.msra.mxu0 0.0
    %661 = vmatprep.subr.mxu0 0.0
    %662 = vmatpush2.msra.mxu0 0.0
    %663 = vmatprep.subr.mxu0 0.0
    %664 = vmatpush2.msra.mxu0 0.0
    %665 = vmatprep.subr.mxu0 0.0
    %666 = vmatpush2.msra.mxu0 0.0
    %667 = vmatprep.subr.mxu0 0.0
    %668 = vmatpush2.msra.mxu0 0.0
    %669 = vmatprep.subr.mxu0 0.0
    %670 = vmatpush2.msra.mxu0 0.0
    %671 = vmatprep.subr.mxu0 0.0
    %672 = vmatpush2.msra.mxu0 0.0
    %673 = vmatprep.subr.mxu0 0.0
    %674 = vmatpush2.msra.mxu0 0.0
    %675 = vmatprep.subr.mxu0 0.0
    %676 = vmatpush2.msra.mxu0 0.0
    %677 = vmatprep.subr.mxu0 0.0
    %678 = vmatpush2.msra.mxu0 0.0
    %679 = vmatprep.subr.mxu0 0.0
    %680 = vmatpush2.msra.mxu0 0.0
    %681 = vmatprep.subr.mxu0 0.0
    %682 = vmatpush2.msra.mxu0 0.0
    %683 = vmatprep.subr.mxu0 0.0
    %684 = vmatpush2.msra.mxu0 0.0
    %685 = vmatprep.subr.mxu0 0.0
    %686 = vmatpush2.msra.mxu0 0.0
    %687 = vmatprep.mubr.f32.mxu0 0.0
    %v688 = vand.u32 %v48, 4294901760
    %v689 = vsub.f32 %v48, %v688
    %690 = vmatmul.mubr.f32.gmra.mxu0 %v689
    %v691 = vpop.f32.mrf.mxu0
    %v692 = vadd.f32 %v555, %v691
    %v693 = vpop.f32.mrf.mxu0
    %v694 = vadd.f32 %v557, %v693
    %695 = vdwg.mxu0
    %v696 = vand.u32 %v170, 4294901760
    %697 = vmatprep.subr.mxu0 %v696
    %v698 = vand.u32 %v169, 4294901760
    %699 = vmatpush1.msra.mxu0 %v698
    %v700 = vand.u32 %v162, 4294901760
    %701 = vmatprep.subr.mxu0 %v700
    %v702 = vand.u32 %v161, 4294901760
    %703 = vmatpush1.msra.mxu0 %v702
    %v704 = vand.u32 %v154, 4294901760
    %705 = vmatprep.subr.mxu0 %v704
    %v706 = vand.u32 %v153, 4294901760
    %707 = vmatpush1.msra.mxu0 %v706
    %v708 = vand.u32 %v146, 4294901760
    %709 = vmatprep.subr.mxu0 %v708
    %v710 = vand.u32 %v145, 4294901760
    %711 = vmatpush1.msra.mxu0 %v710
    %v712 = vand.u32 %v138, 4294901760
    %713 = vmatprep.subr.mxu0 %v712
    %v714 = vand.u32 %v137, 4294901760
    %715 = vmatpush1.msra.mxu0 %v714
    %v716 = vand.u32 %v130, 4294901760
    %717 = vmatprep.subr.mxu0 %v716
    %v718 = vand.u32 %v129, 4294901760
    %719 = vmatpush1.msra.mxu0 %v718
    %v720 = vand.u32 %v122, 4294901760
    %721 = vmatprep.subr.mxu0 %v720
    %v722 = vand.u32 %v121, 4294901760
    %723 = vmatpush1.msra.mxu0 %v722
    %v724 = vand.u32 %v114, 4294901760
    %725 = vmatprep.subr.mxu0 %v724
    %v726 = vand.u32 %v113, 4294901760
    %727 = vmatpush1.msra.mxu0 %v726
    %v728 = vand.u32 %v106, 4294901760
    %729 = vmatprep.subr.mxu0 %v728
    %v730 = vand.u32 %v105, 4294901760
    %731 = vmatpush1.msra.mxu0 %v730
    %v732 = vand.u32 %v98, 4294901760
    %733 = vmatprep.subr.mxu0 %v732
    %v734 = vand.u32 %v97, 4294901760
    %735 = vmatpush1.msra.mxu0 %v734
    %v736 = vand.u32 %v90, 4294901760
    %737 = vmatprep.subr.mxu0 %v736
    %v738 = vand.u32 %v89, 4294901760
    %739 = vmatpush1.msra.mxu0 %v738
    %v740 = vand.u32 %v82, 4294901760
    %741 = vmatprep.subr.mxu0 %v740
    %v742 = vand.u32 %v81, 4294901760
    %743 = vmatpush1.msra.mxu0 %v742
    %v744 = vand.u32 %v74, 4294901760
    %745 = vmatprep.subr.mxu0 %v744
    %v746 = vand.u32 %v73, 4294901760
    %747 = vmatpush1.msra.mxu0 %v746
    %v748 = vand.u32 %v66, 4294901760
    %749 = vmatprep.subr.mxu0 %v748
    %v750 = vand.u32 %v65, 4294901760
    %751 = vmatpush1.msra.mxu0 %v750
    %v752 = vand.u32 %v58, 4294901760
    %753 = vmatprep.subr.mxu0 %v752
    %v754 = vand.u32 %v57, 4294901760
    %755 = vmatpush1.msra.mxu0 %v754
    %v756 = vand.u32 %v50, 4294901760
    %757 = vmatprep.subr.mxu0 %v756
    %v758 = vand.u32 %v49, 4294901760
    %759 = vmatpush1.msra.mxu0 %v758
    %760 = vmatprep.subr.mxu0 0.0
    %761 = vmatpush2.msra.mxu0 0.0
    %762 = vmatprep.subr.mxu0 0.0
    %763 = vmatpush2.msra.mxu0 0.0
    %764 = vmatprep.subr.mxu0 0.0
    %765 = vmatpush2.msra.mxu0 0.0
    %766 = vmatprep.subr.mxu0 0.0
    %767 = vmatpush2.msra.mxu0 0.0
    %768 = vmatprep.subr.mxu0 0.0
    %769 = vmatpush2.msra.mxu0 0.0
    %770 = vmatprep.subr.mxu0 0.0
    %771 = vmatpush2.msra.mxu0 0.0
    %772 = vmatprep.subr.mxu0 0.0
    %773 = vmatpush2.msra.mxu0 0.0
    %774 = vmatprep.subr.mxu0 0.0
    %775 = vmatpush2.msra.mxu0 0.0
    %776 = vmatprep.subr.mxu0 0.0
    %777 = vmatpush2.msra.mxu0 0.0
    %778 = vmatprep.subr.mxu0 0.0
    %779 = vmatpush2.msra.mxu0 0.0
    %780 = vmatprep.subr.mxu0 0.0
    %781 = vmatpush2.msra.mxu0 0.0
    %782 = vmatprep.subr.mxu0 0.0
    %783 = vmatpush2.msra.mxu0 0.0
    %784 = vmatprep.subr.mxu0 0.0
    %785 = vmatpush2.msra.mxu0 0.0
    %786 = vmatprep.subr.mxu0 0.0
    %787 = vmatpush2.msra.mxu0 0.0
    %788 = vmatprep.subr.mxu0 0.0
    %789 = vmatpush2.msra.mxu0 0.0
    %790 = vmatprep.subr.mxu0 0.0
    %791 = vmatpush2.msra.mxu0 0.0
    %792 = vmatprep.mubr.f32.mxu0 0.0
    %v793 = vand.u32 %v48, 4294901760
    %v794 = vsub.f32 %v48, %v793
    %v795 = vand.u32 %v794, 4294901760
    %796 = vmatmul.mubr.f32.gmra.mxu0 %v795
    %v797 = vpop.f32.mrf.mxu0
    %v798 = vadd.f32 %v692, %v797
    %v799 = vpop.f32.mrf.mxu0
    %v800 = vadd.f32 %v694, %v799
    %801 = vdwg.mxu0
    %v802 = vand.u32 %v170, 4294901760
    %v803 = vsub.f32 %v170, %v802
    %v804 = vand.u32 %v803, 4294901760
    %805 = vmatprep.subr.mxu0 %v804
    %v806 = vand.u32 %v169, 4294901760
    %v807 = vsub.f32 %v169, %v806
    %v808 = vand.u32 %v807, 4294901760
    %809 = vmatpush1.msra.mxu0 %v808
    %v810 = vand.u32 %v162, 4294901760
    %v811 = vsub.f32 %v162, %v810
    %v812 = vand.u32 %v811, 4294901760
    %813 = vmatprep.subr.mxu0 %v812
    %v814 = vand.u32 %v161, 4294901760
    %v815 = vsub.f32 %v161, %v814
    %v816 = vand.u32 %v815, 4294901760
    %817 = vmatpush1.msra.mxu0 %v816
    %v818 = vand.u32 %v154, 4294901760
    %v819 = vsub.f32 %v154, %v818
    %v820 = vand.u32 %v819, 4294901760
    %821 = vmatprep.subr.mxu0 %v820
    %v822 = vand.u32 %v153, 4294901760
    %v823 = vsub.f32 %v153, %v822
    %v824 = vand.u32 %v823, 4294901760
    %825 = vmatpush1.msra.mxu0 %v824
    %v826 = vand.u32 %v146, 4294901760
    %v827 = vsub.f32 %v146, %v826
    %v828 = vand.u32 %v827, 4294901760
    %829 = vmatprep.subr.mxu0 %v828
    %v830 = vand.u32 %v145, 4294901760
    %v831 = vsub.f32 %v145, %v830
    %v832 = vand.u32 %v831, 4294901760
    %833 = vmatpush1.msra.mxu0 %v832
    %v834 = vand.u32 %v138, 4294901760
    %v835 = vsub.f32 %v138, %v834
    %v836 = vand.u32 %v835, 4294901760
    %837 = vmatprep.subr.mxu0 %v836
    %v838 = vand.u32 %v137, 4294901760
    %v839 = vsub.f32 %v137, %v838
    %v840 = vand.u32 %v839, 4294901760
    %841 = vmatpush1.msra.mxu0 %v840
    %v842 = vand.u32 %v130, 4294901760
    %v843 = vsub.f32 %v130, %v842
    %v844 = vand.u32 %v843, 4294901760
    %845 = vmatprep.subr.mxu0 %v844
    %v846 = vand.u32 %v129, 4294901760
    %v847 = vsub.f32 %v129, %v846
    %v848 = vand.u32 %v847, 4294901760
    %849 = vmatpush1.msra.mxu0 %v848
    %v850 = vand.u32 %v122, 4294901760
    %v851 = vsub.f32 %v122, %v850
    %v852 = vand.u32 %v851, 4294901760
    %853 = vmatprep.subr.mxu0 %v852
    %v854 = vand.u32 %v121, 4294901760
    %v855 = vsub.f32 %v121, %v854
    %v856 = vand.u32 %v855, 4294901760
    %857 = vmatpush1.msra.mxu0 %v856
    %v858 = vand.u32 %v114, 4294901760
    %v859 = vsub.f32 %v114, %v858
    %v860 = vand.u32 %v859, 4294901760
    %861 = vmatprep.subr.mxu0 %v860
    %v862 = vand.u32 %v113, 4294901760
    %v863 = vsub.f32 %v113, %v862
    %v864 = vand.u32 %v863, 4294901760
    %865 = vmatpush1.msra.mxu0 %v864
    %v866 = vand.u32 %v106, 4294901760
    %v867 = vsub.f32 %v106, %v866
    %v868 = vand.u32 %v867, 4294901760
    %869 = vmatprep.subr.mxu0 %v868
    %v870 = vand.u32 %v105, 4294901760
    %v871 = vsub.f32 %v105, %v870
    %v872 = vand.u32 %v871, 4294901760
    %873 = vmatpush1.msra.mxu0 %v872
    %v874 = vand.u32 %v98, 4294901760
    %v875 = vsub.f32 %v98, %v874
    %v876 = vand.u32 %v875, 4294901760
    %877 = vmatprep.subr.mxu0 %v876
    %v878 = vand.u32 %v97, 4294901760
    %v879 = vsub.f32 %v97, %v878
    %v880 = vand.u32 %v879, 4294901760
    %881 = vmatpush1.msra.mxu0 %v880
    %v882 = vand.u32 %v90, 4294901760
    %v883 = vsub.f32 %v90, %v882
    %v884 = vand.u32 %v883, 4294901760
    %885 = vmatprep.subr.mxu0 %v884
    %v886 = vand.u32 %v89, 4294901760
    %v887 = vsub.f32 %v89, %v886
    %v888 = vand.u32 %v887, 4294901760
    %889 = vmatpush1.msra.mxu0 %v888
    %v890 = vand.u32 %v82, 4294901760
    %v891 = vsub.f32 %v82, %v890
    %v892 = vand.u32 %v891, 4294901760
    %893 = vmatprep.subr.mxu0 %v892
    %v894 = vand.u32 %v81, 4294901760
    %v895 = vsub.f32 %v81, %v894
    %v896 = vand.u32 %v895, 4294901760
    %897 = vmatpush1.msra.mxu0 %v896
    %v898 = vand.u32 %v74, 4294901760
    %v899 = vsub.f32 %v74, %v898
    %v900 = vand.u32 %v899, 4294901760
    %901 = vmatprep.subr.mxu0 %v900
    %v902 = vand.u32 %v73, 4294901760
    %v903 = vsub.f32 %v73, %v902
    %v904 = vand.u32 %v903, 4294901760
    %905 = vmatpush1.msra.mxu0 %v904
    %v906 = vand.u32 %v66, 4294901760
    %v907 = vsub.f32 %v66, %v906
    %v908 = vand.u32 %v907, 4294901760
    %909 = vmatprep.subr.mxu0 %v908
    %v910 = vand.u32 %v65, 4294901760
    %v911 = vsub.f32 %v65, %v910
    %v912 = vand.u32 %v911, 4294901760
    %913 = vmatpush1.msra.mxu0 %v912
    %v914 = vand.u32 %v58, 4294901760
    %v915 = vsub.f32 %v58, %v914
    %v916 = vand.u32 %v915, 4294901760
    %917 = vmatprep.subr.mxu0 %v916
    %v918 = vand.u32 %v57, 4294901760
    %v919 = vsub.f32 %v57, %v918
    %v920 = vand.u32 %v919, 4294901760
    %921 = vmatpush1.msra.mxu0 %v920
    %v922 = vand.u32 %v50, 4294901760
    %v923 = vsub.f32 %v50, %v922
    %v924 = vand.u32 %v923, 4294901760
    %925 = vmatprep.subr.mxu0 %v924
    %v926 = vand.u32 %v49, 4294901760
    %v927 = vsub.f32 %v49, %v926
    %v928 = vand.u32 %v927, 4294901760
    %929 = vmatpush1.msra.mxu0 %v928
    %930 = vmatprep.subr.mxu0 0.0
    %931 = vmatpush2.msra.mxu0 0.0
    %932 = vmatprep.subr.mxu0 0.0
    %933 = vmatpush2.msra.mxu0 0.0
    %934 = vmatprep.subr.mxu0 0.0
    %935 = vmatpush2.msra.mxu0 0.0
    %936 = vmatprep.subr.mxu0 0.0
    %937 = vmatpush2.msra.mxu0 0.0
    %938 = vmatprep.subr.mxu0 0.0
    %939 = vmatpush2.msra.mxu0 0.0
    %940 = vmatprep.subr.mxu0 0.0
    %941 = vmatpush2.msra.mxu0 0.0
    %942 = vmatprep.subr.mxu0 0.0
    %943 = vmatpush2.msra.mxu0 0.0
    %944 = vmatprep.subr.mxu0 0.0
    %945 = vmatpush2.msra.mxu0 0.0
    %946 = vmatprep.subr.mxu0 0.0
    %947 = vmatpush2.msra.mxu0 0.0
    %948 = vmatprep.subr.mxu0 0.0
    %949 = vmatpush2.msra.mxu0 0.0
    %950 = vmatprep.subr.mxu0 0.0
    %951 = vmatpush2.msra.mxu0 0.0
    %952 = vmatprep.subr.mxu0 0.0
    %953 = vmatpush2.msra.mxu0 0.0
    %954 = vmatprep.subr.mxu0 0.0
    %955 = vmatpush2.msra.mxu0 0.0
    %956 = vmatprep.subr.mxu0 0.0
    %957 = vmatpush2.msra.mxu0 0.0
    %958 = vmatprep.subr.mxu0 0.0
    %959 = vmatpush2.msra.mxu0 0.0
    %960 = vmatprep.subr.mxu0 0.0
    %961 = vmatpush2.msra.mxu0 0.0
    %962 = vmatprep.mubr.f32.mxu0 0.0
    %v963 = vand.u32 %v48, 4294901760
    %964 = vmatmul.mubr.f32.gmra.mxu0 %v963
    %v965 = vpop.f32.mrf.mxu0
    %v966 = vadd.f32 %v798, %v965
    %v967 = vpop.f32.mrf.mxu0
    %v968 = vadd.f32 %v800, %v967
    %969 = vdwg.mxu0
    %v970 = vand.u32 %v170, 4294901760
    %971 = vmatprep.subr.mxu0 %v970
    %v972 = vand.u32 %v169, 4294901760
    %973 = vmatpush1.msra.mxu0 %v972
    %v974 = vand.u32 %v162, 4294901760
    %975 = vmatprep.subr.mxu0 %v974
    %v976 = vand.u32 %v161, 4294901760
    %977 = vmatpush1.msra.mxu0 %v976
    %v978 = vand.u32 %v154, 4294901760
    %979 = vmatprep.subr.mxu0 %v978
    %v980 = vand.u32 %v153, 4294901760
    %981 = vmatpush1.msra.mxu0 %v980
    %v982 = vand.u32 %v146, 4294901760
    %983 = vmatprep.subr.mxu0 %v982
    %v984 = vand.u32 %v145, 4294901760
    %985 = vmatpush1.msra.mxu0 %v984
    %v986 = vand.u32 %v138, 4294901760
    %987 = vmatprep.subr.mxu0 %v986
    %v988 = vand.u32 %v137, 4294901760
    %989 = vmatpush1.msra.mxu0 %v988
    %v990 = vand.u32 %v130, 4294901760
    %991 = vmatprep.subr.mxu0 %v990
    %v992 = vand.u32 %v129, 4294901760
    %993 = vmatpush1.msra.mxu0 %v992
    %v994 = vand.u32 %v122, 4294901760
    %995 = vmatprep.subr.mxu0 %v994
    %v996 = vand.u32 %v121, 4294901760
    %997 = vmatpush1.msra.mxu0 %v996
    %v998 = vand.u32 %v114, 4294901760
    %999 = vmatprep.subr.mxu0 %v998
    %v1000 = vand.u32 %v113, 4294901760
    %1001 = vmatpush1.msra.mxu0 %v1000
    %v1002 = vand.u32 %v106, 4294901760
    %1003 = vmatprep.subr.mxu0 %v1002
    %v1004 = vand.u32 %v105, 4294901760
    %1005 = vmatpush1.msra.mxu0 %v1004
    %v1006 = vand.u32 %v98, 4294901760
    %1007 = vmatprep.subr.mxu0 %v1006
    %v1008 = vand.u32 %v97, 4294901760
    %1009 = vmatpush1.msra.mxu0 %v1008
    %v1010 = vand.u32 %v90, 4294901760
    %1011 = vmatprep.subr.mxu0 %v1010
    %v1012 = vand.u32 %v89, 4294901760
    %1013 = vmatpush1.msra.mxu0 %v1012
    %v1014 = vand.u32 %v82, 4294901760
    %1015 = vmatprep.subr.mxu0 %v1014
    %v1016 = vand.u32 %v81, 4294901760
    %1017 = vmatpush1.msra.mxu0 %v1016
    %v1018 = vand.u32 %v74, 4294901760
    %1019 = vmatprep.subr.mxu0 %v1018
    %v1020 = vand.u32 %v73, 4294901760
    %1021 = vmatpush1.msra.mxu0 %v1020
    %v1022 = vand.u32 %v66, 4294901760
    %1023 = vmatprep.subr.mxu0 %v1022
    %v1024 = vand.u32 %v65, 4294901760
    %1025 = vmatpush1.msra.mxu0 %v1024
    %v1026 = vand.u32 %v58, 4294901760
    %1027 = vmatprep.subr.mxu0 %v1026
    %v1028 = vand.u32 %v57, 4294901760
    %1029 = vmatpush1.msra.mxu0 %v1028
    %v1030 = vand.u32 %v50, 4294901760
    %1031 = vmatprep.subr.mxu0 %v1030
    %v1032 = vand.u32 %v49, 4294901760
    %1033 = vmatpush1.msra.mxu0 %v1032
    %1034 = vmatprep.subr.mxu0 0.0
    %1035 = vmatpush2.msra.mxu0 0.0
    %1036 = vmatprep.subr.mxu0 0.0
    %1037 = vmatpush2.msra.mxu0 0.0
    %1038 = vmatprep.subr.mxu0 0.0
    %1039 = vmatpush2.msra.mxu0 0.0
    %1040 = vmatprep.subr.mxu0 0.0
    %1041 = vmatpush2.msra.mxu0 0.0
    %1042 = vmatprep.subr.mxu0 0.0
    %1043 = vmatpush2.msra.mxu0 0.0
    %1044 = vmatprep.subr.mxu0 0.0
    %1045 = vmatpush2.msra.mxu0 0.0
    %1046 = vmatprep.subr.mxu0 0.0
    %1047 = vmatpush2.msra.mxu0 0.0
    %1048 = vmatprep.subr.mxu0 0.0
    %1049 = vmatpush2.msra.mxu0 0.0
    %1050 = vmatprep.subr.mxu0 0.0
    %1051 = vmatpush2.msra.mxu0 0.0
    %1052 = vmatprep.subr.mxu0 0.0
    %1053 = vmatpush2.msra.mxu0 0.0
    %1054 = vmatprep.subr.mxu0 0.0
    %1055 = vmatpush2.msra.mxu0 0.0
    %1056 = vmatprep.subr.mxu0 0.0
    %1057 = vmatpush2.msra.mxu0 0.0
    %1058 = vmatprep.subr.mxu0 0.0
    %1059 = vmatpush2.msra.mxu0 0.0
    %1060 = vmatprep.subr.mxu0 0.0
    %1061 = vmatpush2.msra.mxu0 0.0
    %1062 = vmatprep.subr.mxu0 0.0
    %1063 = vmatpush2.msra.mxu0 0.0
    %1064 = vmatprep.subr.mxu0 0.0
    %1065 = vmatpush2.msra.mxu0 0.0
    %1066 = vmatprep.mubr.f32.mxu0 0.0
    %v1067 = vand.u32 %v48, 4294901760
    %1068 = vmatmul.mubr.f32.gmra.mxu0 %v1067
    %v1069 = vpop.f32.mrf.mxu0
    %v1070 = vadd.f32 %v966, %v1069
    %v1071 = vpop.f32.mrf.mxu0
    %v1072 = vadd.f32 %v968, %v1071
    %1073 = vdwg.mxu0
    %v1074 = vand.u32 %v172, 4294901760
    %1075 = vmatprep.subr.mxu0 %v1074
    %v1076 = vand.u32 %v171, 4294901760
    %1077 = vmatpush1.msra.mxu0 %v1076
    %v1078 = vand.u32 %v164, 4294901760
    %1079 = vmatprep.subr.mxu0 %v1078
    %v1080 = vand.u32 %v163, 4294901760
    %1081 = vmatpush1.msra.mxu0 %v1080
    %v1082 = vand.u32 %v156, 4294901760
    %1083 = vmatprep.subr.mxu0 %v1082
    %v1084 = vand.u32 %v155, 4294901760
    %1085 = vmatpush1.msra.mxu0 %v1084
    %v1086 = vand.u32 %v148, 4294901760
    %1087 = vmatprep.subr.mxu0 %v1086
    %v1088 = vand.u32 %v147, 4294901760
    %1089 = vmatpush1.msra.mxu0 %v1088
    %v1090 = vand.u32 %v140, 4294901760
    %1091 = vmatprep.subr.mxu0 %v1090
    %v1092 = vand.u32 %v139, 4294901760
    %1093 = vmatpush1.msra.mxu0 %v1092
    %v1094 = vand.u32 %v132, 4294901760
    %1095 = vmatprep.subr.mxu0 %v1094
    %v1096 = vand.u32 %v131, 4294901760
    %1097 = vmatpush1.msra.mxu0 %v1096
    %v1098 = vand.u32 %v124, 4294901760
    %1099 = vmatprep.subr.mxu0 %v1098
    %v1100 = vand.u32 %v123, 4294901760
    %1101 = vmatpush1.msra.mxu0 %v1100
    %v1102 = vand.u32 %v116, 4294901760
    %1103 = vmatprep.subr.mxu0 %v1102
    %v1104 = vand.u32 %v115, 4294901760
    %1105 = vmatpush1.msra.mxu0 %v1104
    %v1106 = vand.u32 %v108, 4294901760
    %1107 = vmatprep.subr.mxu0 %v1106
    %v1108 = vand.u32 %v107, 4294901760
    %1109 = vmatpush1.msra.mxu0 %v1108
    %v1110 = vand.u32 %v100, 4294901760
    %1111 = vmatprep.subr.mxu0 %v1110
    %v1112 = vand.u32 %v99, 4294901760
    %1113 = vmatpush1.msra.mxu0 %v1112
    %v1114 = vand.u32 %v92, 4294901760
    %1115 = vmatprep.subr.mxu0 %v1114
    %v1116 = vand.u32 %v91, 4294901760
    %1117 = vmatpush1.msra.mxu0 %v1116
    %v1118 = vand.u32 %v84, 4294901760
    %1119 = vmatprep.subr.mxu0 %v1118
    %v1120 = vand.u32 %v83, 4294901760
    %1121 = vmatpush1.msra.mxu0 %v1120
    %v1122 = vand.u32 %v76, 4294901760
    %1123 = vmatprep.subr.mxu0 %v1122
    %v1124 = vand.u32 %v75, 4294901760
    %1125 = vmatpush1.msra.mxu0 %v1124
    %v1126 = vand.u32 %v68, 4294901760
    %1127 = vmatprep.subr.mxu0 %v1126
    %v1128 = vand.u32 %v67, 4294901760
    %1129 = vmatpush1.msra.mxu0 %v1128
    %v1130 = vand.u32 %v60, 4294901760
    %1131 = vmatprep.subr.mxu0 %v1130
    %v1132 = vand.u32 %v59, 4294901760
    %1133 = vmatpush1.msra.mxu0 %v1132
    %v1134 = vand.u32 %v52, 4294901760
    %1135 = vmatprep.subr.mxu0 %v1134
    %v1136 = vand.u32 %v51, 4294901760
    %1137 = vmatpush1.msra.mxu0 %v1136
    %1138 = vmatprep.subr.mxu0 0.0
    %1139 = vmatpush2.msra.mxu0 0.0
    %1140 = vmatprep.subr.mxu0 0.0
    %1141 = vmatpush2.msra.mxu0 0.0
    %1142 = vmatprep.subr.mxu0 0.0
    %1143 = vmatpush2.msra.mxu0 0.0
    %1144 = vmatprep.subr.mxu0 0.0
    %1145 = vmatpush2.msra.mxu0 0.0
    %1146 = vmatprep.subr.mxu0 0.0
    %1147 = vmatpush2.msra.mxu0 0.0
    %1148 = vmatprep.subr.mxu0 0.0
    %1149 = vmatpush2.msra.mxu0 0.0
    %1150 = vmatprep.subr.mxu0 0.0
    %1151 = vmatpush2.msra.mxu0 0.0
    %1152 = vmatprep.subr.mxu0 0.0
    %1153 = vmatpush2.msra.mxu0 0.0
    %1154 = vmatprep.subr.mxu0 0.0
    %1155 = vmatpush2.msra.mxu0 0.0
    %1156 = vmatprep.subr.mxu0 0.0
    %1157 = vmatpush2.msra.mxu0 0.0
    %1158 = vmatprep.subr.mxu0 0.0
    %1159 = vmatpush2.msra.mxu0 0.0
    %1160 = vmatprep.subr.mxu0 0.0
    %1161 = vmatpush2.msra.mxu0 0.0
    %1162 = vmatprep.subr.mxu0 0.0
    %1163 = vmatpush2.msra.mxu0 0.0
    %1164 = vmatprep.subr.mxu0 0.0
    %1165 = vmatpush2.msra.mxu0 0.0
    %1166 = vmatprep.subr.mxu0 0.0
    %1167 = vmatpush2.msra.mxu0 0.0
    %1168 = vmatprep.subr.mxu0 0.0
    %1169 = vmatpush2.msra.mxu0 0.0
    %1170 = vmatprep.mubr.f32.mxu0 0.0
    %v1171 = vand.u32 %v48, 4294901760
    %v1172 = vsub.f32 %v48, %v1171
    %v1173 = vand.u32 %v1172, 4294901760
    %v1174 = vsub.f32 %v1172, %v1173
    %v1175 = vand.u32 %v1174, 4294901760
    %1176 = vmatmul.mubr.f32.gmra.mxu0 %v1175
    %v1177 = vpop.f32.mrf.mxu0
    %v1178 = vadd.f32 %v190, %v1177
    %v1179 = vpop.f32.mrf.mxu0
    %v1180 = vadd.f32 %v194, %v1179
    %1181 = vdwg.mxu0
    %v1182 = vand.u32 %v172, 4294901760
    %v1183 = vsub.f32 %v172, %v1182
    %v1184 = vand.u32 %v1183, 4294901760
    %v1185 = vsub.f32 %v1183, %v1184
    %v1186 = vand.u32 %v1185, 4294901760
    %1187 = vmatprep.subr.mxu0 %v1186
    %v1188 = vand.u32 %v171, 4294901760
    %v1189 = vsub.f32 %v171, %v1188
    %v1190 = vand.u32 %v1189, 4294901760
    %v1191 = vsub.f32 %v1189, %v1190
    %v1192 = vand.u32 %v1191, 4294901760
    %1193 = vmatpush1.msra.mxu0 %v1192
    %v1194 = vand.u32 %v164, 4294901760
    %v1195 = vsub.f32 %v164, %v1194
    %v1196 = vand.u32 %v1195, 4294901760
    %v1197 = vsub.f32 %v1195, %v1196
    %v1198 = vand.u32 %v1197, 4294901760
    %1199 = vmatprep.subr.mxu0 %v1198
    %v1200 = vand.u32 %v163, 4294901760
    %v1201 = vsub.f32 %v163, %v1200
    %v1202 = vand.u32 %v1201, 4294901760
    %v1203 = vsub.f32 %v1201, %v1202
    %v1204 = vand.u32 %v1203, 4294901760
    %1205 = vmatpush1.msra.mxu0 %v1204
    %v1206 = vand.u32 %v156, 4294901760
    %v1207 = vsub.f32 %v156, %v1206
    %v1208 = vand.u32 %v1207, 4294901760
    %v1209 = vsub.f32 %v1207, %v1208
    %v1210 = vand.u32 %v1209, 4294901760
    %1211 = vmatprep.subr.mxu0 %v1210
    %v1212 = vand.u32 %v155, 4294901760
    %v1213 = vsub.f32 %v155, %v1212
    %v1214 = vand.u32 %v1213, 4294901760
    %v1215 = vsub.f32 %v1213, %v1214
    %v1216 = vand.u32 %v1215, 4294901760
    %1217 = vmatpush1.msra.mxu0 %v1216
    %v1218 = vand.u32 %v148, 4294901760
    %v1219 = vsub.f32 %v148, %v1218
    %v1220 = vand.u32 %v1219, 4294901760
    %v1221 = vsub.f32 %v1219, %v1220
    %v1222 = vand.u32 %v1221, 4294901760
    %1223 = vmatprep.subr.mxu0 %v1222
    %v1224 = vand.u32 %v147, 4294901760
    %v1225 = vsub.f32 %v147, %v1224
    %v1226 = vand.u32 %v1225, 4294901760
    %v1227 = vsub.f32 %v1225, %v1226
    %v1228 = vand.u32 %v1227, 4294901760
    %1229 = vmatpush1.msra.mxu0 %v1228
    %v1230 = vand.u32 %v140, 4294901760
    %v1231 = vsub.f32 %v140, %v1230
    %v1232 = vand.u32 %v1231, 4294901760
    %v1233 = vsub.f32 %v1231, %v1232
    %v1234 = vand.u32 %v1233, 4294901760
    %1235 = vmatprep.subr.mxu0 %v1234
    %v1236 = vand.u32 %v139, 4294901760
    %v1237 = vsub.f32 %v139, %v1236
    %v1238 = vand.u32 %v1237, 4294901760
    %v1239 = vsub.f32 %v1237, %v1238
    %v1240 = vand.u32 %v1239, 4294901760
    %1241 = vmatpush1.msra.mxu0 %v1240
    %v1242 = vand.u32 %v132, 4294901760
    %v1243 = vsub.f32 %v132, %v1242
    %v1244 = vand.u32 %v1243, 4294901760
    %v1245 = vsub.f32 %v1243, %v1244
    %v1246 = vand.u32 %v1245, 4294901760
    %1247 = vmatprep.subr.mxu0 %v1246
    %v1248 = vand.u32 %v131, 4294901760
    %v1249 = vsub.f32 %v131, %v1248
    %v1250 = vand.u32 %v1249, 4294901760
    %v1251 = vsub.f32 %v1249, %v1250
    %v1252 = vand.u32 %v1251, 4294901760
    %1253 = vmatpush1.msra.mxu0 %v1252
    %v1254 = vand.u32 %v124, 4294901760
    %v1255 = vsub.f32 %v124, %v1254
    %v1256 = vand.u32 %v1255, 4294901760
    %v1257 = vsub.f32 %v1255, %v1256
    %v1258 = vand.u32 %v1257, 4294901760
    %1259 = vmatprep.subr.mxu0 %v1258
    %v1260 = vand.u32 %v123, 4294901760
    %v1261 = vsub.f32 %v123, %v1260
    %v1262 = vand.u32 %v1261, 4294901760
    %v1263 = vsub.f32 %v1261, %v1262
    %v1264 = vand.u32 %v1263, 4294901760
    %1265 = vmatpush1.msra.mxu0 %v1264
    %v1266 = vand.u32 %v116, 4294901760
    %v1267 = vsub.f32 %v116, %v1266
    %v1268 = vand.u32 %v1267, 4294901760
    %v1269 = vsub.f32 %v1267, %v1268
    %v1270 = vand.u32 %v1269, 4294901760
    %1271 = vmatprep.subr.mxu0 %v1270
    %v1272 = vand.u32 %v115, 4294901760
    %v1273 = vsub.f32 %v115, %v1272
    %v1274 = vand.u32 %v1273, 4294901760
    %v1275 = vsub.f32 %v1273, %v1274
    %v1276 = vand.u32 %v1275, 4294901760
    %1277 = vmatpush1.msra.mxu0 %v1276
    %v1278 = vand.u32 %v108, 4294901760
    %v1279 = vsub.f32 %v108, %v1278
    %v1280 = vand.u32 %v1279, 4294901760
    %v1281 = vsub.f32 %v1279, %v1280
    %v1282 = vand.u32 %v1281, 4294901760
    %1283 = vmatprep.subr.mxu0 %v1282
    %v1284 = vand.u32 %v107, 4294901760
    %v1285 = vsub.f32 %v107, %v1284
    %v1286 = vand.u32 %v1285, 4294901760
    %v1287 = vsub.f32 %v1285, %v1286
    %v1288 = vand.u32 %v1287, 4294901760
    %1289 = vmatpush1.msra.mxu0 %v1288
    %v1290 = vand.u32 %v100, 4294901760
    %v1291 = vsub.f32 %v100, %v1290
    %v1292 = vand.u32 %v1291, 4294901760
    %v1293 = vsub.f32 %v1291, %v1292
    %v1294 = vand.u32 %v1293, 4294901760
    %1295 = vmatprep.subr.mxu0 %v1294
    %v1296 = vand.u32 %v99, 4294901760
    %v1297 = vsub.f32 %v99, %v1296
    %v1298 = vand.u32 %v1297, 4294901760
    %v1299 = vsub.f32 %v1297, %v1298
    %v1300 = vand.u32 %v1299, 4294901760
    %1301 = vmatpush1.msra.mxu0 %v1300
    %v1302 = vand.u32 %v92, 4294901760
    %v1303 = vsub.f32 %v92, %v1302
    %v1304 = vand.u32 %v1303, 4294901760
    %v1305 = vsub.f32 %v1303, %v1304
    %v1306 = vand.u32 %v1305, 4294901760
    %1307 = vmatprep.subr.mxu0 %v1306
    %v1308 = vand.u32 %v91, 4294901760
    %v1309 = vsub.f32 %v91, %v1308
    %v1310 = vand.u32 %v1309, 4294901760
    %v1311 = vsub.f32 %v1309, %v1310
    %v1312 = vand.u32 %v1311, 4294901760
    %1313 = vmatpush1.msra.mxu0 %v1312
    %v1314 = vand.u32 %v84, 4294901760
    %v1315 = vsub.f32 %v84, %v1314
    %v1316 = vand.u32 %v1315, 4294901760
    %v1317 = vsub.f32 %v1315, %v1316
    %v1318 = vand.u32 %v1317, 4294901760
    %1319 = vmatprep.subr.mxu0 %v1318
    %v1320 = vand.u32 %v83, 4294901760
    %v1321 = vsub.f32 %v83, %v1320
    %v1322 = vand.u32 %v1321, 4294901760
    %v1323 = vsub.f32 %v1321, %v1322
    %v1324 = vand.u32 %v1323, 4294901760
    %1325 = vmatpush1.msra.mxu0 %v1324
    %v1326 = vand.u32 %v76, 4294901760
    %v1327 = vsub.f32 %v76, %v1326
    %v1328 = vand.u32 %v1327, 4294901760
    %v1329 = vsub.f32 %v1327, %v1328
    %v1330 = vand.u32 %v1329, 4294901760
    %1331 = vmatprep.subr.mxu0 %v1330
    %v1332 = vand.u32 %v75, 4294901760
    %v1333 = vsub.f32 %v75, %v1332
    %v1334 = vand.u32 %v1333, 4294901760
    %v1335 = vsub.f32 %v1333, %v1334
    %v1336 = vand.u32 %v1335, 4294901760
    %1337 = vmatpush1.msra.mxu0 %v1336
    %v1338 = vand.u32 %v68, 4294901760
    %v1339 = vsub.f32 %v68, %v1338
    %v1340 = vand.u32 %v1339, 4294901760
    %v1341 = vsub.f32 %v1339, %v1340
    %v1342 = vand.u32 %v1341, 4294901760
    %1343 = vmatprep.subr.mxu0 %v1342
    %v1344 = vand.u32 %v67, 4294901760
    %v1345 = vsub.f32 %v67, %v1344
    %v1346 = vand.u32 %v1345, 4294901760
    %v1347 = vsub.f32 %v1345, %v1346
    %v1348 = vand.u32 %v1347, 4294901760
    %1349 = vmatpush1.msra.mxu0 %v1348
    %v1350 = vand.u32 %v60, 4294901760
    %v1351 = vsub.f32 %v60, %v1350
    %v1352 = vand.u32 %v1351, 4294901760
    %v1353 = vsub.f32 %v1351, %v1352
    %v1354 = vand.u32 %v1353, 4294901760
    %1355 = vmatprep.subr.mxu0 %v1354
    %v1356 = vand.u32 %v59, 4294901760
    %v1357 = vsub.f32 %v59, %v1356
    %v1358 = vand.u32 %v1357, 4294901760
    %v1359 = vsub.f32 %v1357, %v1358
    %v1360 = vand.u32 %v1359, 4294901760
    %1361 = vmatpush1.msra.mxu0 %v1360
    %v1362 = vand.u32 %v52, 4294901760
    %v1363 = vsub.f32 %v52, %v1362
    %v1364 = vand.u32 %v1363, 4294901760
    %v1365 = vsub.f32 %v1363, %v1364
    %v1366 = vand.u32 %v1365, 4294901760
    %1367 = vmatprep.subr.mxu0 %v1366
    %v1368 = vand.u32 %v51, 4294901760
    %v1369 = vsub.f32 %v51, %v1368
    %v1370 = vand.u32 %v1369, 4294901760
    %v1371 = vsub.f32 %v1369, %v1370
    %v1372 = vand.u32 %v1371, 4294901760
    %1373 = vmatpush1.msra.mxu0 %v1372
    %1374 = vmatprep.subr.mxu0 0.0
    %1375 = vmatpush2.msra.mxu0 0.0
    %1376 = vmatprep.subr.mxu0 0.0
    %1377 = vmatpush2.msra.mxu0 0.0
    %1378 = vmatprep.subr.mxu0 0.0
    %1379 = vmatpush2.msra.mxu0 0.0
    %1380 = vmatprep.subr.mxu0 0.0
    %1381 = vmatpush2.msra.mxu0 0.0
    %1382 = vmatprep.subr.mxu0 0.0
    %1383 = vmatpush2.msra.mxu0 0.0
    %1384 = vmatprep.subr.mxu0 0.0
    %1385 = vmatpush2.msra.mxu0 0.0
    %1386 = vmatprep.subr.mxu0 0.0
    %1387 = vmatpush2.msra.mxu0 0.0
    %1388 = vmatprep.subr.mxu0 0.0
    %1389 = vmatpush2.msra.mxu0 0.0
    %1390 = vmatprep.subr.mxu0 0.0
    %1391 = vmatpush2.msra.mxu0 0.0
    %1392 = vmatprep.subr.mxu0 0.0
    %1393 = vmatpush2.msra.mxu0 0.0
    %1394 = vmatprep.subr.mxu0 0.0
    %1395 = vmatpush2.msra.mxu0 0.0
    %1396 = vmatprep.subr.mxu0 0.0
    %1397 = vmatpush2.msra.mxu0 0.0
    %1398 = vmatprep.subr.mxu0 0.0
    %1399 = vmatpush2.msra.mxu0 0.0
    %1400 = vmatprep.subr.mxu0 0.0
    %1401 = vmatpush2.msra.mxu0 0.0
    %1402 = vmatprep.subr.mxu0 0.0
    %1403 = vmatpush2.msra.mxu0 0.0
    %1404 = vmatprep.subr.mxu0 0.0
    %1405 = vmatpush2.msra.mxu0 0.0
    %1406 = vmatprep.mubr.f32.mxu0 0.0
    %v1407 = vand.u32 %v48, 4294901760
    %1408 = vmatmul.mubr.f32.gmra.mxu0 %v1407
    %v1409 = vpop.f32.mrf.mxu0
    %v1410 = vadd.f32 %v1178, %v1409
    %v1411 = vpop.f32.mrf.mxu0
    %v1412 = vadd.f32 %v1180, %v1411
    %1413 = vdwg.mxu0
    %v1414 = vand.u32 %v172, 4294901760
    %v1415 = vsub.f32 %v172, %v1414
    %1416 = vmatprep.subr.mxu0 %v1415
    %v1417 = vand.u32 %v171, 4294901760
    %v1418 = vsub.f32 %v171, %v1417
    %1419 = vmatpush1.msra.mxu0 %v1418
    %v1420 = vand.u32 %v164, 4294901760
    %v1421 = vsub.f32 %v164, %v1420
    %1422 = vmatprep.subr.mxu0 %v1421
    %v1423 = vand.u32 %v163, 4294901760
    %v1424 = vsub.f32 %v163, %v1423
    %1425 = vmatpush1.msra.mxu0 %v1424
    %v1426 = vand.u32 %v156, 4294901760
    %v1427 = vsub.f32 %v156, %v1426
    %1428 = vmatprep.subr.mxu0 %v1427
    %v1429 = vand.u32 %v155, 4294901760
    %v1430 = vsub.f32 %v155, %v1429
    %1431 = vmatpush1.msra.mxu0 %v1430
    %v1432 = vand.u32 %v148, 4294901760
    %v1433 = vsub.f32 %v148, %v1432
    %1434 = vmatprep.subr.mxu0 %v1433
    %v1435 = vand.u32 %v147, 4294901760
    %v1436 = vsub.f32 %v147, %v1435
    %1437 = vmatpush1.msra.mxu0 %v1436
    %v1438 = vand.u32 %v140, 4294901760
    %v1439 = vsub.f32 %v140, %v1438
    %1440 = vmatprep.subr.mxu0 %v1439
    %v1441 = vand.u32 %v139, 4294901760
    %v1442 = vsub.f32 %v139, %v1441
    %1443 = vmatpush1.msra.mxu0 %v1442
    %v1444 = vand.u32 %v132, 4294901760
    %v1445 = vsub.f32 %v132, %v1444
    %1446 = vmatprep.subr.mxu0 %v1445
    %v1447 = vand.u32 %v131, 4294901760
    %v1448 = vsub.f32 %v131, %v1447
    %1449 = vmatpush1.msra.mxu0 %v1448
    %v1450 = vand.u32 %v124, 4294901760
    %v1451 = vsub.f32 %v124, %v1450
    %1452 = vmatprep.subr.mxu0 %v1451
    %v1453 = vand.u32 %v123, 4294901760
    %v1454 = vsub.f32 %v123, %v1453
    %1455 = vmatpush1.msra.mxu0 %v1454
    %v1456 = vand.u32 %v116, 4294901760
    %v1457 = vsub.f32 %v116, %v1456
    %1458 = vmatprep.subr.mxu0 %v1457
    %v1459 = vand.u32 %v115, 4294901760
    %v1460 = vsub.f32 %v115, %v1459
    %1461 = vmatpush1.msra.mxu0 %v1460
    %v1462 = vand.u32 %v108, 4294901760
    %v1463 = vsub.f32 %v108, %v1462
    %1464 = vmatprep.subr.mxu0 %v1463
    %v1465 = vand.u32 %v107, 4294901760
    %v1466 = vsub.f32 %v107, %v1465
    %1467 = vmatpush1.msra.mxu0 %v1466
    %v1468 = vand.u32 %v100, 4294901760
    %v1469 = vsub.f32 %v100, %v1468
    %1470 = vmatprep.subr.mxu0 %v1469
    %v1471 = vand.u32 %v99, 4294901760
    %v1472 = vsub.f32 %v99, %v1471
    %1473 = vmatpush1.msra.mxu0 %v1472
    %v1474 = vand.u32 %v92, 4294901760
    %v1475 = vsub.f32 %v92, %v1474
    %1476 = vmatprep.subr.mxu0 %v1475
    %v1477 = vand.u32 %v91, 4294901760
    %v1478 = vsub.f32 %v91, %v1477
    %1479 = vmatpush1.msra.mxu0 %v1478
    %v1480 = vand.u32 %v84, 4294901760
    %v1481 = vsub.f32 %v84, %v1480
    %1482 = vmatprep.subr.mxu0 %v1481
    %v1483 = vand.u32 %v83, 4294901760
    %v1484 = vsub.f32 %v83, %v1483
    %1485 = vmatpush1.msra.mxu0 %v1484
    %v1486 = vand.u32 %v76, 4294901760
    %v1487 = vsub.f32 %v76, %v1486
    %1488 = vmatprep.subr.mxu0 %v1487
    %v1489 = vand.u32 %v75, 4294901760
    %v1490 = vsub.f32 %v75, %v1489
    %1491 = vmatpush1.msra.mxu0 %v1490
    %v1492 = vand.u32 %v68, 4294901760
    %v1493 = vsub.f32 %v68, %v1492
    %1494 = vmatprep.subr.mxu0 %v1493
    %v1495 = vand.u32 %v67, 4294901760
    %v1496 = vsub.f32 %v67, %v1495
    %1497 = vmatpush1.msra.mxu0 %v1496
    %v1498 = vand.u32 %v60, 4294901760
    %v1499 = vsub.f32 %v60, %v1498
    %1500 = vmatprep.subr.mxu0 %v1499
    %v1501 = vand.u32 %v59, 4294901760
    %v1502 = vsub.f32 %v59, %v1501
    %1503 = vmatpush1.msra.mxu0 %v1502
    %v1504 = vand.u32 %v52, 4294901760
    %v1505 = vsub.f32 %v52, %v1504
    %1506 = vmatprep.subr.mxu0 %v1505
    %v1507 = vand.u32 %v51, 4294901760
    %v1508 = vsub.f32 %v51, %v1507
    %1509 = vmatpush1.msra.mxu0 %v1508
    %1510 = vmatprep.subr.mxu0 0.0
    %1511 = vmatpush2.msra.mxu0 0.0
    %1512 = vmatprep.subr.mxu0 0.0
    %1513 = vmatpush2.msra.mxu0 0.0
    %1514 = vmatprep.subr.mxu0 0.0
    %1515 = vmatpush2.msra.mxu0 0.0
    %1516 = vmatprep.subr.mxu0 0.0
    %1517 = vmatpush2.msra.mxu0 0.0
    %1518 = vmatprep.subr.mxu0 0.0
    %1519 = vmatpush2.msra.mxu0 0.0
    %1520 = vmatprep.subr.mxu0 0.0
    %1521 = vmatpush2.msra.mxu0 0.0
    %1522 = vmatprep.subr.mxu0 0.0
    %1523 = vmatpush2.msra.mxu0 0.0
    %1524 = vmatprep.subr.mxu0 0.0
    %1525 = vmatpush2.msra.mxu0 0.0
    %1526 = vmatprep.subr.mxu0 0.0
    %1527 = vmatpush2.msra.mxu0 0.0
    %1528 = vmatprep.subr.mxu0 0.0
    %1529 = vmatpush2.msra.mxu0 0.0
    %1530 = vmatprep.subr.mxu0 0.0
    %1531 = vmatpush2.msra.mxu0 0.0
    %1532 = vmatprep.subr.mxu0 0.0
    %1533 = vmatpush2.msra.mxu0 0.0
    %1534 = vmatprep.subr.mxu0 0.0
    %1535 = vmatpush2.msra.mxu0 0.0
    %1536 = vmatprep.subr.mxu0 0.0
    %1537 = vmatpush2.msra.mxu0 0.0
    %1538 = vmatprep.subr.mxu0 0.0
    %1539 = vmatpush2.msra.mxu0 0.0
    %1540 = vmatprep.subr.mxu0 0.0
    %1541 = vmatpush2.msra.mxu0 0.0
    %1542 = vmatprep.mubr.f32.mxu0 0.0
    %v1543 = vand.u32 %v48, 4294901760
    %v1544 = vsub.f32 %v48, %v1543
    %1545 = vmatmul.mubr.f32.gmra.mxu0 %v1544
    %v1546 = vpop.f32.mrf.mxu0
    %v1547 = vadd.f32 %v1410, %v1546
    %v1548 = vpop.f32.mrf.mxu0
    %v1549 = vadd.f32 %v1412, %v1548
    %1550 = vdwg.mxu0
    %v1551 = vand.u32 %v172, 4294901760
    %1552 = vmatprep.subr.mxu0 %v1551
    %v1553 = vand.u32 %v171, 4294901760
    %1554 = vmatpush1.msra.mxu0 %v1553
    %v1555 = vand.u32 %v164, 4294901760
    %1556 = vmatprep.subr.mxu0 %v1555
    %v1557 = vand.u32 %v163, 4294901760
    %1558 = vmatpush1.msra.mxu0 %v1557
    %v1559 = vand.u32 %v156, 4294901760
    %1560 = vmatprep.subr.mxu0 %v1559
    %v1561 = vand.u32 %v155, 4294901760
    %1562 = vmatpush1.msra.mxu0 %v1561
    %v1563 = vand.u32 %v148, 4294901760
    %1564 = vmatprep.subr.mxu0 %v1563
    %v1565 = vand.u32 %v147, 4294901760
    %1566 = vmatpush1.msra.mxu0 %v1565
    %v1567 = vand.u32 %v140, 4294901760
    %1568 = vmatprep.subr.mxu0 %v1567
    %v1569 = vand.u32 %v139, 4294901760
    %1570 = vmatpush1.msra.mxu0 %v1569
    %v1571 = vand.u32 %v132, 4294901760
    %1572 = vmatprep.subr.mxu0 %v1571
    %v1573 = vand.u32 %v131, 4294901760
    %1574 = vmatpush1.msra.mxu0 %v1573
    %v1575 = vand.u32 %v124, 4294901760
    %1576 = vmatprep.subr.mxu0 %v1575
    %v1577 = vand.u32 %v123, 4294901760
    %1578 = vmatpush1.msra.mxu0 %v1577
    %v1579 = vand.u32 %v116, 4294901760
    %1580 = vmatprep.subr.mxu0 %v1579
    %v1581 = vand.u32 %v115, 4294901760
    %1582 = vmatpush1.msra.mxu0 %v1581
    %v1583 = vand.u32 %v108, 4294901760
    %1584 = vmatprep.subr.mxu0 %v1583
    %v1585 = vand.u32 %v107, 4294901760
    %1586 = vmatpush1.msra.mxu0 %v1585
    %v1587 = vand.u32 %v100, 4294901760
    %1588 = vmatprep.subr.mxu0 %v1587
    %v1589 = vand.u32 %v99, 4294901760
    %1590 = vmatpush1.msra.mxu0 %v1589
    %v1591 = vand.u32 %v92, 4294901760
    %1592 = vmatprep.subr.mxu0 %v1591
    %v1593 = vand.u32 %v91, 4294901760
    %1594 = vmatpush1.msra.mxu0 %v1593
    %v1595 = vand.u32 %v84, 4294901760
    %1596 = vmatprep.subr.mxu0 %v1595
    %v1597 = vand.u32 %v83, 4294901760
    %1598 = vmatpush1.msra.mxu0 %v1597
    %v1599 = vand.u32 %v76, 4294901760
    %1600 = vmatprep.subr.mxu0 %v1599
    %v1601 = vand.u32 %v75, 4294901760
    %1602 = vmatpush1.msra.mxu0 %v1601
    %v1603 = vand.u32 %v68, 4294901760
    %1604 = vmatprep.subr.mxu0 %v1603
    %v1605 = vand.u32 %v67, 4294901760
    %1606 = vmatpush1.msra.mxu0 %v1605
    %v1607 = vand.u32 %v60, 4294901760
    %1608 = vmatprep.subr.mxu0 %v1607
    %v1609 = vand.u32 %v59, 4294901760
    %1610 = vmatpush1.msra.mxu0 %v1609
    %v1611 = vand.u32 %v52, 4294901760
    %1612 = vmatprep.subr.mxu0 %v1611
    %v1613 = vand.u32 %v51, 4294901760
    %1614 = vmatpush1.msra.mxu0 %v1613
    %1615 = vmatprep.subr.mxu0 0.0
    %1616 = vmatpush2.msra.mxu0 0.0
    %1617 = vmatprep.subr.mxu0 0.0
    %1618 = vmatpush2.msra.mxu0 0.0
    %1619 = vmatprep.subr.mxu0 0.0
    %1620 = vmatpush2.msra.mxu0 0.0
    %1621 = vmatprep.subr.mxu0 0.0
    %1622 = vmatpush2.msra.mxu0 0.0
    %1623 = vmatprep.subr.mxu0 0.0
    %1624 = vmatpush2.msra.mxu0 0.0
    %1625 = vmatprep.subr.mxu0 0.0
    %1626 = vmatpush2.msra.mxu0 0.0
    %1627 = vmatprep.subr.mxu0 0.0
    %1628 = vmatpush2.msra.mxu0 0.0
    %1629 = vmatprep.subr.mxu0 0.0
    %1630 = vmatpush2.msra.mxu0 0.0
    %1631 = vmatprep.subr.mxu0 0.0
    %1632 = vmatpush2.msra.mxu0 0.0
    %1633 = vmatprep.subr.mxu0 0.0
    %1634 = vmatpush2.msra.mxu0 0.0
    %1635 = vmatprep.subr.mxu0 0.0
    %1636 = vmatpush2.msra.mxu0 0.0
    %1637 = vmatprep.subr.mxu0 0.0
    %1638 = vmatpush2.msra.mxu0 0.0
    %1639 = vmatprep.subr.mxu0 0.0
    %1640 = vmatpush2.msra.mxu0 0.0
    %1641 = vmatprep.subr.mxu0 0.0
    %1642 = vmatpush2.msra.mxu0 0.0
    %1643 = vmatprep.subr.mxu0 0.0
    %1644 = vmatpush2.msra.mxu0 0.0
    %1645 = vmatprep.subr.mxu0 0.0
    %1646 = vmatpush2.msra.mxu0 0.0
    %1647 = vmatprep.mubr.f32.mxu0 0.0
    %v1648 = vand.u32 %v48, 4294901760
    %v1649 = vsub.f32 %v48, %v1648
    %v1650 = vand.u32 %v1649, 4294901760
    %1651 = vmatmul.mubr.f32.gmra.mxu0 %v1650
    %v1652 = vpop.f32.mrf.mxu0
    %v1653 = vadd.f32 %v1547, %v1652
    %v1654 = vpop.f32.mrf.mxu0
    %v1655 = vadd.f32 %v1549, %v1654
    %1656 = vdwg.mxu0
    %v1657 = vand.u32 %v172, 4294901760
    %v1658 = vsub.f32 %v172, %v1657
    %v1659 = vand.u32 %v1658, 4294901760
    %1660 = vmatprep.subr.mxu0 %v1659
    %v1661 = vand.u32 %v171, 4294901760
    %v1662 = vsub.f32 %v171, %v1661
    %v1663 = vand.u32 %v1662, 4294901760
    %1664 = vmatpush1.msra.mxu0 %v1663
    %v1665 = vand.u32 %v164, 4294901760
    %v1666 = vsub.f32 %v164, %v1665
    %v1667 = vand.u32 %v1666, 4294901760
    %1668 = vmatprep.subr.mxu0 %v1667
    %v1669 = vand.u32 %v163, 4294901760
    %v1670 = vsub.f32 %v163, %v1669
    %v1671 = vand.u32 %v1670, 4294901760
    %1672 = vmatpush1.msra.mxu0 %v1671
    %v1673 = vand.u32 %v156, 4294901760
    %v1674 = vsub.f32 %v156, %v1673
    %v1675 = vand.u32 %v1674, 4294901760
    %1676 = vmatprep.subr.mxu0 %v1675
    %v1677 = vand.u32 %v155, 4294901760
    %v1678 = vsub.f32 %v155, %v1677
    %v1679 = vand.u32 %v1678, 4294901760
    %1680 = vmatpush1.msra.mxu0 %v1679
    %v1681 = vand.u32 %v148, 4294901760
    %v1682 = vsub.f32 %v148, %v1681
    %v1683 = vand.u32 %v1682, 4294901760
    %1684 = vmatprep.subr.mxu0 %v1683
    %v1685 = vand.u32 %v147, 4294901760
    %v1686 = vsub.f32 %v147, %v1685
    %v1687 = vand.u32 %v1686, 4294901760
    %1688 = vmatpush1.msra.mxu0 %v1687
    %v1689 = vand.u32 %v140, 4294901760
    %v1690 = vsub.f32 %v140, %v1689
    %v1691 = vand.u32 %v1690, 4294901760
    %1692 = vmatprep.subr.mxu0 %v1691
    %v1693 = vand.u32 %v139, 4294901760
    %v1694 = vsub.f32 %v139, %v1693
    %v1695 = vand.u32 %v1694, 4294901760
    %1696 = vmatpush1.msra.mxu0 %v1695
    %v1697 = vand.u32 %v132, 4294901760
    %v1698 = vsub.f32 %v132, %v1697
    %v1699 = vand.u32 %v1698, 4294901760
    %1700 = vmatprep.subr.mxu0 %v1699
    %v1701 = vand.u32 %v131, 4294901760
    %v1702 = vsub.f32 %v131, %v1701
    %v1703 = vand.u32 %v1702, 4294901760
    %1704 = vmatpush1.msra.mxu0 %v1703
    %v1705 = vand.u32 %v124, 4294901760
    %v1706 = vsub.f32 %v124, %v1705
    %v1707 = vand.u32 %v1706, 4294901760
    %1708 = vmatprep.subr.mxu0 %v1707
    %v1709 = vand.u32 %v123, 4294901760
    %v1710 = vsub.f32 %v123, %v1709
    %v1711 = vand.u32 %v1710, 4294901760
    %1712 = vmatpush1.msra.mxu0 %v1711
    %v1713 = vand.u32 %v116, 4294901760
    %v1714 = vsub.f32 %v116, %v1713
    %v1715 = vand.u32 %v1714, 4294901760
    %1716 = vmatprep.subr.mxu0 %v1715
    %v1717 = vand.u32 %v115, 4294901760
    %v1718 = vsub.f32 %v115, %v1717
    %v1719 = vand.u32 %v1718, 4294901760
    %1720 = vmatpush1.msra.mxu0 %v1719
    %v1721 = vand.u32 %v108, 4294901760
    %v1722 = vsub.f32 %v108, %v1721
    %v1723 = vand.u32 %v1722, 4294901760
    %1724 = vmatprep.subr.mxu0 %v1723
    %v1725 = vand.u32 %v107, 4294901760
    %v1726 = vsub.f32 %v107, %v1725
    %v1727 = vand.u32 %v1726, 4294901760
    %1728 = vmatpush1.msra.mxu0 %v1727
    %v1729 = vand.u32 %v100, 4294901760
    %v1730 = vsub.f32 %v100, %v1729
    %v1731 = vand.u32 %v1730, 4294901760
    %1732 = vmatprep.subr.mxu0 %v1731
    %v1733 = vand.u32 %v99, 4294901760
    %v1734 = vsub.f32 %v99, %v1733
    %v1735 = vand.u32 %v1734, 4294901760
    %1736 = vmatpush1.msra.mxu0 %v1735
    %v1737 = vand.u32 %v92, 4294901760
    %v1738 = vsub.f32 %v92, %v1737
    %v1739 = vand.u32 %v1738, 4294901760
    %1740 = vmatprep.subr.mxu0 %v1739
    %v1741 = vand.u32 %v91, 4294901760
    %v1742 = vsub.f32 %v91, %v1741
    %v1743 = vand.u32 %v1742, 4294901760
    %1744 = vmatpush1.msra.mxu0 %v1743
    %v1745 = vand.u32 %v84, 4294901760
    %v1746 = vsub.f32 %v84, %v1745
    %v1747 = vand.u32 %v1746, 4294901760
    %1748 = vmatprep.subr.mxu0 %v1747
    %v1749 = vand.u32 %v83, 4294901760
    %v1750 = vsub.f32 %v83, %v1749
    %v1751 = vand.u32 %v1750, 4294901760
    %1752 = vmatpush1.msra.mxu0 %v1751
    %v1753 = vand.u32 %v76, 4294901760
    %v1754 = vsub.f32 %v76, %v1753
    %v1755 = vand.u32 %v1754, 4294901760
    %1756 = vmatprep.subr.mxu0 %v1755
    %v1757 = vand.u32 %v75, 4294901760
    %v1758 = vsub.f32 %v75, %v1757
    %v1759 = vand.u32 %v1758, 4294901760
    %1760 = vmatpush1.msra.mxu0 %v1759
    %v1761 = vand.u32 %v68, 4294901760
    %v1762 = vsub.f32 %v68, %v1761
    %v1763 = vand.u32 %v1762, 4294901760
    %1764 = vmatprep.subr.mxu0 %v1763
    %v1765 = vand.u32 %v67, 4294901760
    %v1766 = vsub.f32 %v67, %v1765
    %v1767 = vand.u32 %v1766, 4294901760
    %1768 = vmatpush1.msra.mxu0 %v1767
    %v1769 = vand.u32 %v60, 4294901760
    %v1770 = vsub.f32 %v60, %v1769
    %v1771 = vand.u32 %v1770, 4294901760
    %1772 = vmatprep.subr.mxu0 %v1771
    %v1773 = vand.u32 %v59, 4294901760
    %v1774 = vsub.f32 %v59, %v1773
    %v1775 = vand.u32 %v1774, 4294901760
    %1776 = vmatpush1.msra.mxu0 %v1775
    %v1777 = vand.u32 %v52, 4294901760
    %v1778 = vsub.f32 %v52, %v1777
    %v1779 = vand.u32 %v1778, 4294901760
    %1780 = vmatprep.subr.mxu0 %v1779
    %v1781 = vand.u32 %v51, 4294901760
    %v1782 = vsub.f32 %v51, %v1781
    %v1783 = vand.u32 %v1782, 4294901760
    %1784 = vmatpush1.msra.mxu0 %v1783
    %1785 = vmatprep.subr.mxu0 0.0
    %1786 = vmatpush2.msra.mxu0 0.0
    %1787 = vmatprep.subr.mxu0 0.0
    %1788 = vmatpush2.msra.mxu0 0.0
    %1789 = vmatprep.subr.mxu0 0.0
    %1790 = vmatpush2.msra.mxu0 0.0
    %1791 = vmatprep.subr.mxu0 0.0
    %1792 = vmatpush2.msra.mxu0 0.0
    %1793 = vmatprep.subr.mxu0 0.0
    %1794 = vmatpush2.msra.mxu0 0.0
    %1795 = vmatprep.subr.mxu0 0.0
    %1796 = vmatpush2.msra.mxu0 0.0
    %1797 = vmatprep.subr.mxu0 0.0
    %1798 = vmatpush2.msra.mxu0 0.0
    %1799 = vmatprep.subr.mxu0 0.0
    %1800 = vmatpush2.msra.mxu0 0.0
    %1801 = vmatprep.subr.mxu0 0.0
    %1802 = vmatpush2.msra.mxu0 0.0
    %1803 = vmatprep.subr.mxu0 0.0
    %1804 = vmatpush2.msra.mxu0 0.0
    %1805 = vmatprep.subr.mxu0 0.0
    %1806 = vmatpush2.msra.mxu0 0.0
    %1807 = vmatprep.subr.mxu0 0.0
    %1808 = vmatpush2.msra.mxu0 0.0
    %1809 = vmatprep.subr.mxu0 0.0
    %1810 = vmatpush2.msra.mxu0 0.0
    %1811 = vmatprep.subr.mxu0 0.0
    %1812 = vmatpush2.msra.mxu0 0.0
    %1813 = vmatprep.subr.mxu0 0.0
    %1814 = vmatpush2.msra.mxu0 0.0
    %1815 = vmatprep.subr.mxu0 0.0
    %1816 = vmatpush2.msra.mxu0 0.0
    %1817 = vmatprep.mubr.f32.mxu0 0.0
    %v1818 = vand.u32 %v48, 4294901760
    %1819 = vmatmul.mubr.f32.gmra.mxu0 %v1818
    %v1820 = vpop.f32.mrf.mxu0
    %v1821 = vadd.f32 %v1653, %v1820
    %v1822 = vpop.f32.mrf.mxu0
    %v1823 = vadd.f32 %v1655, %v1822
    %1824 = vdwg.mxu0
    %v1825 = vand.u32 %v172, 4294901760
    %1826 = vmatprep.subr.mxu0 %v1825
    %v1827 = vand.u32 %v171, 4294901760
    %1828 = vmatpush1.msra.mxu0 %v1827
    %v1829 = vand.u32 %v164, 4294901760
    %1830 = vmatprep.subr.mxu0 %v1829
    %v1831 = vand.u32 %v163, 4294901760
    %1832 = vmatpush1.msra.mxu0 %v1831
    %v1833 = vand.u32 %v156, 4294901760
    %1834 = vmatprep.subr.mxu0 %v1833
    %v1835 = vand.u32 %v155, 4294901760
    %1836 = vmatpush1.msra.mxu0 %v1835
    %v1837 = vand.u32 %v148, 4294901760
    %1838 = vmatprep.subr.mxu0 %v1837
    %v1839 = vand.u32 %v147, 4294901760
    %1840 = vmatpush1.msra.mxu0 %v1839
    %v1841 = vand.u32 %v140, 4294901760
    %1842 = vmatprep.subr.mxu0 %v1841
    %v1843 = vand.u32 %v139, 4294901760
    %1844 = vmatpush1.msra.mxu0 %v1843
    %v1845 = vand.u32 %v132, 4294901760
    %1846 = vmatprep.subr.mxu0 %v1845
    %v1847 = vand.u32 %v131, 4294901760
    %1848 = vmatpush1.msra.mxu0 %v1847
    %v1849 = vand.u32 %v124, 4294901760
    %1850 = vmatprep.subr.mxu0 %v1849
    %v1851 = vand.u32 %v123, 4294901760
    %1852 = vmatpush1.msra.mxu0 %v1851
    %v1853 = vand.u32 %v116, 4294901760
    %1854 = vmatprep.subr.mxu0 %v1853
    %v1855 = vand.u32 %v115, 4294901760
    %1856 = vmatpush1.msra.mxu0 %v1855
    %v1857 = vand.u32 %v108, 4294901760
    %1858 = vmatprep.subr.mxu0 %v1857
    %v1859 = vand.u32 %v107, 4294901760
    %1860 = vmatpush1.msra.mxu0 %v1859
    %v1861 = vand.u32 %v100, 4294901760
    %1862 = vmatprep.subr.mxu0 %v1861
    %v1863 = vand.u32 %v99, 4294901760
    %1864 = vmatpush1.msra.mxu0 %v1863
    %v1865 = vand.u32 %v92, 4294901760
    %1866 = vmatprep.subr.mxu0 %v1865
    %v1867 = vand.u32 %v91, 4294901760
    %1868 = vmatpush1.msra.mxu0 %v1867
    %v1869 = vand.u32 %v84, 4294901760
    %1870 = vmatprep.subr.mxu0 %v1869
    %v1871 = vand.u32 %v83, 4294901760
    %1872 = vmatpush1.msra.mxu0 %v1871
    %v1873 = vand.u32 %v76, 4294901760
    %1874 = vmatprep.subr.mxu0 %v1873
    %v1875 = vand.u32 %v75, 4294901760
    %1876 = vmatpush1.msra.mxu0 %v1875
    %v1877 = vand.u32 %v68, 4294901760
    %1878 = vmatprep.subr.mxu0 %v1877
    %v1879 = vand.u32 %v67, 4294901760
    %1880 = vmatpush1.msra.mxu0 %v1879
    %v1881 = vand.u32 %v60, 4294901760
    %1882 = vmatprep.subr.mxu0 %v1881
    %v1883 = vand.u32 %v59, 4294901760
    %1884 = vmatpush1.msra.mxu0 %v1883
    %v1885 = vand.u32 %v52, 4294901760
    %1886 = vmatprep.subr.mxu0 %v1885
    %v1887 = vand.u32 %v51, 4294901760
    %1888 = vmatpush1.msra.mxu0 %v1887
    %1889 = vmatprep.subr.mxu0 0.0
    %1890 = vmatpush2.msra.mxu0 0.0
    %1891 = vmatprep.subr.mxu0 0.0
    %1892 = vmatpush2.msra.mxu0 0.0
    %1893 = vmatprep.subr.mxu0 0.0
    %1894 = vmatpush2.msra.mxu0 0.0
    %1895 = vmatprep.subr.mxu0 0.0
    %1896 = vmatpush2.msra.mxu0 0.0
    %1897 = vmatprep.subr.mxu0 0.0
    %1898 = vmatpush2.msra.mxu0 0.0
    %1899 = vmatprep.subr.mxu0 0.0
    %1900 = vmatpush2.msra.mxu0 0.0
    %1901 = vmatprep.subr.mxu0 0.0
    %1902 = vmatpush2.msra.mxu0 0.0
    %1903 = vmatprep.subr.mxu0 0.0
    %1904 = vmatpush2.msra.mxu0 0.0
    %1905 = vmatprep.subr.mxu0 0.0
    %1906 = vmatpush2.msra.mxu0 0.0
    %1907 = vmatprep.subr.mxu0 0.0
    %1908 = vmatpush2.msra.mxu0 0.0
    %1909 = vmatprep.subr.mxu0 0.0
    %1910 = vmatpush2.msra.mxu0 0.0
    %1911 = vmatprep.subr.mxu0 0.0
    %1912 = vmatpush2.msra.mxu0 0.0
    %1913 = vmatprep.subr.mxu0 0.0
    %1914 = vmatpush2.msra.mxu0 0.0
    %1915 = vmatprep.subr.mxu0 0.0
    %1916 = vmatpush2.msra.mxu0 0.0
    %1917 = vmatprep.subr.mxu0 0.0
    %1918 = vmatpush2.msra.mxu0 0.0
    %1919 = vmatprep.subr.mxu0 0.0
    %1920 = vmatpush2.msra.mxu0 0.0
    %1921 = vmatprep.mubr.f32.mxu0 0.0
    %v1922 = vand.u32 %v48, 4294901760
    %1923 = vmatmul.mubr.f32.gmra.mxu0 %v1922
    %v1924 = vpop.f32.mrf.mxu0
    %v1925 = vadd.f32 %v1821, %v1924
    %v1926 = vpop.f32.mrf.mxu0
    %v1927 = vadd.f32 %v1823, %v1926
    %1928 = vdwg.mxu0
    %v1929 = vand.u32 %v174, 4294901760
    %1930 = vmatprep.subr.mxu0 %v1929
    %v1931 = vand.u32 %v173, 4294901760
    %1932 = vmatpush1.msra.mxu0 %v1931
    %v1933 = vand.u32 %v166, 4294901760
    %1934 = vmatprep.subr.mxu0 %v1933
    %v1935 = vand.u32 %v165, 4294901760
    %1936 = vmatpush1.msra.mxu0 %v1935
    %v1937 = vand.u32 %v158, 4294901760
    %1938 = vmatprep.subr.mxu0 %v1937
    %v1939 = vand.u32 %v157, 4294901760
    %1940 = vmatpush1.msra.mxu0 %v1939
    %v1941 = vand.u32 %v150, 4294901760
    %1942 = vmatprep.subr.mxu0 %v1941
    %v1943 = vand.u32 %v149, 4294901760
    %1944 = vmatpush1.msra.mxu0 %v1943
    %v1945 = vand.u32 %v142, 4294901760
    %1946 = vmatprep.subr.mxu0 %v1945
    %v1947 = vand.u32 %v141, 4294901760
    %1948 = vmatpush1.msra.mxu0 %v1947
    %v1949 = vand.u32 %v134, 4294901760
    %1950 = vmatprep.subr.mxu0 %v1949
    %v1951 = vand.u32 %v133, 4294901760
    %1952 = vmatpush1.msra.mxu0 %v1951
    %v1953 = vand.u32 %v126, 4294901760
    %1954 = vmatprep.subr.mxu0 %v1953
    %v1955 = vand.u32 %v125, 4294901760
    %1956 = vmatpush1.msra.mxu0 %v1955
    %v1957 = vand.u32 %v118, 4294901760
    %1958 = vmatprep.subr.mxu0 %v1957
    %v1959 = vand.u32 %v117, 4294901760
    %1960 = vmatpush1.msra.mxu0 %v1959
    %v1961 = vand.u32 %v110, 4294901760
    %1962 = vmatprep.subr.mxu0 %v1961
    %v1963 = vand.u32 %v109, 4294901760
    %1964 = vmatpush1.msra.mxu0 %v1963
    %v1965 = vand.u32 %v102, 4294901760
    %1966 = vmatprep.subr.mxu0 %v1965
    %v1967 = vand.u32 %v101, 4294901760
    %1968 = vmatpush1.msra.mxu0 %v1967
    %v1969 = vand.u32 %v94, 4294901760
    %1970 = vmatprep.subr.mxu0 %v1969
    %v1971 = vand.u32 %v93, 4294901760
    %1972 = vmatpush1.msra.mxu0 %v1971
    %v1973 = vand.u32 %v86, 4294901760
    %1974 = vmatprep.subr.mxu0 %v1973
    %v1975 = vand.u32 %v85, 4294901760
    %1976 = vmatpush1.msra.mxu0 %v1975
    %v1977 = vand.u32 %v78, 4294901760
    %1978 = vmatprep.subr.mxu0 %v1977
    %v1979 = vand.u32 %v77, 4294901760
    %1980 = vmatpush1.msra.mxu0 %v1979
    %v1981 = vand.u32 %v70, 4294901760
    %1982 = vmatprep.subr.mxu0 %v1981
    %v1983 = vand.u32 %v69, 4294901760
    %1984 = vmatpush1.msra.mxu0 %v1983
    %v1985 = vand.u32 %v62, 4294901760
    %1986 = vmatprep.subr.mxu0 %v1985
    %v1987 = vand.u32 %v61, 4294901760
    %1988 = vmatpush1.msra.mxu0 %v1987
    %v1989 = vand.u32 %v54, 4294901760
    %1990 = vmatprep.subr.mxu0 %v1989
    %v1991 = vand.u32 %v53, 4294901760
    %1992 = vmatpush1.msra.mxu0 %v1991
    %1993 = vmatprep.subr.mxu0 0.0
    %1994 = vmatpush2.msra.mxu0 0.0
    %1995 = vmatprep.subr.mxu0 0.0
    %1996 = vmatpush2.msra.mxu0 0.0
    %1997 = vmatprep.subr.mxu0 0.0
    %1998 = vmatpush2.msra.mxu0 0.0
    %1999 = vmatprep.subr.mxu0 0.0
    %2000 = vmatpush2.msra.mxu0 0.0
    %2001 = vmatprep.subr.mxu0 0.0
    %2002 = vmatpush2.msra.mxu0 0.0
    %2003 = vmatprep.subr.mxu0 0.0
    %2004 = vmatpush2.msra.mxu0 0.0
    %2005 = vmatprep.subr.mxu0 0.0
    %2006 = vmatpush2.msra.mxu0 0.0
    %2007 = vmatprep.subr.mxu0 0.0
    %2008 = vmatpush2.msra.mxu0 0.0
    %2009 = vmatprep.subr.mxu0 0.0
    %2010 = vmatpush2.msra.mxu0 0.0
    %2011 = vmatprep.subr.mxu0 0.0
    %2012 = vmatpush2.msra.mxu0 0.0
    %2013 = vmatprep.subr.mxu0 0.0
    %2014 = vmatpush2.msra.mxu0 0.0
    %2015 = vmatprep.subr.mxu0 0.0
    %2016 = vmatpush2.msra.mxu0 0.0
    %2017 = vmatprep.subr.mxu0 0.0
    %2018 = vmatpush2.msra.mxu0 0.0
    %2019 = vmatprep.subr.mxu0 0.0
    %2020 = vmatpush2.msra.mxu0 0.0
    %2021 = vmatprep.subr.mxu0 0.0
    %2022 = vmatpush2.msra.mxu0 0.0
    %2023 = vmatprep.subr.mxu0 0.0
    %2024 = vmatpush2.msra.mxu0 0.0
    %2025 = vmatprep.mubr.f32.mxu0 0.0
    %v2026 = vand.u32 %v48, 4294901760
    %v2027 = vsub.f32 %v48, %v2026
    %v2028 = vand.u32 %v2027, 4294901760
    %v2029 = vsub.f32 %v2027, %v2028
    %v2030 = vand.u32 %v2029, 4294901760
    %2031 = vmatmul.mubr.f32.gmra.mxu0 %v2030
    %v2032 = vpop.f32.mrf.mxu0
    %v2033 = vadd.f32 %v198, %v2032
    %v2034 = vpop.f32.mrf.mxu0
    %v2035 = vadd.f32 %v202, %v2034
    %2036 = vdwg.mxu0
    %v2037 = vand.u32 %v174, 4294901760
    %v2038 = vsub.f32 %v174, %v2037
    %v2039 = vand.u32 %v2038, 4294901760
    %v2040 = vsub.f32 %v2038, %v2039
    %v2041 = vand.u32 %v2040, 4294901760
    %2042 = vmatprep.subr.mxu0 %v2041
    %v2043 = vand.u32 %v173, 4294901760
    %v2044 = vsub.f32 %v173, %v2043
    %v2045 = vand.u32 %v2044, 4294901760
    %v2046 = vsub.f32 %v2044, %v2045
    %v2047 = vand.u32 %v2046, 4294901760
    %2048 = vmatpush1.msra.mxu0 %v2047
    %v2049 = vand.u32 %v166, 4294901760
    %v2050 = vsub.f32 %v166, %v2049
    %v2051 = vand.u32 %v2050, 4294901760
    %v2052 = vsub.f32 %v2050, %v2051
    %v2053 = vand.u32 %v2052, 4294901760
    %2054 = vmatprep.subr.mxu0 %v2053
    %v2055 = vand.u32 %v165, 4294901760
    %v2056 = vsub.f32 %v165, %v2055
    %v2057 = vand.u32 %v2056, 4294901760
    %v2058 = vsub.f32 %v2056, %v2057
    %v2059 = vand.u32 %v2058, 4294901760
    %2060 = vmatpush1.msra.mxu0 %v2059
    %v2061 = vand.u32 %v158, 4294901760
    %v2062 = vsub.f32 %v158, %v2061
    %v2063 = vand.u32 %v2062, 4294901760
    %v2064 = vsub.f32 %v2062, %v2063
    %v2065 = vand.u32 %v2064, 4294901760
    %2066 = vmatprep.subr.mxu0 %v2065
    %v2067 = vand.u32 %v157, 4294901760
    %v2068 = vsub.f32 %v157, %v2067
    %v2069 = vand.u32 %v2068, 4294901760
    %v2070 = vsub.f32 %v2068, %v2069
    %v2071 = vand.u32 %v2070, 4294901760
    %2072 = vmatpush1.msra.mxu0 %v2071
    %v2073 = vand.u32 %v150, 4294901760
    %v2074 = vsub.f32 %v150, %v2073
    %v2075 = vand.u32 %v2074, 4294901760
    %v2076 = vsub.f32 %v2074, %v2075
    %v2077 = vand.u32 %v2076, 4294901760
    %2078 = vmatprep.subr.mxu0 %v2077
    %v2079 = vand.u32 %v149, 4294901760
    %v2080 = vsub.f32 %v149, %v2079
    %v2081 = vand.u32 %v2080, 4294901760
    %v2082 = vsub.f32 %v2080, %v2081
    %v2083 = vand.u32 %v2082, 4294901760
    %2084 = vmatpush1.msra.mxu0 %v2083
    %v2085 = vand.u32 %v142, 4294901760
    %v2086 = vsub.f32 %v142, %v2085
    %v2087 = vand.u32 %v2086, 4294901760
    %v2088 = vsub.f32 %v2086, %v2087
    %v2089 = vand.u32 %v2088, 4294901760
    %2090 = vmatprep.subr.mxu0 %v2089
    %v2091 = vand.u32 %v141, 4294901760
    %v2092 = vsub.f32 %v141, %v2091
    %v2093 = vand.u32 %v2092, 4294901760
    %v2094 = vsub.f32 %v2092, %v2093
    %v2095 = vand.u32 %v2094, 4294901760
    %2096 = vmatpush1.msra.mxu0 %v2095
    %v2097 = vand.u32 %v134, 4294901760
    %v2098 = vsub.f32 %v134, %v2097
    %v2099 = vand.u32 %v2098, 4294901760
    %v2100 = vsub.f32 %v2098, %v2099
    %v2101 = vand.u32 %v2100, 4294901760
    %2102 = vmatprep.subr.mxu0 %v2101
    %v2103 = vand.u32 %v133, 4294901760
    %v2104 = vsub.f32 %v133, %v2103
    %v2105 = vand.u32 %v2104, 4294901760
    %v2106 = vsub.f32 %v2104, %v2105
    %v2107 = vand.u32 %v2106, 4294901760
    %2108 = vmatpush1.msra.mxu0 %v2107
    %v2109 = vand.u32 %v126, 4294901760
    %v2110 = vsub.f32 %v126, %v2109
    %v2111 = vand.u32 %v2110, 4294901760
    %v2112 = vsub.f32 %v2110, %v2111
    %v2113 = vand.u32 %v2112, 4294901760
    %2114 = vmatprep.subr.mxu0 %v2113
    %v2115 = vand.u32 %v125, 4294901760
    %v2116 = vsub.f32 %v125, %v2115
    %v2117 = vand.u32 %v2116, 4294901760
    %v2118 = vsub.f32 %v2116, %v2117
    %v2119 = vand.u32 %v2118, 4294901760
    %2120 = vmatpush1.msra.mxu0 %v2119
    %v2121 = vand.u32 %v118, 4294901760
    %v2122 = vsub.f32 %v118, %v2121
    %v2123 = vand.u32 %v2122, 4294901760
    %v2124 = vsub.f32 %v2122, %v2123
    %v2125 = vand.u32 %v2124, 4294901760
    %2126 = vmatprep.subr.mxu0 %v2125
    %v2127 = vand.u32 %v117, 4294901760
    %v2128 = vsub.f32 %v117, %v2127
    %v2129 = vand.u32 %v2128, 4294901760
    %v2130 = vsub.f32 %v2128, %v2129
    %v2131 = vand.u32 %v2130, 4294901760
    %2132 = vmatpush1.msra.mxu0 %v2131
    %v2133 = vand.u32 %v110, 4294901760
    %v2134 = vsub.f32 %v110, %v2133
    %v2135 = vand.u32 %v2134, 4294901760
    %v2136 = vsub.f32 %v2134, %v2135
    %v2137 = vand.u32 %v2136, 4294901760
    %2138 = vmatprep.subr.mxu0 %v2137
    %v2139 = vand.u32 %v109, 4294901760
    %v2140 = vsub.f32 %v109, %v2139
    %v2141 = vand.u32 %v2140, 4294901760
    %v2142 = vsub.f32 %v2140, %v2141
    %v2143 = vand.u32 %v2142, 4294901760
    %2144 = vmatpush1.msra.mxu0 %v2143
    %v2145 = vand.u32 %v102, 4294901760
    %v2146 = vsub.f32 %v102, %v2145
    %v2147 = vand.u32 %v2146, 4294901760
    %v2148 = vsub.f32 %v2146, %v2147
    %v2149 = vand.u32 %v2148, 4294901760
    %2150 = vmatprep.subr.mxu0 %v2149
    %v2151 = vand.u32 %v101, 4294901760
    %v2152 = vsub.f32 %v101, %v2151
    %v2153 = vand.u32 %v2152, 4294901760
    %v2154 = vsub.f32 %v2152, %v2153
    %v2155 = vand.u32 %v2154, 4294901760
    %2156 = vmatpush1.msra.mxu0 %v2155
    %v2157 = vand.u32 %v94, 4294901760
    %v2158 = vsub.f32 %v94, %v2157
    %v2159 = vand.u32 %v2158, 4294901760
    %v2160 = vsub.f32 %v2158, %v2159
    %v2161 = vand.u32 %v2160, 4294901760
    %2162 = vmatprep.subr.mxu0 %v2161
    %v2163 = vand.u32 %v93, 4294901760
    %v2164 = vsub.f32 %v93, %v2163
    %v2165 = vand.u32 %v2164, 4294901760
    %v2166 = vsub.f32 %v2164, %v2165
    %v2167 = vand.u32 %v2166, 4294901760
    %2168 = vmatpush1.msra.mxu0 %v2167
    %v2169 = vand.u32 %v86, 4294901760
    %v2170 = vsub.f32 %v86, %v2169
    %v2171 = vand.u32 %v2170, 4294901760
    %v2172 = vsub.f32 %v2170, %v2171
    %v2173 = vand.u32 %v2172, 4294901760
    %2174 = vmatprep.subr.mxu0 %v2173
    %v2175 = vand.u32 %v85, 4294901760
    %v2176 = vsub.f32 %v85, %v2175
    %v2177 = vand.u32 %v2176, 4294901760
    %v2178 = vsub.f32 %v2176, %v2177
    %v2179 = vand.u32 %v2178, 4294901760
    %2180 = vmatpush1.msra.mxu0 %v2179
    %v2181 = vand.u32 %v78, 4294901760
    %v2182 = vsub.f32 %v78, %v2181
    %v2183 = vand.u32 %v2182, 4294901760
    %v2184 = vsub.f32 %v2182, %v2183
    %v2185 = vand.u32 %v2184, 4294901760
    %2186 = vmatprep.subr.mxu0 %v2185
    %v2187 = vand.u32 %v77, 4294901760
    %v2188 = vsub.f32 %v77, %v2187
    %v2189 = vand.u32 %v2188, 4294901760
    %v2190 = vsub.f32 %v2188, %v2189
    %v2191 = vand.u32 %v2190, 4294901760
    %2192 = vmatpush1.msra.mxu0 %v2191
    %v2193 = vand.u32 %v70, 4294901760
    %v2194 = vsub.f32 %v70, %v2193
    %v2195 = vand.u32 %v2194, 4294901760
    %v2196 = vsub.f32 %v2194, %v2195
    %v2197 = vand.u32 %v2196, 4294901760
    %2198 = vmatprep.subr.mxu0 %v2197
    %v2199 = vand.u32 %v69, 4294901760
    %v2200 = vsub.f32 %v69, %v2199
    %v2201 = vand.u32 %v2200, 4294901760
    %v2202 = vsub.f32 %v2200, %v2201
    %v2203 = vand.u32 %v2202, 4294901760
    %2204 = vmatpush1.msra.mxu0 %v2203
    %v2205 = vand.u32 %v62, 4294901760
    %v2206 = vsub.f32 %v62, %v2205
    %v2207 = vand.u32 %v2206, 4294901760
    %v2208 = vsub.f32 %v2206, %v2207
    %v2209 = vand.u32 %v2208, 4294901760
    %2210 = vmatprep.subr.mxu0 %v2209
    %v2211 = vand.u32 %v61, 4294901760
    %v2212 = vsub.f32 %v61, %v2211
    %v2213 = vand.u32 %v2212, 4294901760
    %v2214 = vsub.f32 %v2212, %v2213
    %v2215 = vand.u32 %v2214, 4294901760
    %2216 = vmatpush1.msra.mxu0 %v2215
    %v2217 = vand.u32 %v54, 4294901760
    %v2218 = vsub.f32 %v54, %v2217
    %v2219 = vand.u32 %v2218, 4294901760
    %v2220 = vsub.f32 %v2218, %v2219
    %v2221 = vand.u32 %v2220, 4294901760
    %2222 = vmatprep.subr.mxu0 %v2221
    %v2223 = vand.u32 %v53, 4294901760
    %v2224 = vsub.f32 %v53, %v2223
    %v2225 = vand.u32 %v2224, 4294901760
    %v2226 = vsub.f32 %v2224, %v2225
    %v2227 = vand.u32 %v2226, 4294901760
    %2228 = vmatpush1.msra.mxu0 %v2227
    %2229 = vmatprep.subr.mxu0 0.0
    %2230 = vmatpush2.msra.mxu0 0.0
    %2231 = vmatprep.subr.mxu0 0.0
    %2232 = vmatpush2.msra.mxu0 0.0
    %2233 = vmatprep.subr.mxu0 0.0
    %2234 = vmatpush2.msra.mxu0 0.0
    %2235 = vmatprep.subr.mxu0 0.0
    %2236 = vmatpush2.msra.mxu0 0.0
    %2237 = vmatprep.subr.mxu0 0.0
    %2238 = vmatpush2.msra.mxu0 0.0
    %2239 = vmatprep.subr.mxu0 0.0
    %2240 = vmatpush2.msra.mxu0 0.0
    %2241 = vmatprep.subr.mxu0 0.0
    %2242 = vmatpush2.msra.mxu0 0.0
    %2243 = vmatprep.subr.mxu0 0.0
    %2244 = vmatpush2.msra.mxu0 0.0
    %2245 = vmatprep.subr.mxu0 0.0
    %2246 = vmatpush2.msra.mxu0 0.0
    %2247 = vmatprep.subr.mxu0 0.0
    %2248 = vmatpush2.msra.mxu0 0.0
    %2249 = vmatprep.subr.mxu0 0.0
    %2250 = vmatpush2.msra.mxu0 0.0
    %2251 = vmatprep.subr.mxu0 0.0
    %2252 = vmatpush2.msra.mxu0 0.0
    %2253 = vmatprep.subr.mxu0 0.0
    %2254 = vmatpush2.msra.mxu0 0.0
    %2255 = vmatprep.subr.mxu0 0.0
    %2256 = vmatpush2.msra.mxu0 0.0
    %2257 = vmatprep.subr.mxu0 0.0
    %2258 = vmatpush2.msra.mxu0 0.0
    %2259 = vmatprep.subr.mxu0 0.0
    %2260 = vmatpush2.msra.mxu0 0.0
    %2261 = vmatprep.mubr.f32.mxu0 0.0
    %v2262 = vand.u32 %v48, 4294901760
    %2263 = vmatmul.mubr.f32.gmra.mxu0 %v2262
    %v2264 = vpop.f32.mrf.mxu0
    %v2265 = vadd.f32 %v2033, %v2264
    %v2266 = vpop.f32.mrf.mxu0
    %v2267 = vadd.f32 %v2035, %v2266
    %2268 = vdwg.mxu0
    %v2269 = vand.u32 %v174, 4294901760
    %v2270 = vsub.f32 %v174, %v2269
    %2271 = vmatprep.subr.mxu0 %v2270
    %v2272 = vand.u32 %v173, 4294901760
    %v2273 = vsub.f32 %v173, %v2272
    %2274 = vmatpush1.msra.mxu0 %v2273
    %v2275 = vand.u32 %v166, 4294901760
    %v2276 = vsub.f32 %v166, %v2275
    %2277 = vmatprep.subr.mxu0 %v2276
    %v2278 = vand.u32 %v165, 4294901760
    %v2279 = vsub.f32 %v165, %v2278
    %2280 = vmatpush1.msra.mxu0 %v2279
    %v2281 = vand.u32 %v158, 4294901760
    %v2282 = vsub.f32 %v158, %v2281
    %2283 = vmatprep.subr.mxu0 %v2282
    %v2284 = vand.u32 %v157, 4294901760
    %v2285 = vsub.f32 %v157, %v2284
    %2286 = vmatpush1.msra.mxu0 %v2285
    %v2287 = vand.u32 %v150, 4294901760
    %v2288 = vsub.f32 %v150, %v2287
    %2289 = vmatprep.subr.mxu0 %v2288
    %v2290 = vand.u32 %v149, 4294901760
    %v2291 = vsub.f32 %v149, %v2290
    %2292 = vmatpush1.msra.mxu0 %v2291
    %v2293 = vand.u32 %v142, 4294901760
    %v2294 = vsub.f32 %v142, %v2293
    %2295 = vmatprep.subr.mxu0 %v2294
    %v2296 = vand.u32 %v141, 4294901760
    %v2297 = vsub.f32 %v141, %v2296
    %2298 = vmatpush1.msra.mxu0 %v2297
    %v2299 = vand.u32 %v134, 4294901760
    %v2300 = vsub.f32 %v134, %v2299
    %2301 = vmatprep.subr.mxu0 %v2300
    %v2302 = vand.u32 %v133, 4294901760
    %v2303 = vsub.f32 %v133, %v2302
    %2304 = vmatpush1.msra.mxu0 %v2303
    %v2305 = vand.u32 %v126, 4294901760
    %v2306 = vsub.f32 %v126, %v2305
    %2307 = vmatprep.subr.mxu0 %v2306
    %v2308 = vand.u32 %v125, 4294901760
    %v2309 = vsub.f32 %v125, %v2308
    %2310 = vmatpush1.msra.mxu0 %v2309
    %v2311 = vand.u32 %v118, 4294901760
    %v2312 = vsub.f32 %v118, %v2311
    %2313 = vmatprep.subr.mxu0 %v2312
    %v2314 = vand.u32 %v117, 4294901760
    %v2315 = vsub.f32 %v117, %v2314
    %2316 = vmatpush1.msra.mxu0 %v2315
    %v2317 = vand.u32 %v110, 4294901760
    %v2318 = vsub.f32 %v110, %v2317
    %2319 = vmatprep.subr.mxu0 %v2318
    %v2320 = vand.u32 %v109, 4294901760
    %v2321 = vsub.f32 %v109, %v2320
    %2322 = vmatpush1.msra.mxu0 %v2321
    %v2323 = vand.u32 %v102, 4294901760
    %v2324 = vsub.f32 %v102, %v2323
    %2325 = vmatprep.subr.mxu0 %v2324
    %v2326 = vand.u32 %v101, 4294901760
    %v2327 = vsub.f32 %v101, %v2326
    %2328 = vmatpush1.msra.mxu0 %v2327
    %v2329 = vand.u32 %v94, 4294901760
    %v2330 = vsub.f32 %v94, %v2329
    %2331 = vmatprep.subr.mxu0 %v2330
    %v2332 = vand.u32 %v93, 4294901760
    %v2333 = vsub.f32 %v93, %v2332
    %2334 = vmatpush1.msra.mxu0 %v2333
    %v2335 = vand.u32 %v86, 4294901760
    %v2336 = vsub.f32 %v86, %v2335
    %2337 = vmatprep.subr.mxu0 %v2336
    %v2338 = vand.u32 %v85, 4294901760
    %v2339 = vsub.f32 %v85, %v2338
    %2340 = vmatpush1.msra.mxu0 %v2339
    %v2341 = vand.u32 %v78, 4294901760
    %v2342 = vsub.f32 %v78, %v2341
    %2343 = vmatprep.subr.mxu0 %v2342
    %v2344 = vand.u32 %v77, 4294901760
    %v2345 = vsub.f32 %v77, %v2344
    %2346 = vmatpush1.msra.mxu0 %v2345
    %v2347 = vand.u32 %v70, 4294901760
    %v2348 = vsub.f32 %v70, %v2347
    %2349 = vmatprep.subr.mxu0 %v2348
    %v2350 = vand.u32 %v69, 4294901760
    %v2351 = vsub.f32 %v69, %v2350
    %2352 = vmatpush1.msra.mxu0 %v2351
    %v2353 = vand.u32 %v62, 4294901760
    %v2354 = vsub.f32 %v62, %v2353
    %2355 = vmatprep.subr.mxu0 %v2354
    %v2356 = vand.u32 %v61, 4294901760
    %v2357 = vsub.f32 %v61, %v2356
    %2358 = vmatpush1.msra.mxu0 %v2357
    %v2359 = vand.u32 %v54, 4294901760
    %v2360 = vsub.f32 %v54, %v2359
    %2361 = vmatprep.subr.mxu0 %v2360
    %v2362 = vand.u32 %v53, 4294901760
    %v2363 = vsub.f32 %v53, %v2362
    %2364 = vmatpush1.msra.mxu0 %v2363
    %2365 = vmatprep.subr.mxu0 0.0
    %2366 = vmatpush2.msra.mxu0 0.0
    %2367 = vmatprep.subr.mxu0 0.0
    %2368 = vmatpush2.msra.mxu0 0.0
    %2369 = vmatprep.subr.mxu0 0.0
    %2370 = vmatpush2.msra.mxu0 0.0
    %2371 = vmatprep.subr.mxu0 0.0
    %2372 = vmatpush2.msra.mxu0 0.0
    %2373 = vmatprep.subr.mxu0 0.0
    %2374 = vmatpush2.msra.mxu0 0.0
    %2375 = vmatprep.subr.mxu0 0.0
    %2376 = vmatpush2.msra.mxu0 0.0
    %2377 = vmatprep.subr.mxu0 0.0
    %2378 = vmatpush2.msra.mxu0 0.0
    %2379 = vmatprep.subr.mxu0 0.0
    %2380 = vmatpush2.msra.mxu0 0.0
    %2381 = vmatprep.subr.mxu0 0.0
    %2382 = vmatpush2.msra.mxu0 0.0
    %2383 = vmatprep.subr.mxu0 0.0
    %2384 = vmatpush2.msra.mxu0 0.0
    %2385 = vmatprep.subr.mxu0 0.0
    %2386 = vmatpush2.msra.mxu0 0.0
    %2387 = vmatprep.subr.mxu0 0.0
    %2388 = vmatpush2.msra.mxu0 0.0
    %2389 = vmatprep.subr.mxu0 0.0
    %2390 = vmatpush2.msra.mxu0 0.0
    %2391 = vmatprep.subr.mxu0 0.0
    %2392 = vmatpush2.msra.mxu0 0.0
    %2393 = vmatprep.subr.mxu0 0.0
    %2394 = vmatpush2.msra.mxu0 0.0
    %2395 = vmatprep.subr.mxu0 0.0
    %2396 = vmatpush2.msra.mxu0 0.0
    %2397 = vmatprep.mubr.f32.mxu0 0.0
    %v2398 = vand.u32 %v48, 4294901760
    %v2399 = vsub.f32 %v48, %v2398
    %2400 = vmatmul.mubr.f32.gmra.mxu0 %v2399
    %v2401 = vpop.f32.mrf.mxu0
    %v2402 = vadd.f32 %v2265, %v2401
    %v2403 = vpop.f32.mrf.mxu0
    %v2404 = vadd.f32 %v2267, %v2403
    %2405 = vdwg.mxu0
    %v2406 = vand.u32 %v174, 4294901760
    %2407 = vmatprep.subr.mxu0 %v2406
    %v2408 = vand.u32 %v173, 4294901760
    %2409 = vmatpush1.msra.mxu0 %v2408
    %v2410 = vand.u32 %v166, 4294901760
    %2411 = vmatprep.subr.mxu0 %v2410
    %v2412 = vand.u32 %v165, 4294901760
    %2413 = vmatpush1.msra.mxu0 %v2412
    %v2414 = vand.u32 %v158, 4294901760
    %2415 = vmatprep.subr.mxu0 %v2414
    %v2416 = vand.u32 %v157, 4294901760
    %2417 = vmatpush1.msra.mxu0 %v2416
    %v2418 = vand.u32 %v150, 4294901760
    %2419 = vmatprep.subr.mxu0 %v2418
    %v2420 = vand.u32 %v149, 4294901760
    %2421 = vmatpush1.msra.mxu0 %v2420
    %v2422 = vand.u32 %v142, 4294901760
    %2423 = vmatprep.subr.mxu0 %v2422
    %v2424 = vand.u32 %v141, 4294901760
    %2425 = vmatpush1.msra.mxu0 %v2424
    %v2426 = vand.u32 %v134, 4294901760
    %2427 = vmatprep.subr.mxu0 %v2426
    %v2428 = vand.u32 %v133, 4294901760
    %2429 = vmatpush1.msra.mxu0 %v2428
    %v2430 = vand.u32 %v126, 4294901760
    %2431 = vmatprep.subr.mxu0 %v2430
    %v2432 = vand.u32 %v125, 4294901760
    %2433 = vmatpush1.msra.mxu0 %v2432
    %v2434 = vand.u32 %v118, 4294901760
    %2435 = vmatprep.subr.mxu0 %v2434
    %v2436 = vand.u32 %v117, 4294901760
    %2437 = vmatpush1.msra.mxu0 %v2436
    %v2438 = vand.u32 %v110, 4294901760
    %2439 = vmatprep.subr.mxu0 %v2438
    %v2440 = vand.u32 %v109, 4294901760
    %2441 = vmatpush1.msra.mxu0 %v2440
    %v2442 = vand.u32 %v102, 4294901760
    %2443 = vmatprep.subr.mxu0 %v2442
    %v2444 = vand.u32 %v101, 4294901760
    %2445 = vmatpush1.msra.mxu0 %v2444
    %v2446 = vand.u32 %v94, 4294901760
    %2447 = vmatprep.subr.mxu0 %v2446
    %v2448 = vand.u32 %v93, 4294901760
    %2449 = vmatpush1.msra.mxu0 %v2448
    %v2450 = vand.u32 %v86, 4294901760
    %2451 = vmatprep.subr.mxu0 %v2450
    %v2452 = vand.u32 %v85, 4294901760
    %2453 = vmatpush1.msra.mxu0 %v2452
    %v2454 = vand.u32 %v78, 4294901760
    %2455 = vmatprep.subr.mxu0 %v2454
    %v2456 = vand.u32 %v77, 4294901760
    %2457 = vmatpush1.msra.mxu0 %v2456
    %v2458 = vand.u32 %v70, 4294901760
    %2459 = vmatprep.subr.mxu0 %v2458
    %v2460 = vand.u32 %v69, 4294901760
    %2461 = vmatpush1.msra.mxu0 %v2460
    %v2462 = vand.u32 %v62, 4294901760
    %2463 = vmatprep.subr.mxu0 %v2462
    %v2464 = vand.u32 %v61, 4294901760
    %2465 = vmatpush1.msra.mxu0 %v2464
    %v2466 = vand.u32 %v54, 4294901760
    %2467 = vmatprep.subr.mxu0 %v2466
    %v2468 = vand.u32 %v53, 4294901760
    %2469 = vmatpush1.msra.mxu0 %v2468
    %2470 = vmatprep.subr.mxu0 0.0
    %2471 = vmatpush2.msra.mxu0 0.0
    %2472 = vmatprep.subr.mxu0 0.0
    %2473 = vmatpush2.msra.mxu0 0.0
    %2474 = vmatprep.subr.mxu0 0.0
    %2475 = vmatpush2.msra.mxu0 0.0
    %2476 = vmatprep.subr.mxu0 0.0
    %2477 = vmatpush2.msra.mxu0 0.0
    %2478 = vmatprep.subr.mxu0 0.0
    %2479 = vmatpush2.msra.mxu0 0.0
    %2480 = vmatprep.subr.mxu0 0.0
    %2481 = vmatpush2.msra.mxu0 0.0
    %2482 = vmatprep.subr.mxu0 0.0
    %2483 = vmatpush2.msra.mxu0 0.0
    %2484 = vmatprep.subr.mxu0 0.0
    %2485 = vmatpush2.msra.mxu0 0.0
    %2486 = vmatprep.subr.mxu0 0.0
    %2487 = vmatpush2.msra.mxu0 0.0
    %2488 = vmatprep.subr.mxu0 0.0
    %2489 = vmatpush2.msra.mxu0 0.0
    %2490 = vmatprep.subr.mxu0 0.0
    %2491 = vmatpush2.msra.mxu0 0.0
    %2492 = vmatprep.subr.mxu0 0.0
    %2493 = vmatpush2.msra.mxu0 0.0
    %2494 = vmatprep.subr.mxu0 0.0
    %2495 = vmatpush2.msra.mxu0 0.0
    %2496 = vmatprep.subr.mxu0 0.0
    %2497 = vmatpush2.msra.mxu0 0.0
    %2498 = vmatprep.subr.mxu0 0.0
    %2499 = vmatpush2.msra.mxu0 0.0
    %2500 = vmatprep.subr.mxu0 0.0
    %2501 = vmatpush2.msra.mxu0 0.0
    %2502 = vmatprep.mubr.f32.mxu0 0.0
    %v2503 = vand.u32 %v48, 4294901760
    %v2504 = vsub.f32 %v48, %v2503
    %v2505 = vand.u32 %v2504, 4294901760
    %2506 = vmatmul.mubr.f32.gmra.mxu0 %v2505
    %v2507 = vpop.f32.mrf.mxu0
    %v2508 = vadd.f32 %v2402, %v2507
    %v2509 = vpop.f32.mrf.mxu0
    %v2510 = vadd.f32 %v2404, %v2509
    %2511 = vdwg.mxu0
    %v2512 = vand.u32 %v174, 4294901760
    %v2513 = vsub.f32 %v174, %v2512
    %v2514 = vand.u32 %v2513, 4294901760
    %2515 = vmatprep.subr.mxu0 %v2514
    %v2516 = vand.u32 %v173, 4294901760
    %v2517 = vsub.f32 %v173, %v2516
    %v2518 = vand.u32 %v2517, 4294901760
    %2519 = vmatpush1.msra.mxu0 %v2518
    %v2520 = vand.u32 %v166, 4294901760
    %v2521 = vsub.f32 %v166, %v2520
    %v2522 = vand.u32 %v2521, 4294901760
    %2523 = vmatprep.subr.mxu0 %v2522
    %v2524 = vand.u32 %v165, 4294901760
    %v2525 = vsub.f32 %v165, %v2524
    %v2526 = vand.u32 %v2525, 4294901760
    %2527 = vmatpush1.msra.mxu0 %v2526
    %v2528 = vand.u32 %v158, 4294901760
    %v2529 = vsub.f32 %v158, %v2528
    %v2530 = vand.u32 %v2529, 4294901760
    %2531 = vmatprep.subr.mxu0 %v2530
    %v2532 = vand.u32 %v157, 4294901760
    %v2533 = vsub.f32 %v157, %v2532
    %v2534 = vand.u32 %v2533, 4294901760
    %2535 = vmatpush1.msra.mxu0 %v2534
    %v2536 = vand.u32 %v150, 4294901760
    %v2537 = vsub.f32 %v150, %v2536
    %v2538 = vand.u32 %v2537, 4294901760
    %2539 = vmatprep.subr.mxu0 %v2538
    %v2540 = vand.u32 %v149, 4294901760
    %v2541 = vsub.f32 %v149, %v2540
    %v2542 = vand.u32 %v2541, 4294901760
    %2543 = vmatpush1.msra.mxu0 %v2542
    %v2544 = vand.u32 %v142, 4294901760
    %v2545 = vsub.f32 %v142, %v2544
    %v2546 = vand.u32 %v2545, 4294901760
    %2547 = vmatprep.subr.mxu0 %v2546
    %v2548 = vand.u32 %v141, 4294901760
    %v2549 = vsub.f32 %v141, %v2548
    %v2550 = vand.u32 %v2549, 4294901760
    %2551 = vmatpush1.msra.mxu0 %v2550
    %v2552 = vand.u32 %v134, 4294901760
    %v2553 = vsub.f32 %v134, %v2552
    %v2554 = vand.u32 %v2553, 4294901760
    %2555 = vmatprep.subr.mxu0 %v2554
    %v2556 = vand.u32 %v133, 4294901760
    %v2557 = vsub.f32 %v133, %v2556
    %v2558 = vand.u32 %v2557, 4294901760
    %2559 = vmatpush1.msra.mxu0 %v2558
    %v2560 = vand.u32 %v126, 4294901760
    %v2561 = vsub.f32 %v126, %v2560
    %v2562 = vand.u32 %v2561, 4294901760
    %2563 = vmatprep.subr.mxu0 %v2562
    %v2564 = vand.u32 %v125, 4294901760
    %v2565 = vsub.f32 %v125, %v2564
    %v2566 = vand.u32 %v2565, 4294901760
    %2567 = vmatpush1.msra.mxu0 %v2566
    %v2568 = vand.u32 %v118, 4294901760
    %v2569 = vsub.f32 %v118, %v2568
    %v2570 = vand.u32 %v2569, 4294901760
    %2571 = vmatprep.subr.mxu0 %v2570
    %v2572 = vand.u32 %v117, 4294901760
    %v2573 = vsub.f32 %v117, %v2572
    %v2574 = vand.u32 %v2573, 4294901760
    %2575 = vmatpush1.msra.mxu0 %v2574
    %v2576 = vand.u32 %v110, 4294901760
    %v2577 = vsub.f32 %v110, %v2576
    %v2578 = vand.u32 %v2577, 4294901760
    %2579 = vmatprep.subr.mxu0 %v2578
    %v2580 = vand.u32 %v109, 4294901760
    %v2581 = vsub.f32 %v109, %v2580
    %v2582 = vand.u32 %v2581, 4294901760
    %2583 = vmatpush1.msra.mxu0 %v2582
    %v2584 = vand.u32 %v102, 4294901760
    %v2585 = vsub.f32 %v102, %v2584
    %v2586 = vand.u32 %v2585, 4294901760
    %2587 = vmatprep.subr.mxu0 %v2586
    %v2588 = vand.u32 %v101, 4294901760
    %v2589 = vsub.f32 %v101, %v2588
    %v2590 = vand.u32 %v2589, 4294901760
    %2591 = vmatpush1.msra.mxu0 %v2590
    %v2592 = vand.u32 %v94, 4294901760
    %v2593 = vsub.f32 %v94, %v2592
    %v2594 = vand.u32 %v2593, 4294901760
    %2595 = vmatprep.subr.mxu0 %v2594
    %v2596 = vand.u32 %v93, 4294901760
    %v2597 = vsub.f32 %v93, %v2596
    %v2598 = vand.u32 %v2597, 4294901760
    %2599 = vmatpush1.msra.mxu0 %v2598
    %v2600 = vand.u32 %v86, 4294901760
    %v2601 = vsub.f32 %v86, %v2600
    %v2602 = vand.u32 %v2601, 4294901760
    %2603 = vmatprep.subr.mxu0 %v2602
    %v2604 = vand.u32 %v85, 4294901760
    %v2605 = vsub.f32 %v85, %v2604
    %v2606 = vand.u32 %v2605, 4294901760
    %2607 = vmatpush1.msra.mxu0 %v2606
    %v2608 = vand.u32 %v78, 4294901760
    %v2609 = vsub.f32 %v78, %v2608
    %v2610 = vand.u32 %v2609, 4294901760
    %2611 = vmatprep.subr.mxu0 %v2610
    %v2612 = vand.u32 %v77, 4294901760
    %v2613 = vsub.f32 %v77, %v2612
    %v2614 = vand.u32 %v2613, 4294901760
    %2615 = vmatpush1.msra.mxu0 %v2614
    %v2616 = vand.u32 %v70, 4294901760
    %v2617 = vsub.f32 %v70, %v2616
    %v2618 = vand.u32 %v2617, 4294901760
    %2619 = vmatprep.subr.mxu0 %v2618
    %v2620 = vand.u32 %v69, 4294901760
    %v2621 = vsub.f32 %v69, %v2620
    %v2622 = vand.u32 %v2621, 4294901760
    %2623 = vmatpush1.msra.mxu0 %v2622
    %v2624 = vand.u32 %v62, 4294901760
    %v2625 = vsub.f32 %v62, %v2624
    %v2626 = vand.u32 %v2625, 4294901760
    %2627 = vmatprep.subr.mxu0 %v2626
    %v2628 = vand.u32 %v61, 4294901760
    %v2629 = vsub.f32 %v61, %v2628
    %v2630 = vand.u32 %v2629, 4294901760
    %2631 = vmatpush1.msra.mxu0 %v2630
    %v2632 = vand.u32 %v54, 4294901760
    %v2633 = vsub.f32 %v54, %v2632
    %v2634 = vand.u32 %v2633, 4294901760
    %2635 = vmatprep.subr.mxu0 %v2634
    %v2636 = vand.u32 %v53, 4294901760
    %v2637 = vsub.f32 %v53, %v2636
    %v2638 = vand.u32 %v2637, 4294901760
    %2639 = vmatpush1.msra.mxu0 %v2638
    %2640 = vmatprep.subr.mxu0 0.0
    %2641 = vmatpush2.msra.mxu0 0.0
    %2642 = vmatprep.subr.mxu0 0.0
    %2643 = vmatpush2.msra.mxu0 0.0
    %2644 = vmatprep.subr.mxu0 0.0
    %2645 = vmatpush2.msra.mxu0 0.0
    %2646 = vmatprep.subr.mxu0 0.0
    %2647 = vmatpush2.msra.mxu0 0.0
    %2648 = vmatprep.subr.mxu0 0.0
    %2649 = vmatpush2.msra.mxu0 0.0
    %2650 = vmatprep.subr.mxu0 0.0
    %2651 = vmatpush2.msra.mxu0 0.0
    %2652 = vmatprep.subr.mxu0 0.0
    %2653 = vmatpush2.msra.mxu0 0.0
    %2654 = vmatprep.subr.mxu0 0.0
    %2655 = vmatpush2.msra.mxu0 0.0
    %2656 = vmatprep.subr.mxu0 0.0
    %2657 = vmatpush2.msra.mxu0 0.0
    %2658 = vmatprep.subr.mxu0 0.0
    %2659 = vmatpush2.msra.mxu0 0.0
    %2660 = vmatprep.subr.mxu0 0.0
    %2661 = vmatpush2.msra.mxu0 0.0
    %2662 = vmatprep.subr.mxu0 0.0
    %2663 = vmatpush2.msra.mxu0 0.0
    %2664 = vmatprep.subr.mxu0 0.0
    %2665 = vmatpush2.msra.mxu0 0.0
    %2666 = vmatprep.subr.mxu0 0.0
    %2667 = vmatpush2.msra.mxu0 0.0
    %2668 = vmatprep.subr.mxu0 0.0
    %2669 = vmatpush2.msra.mxu0 0.0
    %2670 = vmatprep.subr.mxu0 0.0
    %2671 = vmatpush2.msra.mxu0 0.0
    %2672 = vmatprep.mubr.f32.mxu0 0.0
    %v2673 = vand.u32 %v48, 4294901760
    %2674 = vmatmul.mubr.f32.gmra.mxu0 %v2673
    %v2675 = vpop.f32.mrf.mxu0
    %v2676 = vadd.f32 %v2508, %v2675
    %v2677 = vpop.f32.mrf.mxu0
    %v2678 = vadd.f32 %v2510, %v2677
    %2679 = vdwg.mxu0
    %v2680 = vand.u32 %v174, 4294901760
    %2681 = vmatprep.subr.mxu0 %v2680
    %v2682 = vand.u32 %v173, 4294901760
    %2683 = vmatpush1.msra.mxu0 %v2682
    %v2684 = vand.u32 %v166, 4294901760
    %2685 = vmatprep.subr.mxu0 %v2684
    %v2686 = vand.u32 %v165, 4294901760
    %2687 = vmatpush1.msra.mxu0 %v2686
    %v2688 = vand.u32 %v158, 4294901760
    %2689 = vmatprep.subr.mxu0 %v2688
    %v2690 = vand.u32 %v157, 4294901760
    %2691 = vmatpush1.msra.mxu0 %v2690
    %v2692 = vand.u32 %v150, 4294901760
    %2693 = vmatprep.subr.mxu0 %v2692
    %v2694 = vand.u32 %v149, 4294901760
    %2695 = vmatpush1.msra.mxu0 %v2694
    %v2696 = vand.u32 %v142, 4294901760
    %2697 = vmatprep.subr.mxu0 %v2696
    %v2698 = vand.u32 %v141, 4294901760
    %2699 = vmatpush1.msra.mxu0 %v2698
    %v2700 = vand.u32 %v134, 4294901760
    %2701 = vmatprep.subr.mxu0 %v2700
    %v2702 = vand.u32 %v133, 4294901760
    %2703 = vmatpush1.msra.mxu0 %v2702
    %v2704 = vand.u32 %v126, 4294901760
    %2705 = vmatprep.subr.mxu0 %v2704
    %v2706 = vand.u32 %v125, 4294901760
    %2707 = vmatpush1.msra.mxu0 %v2706
    %v2708 = vand.u32 %v118, 4294901760
    %2709 = vmatprep.subr.mxu0 %v2708
    %v2710 = vand.u32 %v117, 4294901760
    %2711 = vmatpush1.msra.mxu0 %v2710
    %v2712 = vand.u32 %v110, 4294901760
    %2713 = vmatprep.subr.mxu0 %v2712
    %v2714 = vand.u32 %v109, 4294901760
    %2715 = vmatpush1.msra.mxu0 %v2714
    %v2716 = vand.u32 %v102, 4294901760
    %2717 = vmatprep.subr.mxu0 %v2716
    %v2718 = vand.u32 %v101, 4294901760
    %2719 = vmatpush1.msra.mxu0 %v2718
    %v2720 = vand.u32 %v94, 4294901760
    %2721 = vmatprep.subr.mxu0 %v2720
    %v2722 = vand.u32 %v93, 4294901760
    %2723 = vmatpush1.msra.mxu0 %v2722
    %v2724 = vand.u32 %v86, 4294901760
    %2725 = vmatprep.subr.mxu0 %v2724
    %v2726 = vand.u32 %v85, 4294901760
    %2727 = vmatpush1.msra.mxu0 %v2726
    %v2728 = vand.u32 %v78, 4294901760
    %2729 = vmatprep.subr.mxu0 %v2728
    %v2730 = vand.u32 %v77, 4294901760
    %2731 = vmatpush1.msra.mxu0 %v2730
    %v2732 = vand.u32 %v70, 4294901760
    %2733 = vmatprep.subr.mxu0 %v2732
    %v2734 = vand.u32 %v69, 4294901760
    %2735 = vmatpush1.msra.mxu0 %v2734
    %v2736 = vand.u32 %v62, 4294901760
    %2737 = vmatprep.subr.mxu0 %v2736
    %v2738 = vand.u32 %v61, 4294901760
    %2739 = vmatpush1.msra.mxu0 %v2738
    %v2740 = vand.u32 %v54, 4294901760
    %2741 = vmatprep.subr.mxu0 %v2740
    %v2742 = vand.u32 %v53, 4294901760
    %2743 = vmatpush1.msra.mxu0 %v2742
    %2744 = vmatprep.subr.mxu0 0.0
    %2745 = vmatpush2.msra.mxu0 0.0
    %2746 = vmatprep.subr.mxu0 0.0
    %2747 = vmatpush2.msra.mxu0 0.0
    %2748 = vmatprep.subr.mxu0 0.0
    %2749 = vmatpush2.msra.mxu0 0.0
    %2750 = vmatprep.subr.mxu0 0.0
    %2751 = vmatpush2.msra.mxu0 0.0
    %2752 = vmatprep.subr.mxu0 0.0
    %2753 = vmatpush2.msra.mxu0 0.0
    %2754 = vmatprep.subr.mxu0 0.0
    %2755 = vmatpush2.msra.mxu0 0.0
    %2756 = vmatprep.subr.mxu0 0.0
    %2757 = vmatpush2.msra.mxu0 0.0
    %2758 = vmatprep.subr.mxu0 0.0
    %2759 = vmatpush2.msra.mxu0 0.0
    %2760 = vmatprep.subr.mxu0 0.0
    %2761 = vmatpush2.msra.mxu0 0.0
    %2762 = vmatprep.subr.mxu0 0.0
    %2763 = vmatpush2.msra.mxu0 0.0
    %2764 = vmatprep.subr.mxu0 0.0
    %2765 = vmatpush2.msra.mxu0 0.0
    %2766 = vmatprep.subr.mxu0 0.0
    %2767 = vmatpush2.msra.mxu0 0.0
    %2768 = vmatprep.subr.mxu0 0.0
    %2769 = vmatpush2.msra.mxu0 0.0
    %2770 = vmatprep.subr.mxu0 0.0
    %2771 = vmatpush2.msra.mxu0 0.0
    %2772 = vmatprep.subr.mxu0 0.0
    %2773 = vmatpush2.msra.mxu0 0.0
    %2774 = vmatprep.subr.mxu0 0.0
    %2775 = vmatpush2.msra.mxu0 0.0
    %2776 = vmatprep.mubr.f32.mxu0 0.0
    %v2777 = vand.u32 %v48, 4294901760
    %2778 = vmatmul.mubr.f32.gmra.mxu0 %v2777
    %v2779 = vpop.f32.mrf.mxu0
    %v2780 = vadd.f32 %v2676, %v2779
    %v2781 = vpop.f32.mrf.mxu0
    %v2782 = vadd.f32 %v2678, %v2781
    %2783 = vdwg.mxu0
    %v2784 = vand.u32 %v176, 4294901760
    %2785 = vmatprep.subr.mxu0 %v2784
    %v2786 = vand.u32 %v175, 4294901760
    %2787 = vmatpush1.msra.mxu0 %v2786
    %v2788 = vand.u32 %v168, 4294901760
    %2789 = vmatprep.subr.mxu0 %v2788
    %v2790 = vand.u32 %v167, 4294901760
    %2791 = vmatpush1.msra.mxu0 %v2790
    %v2792 = vand.u32 %v160, 4294901760
    %2793 = vmatprep.subr.mxu0 %v2792
    %v2794 = vand.u32 %v159, 4294901760
    %2795 = vmatpush1.msra.mxu0 %v2794
    %v2796 = vand.u32 %v152, 4294901760
    %2797 = vmatprep.subr.mxu0 %v2796
    %v2798 = vand.u32 %v151, 4294901760
    %2799 = vmatpush1.msra.mxu0 %v2798
    %v2800 = vand.u32 %v144, 4294901760
    %2801 = vmatprep.subr.mxu0 %v2800
    %v2802 = vand.u32 %v143, 4294901760
    %2803 = vmatpush1.msra.mxu0 %v2802
    %v2804 = vand.u32 %v136, 4294901760
    %2805 = vmatprep.subr.mxu0 %v2804
    %v2806 = vand.u32 %v135, 4294901760
    %2807 = vmatpush1.msra.mxu0 %v2806
    %v2808 = vand.u32 %v128, 4294901760
    %2809 = vmatprep.subr.mxu0 %v2808
    %v2810 = vand.u32 %v127, 4294901760
    %2811 = vmatpush1.msra.mxu0 %v2810
    %v2812 = vand.u32 %v120, 4294901760
    %2813 = vmatprep.subr.mxu0 %v2812
    %v2814 = vand.u32 %v119, 4294901760
    %2815 = vmatpush1.msra.mxu0 %v2814
    %v2816 = vand.u32 %v112, 4294901760
    %2817 = vmatprep.subr.mxu0 %v2816
    %v2818 = vand.u32 %v111, 4294901760
    %2819 = vmatpush1.msra.mxu0 %v2818
    %v2820 = vand.u32 %v104, 4294901760
    %2821 = vmatprep.subr.mxu0 %v2820
    %v2822 = vand.u32 %v103, 4294901760
    %2823 = vmatpush1.msra.mxu0 %v2822
    %v2824 = vand.u32 %v96, 4294901760
    %2825 = vmatprep.subr.mxu0 %v2824
    %v2826 = vand.u32 %v95, 4294901760
    %2827 = vmatpush1.msra.mxu0 %v2826
    %v2828 = vand.u32 %v88, 4294901760
    %2829 = vmatprep.subr.mxu0 %v2828
    %v2830 = vand.u32 %v87, 4294901760
    %2831 = vmatpush1.msra.mxu0 %v2830
    %v2832 = vand.u32 %v80, 4294901760
    %2833 = vmatprep.subr.mxu0 %v2832
    %v2834 = vand.u32 %v79, 4294901760
    %2835 = vmatpush1.msra.mxu0 %v2834
    %v2836 = vand.u32 %v72, 4294901760
    %2837 = vmatprep.subr.mxu0 %v2836
    %v2838 = vand.u32 %v71, 4294901760
    %2839 = vmatpush1.msra.mxu0 %v2838
    %v2840 = vand.u32 %v64, 4294901760
    %2841 = vmatprep.subr.mxu0 %v2840
    %v2842 = vand.u32 %v63, 4294901760
    %2843 = vmatpush1.msra.mxu0 %v2842
    %v2844 = vand.u32 %v56, 4294901760
    %2845 = vmatprep.subr.mxu0 %v2844
    %v2846 = vand.u32 %v55, 4294901760
    %2847 = vmatpush1.msra.mxu0 %v2846
    %2848 = vmatprep.subr.mxu0 0.0
    %2849 = vmatpush2.msra.mxu0 0.0
    %2850 = vmatprep.subr.mxu0 0.0
    %2851 = vmatpush2.msra.mxu0 0.0
    %2852 = vmatprep.subr.mxu0 0.0
    %2853 = vmatpush2.msra.mxu0 0.0
    %2854 = vmatprep.subr.mxu0 0.0
    %2855 = vmatpush2.msra.mxu0 0.0
    %2856 = vmatprep.subr.mxu0 0.0
    %2857 = vmatpush2.msra.mxu0 0.0
    %2858 = vmatprep.subr.mxu0 0.0
    %2859 = vmatpush2.msra.mxu0 0.0
    %2860 = vmatprep.subr.mxu0 0.0
    %2861 = vmatpush2.msra.mxu0 0.0
    %2862 = vmatprep.subr.mxu0 0.0
    %2863 = vmatpush2.msra.mxu0 0.0
    %2864 = vmatprep.subr.mxu0 0.0
    %2865 = vmatpush2.msra.mxu0 0.0
    %2866 = vmatprep.subr.mxu0 0.0
    %2867 = vmatpush2.msra.mxu0 0.0
    %2868 = vmatprep.subr.mxu0 0.0
    %2869 = vmatpush2.msra.mxu0 0.0
    %2870 = vmatprep.subr.mxu0 0.0
    %2871 = vmatpush2.msra.mxu0 0.0
    %2872 = vmatprep.subr.mxu0 0.0
    %2873 = vmatpush2.msra.mxu0 0.0
    %2874 = vmatprep.subr.mxu0 0.0
    %2875 = vmatpush2.msra.mxu0 0.0
    %2876 = vmatprep.subr.mxu0 0.0
    %2877 = vmatpush2.msra.mxu0 0.0
    %2878 = vmatprep.subr.mxu0 0.0
    %2879 = vmatpush2.msra.mxu0 0.0
    %2880 = vmatprep.mubr.f32.mxu0 0.0
    %v2881 = vand.u32 %v48, 4294901760
    %v2882 = vsub.f32 %v48, %v2881
    %v2883 = vand.u32 %v2882, 4294901760
    %v2884 = vsub.f32 %v2882, %v2883
    %v2885 = vand.u32 %v2884, 4294901760
    %2886 = vmatmul.mubr.f32.gmra.mxu0 %v2885
    %v2887 = vpop.f32.mrf.mxu0
    %v2888 = vadd.f32 %v206, %v2887
    %v2889 = vpop.f32.mrf.mxu0
    %v2890 = vadd.f32 %v210, %v2889
    %2891 = vdwg.mxu0
    %v2892 = vand.u32 %v176, 4294901760
    %v2893 = vsub.f32 %v176, %v2892
    %v2894 = vand.u32 %v2893, 4294901760
    %v2895 = vsub.f32 %v2893, %v2894
    %v2896 = vand.u32 %v2895, 4294901760
    %2897 = vmatprep.subr.mxu0 %v2896
    %v2898 = vand.u32 %v175, 4294901760
    %v2899 = vsub.f32 %v175, %v2898
    %v2900 = vand.u32 %v2899, 4294901760
    %v2901 = vsub.f32 %v2899, %v2900
    %v2902 = vand.u32 %v2901, 4294901760
    %2903 = vmatpush1.msra.mxu0 %v2902
    %v2904 = vand.u32 %v168, 4294901760
    %v2905 = vsub.f32 %v168, %v2904
    %v2906 = vand.u32 %v2905, 4294901760
    %v2907 = vsub.f32 %v2905, %v2906
    %v2908 = vand.u32 %v2907, 4294901760
    %2909 = vmatprep.subr.mxu0 %v2908
    %v2910 = vand.u32 %v167, 4294901760
    %v2911 = vsub.f32 %v167, %v2910
    %v2912 = vand.u32 %v2911, 4294901760
    %v2913 = vsub.f32 %v2911, %v2912
    %v2914 = vand.u32 %v2913, 4294901760
    %2915 = vmatpush1.msra.mxu0 %v2914
    %v2916 = vand.u32 %v160, 4294901760
    %v2917 = vsub.f32 %v160, %v2916
    %v2918 = vand.u32 %v2917, 4294901760
    %v2919 = vsub.f32 %v2917, %v2918
    %v2920 = vand.u32 %v2919, 4294901760
    %2921 = vmatprep.subr.mxu0 %v2920
    %v2922 = vand.u32 %v159, 4294901760
    %v2923 = vsub.f32 %v159, %v2922
    %v2924 = vand.u32 %v2923, 4294901760
    %v2925 = vsub.f32 %v2923, %v2924
    %v2926 = vand.u32 %v2925, 4294901760
    %2927 = vmatpush1.msra.mxu0 %v2926
    %v2928 = vand.u32 %v152, 4294901760
    %v2929 = vsub.f32 %v152, %v2928
    %v2930 = vand.u32 %v2929, 4294901760
    %v2931 = vsub.f32 %v2929, %v2930
    %v2932 = vand.u32 %v2931, 4294901760
    %2933 = vmatprep.subr.mxu0 %v2932
    %v2934 = vand.u32 %v151, 4294901760
    %v2935 = vsub.f32 %v151, %v2934
    %v2936 = vand.u32 %v2935, 4294901760
    %v2937 = vsub.f32 %v2935, %v2936
    %v2938 = vand.u32 %v2937, 4294901760
    %2939 = vmatpush1.msra.mxu0 %v2938
    %v2940 = vand.u32 %v144, 4294901760
    %v2941 = vsub.f32 %v144, %v2940
    %v2942 = vand.u32 %v2941, 4294901760
    %v2943 = vsub.f32 %v2941, %v2942
    %v2944 = vand.u32 %v2943, 4294901760
    %2945 = vmatprep.subr.mxu0 %v2944
    %v2946 = vand.u32 %v143, 4294901760
    %v2947 = vsub.f32 %v143, %v2946
    %v2948 = vand.u32 %v2947, 4294901760
    %v2949 = vsub.f32 %v2947, %v2948
    %v2950 = vand.u32 %v2949, 4294901760
    %2951 = vmatpush1.msra.mxu0 %v2950
    %v2952 = vand.u32 %v136, 4294901760
    %v2953 = vsub.f32 %v136, %v2952
    %v2954 = vand.u32 %v2953, 4294901760
    %v2955 = vsub.f32 %v2953, %v2954
    %v2956 = vand.u32 %v2955, 4294901760
    %2957 = vmatprep.subr.mxu0 %v2956
    %v2958 = vand.u32 %v135, 4294901760
    %v2959 = vsub.f32 %v135, %v2958
    %v2960 = vand.u32 %v2959, 4294901760
    %v2961 = vsub.f32 %v2959, %v2960
    %v2962 = vand.u32 %v2961, 4294901760
    %2963 = vmatpush1.msra.mxu0 %v2962
    %v2964 = vand.u32 %v128, 4294901760
    %v2965 = vsub.f32 %v128, %v2964
    %v2966 = vand.u32 %v2965, 4294901760
    %v2967 = vsub.f32 %v2965, %v2966
    %v2968 = vand.u32 %v2967, 4294901760
    %2969 = vmatprep.subr.mxu0 %v2968
    %v2970 = vand.u32 %v127, 4294901760
    %v2971 = vsub.f32 %v127, %v2970
    %v2972 = vand.u32 %v2971, 4294901760
    %v2973 = vsub.f32 %v2971, %v2972
    %v2974 = vand.u32 %v2973, 4294901760
    %2975 = vmatpush1.msra.mxu0 %v2974
    %v2976 = vand.u32 %v120, 4294901760
    %v2977 = vsub.f32 %v120, %v2976
    %v2978 = vand.u32 %v2977, 4294901760
    %v2979 = vsub.f32 %v2977, %v2978
    %v2980 = vand.u32 %v2979, 4294901760
    %2981 = vmatprep.subr.mxu0 %v2980
    %v2982 = vand.u32 %v119, 4294901760
    %v2983 = vsub.f32 %v119, %v2982
    %v2984 = vand.u32 %v2983, 4294901760
    %v2985 = vsub.f32 %v2983, %v2984
    %v2986 = vand.u32 %v2985, 4294901760
    %2987 = vmatpush1.msra.mxu0 %v2986
    %v2988 = vand.u32 %v112, 4294901760
    %v2989 = vsub.f32 %v112, %v2988
    %v2990 = vand.u32 %v2989, 4294901760
    %v2991 = vsub.f32 %v2989, %v2990
    %v2992 = vand.u32 %v2991, 4294901760
    %2993 = vmatprep.subr.mxu0 %v2992
    %v2994 = vand.u32 %v111, 4294901760
    %v2995 = vsub.f32 %v111, %v2994
    %v2996 = vand.u32 %v2995, 4294901760
    %v2997 = vsub.f32 %v2995, %v2996
    %v2998 = vand.u32 %v2997, 4294901760
    %2999 = vmatpush1.msra.mxu0 %v2998
    %v3000 = vand.u32 %v104, 4294901760
    %v3001 = vsub.f32 %v104, %v3000
    %v3002 = vand.u32 %v3001, 4294901760
    %v3003 = vsub.f32 %v3001, %v3002
    %v3004 = vand.u32 %v3003, 4294901760
    %3005 = vmatprep.subr.mxu0 %v3004
    %v3006 = vand.u32 %v103, 4294901760
    %v3007 = vsub.f32 %v103, %v3006
    %v3008 = vand.u32 %v3007, 4294901760
    %v3009 = vsub.f32 %v3007, %v3008
    %v3010 = vand.u32 %v3009, 4294901760
    %3011 = vmatpush1.msra.mxu0 %v3010
    %v3012 = vand.u32 %v96, 4294901760
    %v3013 = vsub.f32 %v96, %v3012
    %v3014 = vand.u32 %v3013, 4294901760
    %v3015 = vsub.f32 %v3013, %v3014
    %v3016 = vand.u32 %v3015, 4294901760
    %3017 = vmatprep.subr.mxu0 %v3016
    %v3018 = vand.u32 %v95, 4294901760
    %v3019 = vsub.f32 %v95, %v3018
    %v3020 = vand.u32 %v3019, 4294901760
    %v3021 = vsub.f32 %v3019, %v3020
    %v3022 = vand.u32 %v3021, 4294901760
    %3023 = vmatpush1.msra.mxu0 %v3022
    %v3024 = vand.u32 %v88, 4294901760
    %v3025 = vsub.f32 %v88, %v3024
    %v3026 = vand.u32 %v3025, 4294901760
    %v3027 = vsub.f32 %v3025, %v3026
    %v3028 = vand.u32 %v3027, 4294901760
    %3029 = vmatprep.subr.mxu0 %v3028
    %v3030 = vand.u32 %v87, 4294901760
    %v3031 = vsub.f32 %v87, %v3030
    %v3032 = vand.u32 %v3031, 4294901760
    %v3033 = vsub.f32 %v3031, %v3032
    %v3034 = vand.u32 %v3033, 4294901760
    %3035 = vmatpush1.msra.mxu0 %v3034
    %v3036 = vand.u32 %v80, 4294901760
    %v3037 = vsub.f32 %v80, %v3036
    %v3038 = vand.u32 %v3037, 4294901760
    %v3039 = vsub.f32 %v3037, %v3038
    %v3040 = vand.u32 %v3039, 4294901760
    %3041 = vmatprep.subr.mxu0 %v3040
    %v3042 = vand.u32 %v79, 4294901760
    %v3043 = vsub.f32 %v79, %v3042
    %v3044 = vand.u32 %v3043, 4294901760
    %v3045 = vsub.f32 %v3043, %v3044
    %v3046 = vand.u32 %v3045, 4294901760
    %3047 = vmatpush1.msra.mxu0 %v3046
    %v3048 = vand.u32 %v72, 4294901760
    %v3049 = vsub.f32 %v72, %v3048
    %v3050 = vand.u32 %v3049, 4294901760
    %v3051 = vsub.f32 %v3049, %v3050
    %v3052 = vand.u32 %v3051, 4294901760
    %3053 = vmatprep.subr.mxu0 %v3052
    %v3054 = vand.u32 %v71, 4294901760
    %v3055 = vsub.f32 %v71, %v3054
    %v3056 = vand.u32 %v3055, 4294901760
    %v3057 = vsub.f32 %v3055, %v3056
    %v3058 = vand.u32 %v3057, 4294901760
    %3059 = vmatpush1.msra.mxu0 %v3058
    %v3060 = vand.u32 %v64, 4294901760
    %v3061 = vsub.f32 %v64, %v3060
    %v3062 = vand.u32 %v3061, 4294901760
    %v3063 = vsub.f32 %v3061, %v3062
    %v3064 = vand.u32 %v3063, 4294901760
    %3065 = vmatprep.subr.mxu0 %v3064
    %v3066 = vand.u32 %v63, 4294901760
    %v3067 = vsub.f32 %v63, %v3066
    %v3068 = vand.u32 %v3067, 4294901760
    %v3069 = vsub.f32 %v3067, %v3068
    %v3070 = vand.u32 %v3069, 4294901760
    %3071 = vmatpush1.msra.mxu0 %v3070
    %v3072 = vand.u32 %v56, 4294901760
    %v3073 = vsub.f32 %v56, %v3072
    %v3074 = vand.u32 %v3073, 4294901760
    %v3075 = vsub.f32 %v3073, %v3074
    %v3076 = vand.u32 %v3075, 4294901760
    %3077 = vmatprep.subr.mxu0 %v3076
    %v3078 = vand.u32 %v55, 4294901760
    %v3079 = vsub.f32 %v55, %v3078
    %v3080 = vand.u32 %v3079, 4294901760
    %v3081 = vsub.f32 %v3079, %v3080
    %v3082 = vand.u32 %v3081, 4294901760
    %3083 = vmatpush1.msra.mxu0 %v3082
    %3084 = vmatprep.subr.mxu0 0.0
    %3085 = vmatpush2.msra.mxu0 0.0
    %3086 = vmatprep.subr.mxu0 0.0
    %3087 = vmatpush2.msra.mxu0 0.0
    %3088 = vmatprep.subr.mxu0 0.0
    %3089 = vmatpush2.msra.mxu0 0.0
    %3090 = vmatprep.subr.mxu0 0.0
    %3091 = vmatpush2.msra.mxu0 0.0
    %3092 = vmatprep.subr.mxu0 0.0
    %3093 = vmatpush2.msra.mxu0 0.0
    %3094 = vmatprep.subr.mxu0 0.0
    %3095 = vmatpush2.msra.mxu0 0.0
    %3096 = vmatprep.subr.mxu0 0.0
    %3097 = vmatpush2.msra.mxu0 0.0
    %3098 = vmatprep.subr.mxu0 0.0
    %3099 = vmatpush2.msra.mxu0 0.0
    %3100 = vmatprep.subr.mxu0 0.0
    %3101 = vmatpush2.msra.mxu0 0.0
    %3102 = vmatprep.subr.mxu0 0.0
    %3103 = vmatpush2.msra.mxu0 0.0
    %3104 = vmatprep.subr.mxu0 0.0
    %3105 = vmatpush2.msra.mxu0 0.0
    %3106 = vmatprep.subr.mxu0 0.0
    %3107 = vmatpush2.msra.mxu0 0.0
    %3108 = vmatprep.subr.mxu0 0.0
    %3109 = vmatpush2.msra.mxu0 0.0
    %3110 = vmatprep.subr.mxu0 0.0
    %3111 = vmatpush2.msra.mxu0 0.0
    %3112 = vmatprep.subr.mxu0 0.0
    %3113 = vmatpush2.msra.mxu0 0.0
    %3114 = vmatprep.subr.mxu0 0.0
    %3115 = vmatpush2.msra.mxu0 0.0
    %3116 = vmatprep.mubr.f32.mxu0 0.0
    %v3117 = vand.u32 %v48, 4294901760
    %3118 = vmatmul.mubr.f32.gmra.mxu0 %v3117
    %v3119 = vpop.f32.mrf.mxu0
    %v3120 = vadd.f32 %v2888, %v3119
    %v3121 = vpop.f32.mrf.mxu0
    %v3122 = vadd.f32 %v2890, %v3121
    %3123 = vdwg.mxu0
    %v3124 = vand.u32 %v176, 4294901760
    %v3125 = vsub.f32 %v176, %v3124
    %3126 = vmatprep.subr.mxu0 %v3125
    %v3127 = vand.u32 %v175, 4294901760
    %v3128 = vsub.f32 %v175, %v3127
    %3129 = vmatpush1.msra.mxu0 %v3128
    %v3130 = vand.u32 %v168, 4294901760
    %v3131 = vsub.f32 %v168, %v3130
    %3132 = vmatprep.subr.mxu0 %v3131
    %v3133 = vand.u32 %v167, 4294901760
    %v3134 = vsub.f32 %v167, %v3133
    %3135 = vmatpush1.msra.mxu0 %v3134
    %v3136 = vand.u32 %v160, 4294901760
    %v3137 = vsub.f32 %v160, %v3136
    %3138 = vmatprep.subr.mxu0 %v3137
    %v3139 = vand.u32 %v159, 4294901760
    %v3140 = vsub.f32 %v159, %v3139
    %3141 = vmatpush1.msra.mxu0 %v3140
    %v3142 = vand.u32 %v152, 4294901760
    %v3143 = vsub.f32 %v152, %v3142
    %3144 = vmatprep.subr.mxu0 %v3143
    %v3145 = vand.u32 %v151, 4294901760
    %v3146 = vsub.f32 %v151, %v3145
    %3147 = vmatpush1.msra.mxu0 %v3146
    %v3148 = vand.u32 %v144, 4294901760
    %v3149 = vsub.f32 %v144, %v3148
    %3150 = vmatprep.subr.mxu0 %v3149
    %v3151 = vand.u32 %v143, 4294901760
    %v3152 = vsub.f32 %v143, %v3151
    %3153 = vmatpush1.msra.mxu0 %v3152
    %v3154 = vand.u32 %v136, 4294901760
    %v3155 = vsub.f32 %v136, %v3154
    %3156 = vmatprep.subr.mxu0 %v3155
    %v3157 = vand.u32 %v135, 4294901760
    %v3158 = vsub.f32 %v135, %v3157
    %3159 = vmatpush1.msra.mxu0 %v3158
    %v3160 = vand.u32 %v128, 4294901760
    %v3161 = vsub.f32 %v128, %v3160
    %3162 = vmatprep.subr.mxu0 %v3161
    %v3163 = vand.u32 %v127, 4294901760
    %v3164 = vsub.f32 %v127, %v3163
    %3165 = vmatpush1.msra.mxu0 %v3164
    %v3166 = vand.u32 %v120, 4294901760
    %v3167 = vsub.f32 %v120, %v3166
    %3168 = vmatprep.subr.mxu0 %v3167
    %v3169 = vand.u32 %v119, 4294901760
    %v3170 = vsub.f32 %v119, %v3169
    %3171 = vmatpush1.msra.mxu0 %v3170
    %v3172 = vand.u32 %v112, 4294901760
    %v3173 = vsub.f32 %v112, %v3172
    %3174 = vmatprep.subr.mxu0 %v3173
    %v3175 = vand.u32 %v111, 4294901760
    %v3176 = vsub.f32 %v111, %v3175
    %3177 = vmatpush1.msra.mxu0 %v3176
    %v3178 = vand.u32 %v104, 4294901760
    %v3179 = vsub.f32 %v104, %v3178
    %3180 = vmatprep.subr.mxu0 %v3179
    %v3181 = vand.u32 %v103, 4294901760
    %v3182 = vsub.f32 %v103, %v3181
    %3183 = vmatpush1.msra.mxu0 %v3182
    %v3184 = vand.u32 %v96, 4294901760
    %v3185 = vsub.f32 %v96, %v3184
    %3186 = vmatprep.subr.mxu0 %v3185
    %v3187 = vand.u32 %v95, 4294901760
    %v3188 = vsub.f32 %v95, %v3187
    %3189 = vmatpush1.msra.mxu0 %v3188
    %v3190 = vand.u32 %v88, 4294901760
    %v3191 = vsub.f32 %v88, %v3190
    %3192 = vmatprep.subr.mxu0 %v3191
    %v3193 = vand.u32 %v87, 4294901760
    %v3194 = vsub.f32 %v87, %v3193
    %3195 = vmatpush1.msra.mxu0 %v3194
    %v3196 = vand.u32 %v80, 4294901760
    %v3197 = vsub.f32 %v80, %v3196
    %3198 = vmatprep.subr.mxu0 %v3197
    %v3199 = vand.u32 %v79, 4294901760
    %v3200 = vsub.f32 %v79, %v3199
    %3201 = vmatpush1.msra.mxu0 %v3200
    %v3202 = vand.u32 %v72, 4294901760
    %v3203 = vsub.f32 %v72, %v3202
    %3204 = vmatprep.subr.mxu0 %v3203
    %v3205 = vand.u32 %v71, 4294901760
    %v3206 = vsub.f32 %v71, %v3205
    %3207 = vmatpush1.msra.mxu0 %v3206
    %v3208 = vand.u32 %v64, 4294901760
    %v3209 = vsub.f32 %v64, %v3208
    %3210 = vmatprep.subr.mxu0 %v3209
    %v3211 = vand.u32 %v63, 4294901760
    %v3212 = vsub.f32 %v63, %v3211
    %3213 = vmatpush1.msra.mxu0 %v3212
    %v3214 = vand.u32 %v56, 4294901760
    %v3215 = vsub.f32 %v56, %v3214
    %3216 = vmatprep.subr.mxu0 %v3215
    %v3217 = vand.u32 %v55, 4294901760
    %v3218 = vsub.f32 %v55, %v3217
    %3219 = vmatpush1.msra.mxu0 %v3218
    %3220 = vmatprep.subr.mxu0 0.0
    %3221 = vmatpush2.msra.mxu0 0.0
    %3222 = vmatprep.subr.mxu0 0.0
    %3223 = vmatpush2.msra.mxu0 0.0
    %3224 = vmatprep.subr.mxu0 0.0
    %3225 = vmatpush2.msra.mxu0 0.0
    %3226 = vmatprep.subr.mxu0 0.0
    %3227 = vmatpush2.msra.mxu0 0.0
    %3228 = vmatprep.subr.mxu0 0.0
    %3229 = vmatpush2.msra.mxu0 0.0
    %3230 = vmatprep.subr.mxu0 0.0
    %3231 = vmatpush2.msra.mxu0 0.0
    %3232 = vmatprep.subr.mxu0 0.0
    %3233 = vmatpush2.msra.mxu0 0.0
    %3234 = vmatprep.subr.mxu0 0.0
    %3235 = vmatpush2.msra.mxu0 0.0
    %3236 = vmatprep.subr.mxu0 0.0
    %3237 = vmatpush2.msra.mxu0 0.0
    %3238 = vmatprep.subr.mxu0 0.0
    %3239 = vmatpush2.msra.mxu0 0.0
    %3240 = vmatprep.subr.mxu0 0.0
    %3241 = vmatpush2.msra.mxu0 0.0
    %3242 = vmatprep.subr.mxu0 0.0
    %3243 = vmatpush2.msra.mxu0 0.0
    %3244 = vmatprep.subr.mxu0 0.0
    %3245 = vmatpush2.msra.mxu0 0.0
    %3246 = vmatprep.subr.mxu0 0.0
    %3247 = vmatpush2.msra.mxu0 0.0
    %3248 = vmatprep.subr.mxu0 0.0
    %3249 = vmatpush2.msra.mxu0 0.0
    %3250 = vmatprep.subr.mxu0 0.0
    %3251 = vmatpush2.msra.mxu0 0.0
    %3252 = vmatprep.mubr.f32.mxu0 0.0
    %v3253 = vand.u32 %v48, 4294901760
    %v3254 = vsub.f32 %v48, %v3253
    %3255 = vmatmul.mubr.f32.gmra.mxu0 %v3254
    %v3256 = vpop.f32.mrf.mxu0
    %v3257 = vadd.f32 %v3120, %v3256
    %v3258 = vpop.f32.mrf.mxu0
    %v3259 = vadd.f32 %v3122, %v3258
    %3260 = vdwg.mxu0
    %v3261 = vand.u32 %v176, 4294901760
    %3262 = vmatprep.subr.mxu0 %v3261
    %v3263 = vand.u32 %v175, 4294901760
    %3264 = vmatpush1.msra.mxu0 %v3263
    %v3265 = vand.u32 %v168, 4294901760
    %3266 = vmatprep.subr.mxu0 %v3265
    %v3267 = vand.u32 %v167, 4294901760
    %3268 = vmatpush1.msra.mxu0 %v3267
    %v3269 = vand.u32 %v160, 4294901760
    %3270 = vmatprep.subr.mxu0 %v3269
    %v3271 = vand.u32 %v159, 4294901760
    %3272 = vmatpush1.msra.mxu0 %v3271
    %v3273 = vand.u32 %v152, 4294901760
    %3274 = vmatprep.subr.mxu0 %v3273
    %v3275 = vand.u32 %v151, 4294901760
    %3276 = vmatpush1.msra.mxu0 %v3275
    %v3277 = vand.u32 %v144, 4294901760
    %3278 = vmatprep.subr.mxu0 %v3277
    %v3279 = vand.u32 %v143, 4294901760
    %3280 = vmatpush1.msra.mxu0 %v3279
    %v3281 = vand.u32 %v136, 4294901760
    %3282 = vmatprep.subr.mxu0 %v3281
    %v3283 = vand.u32 %v135, 4294901760
    %3284 = vmatpush1.msra.mxu0 %v3283
    %v3285 = vand.u32 %v128, 4294901760
    %3286 = vmatprep.subr.mxu0 %v3285
    %v3287 = vand.u32 %v127, 4294901760
    %3288 = vmatpush1.msra.mxu0 %v3287
    %v3289 = vand.u32 %v120, 4294901760
    %3290 = vmatprep.subr.mxu0 %v3289
    %v3291 = vand.u32 %v119, 4294901760
    %3292 = vmatpush1.msra.mxu0 %v3291
    %v3293 = vand.u32 %v112, 4294901760
    %3294 = vmatprep.subr.mxu0 %v3293
    %v3295 = vand.u32 %v111, 4294901760
    %3296 = vmatpush1.msra.mxu0 %v3295
    %v3297 = vand.u32 %v104, 4294901760
    %3298 = vmatprep.subr.mxu0 %v3297
    %v3299 = vand.u32 %v103, 4294901760
    %3300 = vmatpush1.msra.mxu0 %v3299
    %v3301 = vand.u32 %v96, 4294901760
    %3302 = vmatprep.subr.mxu0 %v3301
    %v3303 = vand.u32 %v95, 4294901760
    %3304 = vmatpush1.msra.mxu0 %v3303
    %v3305 = vand.u32 %v88, 4294901760
    %3306 = vmatprep.subr.mxu0 %v3305
    %v3307 = vand.u32 %v87, 4294901760
    %3308 = vmatpush1.msra.mxu0 %v3307
    %v3309 = vand.u32 %v80, 4294901760
    %3310 = vmatprep.subr.mxu0 %v3309
    %v3311 = vand.u32 %v79, 4294901760
    %3312 = vmatpush1.msra.mxu0 %v3311
    %v3313 = vand.u32 %v72, 4294901760
    %3314 = vmatprep.subr.mxu0 %v3313
    %v3315 = vand.u32 %v71, 4294901760
    %3316 = vmatpush1.msra.mxu0 %v3315
    %v3317 = vand.u32 %v64, 4294901760
    %3318 = vmatprep.subr.mxu0 %v3317
    %v3319 = vand.u32 %v63, 4294901760
    %3320 = vmatpush1.msra.mxu0 %v3319
    %v3321 = vand.u32 %v56, 4294901760
    %3322 = vmatprep.subr.mxu0 %v3321
    %v3323 = vand.u32 %v55, 4294901760
    %3324 = vmatpush1.msra.mxu0 %v3323
    %3325 = vmatprep.subr.mxu0 0.0
    %3326 = vmatpush2.msra.mxu0 0.0
    %3327 = vmatprep.subr.mxu0 0.0
    %3328 = vmatpush2.msra.mxu0 0.0
    %3329 = vmatprep.subr.mxu0 0.0
    %3330 = vmatpush2.msra.mxu0 0.0
    %3331 = vmatprep.subr.mxu0 0.0
    %3332 = vmatpush2.msra.mxu0 0.0
    %3333 = vmatprep.subr.mxu0 0.0
    %3334 = vmatpush2.msra.mxu0 0.0
    %3335 = vmatprep.subr.mxu0 0.0
    %3336 = vmatpush2.msra.mxu0 0.0
    %3337 = vmatprep.subr.mxu0 0.0
    %3338 = vmatpush2.msra.mxu0 0.0
    %3339 = vmatprep.subr.mxu0 0.0
    %3340 = vmatpush2.msra.mxu0 0.0
    %3341 = vmatprep.subr.mxu0 0.0
    %3342 = vmatpush2.msra.mxu0 0.0
    %3343 = vmatprep.subr.mxu0 0.0
    %3344 = vmatpush2.msra.mxu0 0.0
    %3345 = vmatprep.subr.mxu0 0.0
    %3346 = vmatpush2.msra.mxu0 0.0
    %3347 = vmatprep.subr.mxu0 0.0
    %3348 = vmatpush2.msra.mxu0 0.0
    %3349 = vmatprep.subr.mxu0 0.0
    %3350 = vmatpush2.msra.mxu0 0.0
    %3351 = vmatprep.subr.mxu0 0.0
    %3352 = vmatpush2.msra.mxu0 0.0
    %3353 = vmatprep.subr.mxu0 0.0
    %3354 = vmatpush2.msra.mxu0 0.0
    %3355 = vmatprep.subr.mxu0 0.0
    %3356 = vmatpush2.msra.mxu0 0.0
    %3357 = vmatprep.mubr.f32.mxu0 0.0
    %v3358 = vand.u32 %v48, 4294901760
    %v3359 = vsub.f32 %v48, %v3358
    %v3360 = vand.u32 %v3359, 4294901760
    %3361 = vmatmul.mubr.f32.gmra.mxu0 %v3360
    %v3362 = vpop.f32.mrf.mxu0
    %v3363 = vadd.f32 %v3257, %v3362
    %v3364 = vpop.f32.mrf.mxu0
    %v3365 = vadd.f32 %v3259, %v3364
    %3366 = vdwg.mxu0
    %v3367 = vand.u32 %v176, 4294901760
    %v3368 = vsub.f32 %v176, %v3367
    %v3369 = vand.u32 %v3368, 4294901760
    %3370 = vmatprep.subr.mxu0 %v3369
    %v3371 = vand.u32 %v175, 4294901760
    %v3372 = vsub.f32 %v175, %v3371
    %v3373 = vand.u32 %v3372, 4294901760
    %3374 = vmatpush1.msra.mxu0 %v3373
    %v3375 = vand.u32 %v168, 4294901760
    %v3376 = vsub.f32 %v168, %v3375
    %v3377 = vand.u32 %v3376, 4294901760
    %3378 = vmatprep.subr.mxu0 %v3377
    %v3379 = vand.u32 %v167, 4294901760
    %v3380 = vsub.f32 %v167, %v3379
    %v3381 = vand.u32 %v3380, 4294901760
    %3382 = vmatpush1.msra.mxu0 %v3381
    %v3383 = vand.u32 %v160, 4294901760
    %v3384 = vsub.f32 %v160, %v3383
    %v3385 = vand.u32 %v3384, 4294901760
    %3386 = vmatprep.subr.mxu0 %v3385
    %v3387 = vand.u32 %v159, 4294901760
    %v3388 = vsub.f32 %v159, %v3387
    %v3389 = vand.u32 %v3388, 4294901760
    %3390 = vmatpush1.msra.mxu0 %v3389
    %v3391 = vand.u32 %v152, 4294901760
    %v3392 = vsub.f32 %v152, %v3391
    %v3393 = vand.u32 %v3392, 4294901760
    %3394 = vmatprep.subr.mxu0 %v3393
    %v3395 = vand.u32 %v151, 4294901760
    %v3396 = vsub.f32 %v151, %v3395
    %v3397 = vand.u32 %v3396, 4294901760
    %3398 = vmatpush1.msra.mxu0 %v3397
    %v3399 = vand.u32 %v144, 4294901760
    %v3400 = vsub.f32 %v144, %v3399
    %v3401 = vand.u32 %v3400, 4294901760
    %3402 = vmatprep.subr.mxu0 %v3401
    %v3403 = vand.u32 %v143, 4294901760
    %v3404 = vsub.f32 %v143, %v3403
    %v3405 = vand.u32 %v3404, 4294901760
    %3406 = vmatpush1.msra.mxu0 %v3405
    %v3407 = vand.u32 %v136, 4294901760
    %v3408 = vsub.f32 %v136, %v3407
    %v3409 = vand.u32 %v3408, 4294901760
    %3410 = vmatprep.subr.mxu0 %v3409
    %v3411 = vand.u32 %v135, 4294901760
    %v3412 = vsub.f32 %v135, %v3411
    %v3413 = vand.u32 %v3412, 4294901760
    %3414 = vmatpush1.msra.mxu0 %v3413
    %v3415 = vand.u32 %v128, 4294901760
    %v3416 = vsub.f32 %v128, %v3415
    %v3417 = vand.u32 %v3416, 4294901760
    %3418 = vmatprep.subr.mxu0 %v3417
    %v3419 = vand.u32 %v127, 4294901760
    %v3420 = vsub.f32 %v127, %v3419
    %v3421 = vand.u32 %v3420, 4294901760
    %3422 = vmatpush1.msra.mxu0 %v3421
    %v3423 = vand.u32 %v120, 4294901760
    %v3424 = vsub.f32 %v120, %v3423
    %v3425 = vand.u32 %v3424, 4294901760
    %3426 = vmatprep.subr.mxu0 %v3425
    %v3427 = vand.u32 %v119, 4294901760
    %v3428 = vsub.f32 %v119, %v3427
    %v3429 = vand.u32 %v3428, 4294901760
    %3430 = vmatpush1.msra.mxu0 %v3429
    %v3431 = vand.u32 %v112, 4294901760
    %v3432 = vsub.f32 %v112, %v3431
    %v3433 = vand.u32 %v3432, 4294901760
    %3434 = vmatprep.subr.mxu0 %v3433
    %v3435 = vand.u32 %v111, 4294901760
    %v3436 = vsub.f32 %v111, %v3435
    %v3437 = vand.u32 %v3436, 4294901760
    %3438 = vmatpush1.msra.mxu0 %v3437
    %v3439 = vand.u32 %v104, 4294901760
    %v3440 = vsub.f32 %v104, %v3439
    %v3441 = vand.u32 %v3440, 4294901760
    %3442 = vmatprep.subr.mxu0 %v3441
    %v3443 = vand.u32 %v103, 4294901760
    %v3444 = vsub.f32 %v103, %v3443
    %v3445 = vand.u32 %v3444, 4294901760
    %3446 = vmatpush1.msra.mxu0 %v3445
    %v3447 = vand.u32 %v96, 4294901760
    %v3448 = vsub.f32 %v96, %v3447
    %v3449 = vand.u32 %v3448, 4294901760
    %3450 = vmatprep.subr.mxu0 %v3449
    %v3451 = vand.u32 %v95, 4294901760
    %v3452 = vsub.f32 %v95, %v3451
    %v3453 = vand.u32 %v3452, 4294901760
    %3454 = vmatpush1.msra.mxu0 %v3453
    %v3455 = vand.u32 %v88, 4294901760
    %v3456 = vsub.f32 %v88, %v3455
    %v3457 = vand.u32 %v3456, 4294901760
    %3458 = vmatprep.subr.mxu0 %v3457
    %v3459 = vand.u32 %v87, 4294901760
    %v3460 = vsub.f32 %v87, %v3459
    %v3461 = vand.u32 %v3460, 4294901760
    %3462 = vmatpush1.msra.mxu0 %v3461
    %v3463 = vand.u32 %v80, 4294901760
    %v3464 = vsub.f32 %v80, %v3463
    %v3465 = vand.u32 %v3464, 4294901760
    %3466 = vmatprep.subr.mxu0 %v3465
    %v3467 = vand.u32 %v79, 4294901760
    %v3468 = vsub.f32 %v79, %v3467
    %v3469 = vand.u32 %v3468, 4294901760
    %3470 = vmatpush1.msra.mxu0 %v3469
    %v3471 = vand.u32 %v72, 4294901760
    %v3472 = vsub.f32 %v72, %v3471
    %v3473 = vand.u32 %v3472, 4294901760
    %3474 = vmatprep.subr.mxu0 %v3473
    %v3475 = vand.u32 %v71, 4294901760
    %v3476 = vsub.f32 %v71, %v3475
    %v3477 = vand.u32 %v3476, 4294901760
    %3478 = vmatpush1.msra.mxu0 %v3477
    %v3479 = vand.u32 %v64, 4294901760
    %v3480 = vsub.f32 %v64, %v3479
    %v3481 = vand.u32 %v3480, 4294901760
    %3482 = vmatprep.subr.mxu0 %v3481
    %v3483 = vand.u32 %v63, 4294901760
    %v3484 = vsub.f32 %v63, %v3483
    %v3485 = vand.u32 %v3484, 4294901760
    %3486 = vmatpush1.msra.mxu0 %v3485
    %v3487 = vand.u32 %v56, 4294901760
    %v3488 = vsub.f32 %v56, %v3487
    %v3489 = vand.u32 %v3488, 4294901760
    %3490 = vmatprep.subr.mxu0 %v3489
    %v3491 = vand.u32 %v55, 4294901760
    %v3492 = vsub.f32 %v55, %v3491
    %v3493 = vand.u32 %v3492, 4294901760
    %3494 = vmatpush1.msra.mxu0 %v3493
    %3495 = vmatprep.subr.mxu0 0.0
    %3496 = vmatpush2.msra.mxu0 0.0
    %3497 = vmatprep.subr.mxu0 0.0
    %3498 = vmatpush2.msra.mxu0 0.0
    %3499 = vmatprep.subr.mxu0 0.0
    %3500 = vmatpush2.msra.mxu0 0.0
    %3501 = vmatprep.subr.mxu0 0.0
    %3502 = vmatpush2.msra.mxu0 0.0
    %3503 = vmatprep.subr.mxu0 0.0
    %3504 = vmatpush2.msra.mxu0 0.0
    %3505 = vmatprep.subr.mxu0 0.0
    %3506 = vmatpush2.msra.mxu0 0.0
    %3507 = vmatprep.subr.mxu0 0.0
    %3508 = vmatpush2.msra.mxu0 0.0
    %3509 = vmatprep.subr.mxu0 0.0
    %3510 = vmatpush2.msra.mxu0 0.0
    %3511 = vmatprep.subr.mxu0 0.0
    %3512 = vmatpush2.msra.mxu0 0.0
    %3513 = vmatprep.subr.mxu0 0.0
    %3514 = vmatpush2.msra.mxu0 0.0
    %3515 = vmatprep.subr.mxu0 0.0
    %3516 = vmatpush2.msra.mxu0 0.0
    %3517 = vmatprep.subr.mxu0 0.0
    %3518 = vmatpush2.msra.mxu0 0.0
    %3519 = vmatprep.subr.mxu0 0.0
    %3520 = vmatpush2.msra.mxu0 0.0
    %3521 = vmatprep.subr.mxu0 0.0
    %3522 = vmatpush2.msra.mxu0 0.0
    %3523 = vmatprep.subr.mxu0 0.0
    %3524 = vmatpush2.msra.mxu0 0.0
    %3525 = vmatprep.subr.mxu0 0.0
    %3526 = vmatpush2.msra.mxu0 0.0
    %3527 = vmatprep.mubr.f32.mxu0 0.0
    %v3528 = vand.u32 %v48, 4294901760
    %3529 = vmatmul.mubr.f32.gmra.mxu0 %v3528
    %v3530 = vpop.f32.mrf.mxu0
    %v3531 = vadd.f32 %v3363, %v3530
    %v3532 = vpop.f32.mrf.mxu0
    %v3533 = vadd.f32 %v3365, %v3532
    %3534 = vdwg.mxu0
    %v3535 = vand.u32 %v176, 4294901760
    %3536 = vmatprep.subr.mxu0 %v3535
    %v3537 = vand.u32 %v175, 4294901760
    %3538 = vmatpush1.msra.mxu0 %v3537
    %v3539 = vand.u32 %v168, 4294901760
    %3540 = vmatprep.subr.mxu0 %v3539
    %v3541 = vand.u32 %v167, 4294901760
    %3542 = vmatpush1.msra.mxu0 %v3541
    %v3543 = vand.u32 %v160, 4294901760
    %3544 = vmatprep.subr.mxu0 %v3543
    %v3545 = vand.u32 %v159, 4294901760
    %3546 = vmatpush1.msra.mxu0 %v3545
    %v3547 = vand.u32 %v152, 4294901760
    %3548 = vmatprep.subr.mxu0 %v3547
    %v3549 = vand.u32 %v151, 4294901760
    %3550 = vmatpush1.msra.mxu0 %v3549
    %v3551 = vand.u32 %v144, 4294901760
    %3552 = vmatprep.subr.mxu0 %v3551
    %v3553 = vand.u32 %v143, 4294901760
    %3554 = vmatpush1.msra.mxu0 %v3553
    %v3555 = vand.u32 %v136, 4294901760
    %3556 = vmatprep.subr.mxu0 %v3555
    %v3557 = vand.u32 %v135, 4294901760
    %3558 = vmatpush1.msra.mxu0 %v3557
    %v3559 = vand.u32 %v128, 4294901760
    %3560 = vmatprep.subr.mxu0 %v3559
    %v3561 = vand.u32 %v127, 4294901760
    %3562 = vmatpush1.msra.mxu0 %v3561
    %v3563 = vand.u32 %v120, 4294901760
    %3564 = vmatprep.subr.mxu0 %v3563
    %v3565 = vand.u32 %v119, 4294901760
    %3566 = vmatpush1.msra.mxu0 %v3565
    %v3567 = vand.u32 %v112, 4294901760
    %3568 = vmatprep.subr.mxu0 %v3567
    %v3569 = vand.u32 %v111, 4294901760
    %3570 = vmatpush1.msra.mxu0 %v3569
    %v3571 = vand.u32 %v104, 4294901760
    %3572 = vmatprep.subr.mxu0 %v3571
    %v3573 = vand.u32 %v103, 4294901760
    %3574 = vmatpush1.msra.mxu0 %v3573
    %v3575 = vand.u32 %v96, 4294901760
    %3576 = vmatprep.subr.mxu0 %v3575
    %v3577 = vand.u32 %v95, 4294901760
    %3578 = vmatpush1.msra.mxu0 %v3577
    %v3579 = vand.u32 %v88, 4294901760
    %3580 = vmatprep.subr.mxu0 %v3579
    %v3581 = vand.u32 %v87, 4294901760
    %3582 = vmatpush1.msra.mxu0 %v3581
    %v3583 = vand.u32 %v80, 4294901760
    %3584 = vmatprep.subr.mxu0 %v3583
    %v3585 = vand.u32 %v79, 4294901760
    %3586 = vmatpush1.msra.mxu0 %v3585
    %v3587 = vand.u32 %v72, 4294901760
    %3588 = vmatprep.subr.mxu0 %v3587
    %v3589 = vand.u32 %v71, 4294901760
    %3590 = vmatpush1.msra.mxu0 %v3589
    %v3591 = vand.u32 %v64, 4294901760
    %3592 = vmatprep.subr.mxu0 %v3591
    %v3593 = vand.u32 %v63, 4294901760
    %3594 = vmatpush1.msra.mxu0 %v3593
    %v3595 = vand.u32 %v56, 4294901760
    %3596 = vmatprep.subr.mxu0 %v3595
    %v3597 = vand.u32 %v55, 4294901760
    %3598 = vmatpush1.msra.mxu0 %v3597
    %3599 = vmatprep.subr.mxu0 0.0
    %3600 = vmatpush2.msra.mxu0 0.0
    %3601 = vmatprep.subr.mxu0 0.0
    %3602 = vmatpush2.msra.mxu0 0.0
    %3603 = vmatprep.subr.mxu0 0.0
    %3604 = vmatpush2.msra.mxu0 0.0
    %3605 = vmatprep.subr.mxu0 0.0
    %3606 = vmatpush2.msra.mxu0 0.0
    %3607 = vmatprep.subr.mxu0 0.0
    %3608 = vmatpush2.msra.mxu0 0.0
    %3609 = vmatprep.subr.mxu0 0.0
    %3610 = vmatpush2.msra.mxu0 0.0
    %3611 = vmatprep.subr.mxu0 0.0
    %3612 = vmatpush2.msra.mxu0 0.0
    %3613 = vmatprep.subr.mxu0 0.0
    %3614 = vmatpush2.msra.mxu0 0.0
    %3615 = vmatprep.subr.mxu0 0.0
    %3616 = vmatpush2.msra.mxu0 0.0
    %3617 = vmatprep.subr.mxu0 0.0
    %3618 = vmatpush2.msra.mxu0 0.0
    %3619 = vmatprep.subr.mxu0 0.0
    %3620 = vmatpush2.msra.mxu0 0.0
    %3621 = vmatprep.subr.mxu0 0.0
    %3622 = vmatpush2.msra.mxu0 0.0
    %3623 = vmatprep.subr.mxu0 0.0
    %3624 = vmatpush2.msra.mxu0 0.0
    %3625 = vmatprep.subr.mxu0 0.0
    %3626 = vmatpush2.msra.mxu0 0.0
    %3627 = vmatprep.subr.mxu0 0.0
    %3628 = vmatpush2.msra.mxu0 0.0
    %3629 = vmatprep.subr.mxu0 0.0
    %3630 = vmatpush2.msra.mxu0 0.0
    %3631 = vmatprep.mubr.f32.mxu0 0.0
    %v3632 = vand.u32 %v48, 4294901760
    %3633 = vmatmul.mubr.f32.gmra.mxu0 %v3632
    %v3634 = vpop.f32.mrf.mxu0
    %v3635 = vadd.f32 %v3531, %v3634
    %v3636 = vpop.f32.mrf.mxu0
    %v3637 = vadd.f32 %v3533, %v3636
    %3638 = vdwg.mxu0
    %v3639 = vmul.f32 %v1070, %v1070
    %v3640 = vmul.f32 %v1072, %v1072
    %v3641 = vmul.f32 %v1925, %v1925
    %v3642 = vmul.f32 %v1927, %v1927
    %v3643 = vmul.f32 %v2780, %v2780
    %v3644 = vmul.f32 %v2782, %v2782
    %v3645 = vmul.f32 %v3635, %v3635
    %v3646 = vmul.f32 %v3637, %v3637
    %v3647 = vld [vmem:[%s3] sm:$0xff]
    %v3648 = vld [vmem:[%s3 + $0x8] sm:$0xff]
    %v3649 = vld [vmem:[%s3 + $0x10] sm:$0xff]
    %v3650 = vld [vmem:[%s3 + $0x18] sm:$0xff]
    %v3651 = vld [vmem:[%s3 + $0x20] sm:$0xff]
    %v3652 = vld [vmem:[%s3 + $0x28] sm:$0xff]
    %v3653 = vld [vmem:[%s3 + $0x30] sm:$0xff]
    %v3654 = vld [vmem:[%s3 + $0x38] sm:$0xff]
    %v3655 = vld [vmem:[%s3 + $0x40] sm:$0xff]
    %v3656 = vld [vmem:[%s3 + $0x48] sm:$0xff]
    %v3657 = vld [vmem:[%s3 + $0x50] sm:$0xff]
    %v3658 = vld [vmem:[%s3 + $0x58] sm:$0xff]
    %v3659 = vld [vmem:[%s3 + $0x60] sm:$0xff]
    %v3660 = vld [vmem:[%s3 + $0x68] sm:$0xff]
    %v3661 = vld [vmem:[%s3 + $0x70] sm:$0xff]
    %v3662 = vld [vmem:[%s3 + $0x78] sm:$0xff]
    %v3663 = vld [vmem:[%s3 + $0x80] sm:$0xff]
    %v3664 = vld [vmem:[%s3 + $0x88] sm:$0xff]
    %v3665 = vld [vmem:[%s3 + $0x90] sm:$0xff]
    %v3666 = vld [vmem:[%s3 + $0x98] sm:$0xff]
    %v3667 = vld [vmem:[%s3 + $0xa0] sm:$0xff]
    %v3668 = vld [vmem:[%s3 + $0xa8] sm:$0xff]
    %v3669 = vld [vmem:[%s3 + $0xb0] sm:$0xff]
    %v3670 = vld [vmem:[%s3 + $0xb8] sm:$0xff]
    %v3671 = vld [vmem:[%s3 + $0xc0] sm:$0xff]
    %v3672 = vld [vmem:[%s3 + $0xc8] sm:$0xff]
    %v3673 = vld [vmem:[%s3 + $0xd0] sm:$0xff]
    %v3674 = vld [vmem:[%s3 + $0xd8] sm:$0xff]
    %v3675 = vld [vmem:[%s3 + $0xe0] sm:$0xff]
    %v3676 = vld [vmem:[%s3 + $0xe8] sm:$0xff]
    %v3677 = vld [vmem:[%s3 + $0xf0] sm:$0xff]
    %v3678 = vld [vmem:[%s3 + $0xf8] sm:$0xff]
    %v3679 = vld [vmem:[%s3 + $0x100] sm:$0xff]
    %v3680 = vld [vmem:[%s3 + $0x108] sm:$0xff]
    %v3681 = vld [vmem:[%s3 + $0x110] sm:$0xff]
    %v3682 = vld [vmem:[%s3 + $0x118] sm:$0xff]
    %v3683 = vld [vmem:[%s3 + $0x120] sm:$0xff]
    %v3684 = vld [vmem:[%s3 + $0x128] sm:$0xff]
    %v3685 = vld [vmem:[%s3 + $0x130] sm:$0xff]
    %v3686 = vld [vmem:[%s3 + $0x138] sm:$0xff]
    %v3687 = vld [vmem:[%s3 + $0x140] sm:$0xff]
    %v3688 = vld [vmem:[%s3 + $0x148] sm:$0xff]
    %v3689 = vld [vmem:[%s3 + $0x150] sm:$0xff]
    %v3690 = vld [vmem:[%s3 + $0x158] sm:$0xff]
    %v3691 = vld [vmem:[%s3 + $0x160] sm:$0xff]
    %v3692 = vld [vmem:[%s3 + $0x168] sm:$0xff]
    %v3693 = vld [vmem:[%s3 + $0x170] sm:$0xff]
    %v3694 = vld [vmem:[%s3 + $0x178] sm:$0xff]
    %v3695 = vld [vmem:[%s3 + $0x180] sm:$0xff]
    %v3696 = vld [vmem:[%s3 + $0x188] sm:$0xff]
    %v3697 = vld [vmem:[%s3 + $0x190] sm:$0xff]
    %v3698 = vld [vmem:[%s3 + $0x198] sm:$0xff]
    %v3699 = vld [vmem:[%s3 + $0x1a0] sm:$0xff]
    %v3700 = vld [vmem:[%s3 + $0x1a8] sm:$0xff]
    %v3701 = vld [vmem:[%s3 + $0x1b0] sm:$0xff]
    %v3702 = vld [vmem:[%s3 + $0x1b8] sm:$0xff]
    %v3703 = vld [vmem:[%s3 + $0x1c0] sm:$0xff]
    %v3704 = vld [vmem:[%s3 + $0x1c8] sm:$0xff]
    %v3705 = vld [vmem:[%s3 + $0x1d0] sm:$0xff]
    %v3706 = vld [vmem:[%s3 + $0x1d8] sm:$0xff]
    %v3707 = vld [vmem:[%s3 + $0x1e0] sm:$0xff]
    %v3708 = vld [vmem:[%s3 + $0x1e8] sm:$0xff]
    %v3709 = vld [vmem:[%s3 + $0x1f0] sm:$0xff]
    %v3710 = vld [vmem:[%s3 + $0x1f8] sm:$0xff]
    %v3711 = vld [vmem:[%s3 + $0x200] sm:$0xff]
    %v3712 = vld [vmem:[%s3 + $0x208] sm:$0xff]
    %v3713 = vld [vmem:[%s3 + $0x210] sm:$0xff]
    %v3714 = vld [vmem:[%s3 + $0x218] sm:$0xff]
    %v3715 = vld [vmem:[%s3 + $0x220] sm:$0xff]
    %v3716 = vld [vmem:[%s3 + $0x228] sm:$0xff]
    %v3717 = vld [vmem:[%s3 + $0x230] sm:$0xff]
    %v3718 = vld [vmem:[%s3 + $0x238] sm:$0xff]
    %v3719 = vld [vmem:[%s3 + $0x240] sm:$0xff]
    %v3720 = vld [vmem:[%s3 + $0x248] sm:$0xff]
    %v3721 = vld [vmem:[%s3 + $0x250] sm:$0xff]
    %v3722 = vld [vmem:[%s3 + $0x258] sm:$0xff]
    %v3723 = vld [vmem:[%s3 + $0x260] sm:$0xff]
    %v3724 = vld [vmem:[%s3 + $0x268] sm:$0xff]
    %v3725 = vld [vmem:[%s3 + $0x270] sm:$0xff]
    %v3726 = vld [vmem:[%s3 + $0x278] sm:$0xff]
    %v3727 = vld [vmem:[%s3 + $0x280] sm:$0xff]
    %v3728 = vld [vmem:[%s3 + $0x288] sm:$0xff]
    %v3729 = vld [vmem:[%s3 + $0x290] sm:$0xff]
    %v3730 = vld [vmem:[%s3 + $0x298] sm:$0xff]
    %v3731 = vld [vmem:[%s3 + $0x2a0] sm:$0xff]
    %v3732 = vld [vmem:[%s3 + $0x2a8] sm:$0xff]
    %v3733 = vld [vmem:[%s3 + $0x2b0] sm:$0xff]
    %v3734 = vld [vmem:[%s3 + $0x2b8] sm:$0xff]
    %v3735 = vld [vmem:[%s3 + $0x2c0] sm:$0xff]
    %v3736 = vld [vmem:[%s3 + $0x2c8] sm:$0xff]
    %v3737 = vld [vmem:[%s3 + $0x2d0] sm:$0xff]
    %v3738 = vld [vmem:[%s3 + $0x2d8] sm:$0xff]
    %v3739 = vld [vmem:[%s3 + $0x2e0] sm:$0xff]
    %v3740 = vld [vmem:[%s3 + $0x2e8] sm:$0xff]
    %v3741 = vld [vmem:[%s3 + $0x2f0] sm:$0xff]
    %v3742 = vld [vmem:[%s3 + $0x2f8] sm:$0xff]
    %v3743 = vld [vmem:[%s3 + $0x300] sm:$0xff]
    %v3744 = vld [vmem:[%s3 + $0x308] sm:$0xff]
    %v3745 = vld [vmem:[%s3 + $0x310] sm:$0xff]
    %v3746 = vld [vmem:[%s3 + $0x318] sm:$0xff]
    %v3747 = vld [vmem:[%s3 + $0x320] sm:$0xff]
    %v3748 = vld [vmem:[%s3 + $0x328] sm:$0xff]
    %v3749 = vld [vmem:[%s3 + $0x330] sm:$0xff]
    %v3750 = vld [vmem:[%s3 + $0x338] sm:$0xff]
    %v3751 = vld [vmem:[%s3 + $0x340] sm:$0xff]
    %v3752 = vld [vmem:[%s3 + $0x348] sm:$0xff]
    %v3753 = vld [vmem:[%s3 + $0x350] sm:$0xff]
    %v3754 = vld [vmem:[%s3 + $0x358] sm:$0xff]
    %v3755 = vld [vmem:[%s3 + $0x360] sm:$0xff]
    %v3756 = vld [vmem:[%s3 + $0x368] sm:$0xff]
    %v3757 = vld [vmem:[%s3 + $0x370] sm:$0xff]
    %v3758 = vld [vmem:[%s3 + $0x378] sm:$0xff]
    %v3759 = vld [vmem:[%s3 + $0x380] sm:$0xff]
    %v3760 = vld [vmem:[%s3 + $0x388] sm:$0xff]
    %v3761 = vld [vmem:[%s3 + $0x390] sm:$0xff]
    %v3762 = vld [vmem:[%s3 + $0x398] sm:$0xff]
    %v3763 = vld [vmem:[%s3 + $0x3a0] sm:$0xff]
    %v3764 = vld [vmem:[%s3 + $0x3a8] sm:$0xff]
    %v3765 = vld [vmem:[%s3 + $0x3b0] sm:$0xff]
    %v3766 = vld [vmem:[%s3 + $0x3b8] sm:$0xff]
    %v3767 = vld [vmem:[%s3 + $0x3c0] sm:$0xff]
    %v3768 = vld [vmem:[%s3 + $0x3c8] sm:$0xff]
    %v3769 = vld [vmem:[%s3 + $0x3d0] sm:$0xff]
    %v3770 = vld [vmem:[%s3 + $0x3d8] sm:$0xff]
    %v3771 = vld [vmem:[%s3 + $0x3e0] sm:$0xff]
    %v3772 = vld [vmem:[%s3 + $0x3e8] sm:$0xff]
    %v3773 = vld [vmem:[%s3 + $0x3f0] sm:$0xff]
    %v3774 = vld [vmem:[%s3 + $0x3f8] sm:$0xff]
    %3775 = vmatprep.subr.mxu0 0.0
    %v3776 = vand.u32 %v3662, 4294901760
    %3777 = vmatpush1.msra.mxu0 %v3776
    %3778 = vmatprep.subr.mxu0 0.0
    %v3779 = vand.u32 %v3661, 4294901760
    %3780 = vmatpush1.msra.mxu0 %v3779
    %3781 = vmatprep.subr.mxu0 0.0
    %v3782 = vand.u32 %v3660, 4294901760
    %3783 = vmatpush1.msra.mxu0 %v3782
    %3784 = vmatprep.subr.mxu0 0.0
    %v3785 = vand.u32 %v3659, 4294901760
    %3786 = vmatpush1.msra.mxu0 %v3785
    %3787 = vmatprep.subr.mxu0 0.0
    %v3788 = vand.u32 %v3658, 4294901760
    %3789 = vmatpush1.msra.mxu0 %v3788
    %3790 = vmatprep.subr.mxu0 0.0
    %v3791 = vand.u32 %v3657, 4294901760
    %3792 = vmatpush1.msra.mxu0 %v3791
    %3793 = vmatprep.subr.mxu0 0.0
    %v3794 = vand.u32 %v3656, 4294901760
    %3795 = vmatpush1.msra.mxu0 %v3794
    %3796 = vmatprep.subr.mxu0 0.0
    %v3797 = vand.u32 %v3655, 4294901760
    %3798 = vmatpush1.msra.mxu0 %v3797
    %3799 = vmatprep.subr.mxu0 0.0
    %v3800 = vand.u32 %v3654, 4294901760
    %3801 = vmatpush1.msra.mxu0 %v3800
    %3802 = vmatprep.subr.mxu0 0.0
    %v3803 = vand.u32 %v3653, 4294901760
    %3804 = vmatpush1.msra.mxu0 %v3803
    %3805 = vmatprep.subr.mxu0 0.0
    %v3806 = vand.u32 %v3652, 4294901760
    %3807 = vmatpush1.msra.mxu0 %v3806
    %3808 = vmatprep.subr.mxu0 0.0
    %v3809 = vand.u32 %v3651, 4294901760
    %3810 = vmatpush1.msra.mxu0 %v3809
    %3811 = vmatprep.subr.mxu0 0.0
    %v3812 = vand.u32 %v3650, 4294901760
    %3813 = vmatpush1.msra.mxu0 %v3812
    %3814 = vmatprep.subr.mxu0 0.0
    %v3815 = vand.u32 %v3649, 4294901760
    %3816 = vmatpush1.msra.mxu0 %v3815
    %3817 = vmatprep.subr.mxu0 0.0
    %v3818 = vand.u32 %v3648, 4294901760
    %3819 = vmatpush1.msra.mxu0 %v3818
    %3820 = vmatprep.subr.mxu0 0.0
    %v3821 = vand.u32 %v3647, 4294901760
    %3822 = vmatpush1.msra.mxu0 %v3821
    %3823 = vmatprep.subr.mxu0 0.0
    %v3824 = vand.u32 %v3678, 4294901760
    %3825 = vmatpush2.msra.mxu0 %v3824
    %3826 = vmatprep.subr.mxu0 0.0
    %v3827 = vand.u32 %v3677, 4294901760
    %3828 = vmatpush2.msra.mxu0 %v3827
    %3829 = vmatprep.subr.mxu0 0.0
    %v3830 = vand.u32 %v3676, 4294901760
    %3831 = vmatpush2.msra.mxu0 %v3830
    %3832 = vmatprep.subr.mxu0 0.0
    %v3833 = vand.u32 %v3675, 4294901760
    %3834 = vmatpush2.msra.mxu0 %v3833
    %3835 = vmatprep.subr.mxu0 0.0
    %v3836 = vand.u32 %v3674, 4294901760
    %3837 = vmatpush2.msra.mxu0 %v3836
    %3838 = vmatprep.subr.mxu0 0.0
    %v3839 = vand.u32 %v3673, 4294901760
    %3840 = vmatpush2.msra.mxu0 %v3839
    %3841 = vmatprep.subr.mxu0 0.0
    %v3842 = vand.u32 %v3672, 4294901760
    %3843 = vmatpush2.msra.mxu0 %v3842
    %3844 = vmatprep.subr.mxu0 0.0
    %v3845 = vand.u32 %v3671, 4294901760
    %3846 = vmatpush2.msra.mxu0 %v3845
    %3847 = vmatprep.subr.mxu0 0.0
    %v3848 = vand.u32 %v3670, 4294901760
    %3849 = vmatpush2.msra.mxu0 %v3848
    %3850 = vmatprep.subr.mxu0 0.0
    %v3851 = vand.u32 %v3669, 4294901760
    %3852 = vmatpush2.msra.mxu0 %v3851
    %3853 = vmatprep.subr.mxu0 0.0
    %v3854 = vand.u32 %v3668, 4294901760
    %3855 = vmatpush2.msra.mxu0 %v3854
    %3856 = vmatprep.subr.mxu0 0.0
    %v3857 = vand.u32 %v3667, 4294901760
    %3858 = vmatpush2.msra.mxu0 %v3857
    %3859 = vmatprep.subr.mxu0 0.0
    %v3860 = vand.u32 %v3666, 4294901760
    %3861 = vmatpush2.msra.mxu0 %v3860
    %3862 = vmatprep.subr.mxu0 0.0
    %v3863 = vand.u32 %v3665, 4294901760
    %3864 = vmatpush2.msra.mxu0 %v3863
    %3865 = vmatprep.subr.mxu0 0.0
    %v3866 = vand.u32 %v3664, 4294901760
    %3867 = vmatpush2.msra.mxu0 %v3866
    %3868 = vmatprep.subr.mxu0 0.0
    %v3869 = vand.u32 %v3663, 4294901760
    %3870 = vmatpush2.msra.mxu0 %v3869
    %v3871 = vand.u32 %v3640, 4294901760
    %v3872 = vsub.f32 %v3640, %v3871
    %v3873 = vand.u32 %v3872, 4294901760
    %v3874 = vsub.f32 %v3872, %v3873
    %v3875 = vand.u32 %v3874, 4294901760
    %3876 = vmatprep.mubr.f32.mxu0 %v3875
    %v3877 = vand.u32 %v3639, 4294901760
    %v3878 = vsub.f32 %v3639, %v3877
    %v3879 = vand.u32 %v3878, 4294901760
    %v3880 = vsub.f32 %v3878, %v3879
    %v3881 = vand.u32 %v3880, 4294901760
    %3882 = vmatmul.mubr.f32.gmra.mxu0 %v3881
    %v3883 = vpop.f32.mrf.mxu0
    %v3884 = vadd.f32 1e-05, %v3883
    %v3885 = vpop.f32.mrf.mxu0
    %3886 = vdwg.mxu0
    %3887 = vmatprep.subr.mxu0 0.0
    %v3888 = vand.u32 %v3662, 4294901760
    %v3889 = vsub.f32 %v3662, %v3888
    %v3890 = vand.u32 %v3889, 4294901760
    %v3891 = vsub.f32 %v3889, %v3890
    %v3892 = vand.u32 %v3891, 4294901760
    %3893 = vmatpush1.msra.mxu0 %v3892
    %3894 = vmatprep.subr.mxu0 0.0
    %v3895 = vand.u32 %v3661, 4294901760
    %v3896 = vsub.f32 %v3661, %v3895
    %v3897 = vand.u32 %v3896, 4294901760
    %v3898 = vsub.f32 %v3896, %v3897
    %v3899 = vand.u32 %v3898, 4294901760
    %3900 = vmatpush1.msra.mxu0 %v3899
    %3901 = vmatprep.subr.mxu0 0.0
    %v3902 = vand.u32 %v3660, 4294901760
    %v3903 = vsub.f32 %v3660, %v3902
    %v3904 = vand.u32 %v3903, 4294901760
    %v3905 = vsub.f32 %v3903, %v3904
    %v3906 = vand.u32 %v3905, 4294901760
    %3907 = vmatpush1.msra.mxu0 %v3906
    %3908 = vmatprep.subr.mxu0 0.0
    %v3909 = vand.u32 %v3659, 4294901760
    %v3910 = vsub.f32 %v3659, %v3909
    %v3911 = vand.u32 %v3910, 4294901760
    %v3912 = vsub.f32 %v3910, %v3911
    %v3913 = vand.u32 %v3912, 4294901760
    %3914 = vmatpush1.msra.mxu0 %v3913
    %3915 = vmatprep.subr.mxu0 0.0
    %v3916 = vand.u32 %v3658, 4294901760
    %v3917 = vsub.f32 %v3658, %v3916
    %v3918 = vand.u32 %v3917, 4294901760
    %v3919 = vsub.f32 %v3917, %v3918
    %v3920 = vand.u32 %v3919, 4294901760
    %3921 = vmatpush1.msra.mxu0 %v3920
    %3922 = vmatprep.subr.mxu0 0.0
    %v3923 = vand.u32 %v3657, 4294901760
    %v3924 = vsub.f32 %v3657, %v3923
    %v3925 = vand.u32 %v3924, 4294901760
    %v3926 = vsub.f32 %v3924, %v3925
    %v3927 = vand.u32 %v3926, 4294901760
    %3928 = vmatpush1.msra.mxu0 %v3927
    %3929 = vmatprep.subr.mxu0 0.0
    %v3930 = vand.u32 %v3656, 4294901760
    %v3931 = vsub.f32 %v3656, %v3930
    %v3932 = vand.u32 %v3931, 4294901760
    %v3933 = vsub.f32 %v3931, %v3932
    %v3934 = vand.u32 %v3933, 4294901760
    %3935 = vmatpush1.msra.mxu0 %v3934
    %3936 = vmatprep.subr.mxu0 0.0
    %v3937 = vand.u32 %v3655, 4294901760
    %v3938 = vsub.f32 %v3655, %v3937
    %v3939 = vand.u32 %v3938, 4294901760
    %v3940 = vsub.f32 %v3938, %v3939
    %v3941 = vand.u32 %v3940, 4294901760
    %3942 = vmatpush1.msra.mxu0 %v3941
    %3943 = vmatprep.subr.mxu0 0.0
    %v3944 = vand.u32 %v3654, 4294901760
    %v3945 = vsub.f32 %v3654, %v3944
    %v3946 = vand.u32 %v3945, 4294901760
    %v3947 = vsub.f32 %v3945, %v3946
    %v3948 = vand.u32 %v3947, 4294901760
    %3949 = vmatpush1.msra.mxu0 %v3948
    %3950 = vmatprep.subr.mxu0 0.0
    %v3951 = vand.u32 %v3653, 4294901760
    %v3952 = vsub.f32 %v3653, %v3951
    %v3953 = vand.u32 %v3952, 4294901760
    %v3954 = vsub.f32 %v3952, %v3953
    %v3955 = vand.u32 %v3954, 4294901760
    %3956 = vmatpush1.msra.mxu0 %v3955
    %3957 = vmatprep.subr.mxu0 0.0
    %v3958 = vand.u32 %v3652, 4294901760
    %v3959 = vsub.f32 %v3652, %v3958
    %v3960 = vand.u32 %v3959, 4294901760
    %v3961 = vsub.f32 %v3959, %v3960
    %v3962 = vand.u32 %v3961, 4294901760
    %3963 = vmatpush1.msra.mxu0 %v3962
    %3964 = vmatprep.subr.mxu0 0.0
    %v3965 = vand.u32 %v3651, 4294901760
    %v3966 = vsub.f32 %v3651, %v3965
    %v3967 = vand.u32 %v3966, 4294901760
    %v3968 = vsub.f32 %v3966, %v3967
    %v3969 = vand.u32 %v3968, 4294901760
    %3970 = vmatpush1.msra.mxu0 %v3969
    %3971 = vmatprep.subr.mxu0 0.0
    %v3972 = vand.u32 %v3650, 4294901760
    %v3973 = vsub.f32 %v3650, %v3972
    %v3974 = vand.u32 %v3973, 4294901760
    %v3975 = vsub.f32 %v3973, %v3974
    %v3976 = vand.u32 %v3975, 4294901760
    %3977 = vmatpush1.msra.mxu0 %v3976
    %3978 = vmatprep.subr.mxu0 0.0
    %v3979 = vand.u32 %v3649, 4294901760
    %v3980 = vsub.f32 %v3649, %v3979
    %v3981 = vand.u32 %v3980, 4294901760
    %v3982 = vsub.f32 %v3980, %v3981
    %v3983 = vand.u32 %v3982, 4294901760
    %3984 = vmatpush1.msra.mxu0 %v3983
    %3985 = vmatprep.subr.mxu0 0.0
    %v3986 = vand.u32 %v3648, 4294901760
    %v3987 = vsub.f32 %v3648, %v3986
    %v3988 = vand.u32 %v3987, 4294901760
    %v3989 = vsub.f32 %v3987, %v3988
    %v3990 = vand.u32 %v3989, 4294901760
    %3991 = vmatpush1.msra.mxu0 %v3990
    %3992 = vmatprep.subr.mxu0 0.0
    %v3993 = vand.u32 %v3647, 4294901760
    %v3994 = vsub.f32 %v3647, %v3993
    %v3995 = vand.u32 %v3994, 4294901760
    %v3996 = vsub.f32 %v3994, %v3995
    %v3997 = vand.u32 %v3996, 4294901760
    %3998 = vmatpush1.msra.mxu0 %v3997
    %3999 = vmatprep.subr.mxu0 0.0
    %v4000 = vand.u32 %v3678, 4294901760
    %v4001 = vsub.f32 %v3678, %v4000
    %v4002 = vand.u32 %v4001, 4294901760
    %v4003 = vsub.f32 %v4001, %v4002
    %v4004 = vand.u32 %v4003, 4294901760
    %4005 = vmatpush2.msra.mxu0 %v4004
    %4006 = vmatprep.subr.mxu0 0.0
    %v4007 = vand.u32 %v3677, 4294901760
    %v4008 = vsub.f32 %v3677, %v4007
    %v4009 = vand.u32 %v4008, 4294901760
    %v4010 = vsub.f32 %v4008, %v4009
    %v4011 = vand.u32 %v4010, 4294901760
    %4012 = vmatpush2.msra.mxu0 %v4011
    %4013 = vmatprep.subr.mxu0 0.0
    %v4014 = vand.u32 %v3676, 4294901760
    %v4015 = vsub.f32 %v3676, %v4014
    %v4016 = vand.u32 %v4015, 4294901760
    %v4017 = vsub.f32 %v4015, %v4016
    %v4018 = vand.u32 %v4017, 4294901760
    %4019 = vmatpush2.msra.mxu0 %v4018
    %4020 = vmatprep.subr.mxu0 0.0
    %v4021 = vand.u32 %v3675, 4294901760
    %v4022 = vsub.f32 %v3675, %v4021
    %v4023 = vand.u32 %v4022, 4294901760
    %v4024 = vsub.f32 %v4022, %v4023
    %v4025 = vand.u32 %v4024, 4294901760
    %4026 = vmatpush2.msra.mxu0 %v4025
    %4027 = vmatprep.subr.mxu0 0.0
    %v4028 = vand.u32 %v3674, 4294901760
    %v4029 = vsub.f32 %v3674, %v4028
    %v4030 = vand.u32 %v4029, 4294901760
    %v4031 = vsub.f32 %v4029, %v4030
    %v4032 = vand.u32 %v4031, 4294901760
    %4033 = vmatpush2.msra.mxu0 %v4032
    %4034 = vmatprep.subr.mxu0 0.0
    %v4035 = vand.u32 %v3673, 4294901760
    %v4036 = vsub.f32 %v3673, %v4035
    %v4037 = vand.u32 %v4036, 4294901760
    %v4038 = vsub.f32 %v4036, %v4037
    %v4039 = vand.u32 %v4038, 4294901760
    %4040 = vmatpush2.msra.mxu0 %v4039
    %4041 = vmatprep.subr.mxu0 0.0
    %v4042 = vand.u32 %v3672, 4294901760
    %v4043 = vsub.f32 %v3672, %v4042
    %v4044 = vand.u32 %v4043, 4294901760
    %v4045 = vsub.f32 %v4043, %v4044
    %v4046 = vand.u32 %v4045, 4294901760
    %4047 = vmatpush2.msra.mxu0 %v4046
    %4048 = vmatprep.subr.mxu0 0.0
    %v4049 = vand.u32 %v3671, 4294901760
    %v4050 = vsub.f32 %v3671, %v4049
    %v4051 = vand.u32 %v4050, 4294901760
    %v4052 = vsub.f32 %v4050, %v4051
    %v4053 = vand.u32 %v4052, 4294901760
    %4054 = vmatpush2.msra.mxu0 %v4053
    %4055 = vmatprep.subr.mxu0 0.0
    %v4056 = vand.u32 %v3670, 4294901760
    %v4057 = vsub.f32 %v3670, %v4056
    %v4058 = vand.u32 %v4057, 4294901760
    %v4059 = vsub.f32 %v4057, %v4058
    %v4060 = vand.u32 %v4059, 4294901760
    %4061 = vmatpush2.msra.mxu0 %v4060
    %4062 = vmatprep.subr.mxu0 0.0
    %v4063 = vand.u32 %v3669, 4294901760
    %v4064 = vsub.f32 %v3669, %v4063
    %v4065 = vand.u32 %v4064, 4294901760
    %v4066 = vsub.f32 %v4064, %v4065
    %v4067 = vand.u32 %v4066, 4294901760
    %4068 = vmatpush2.msra.mxu0 %v4067
    %4069 = vmatprep.subr.mxu0 0.0
    %v4070 = vand.u32 %v3668, 4294901760
    %v4071 = vsub.f32 %v3668, %v4070
    %v4072 = vand.u32 %v4071, 4294901760
    %v4073 = vsub.f32 %v4071, %v4072
    %v4074 = vand.u32 %v4073, 4294901760
    %4075 = vmatpush2.msra.mxu0 %v4074
    %4076 = vmatprep.subr.mxu0 0.0
    %v4077 = vand.u32 %v3667, 4294901760
    %v4078 = vsub.f32 %v3667, %v4077
    %v4079 = vand.u32 %v4078, 4294901760
    %v4080 = vsub.f32 %v4078, %v4079
    %v4081 = vand.u32 %v4080, 4294901760
    %4082 = vmatpush2.msra.mxu0 %v4081
    %4083 = vmatprep.subr.mxu0 0.0
    %v4084 = vand.u32 %v3666, 4294901760
    %v4085 = vsub.f32 %v3666, %v4084
    %v4086 = vand.u32 %v4085, 4294901760
    %v4087 = vsub.f32 %v4085, %v4086
    %v4088 = vand.u32 %v4087, 4294901760
    %4089 = vmatpush2.msra.mxu0 %v4088
    %4090 = vmatprep.subr.mxu0 0.0
    %v4091 = vand.u32 %v3665, 4294901760
    %v4092 = vsub.f32 %v3665, %v4091
    %v4093 = vand.u32 %v4092, 4294901760
    %v4094 = vsub.f32 %v4092, %v4093
    %v4095 = vand.u32 %v4094, 4294901760
    %4096 = vmatpush2.msra.mxu0 %v4095
    %4097 = vmatprep.subr.mxu0 0.0
    %v4098 = vand.u32 %v3664, 4294901760
    %v4099 = vsub.f32 %v3664, %v4098
    %v4100 = vand.u32 %v4099, 4294901760
    %v4101 = vsub.f32 %v4099, %v4100
    %v4102 = vand.u32 %v4101, 4294901760
    %4103 = vmatpush2.msra.mxu0 %v4102
    %4104 = vmatprep.subr.mxu0 0.0
    %v4105 = vand.u32 %v3663, 4294901760
    %v4106 = vsub.f32 %v3663, %v4105
    %v4107 = vand.u32 %v4106, 4294901760
    %v4108 = vsub.f32 %v4106, %v4107
    %v4109 = vand.u32 %v4108, 4294901760
    %4110 = vmatpush2.msra.mxu0 %v4109
    %v4111 = vand.u32 %v3640, 4294901760
    %4112 = vmatprep.mubr.f32.mxu0 %v4111
    %v4113 = vand.u32 %v3639, 4294901760
    %4114 = vmatmul.mubr.f32.gmra.mxu0 %v4113
    %v4115 = vpop.f32.mrf.mxu0
    %v4116 = vadd.f32 %v3884, %v4115
    %v4117 = vpop.f32.mrf.mxu0
    %4118 = vdwg.mxu0
    %4119 = vmatprep.subr.mxu0 0.0
    %v4120 = vand.u32 %v3662, 4294901760
    %v4121 = vsub.f32 %v3662, %v4120
    %4122 = vmatpush1.msra.mxu0 %v4121
    %4123 = vmatprep.subr.mxu0 0.0
    %v4124 = vand.u32 %v3661, 4294901760
    %v4125 = vsub.f32 %v3661, %v4124
    %4126 = vmatpush1.msra.mxu0 %v4125
    %4127 = vmatprep.subr.mxu0 0.0
    %v4128 = vand.u32 %v3660, 4294901760
    %v4129 = vsub.f32 %v3660, %v4128
    %4130 = vmatpush1.msra.mxu0 %v4129
    %4131 = vmatprep.subr.mxu0 0.0
    %v4132 = vand.u32 %v3659, 4294901760
    %v4133 = vsub.f32 %v3659, %v4132
    %4134 = vmatpush1.msra.mxu0 %v4133
    %4135 = vmatprep.subr.mxu0 0.0
    %v4136 = vand.u32 %v3658, 4294901760
    %v4137 = vsub.f32 %v3658, %v4136
    %4138 = vmatpush1.msra.mxu0 %v4137
    %4139 = vmatprep.subr.mxu0 0.0
    %v4140 = vand.u32 %v3657, 4294901760
    %v4141 = vsub.f32 %v3657, %v4140
    %4142 = vmatpush1.msra.mxu0 %v4141
    %4143 = vmatprep.subr.mxu0 0.0
    %v4144 = vand.u32 %v3656, 4294901760
    %v4145 = vsub.f32 %v3656, %v4144
    %4146 = vmatpush1.msra.mxu0 %v4145
    %4147 = vmatprep.subr.mxu0 0.0
    %v4148 = vand.u32 %v3655, 4294901760
    %v4149 = vsub.f32 %v3655, %v4148
    %4150 = vmatpush1.msra.mxu0 %v4149
    %4151 = vmatprep.subr.mxu0 0.0
    %v4152 = vand.u32 %v3654, 4294901760
    %v4153 = vsub.f32 %v3654, %v4152
    %4154 = vmatpush1.msra.mxu0 %v4153
    %4155 = vmatprep.subr.mxu0 0.0
    %v4156 = vand.u32 %v3653, 4294901760
    %v4157 = vsub.f32 %v3653, %v4156
    %4158 = vmatpush1.msra.mxu0 %v4157
    %4159 = vmatprep.subr.mxu0 0.0
    %v4160 = vand.u32 %v3652, 4294901760
    %v4161 = vsub.f32 %v3652, %v4160
    %4162 = vmatpush1.msra.mxu0 %v4161
    %4163 = vmatprep.subr.mxu0 0.0
    %v4164 = vand.u32 %v3651, 4294901760
    %v4165 = vsub.f32 %v3651, %v4164
    %4166 = vmatpush1.msra.mxu0 %v4165
    %4167 = vmatprep.subr.mxu0 0.0
    %v4168 = vand.u32 %v3650, 4294901760
    %v4169 = vsub.f32 %v3650, %v4168
    %4170 = vmatpush1.msra.mxu0 %v4169
    %4171 = vmatprep.subr.mxu0 0.0
    %v4172 = vand.u32 %v3649, 4294901760
    %v4173 = vsub.f32 %v3649, %v4172
    %4174 = vmatpush1.msra.mxu0 %v4173
    %4175 = vmatprep.subr.mxu0 0.0
    %v4176 = vand.u32 %v3648, 4294901760
    %v4177 = vsub.f32 %v3648, %v4176
    %4178 = vmatpush1.msra.mxu0 %v4177
    %4179 = vmatprep.subr.mxu0 0.0
    %v4180 = vand.u32 %v3647, 4294901760
    %v4181 = vsub.f32 %v3647, %v4180
    %4182 = vmatpush1.msra.mxu0 %v4181
    %4183 = vmatprep.subr.mxu0 0.0
    %v4184 = vand.u32 %v3678, 4294901760
    %v4185 = vsub.f32 %v3678, %v4184
    %4186 = vmatpush2.msra.mxu0 %v4185
    %4187 = vmatprep.subr.mxu0 0.0
    %v4188 = vand.u32 %v3677, 4294901760
    %v4189 = vsub.f32 %v3677, %v4188
    %4190 = vmatpush2.msra.mxu0 %v4189
    %4191 = vmatprep.subr.mxu0 0.0
    %v4192 = vand.u32 %v3676, 4294901760
    %v4193 = vsub.f32 %v3676, %v4192
    %4194 = vmatpush2.msra.mxu0 %v4193
    %4195 = vmatprep.subr.mxu0 0.0
    %v4196 = vand.u32 %v3675, 4294901760
    %v4197 = vsub.f32 %v3675, %v4196
    %4198 = vmatpush2.msra.mxu0 %v4197
    %4199 = vmatprep.subr.mxu0 0.0
    %v4200 = vand.u32 %v3674, 4294901760
    %v4201 = vsub.f32 %v3674, %v4200
    %4202 = vmatpush2.msra.mxu0 %v4201
    %4203 = vmatprep.subr.mxu0 0.0
    %v4204 = vand.u32 %v3673, 4294901760
    %v4205 = vsub.f32 %v3673, %v4204
    %4206 = vmatpush2.msra.mxu0 %v4205
    %4207 = vmatprep.subr.mxu0 0.0
    %v4208 = vand.u32 %v3672, 4294901760
    %v4209 = vsub.f32 %v3672, %v4208
    %4210 = vmatpush2.msra.mxu0 %v4209
    %4211 = vmatprep.subr.mxu0 0.0
    %v4212 = vand.u32 %v3671, 4294901760
    %v4213 = vsub.f32 %v3671, %v4212
    %4214 = vmatpush2.msra.mxu0 %v4213
    %4215 = vmatprep.subr.mxu0 0.0
    %v4216 = vand.u32 %v3670, 4294901760
    %v4217 = vsub.f32 %v3670, %v4216
    %4218 = vmatpush2.msra.mxu0 %v4217
    %4219 = vmatprep.subr.mxu0 0.0
    %v4220 = vand.u32 %v3669, 4294901760
    %v4221 = vsub.f32 %v3669, %v4220
    %4222 = vmatpush2.msra.mxu0 %v4221
    %4223 = vmatprep.subr.mxu0 0.0
    %v4224 = vand.u32 %v3668, 4294901760
    %v4225 = vsub.f32 %v3668, %v4224
    %4226 = vmatpush2.msra.mxu0 %v4225
    %4227 = vmatprep.subr.mxu0 0.0
    %v4228 = vand.u32 %v3667, 4294901760
    %v4229 = vsub.f32 %v3667, %v4228
    %4230 = vmatpush2.msra.mxu0 %v4229
    %4231 = vmatprep.subr.mxu0 0.0
    %v4232 = vand.u32 %v3666, 4294901760
    %v4233 = vsub.f32 %v3666, %v4232
    %4234 = vmatpush2.msra.mxu0 %v4233
    %4235 = vmatprep.subr.mxu0 0.0
    %v4236 = vand.u32 %v3665, 4294901760
    %v4237 = vsub.f32 %v3665, %v4236
    %4238 = vmatpush2.msra.mxu0 %v4237
    %4239 = vmatprep.subr.mxu0 0.0
    %v4240 = vand.u32 %v3664, 4294901760
    %v4241 = vsub.f32 %v3664, %v4240
    %4242 = vmatpush2.msra.mxu0 %v4241
    %4243 = vmatprep.subr.mxu0 0.0
    %v4244 = vand.u32 %v3663, 4294901760
    %v4245 = vsub.f32 %v3663, %v4244
    %4246 = vmatpush2.msra.mxu0 %v4245
    %v4247 = vand.u32 %v3640, 4294901760
    %v4248 = vsub.f32 %v3640, %v4247
    %4249 = vmatprep.mubr.f32.mxu0 %v4248
    %v4250 = vand.u32 %v3639, 4294901760
    %v4251 = vsub.f32 %v3639, %v4250
    %4252 = vmatmul.mubr.f32.gmra.mxu0 %v4251
    %v4253 = vpop.f32.mrf.mxu0
    %v4254 = vadd.f32 %v4116, %v4253
    %v4255 = vpop.f32.mrf.mxu0
    %4256 = vdwg.mxu0
    %4257 = vmatprep.subr.mxu0 0.0
    %v4258 = vand.u32 %v3662, 4294901760
    %4259 = vmatpush1.msra.mxu0 %v4258
    %4260 = vmatprep.subr.mxu0 0.0
    %v4261 = vand.u32 %v3661, 4294901760
    %4262 = vmatpush1.msra.mxu0 %v4261
    %4263 = vmatprep.subr.mxu0 0.0
    %v4264 = vand.u32 %v3660, 4294901760
    %4265 = vmatpush1.msra.mxu0 %v4264
    %4266 = vmatprep.subr.mxu0 0.0
    %v4267 = vand.u32 %v3659, 4294901760
    %4268 = vmatpush1.msra.mxu0 %v4267
    %4269 = vmatprep.subr.mxu0 0.0
    %v4270 = vand.u32 %v3658, 4294901760
    %4271 = vmatpush1.msra.mxu0 %v4270
    %4272 = vmatprep.subr.mxu0 0.0
    %v4273 = vand.u32 %v3657, 4294901760
    %4274 = vmatpush1.msra.mxu0 %v4273
    %4275 = vmatprep.subr.mxu0 0.0
    %v4276 = vand.u32 %v3656, 4294901760
    %4277 = vmatpush1.msra.mxu0 %v4276
    %4278 = vmatprep.subr.mxu0 0.0
    %v4279 = vand.u32 %v3655, 4294901760
    %4280 = vmatpush1.msra.mxu0 %v4279
    %4281 = vmatprep.subr.mxu0 0.0
    %v4282 = vand.u32 %v3654, 4294901760
    %4283 = vmatpush1.msra.mxu0 %v4282
    %4284 = vmatprep.subr.mxu0 0.0
    %v4285 = vand.u32 %v3653, 4294901760
    %4286 = vmatpush1.msra.mxu0 %v4285
    %4287 = vmatprep.subr.mxu0 0.0
    %v4288 = vand.u32 %v3652, 4294901760
    %4289 = vmatpush1.msra.mxu0 %v4288
    %4290 = vmatprep.subr.mxu0 0.0
    %v4291 = vand.u32 %v3651, 4294901760
    %4292 = vmatpush1.msra.mxu0 %v4291
    %4293 = vmatprep.subr.mxu0 0.0
    %v4294 = vand.u32 %v3650, 4294901760
    %4295 = vmatpush1.msra.mxu0 %v4294
    %4296 = vmatprep.subr.mxu0 0.0
    %v4297 = vand.u32 %v3649, 4294901760
    %4298 = vmatpush1.msra.mxu0 %v4297
    %4299 = vmatprep.subr.mxu0 0.0
    %v4300 = vand.u32 %v3648, 4294901760
    %4301 = vmatpush1.msra.mxu0 %v4300
    %4302 = vmatprep.subr.mxu0 0.0
    %v4303 = vand.u32 %v3647, 4294901760
    %4304 = vmatpush1.msra.mxu0 %v4303
    %4305 = vmatprep.subr.mxu0 0.0
    %v4306 = vand.u32 %v3678, 4294901760
    %4307 = vmatpush2.msra.mxu0 %v4306
    %4308 = vmatprep.subr.mxu0 0.0
    %v4309 = vand.u32 %v3677, 4294901760
    %4310 = vmatpush2.msra.mxu0 %v4309
    %4311 = vmatprep.subr.mxu0 0.0
    %v4312 = vand.u32 %v3676, 4294901760
    %4313 = vmatpush2.msra.mxu0 %v4312
    %4314 = vmatprep.subr.mxu0 0.0
    %v4315 = vand.u32 %v3675, 4294901760
    %4316 = vmatpush2.msra.mxu0 %v4315
    %4317 = vmatprep.subr.mxu0 0.0
    %v4318 = vand.u32 %v3674, 4294901760
    %4319 = vmatpush2.msra.mxu0 %v4318
    %4320 = vmatprep.subr.mxu0 0.0
    %v4321 = vand.u32 %v3673, 4294901760
    %4322 = vmatpush2.msra.mxu0 %v4321
    %4323 = vmatprep.subr.mxu0 0.0
    %v4324 = vand.u32 %v3672, 4294901760
    %4325 = vmatpush2.msra.mxu0 %v4324
    %4326 = vmatprep.subr.mxu0 0.0
    %v4327 = vand.u32 %v3671, 4294901760
    %4328 = vmatpush2.msra.mxu0 %v4327
    %4329 = vmatprep.subr.mxu0 0.0
    %v4330 = vand.u32 %v3670, 4294901760
    %4331 = vmatpush2.msra.mxu0 %v4330
    %4332 = vmatprep.subr.mxu0 0.0
    %v4333 = vand.u32 %v3669, 4294901760
    %4334 = vmatpush2.msra.mxu0 %v4333
    %4335 = vmatprep.subr.mxu0 0.0
    %v4336 = vand.u32 %v3668, 4294901760
    %4337 = vmatpush2.msra.mxu0 %v4336
    %4338 = vmatprep.subr.mxu0 0.0
    %v4339 = vand.u32 %v3667, 4294901760
    %4340 = vmatpush2.msra.mxu0 %v4339
    %4341 = vmatprep.subr.mxu0 0.0
    %v4342 = vand.u32 %v3666, 4294901760
    %4343 = vmatpush2.msra.mxu0 %v4342
    %4344 = vmatprep.subr.mxu0 0.0
    %v4345 = vand.u32 %v3665, 4294901760
    %4346 = vmatpush2.msra.mxu0 %v4345
    %4347 = vmatprep.subr.mxu0 0.0
    %v4348 = vand.u32 %v3664, 4294901760
    %4349 = vmatpush2.msra.mxu0 %v4348
    %4350 = vmatprep.subr.mxu0 0.0
    %v4351 = vand.u32 %v3663, 4294901760
    %4352 = vmatpush2.msra.mxu0 %v4351
    %v4353 = vand.u32 %v3640, 4294901760
    %v4354 = vsub.f32 %v3640, %v4353
    %v4355 = vand.u32 %v4354, 4294901760
    %4356 = vmatprep.mubr.f32.mxu0 %v4355
    %v4357 = vand.u32 %v3639, 4294901760
    %v4358 = vsub.f32 %v3639, %v4357
    %v4359 = vand.u32 %v4358, 4294901760
    %4360 = vmatmul.mubr.f32.gmra.mxu0 %v4359
    %v4361 = vpop.f32.mrf.mxu0
    %v4362 = vadd.f32 %v4254, %v4361
    %v4363 = vpop.f32.mrf.mxu0
    %4364 = vdwg.mxu0
    %4365 = vmatprep.subr.mxu0 0.0
    %v4366 = vand.u32 %v3662, 4294901760
    %v4367 = vsub.f32 %v3662, %v4366
    %v4368 = vand.u32 %v4367, 4294901760
    %4369 = vmatpush1.msra.mxu0 %v4368
    %4370 = vmatprep.subr.mxu0 0.0
    %v4371 = vand.u32 %v3661, 4294901760
    %v4372 = vsub.f32 %v3661, %v4371
    %v4373 = vand.u32 %v4372, 4294901760
    %4374 = vmatpush1.msra.mxu0 %v4373
    %4375 = vmatprep.subr.mxu0 0.0
    %v4376 = vand.u32 %v3660, 4294901760
    %v4377 = vsub.f32 %v3660, %v4376
    %v4378 = vand.u32 %v4377, 4294901760
    %4379 = vmatpush1.msra.mxu0 %v4378
    %4380 = vmatprep.subr.mxu0 0.0
    %v4381 = vand.u32 %v3659, 4294901760
    %v4382 = vsub.f32 %v3659, %v4381
    %v4383 = vand.u32 %v4382, 4294901760
    %4384 = vmatpush1.msra.mxu0 %v4383
    %4385 = vmatprep.subr.mxu0 0.0
    %v4386 = vand.u32 %v3658, 4294901760
    %v4387 = vsub.f32 %v3658, %v4386
    %v4388 = vand.u32 %v4387, 4294901760
    %4389 = vmatpush1.msra.mxu0 %v4388
    %4390 = vmatprep.subr.mxu0 0.0
    %v4391 = vand.u32 %v3657, 4294901760
    %v4392 = vsub.f32 %v3657, %v4391
    %v4393 = vand.u32 %v4392, 4294901760
    %4394 = vmatpush1.msra.mxu0 %v4393
    %4395 = vmatprep.subr.mxu0 0.0
    %v4396 = vand.u32 %v3656, 4294901760
    %v4397 = vsub.f32 %v3656, %v4396
    %v4398 = vand.u32 %v4397, 4294901760
    %4399 = vmatpush1.msra.mxu0 %v4398
    %4400 = vmatprep.subr.mxu0 0.0
    %v4401 = vand.u32 %v3655, 4294901760
    %v4402 = vsub.f32 %v3655, %v4401
    %v4403 = vand.u32 %v4402, 4294901760
    %4404 = vmatpush1.msra.mxu0 %v4403
    %4405 = vmatprep.subr.mxu0 0.0
    %v4406 = vand.u32 %v3654, 4294901760
    %v4407 = vsub.f32 %v3654, %v4406
    %v4408 = vand.u32 %v4407, 4294901760
    %4409 = vmatpush1.msra.mxu0 %v4408
    %4410 = vmatprep.subr.mxu0 0.0
    %v4411 = vand.u32 %v3653, 4294901760
    %v4412 = vsub.f32 %v3653, %v4411
    %v4413 = vand.u32 %v4412, 4294901760
    %4414 = vmatpush1.msra.mxu0 %v4413
    %4415 = vmatprep.subr.mxu0 0.0
    %v4416 = vand.u32 %v3652, 4294901760
    %v4417 = vsub.f32 %v3652, %v4416
    %v4418 = vand.u32 %v4417, 4294901760
    %4419 = vmatpush1.msra.mxu0 %v4418
    %4420 = vmatprep.subr.mxu0 0.0
    %v4421 = vand.u32 %v3651, 4294901760
    %v4422 = vsub.f32 %v3651, %v4421
    %v4423 = vand.u32 %v4422, 4294901760
    %4424 = vmatpush1.msra.mxu0 %v4423
    %4425 = vmatprep.subr.mxu0 0.0
    %v4426 = vand.u32 %v3650, 4294901760
    %v4427 = vsub.f32 %v3650, %v4426
    %v4428 = vand.u32 %v4427, 4294901760
    %4429 = vmatpush1.msra.mxu0 %v4428
    %4430 = vmatprep.subr.mxu0 0.0
    %v4431 = vand.u32 %v3649, 4294901760
    %v4432 = vsub.f32 %v3649, %v4431
    %v4433 = vand.u32 %v4432, 4294901760
    %4434 = vmatpush1.msra.mxu0 %v4433
    %4435 = vmatprep.subr.mxu0 0.0
    %v4436 = vand.u32 %v3648, 4294901760
    %v4437 = vsub.f32 %v3648, %v4436
    %v4438 = vand.u32 %v4437, 4294901760
    %4439 = vmatpush1.msra.mxu0 %v4438
    %4440 = vmatprep.subr.mxu0 0.0
    %v4441 = vand.u32 %v3647, 4294901760
    %v4442 = vsub.f32 %v3647, %v4441
    %v4443 = vand.u32 %v4442, 4294901760
    %4444 = vmatpush1.msra.mxu0 %v4443
    %4445 = vmatprep.subr.mxu0 0.0
    %v4446 = vand.u32 %v3678, 4294901760
    %v4447 = vsub.f32 %v3678, %v4446
    %v4448 = vand.u32 %v4447, 4294901760
    %4449 = vmatpush2.msra.mxu0 %v4448
    %4450 = vmatprep.subr.mxu0 0.0
    %v4451 = vand.u32 %v3677, 4294901760
    %v4452 = vsub.f32 %v3677, %v4451
    %v4453 = vand.u32 %v4452, 4294901760
    %4454 = vmatpush2.msra.mxu0 %v4453
    %4455 = vmatprep.subr.mxu0 0.0
    %v4456 = vand.u32 %v3676, 4294901760
    %v4457 = vsub.f32 %v3676, %v4456
    %v4458 = vand.u32 %v4457, 4294901760
    %4459 = vmatpush2.msra.mxu0 %v4458
    %4460 = vmatprep.subr.mxu0 0.0
    %v4461 = vand.u32 %v3675, 4294901760
    %v4462 = vsub.f32 %v3675, %v4461
    %v4463 = vand.u32 %v4462, 4294901760
    %4464 = vmatpush2.msra.mxu0 %v4463
    %4465 = vmatprep.subr.mxu0 0.0
    %v4466 = vand.u32 %v3674, 4294901760
    %v4467 = vsub.f32 %v3674, %v4466
    %v4468 = vand.u32 %v4467, 4294901760
    %4469 = vmatpush2.msra.mxu0 %v4468
    %4470 = vmatprep.subr.mxu0 0.0
    %v4471 = vand.u32 %v3673, 4294901760
    %v4472 = vsub.f32 %v3673, %v4471
    %v4473 = vand.u32 %v4472, 4294901760
    %4474 = vmatpush2.msra.mxu0 %v4473
    %4475 = vmatprep.subr.mxu0 0.0
    %v4476 = vand.u32 %v3672, 4294901760
    %v4477 = vsub.f32 %v3672, %v4476
    %v4478 = vand.u32 %v4477, 4294901760
    %4479 = vmatpush2.msra.mxu0 %v4478
    %4480 = vmatprep.subr.mxu0 0.0
    %v4481 = vand.u32 %v3671, 4294901760
    %v4482 = vsub.f32 %v3671, %v4481
    %v4483 = vand.u32 %v4482, 4294901760
    %4484 = vmatpush2.msra.mxu0 %v4483
    %4485 = vmatprep.subr.mxu0 0.0
    %v4486 = vand.u32 %v3670, 4294901760
    %v4487 = vsub.f32 %v3670, %v4486
    %v4488 = vand.u32 %v4487, 4294901760
    %4489 = vmatpush2.msra.mxu0 %v4488
    %4490 = vmatprep.subr.mxu0 0.0
    %v4491 = vand.u32 %v3669, 4294901760
    %v4492 = vsub.f32 %v3669, %v4491
    %v4493 = vand.u32 %v4492, 4294901760
    %4494 = vmatpush2.msra.mxu0 %v4493
    %4495 = vmatprep.subr.mxu0 0.0
    %v4496 = vand.u32 %v3668, 4294901760
    %v4497 = vsub.f32 %v3668, %v4496
    %v4498 = vand.u32 %v4497, 4294901760
    %4499 = vmatpush2.msra.mxu0 %v4498
    %4500 = vmatprep.subr.mxu0 0.0
    %v4501 = vand.u32 %v3667, 4294901760
    %v4502 = vsub.f32 %v3667, %v4501
    %v4503 = vand.u32 %v4502, 4294901760
    %4504 = vmatpush2.msra.mxu0 %v4503
    %4505 = vmatprep.subr.mxu0 0.0
    %v4506 = vand.u32 %v3666, 4294901760
    %v4507 = vsub.f32 %v3666, %v4506
    %v4508 = vand.u32 %v4507, 4294901760
    %4509 = vmatpush2.msra.mxu0 %v4508
    %4510 = vmatprep.subr.mxu0 0.0
    %v4511 = vand.u32 %v3665, 4294901760
    %v4512 = vsub.f32 %v3665, %v4511
    %v4513 = vand.u32 %v4512, 4294901760
    %4514 = vmatpush2.msra.mxu0 %v4513
    %4515 = vmatprep.subr.mxu0 0.0
    %v4516 = vand.u32 %v3664, 4294901760
    %v4517 = vsub.f32 %v3664, %v4516
    %v4518 = vand.u32 %v4517, 4294901760
    %4519 = vmatpush2.msra.mxu0 %v4518
    %4520 = vmatprep.subr.mxu0 0.0
    %v4521 = vand.u32 %v3663, 4294901760
    %v4522 = vsub.f32 %v3663, %v4521
    %v4523 = vand.u32 %v4522, 4294901760
    %4524 = vmatpush2.msra.mxu0 %v4523
    %v4525 = vand.u32 %v3640, 4294901760
    %4526 = vmatprep.mubr.f32.mxu0 %v4525
    %v4527 = vand.u32 %v3639, 4294901760
    %4528 = vmatmul.mubr.f32.gmra.mxu0 %v4527
    %v4529 = vpop.f32.mrf.mxu0
    %v4530 = vadd.f32 %v4362, %v4529
    %v4531 = vpop.f32.mrf.mxu0
    %4532 = vdwg.mxu0
    %4533 = vmatprep.subr.mxu0 0.0
    %v4534 = vand.u32 %v3662, 4294901760
    %4535 = vmatpush1.msra.mxu0 %v4534
    %4536 = vmatprep.subr.mxu0 0.0
    %v4537 = vand.u32 %v3661, 4294901760
    %4538 = vmatpush1.msra.mxu0 %v4537
    %4539 = vmatprep.subr.mxu0 0.0
    %v4540 = vand.u32 %v3660, 4294901760
    %4541 = vmatpush1.msra.mxu0 %v4540
    %4542 = vmatprep.subr.mxu0 0.0
    %v4543 = vand.u32 %v3659, 4294901760
    %4544 = vmatpush1.msra.mxu0 %v4543
    %4545 = vmatprep.subr.mxu0 0.0
    %v4546 = vand.u32 %v3658, 4294901760
    %4547 = vmatpush1.msra.mxu0 %v4546
    %4548 = vmatprep.subr.mxu0 0.0
    %v4549 = vand.u32 %v3657, 4294901760
    %4550 = vmatpush1.msra.mxu0 %v4549
    %4551 = vmatprep.subr.mxu0 0.0
    %v4552 = vand.u32 %v3656, 4294901760
    %4553 = vmatpush1.msra.mxu0 %v4552
    %4554 = vmatprep.subr.mxu0 0.0
    %v4555 = vand.u32 %v3655, 4294901760
    %4556 = vmatpush1.msra.mxu0 %v4555
    %4557 = vmatprep.subr.mxu0 0.0
    %v4558 = vand.u32 %v3654, 4294901760
    %4559 = vmatpush1.msra.mxu0 %v4558
    %4560 = vmatprep.subr.mxu0 0.0
    %v4561 = vand.u32 %v3653, 4294901760
    %4562 = vmatpush1.msra.mxu0 %v4561
    %4563 = vmatprep.subr.mxu0 0.0
    %v4564 = vand.u32 %v3652, 4294901760
    %4565 = vmatpush1.msra.mxu0 %v4564
    %4566 = vmatprep.subr.mxu0 0.0
    %v4567 = vand.u32 %v3651, 4294901760
    %4568 = vmatpush1.msra.mxu0 %v4567
    %4569 = vmatprep.subr.mxu0 0.0
    %v4570 = vand.u32 %v3650, 4294901760
    %4571 = vmatpush1.msra.mxu0 %v4570
    %4572 = vmatprep.subr.mxu0 0.0
    %v4573 = vand.u32 %v3649, 4294901760
    %4574 = vmatpush1.msra.mxu0 %v4573
    %4575 = vmatprep.subr.mxu0 0.0
    %v4576 = vand.u32 %v3648, 4294901760
    %4577 = vmatpush1.msra.mxu0 %v4576
    %4578 = vmatprep.subr.mxu0 0.0
    %v4579 = vand.u32 %v3647, 4294901760
    %4580 = vmatpush1.msra.mxu0 %v4579
    %4581 = vmatprep.subr.mxu0 0.0
    %v4582 = vand.u32 %v3678, 4294901760
    %4583 = vmatpush2.msra.mxu0 %v4582
    %4584 = vmatprep.subr.mxu0 0.0
    %v4585 = vand.u32 %v3677, 4294901760
    %4586 = vmatpush2.msra.mxu0 %v4585
    %4587 = vmatprep.subr.mxu0 0.0
    %v4588 = vand.u32 %v3676, 4294901760
    %4589 = vmatpush2.msra.mxu0 %v4588
    %4590 = vmatprep.subr.mxu0 0.0
    %v4591 = vand.u32 %v3675, 4294901760
    %4592 = vmatpush2.msra.mxu0 %v4591
    %4593 = vmatprep.subr.mxu0 0.0
    %v4594 = vand.u32 %v3674, 4294901760
    %4595 = vmatpush2.msra.mxu0 %v4594
    %4596 = vmatprep.subr.mxu0 0.0
    %v4597 = vand.u32 %v3673, 4294901760
    %4598 = vmatpush2.msra.mxu0 %v4597
    %4599 = vmatprep.subr.mxu0 0.0
    %v4600 = vand.u32 %v3672, 4294901760
    %4601 = vmatpush2.msra.mxu0 %v4600
    %4602 = vmatprep.subr.mxu0 0.0
    %v4603 = vand.u32 %v3671, 4294901760
    %4604 = vmatpush2.msra.mxu0 %v4603
    %4605 = vmatprep.subr.mxu0 0.0
    %v4606 = vand.u32 %v3670, 4294901760
    %4607 = vmatpush2.msra.mxu0 %v4606
    %4608 = vmatprep.subr.mxu0 0.0
    %v4609 = vand.u32 %v3669, 4294901760
    %4610 = vmatpush2.msra.mxu0 %v4609
    %4611 = vmatprep.subr.mxu0 0.0
    %v4612 = vand.u32 %v3668, 4294901760
    %4613 = vmatpush2.msra.mxu0 %v4612
    %4614 = vmatprep.subr.mxu0 0.0
    %v4615 = vand.u32 %v3667, 4294901760
    %4616 = vmatpush2.msra.mxu0 %v4615
    %4617 = vmatprep.subr.mxu0 0.0
    %v4618 = vand.u32 %v3666, 4294901760
    %4619 = vmatpush2.msra.mxu0 %v4618
    %4620 = vmatprep.subr.mxu0 0.0
    %v4621 = vand.u32 %v3665, 4294901760
    %4622 = vmatpush2.msra.mxu0 %v4621
    %4623 = vmatprep.subr.mxu0 0.0
    %v4624 = vand.u32 %v3664, 4294901760
    %4625 = vmatpush2.msra.mxu0 %v4624
    %4626 = vmatprep.subr.mxu0 0.0
    %v4627 = vand.u32 %v3663, 4294901760
    %4628 = vmatpush2.msra.mxu0 %v4627
    %v4629 = vand.u32 %v3640, 4294901760
    %4630 = vmatprep.mubr.f32.mxu0 %v4629
    %v4631 = vand.u32 %v3639, 4294901760
    %4632 = vmatmul.mubr.f32.gmra.mxu0 %v4631
    %v4633 = vpop.f32.mrf.mxu0
    %v4634 = vadd.f32 %v4530, %v4633
    %v4635 = vpop.f32.mrf.mxu0
    %4636 = vdwg.mxu0
    %4637 = vmatprep.subr.mxu0 0.0
    %v4638 = vand.u32 %v3694, 4294901760
    %4639 = vmatpush1.msra.mxu0 %v4638
    %4640 = vmatprep.subr.mxu0 0.0
    %v4641 = vand.u32 %v3693, 4294901760
    %4642 = vmatpush1.msra.mxu0 %v4641
    %4643 = vmatprep.subr.mxu0 0.0
    %v4644 = vand.u32 %v3692, 4294901760
    %4645 = vmatpush1.msra.mxu0 %v4644
    %4646 = vmatprep.subr.mxu0 0.0
    %v4647 = vand.u32 %v3691, 4294901760
    %4648 = vmatpush1.msra.mxu0 %v4647
    %4649 = vmatprep.subr.mxu0 0.0
    %v4650 = vand.u32 %v3690, 4294901760
    %4651 = vmatpush1.msra.mxu0 %v4650
    %4652 = vmatprep.subr.mxu0 0.0
    %v4653 = vand.u32 %v3689, 4294901760
    %4654 = vmatpush1.msra.mxu0 %v4653
    %4655 = vmatprep.subr.mxu0 0.0
    %v4656 = vand.u32 %v3688, 4294901760
    %4657 = vmatpush1.msra.mxu0 %v4656
    %4658 = vmatprep.subr.mxu0 0.0
    %v4659 = vand.u32 %v3687, 4294901760
    %4660 = vmatpush1.msra.mxu0 %v4659
    %4661 = vmatprep.subr.mxu0 0.0
    %v4662 = vand.u32 %v3686, 4294901760
    %4663 = vmatpush1.msra.mxu0 %v4662
    %4664 = vmatprep.subr.mxu0 0.0
    %v4665 = vand.u32 %v3685, 4294901760
    %4666 = vmatpush1.msra.mxu0 %v4665
    %4667 = vmatprep.subr.mxu0 0.0
    %v4668 = vand.u32 %v3684, 4294901760
    %4669 = vmatpush1.msra.mxu0 %v4668
    %4670 = vmatprep.subr.mxu0 0.0
    %v4671 = vand.u32 %v3683, 4294901760
    %4672 = vmatpush1.msra.mxu0 %v4671
    %4673 = vmatprep.subr.mxu0 0.0
    %v4674 = vand.u32 %v3682, 4294901760
    %4675 = vmatpush1.msra.mxu0 %v4674
    %4676 = vmatprep.subr.mxu0 0.0
    %v4677 = vand.u32 %v3681, 4294901760
    %4678 = vmatpush1.msra.mxu0 %v4677
    %4679 = vmatprep.subr.mxu0 0.0
    %v4680 = vand.u32 %v3680, 4294901760
    %4681 = vmatpush1.msra.mxu0 %v4680
    %4682 = vmatprep.subr.mxu0 0.0
    %v4683 = vand.u32 %v3679, 4294901760
    %4684 = vmatpush1.msra.mxu0 %v4683
    %4685 = vmatprep.subr.mxu0 0.0
    %v4686 = vand.u32 %v3710, 4294901760
    %4687 = vmatpush2.msra.mxu0 %v4686
    %4688 = vmatprep.subr.mxu0 0.0
    %v4689 = vand.u32 %v3709, 4294901760
    %4690 = vmatpush2.msra.mxu0 %v4689
    %4691 = vmatprep.subr.mxu0 0.0
    %v4692 = vand.u32 %v3708, 4294901760
    %4693 = vmatpush2.msra.mxu0 %v4692
    %4694 = vmatprep.subr.mxu0 0.0
    %v4695 = vand.u32 %v3707, 4294901760
    %4696 = vmatpush2.msra.mxu0 %v4695
    %4697 = vmatprep.subr.mxu0 0.0
    %v4698 = vand.u32 %v3706, 4294901760
    %4699 = vmatpush2.msra.mxu0 %v4698
    %4700 = vmatprep.subr.mxu0 0.0
    %v4701 = vand.u32 %v3705, 4294901760
    %4702 = vmatpush2.msra.mxu0 %v4701
    %4703 = vmatprep.subr.mxu0 0.0
    %v4704 = vand.u32 %v3704, 4294901760
    %4705 = vmatpush2.msra.mxu0 %v4704
    %4706 = vmatprep.subr.mxu0 0.0
    %v4707 = vand.u32 %v3703, 4294901760
    %4708 = vmatpush2.msra.mxu0 %v4707
    %4709 = vmatprep.subr.mxu0 0.0
    %v4710 = vand.u32 %v3702, 4294901760
    %4711 = vmatpush2.msra.mxu0 %v4710
    %4712 = vmatprep.subr.mxu0 0.0
    %v4713 = vand.u32 %v3701, 4294901760
    %4714 = vmatpush2.msra.mxu0 %v4713
    %4715 = vmatprep.subr.mxu0 0.0
    %v4716 = vand.u32 %v3700, 4294901760
    %4717 = vmatpush2.msra.mxu0 %v4716
    %4718 = vmatprep.subr.mxu0 0.0
    %v4719 = vand.u32 %v3699, 4294901760
    %4720 = vmatpush2.msra.mxu0 %v4719
    %4721 = vmatprep.subr.mxu0 0.0
    %v4722 = vand.u32 %v3698, 4294901760
    %4723 = vmatpush2.msra.mxu0 %v4722
    %4724 = vmatprep.subr.mxu0 0.0
    %v4725 = vand.u32 %v3697, 4294901760
    %4726 = vmatpush2.msra.mxu0 %v4725
    %4727 = vmatprep.subr.mxu0 0.0
    %v4728 = vand.u32 %v3696, 4294901760
    %4729 = vmatpush2.msra.mxu0 %v4728
    %4730 = vmatprep.subr.mxu0 0.0
    %v4731 = vand.u32 %v3695, 4294901760
    %4732 = vmatpush2.msra.mxu0 %v4731
    %v4733 = vand.u32 %v3642, 4294901760
    %v4734 = vsub.f32 %v3642, %v4733
    %v4735 = vand.u32 %v4734, 4294901760
    %v4736 = vsub.f32 %v4734, %v4735
    %v4737 = vand.u32 %v4736, 4294901760
    %4738 = vmatprep.mubr.f32.mxu0 %v4737
    %v4739 = vand.u32 %v3641, 4294901760
    %v4740 = vsub.f32 %v3641, %v4739
    %v4741 = vand.u32 %v4740, 4294901760
    %v4742 = vsub.f32 %v4740, %v4741
    %v4743 = vand.u32 %v4742, 4294901760
    %4744 = vmatmul.mubr.f32.gmra.mxu0 %v4743
    %v4745 = vpop.f32.mrf.mxu0
    %v4746 = vadd.f32 %v4634, %v4745
    %v4747 = vpop.f32.mrf.mxu0
    %4748 = vdwg.mxu0
    %4749 = vmatprep.subr.mxu0 0.0
    %v4750 = vand.u32 %v3694, 4294901760
    %v4751 = vsub.f32 %v3694, %v4750
    %v4752 = vand.u32 %v4751, 4294901760
    %v4753 = vsub.f32 %v4751, %v4752
    %v4754 = vand.u32 %v4753, 4294901760
    %4755 = vmatpush1.msra.mxu0 %v4754
    %4756 = vmatprep.subr.mxu0 0.0
    %v4757 = vand.u32 %v3693, 4294901760
    %v4758 = vsub.f32 %v3693, %v4757
    %v4759 = vand.u32 %v4758, 4294901760
    %v4760 = vsub.f32 %v4758, %v4759
    %v4761 = vand.u32 %v4760, 4294901760
    %4762 = vmatpush1.msra.mxu0 %v4761
    %4763 = vmatprep.subr.mxu0 0.0
    %v4764 = vand.u32 %v3692, 4294901760
    %v4765 = vsub.f32 %v3692, %v4764
    %v4766 = vand.u32 %v4765, 4294901760
    %v4767 = vsub.f32 %v4765, %v4766
    %v4768 = vand.u32 %v4767, 4294901760
    %4769 = vmatpush1.msra.mxu0 %v4768
    %4770 = vmatprep.subr.mxu0 0.0
    %v4771 = vand.u32 %v3691, 4294901760
    %v4772 = vsub.f32 %v3691, %v4771
    %v4773 = vand.u32 %v4772, 4294901760
    %v4774 = vsub.f32 %v4772, %v4773
    %v4775 = vand.u32 %v4774, 4294901760
    %4776 = vmatpush1.msra.mxu0 %v4775
    %4777 = vmatprep.subr.mxu0 0.0
    %v4778 = vand.u32 %v3690, 4294901760
    %v4779 = vsub.f32 %v3690, %v4778
    %v4780 = vand.u32 %v4779, 4294901760
    %v4781 = vsub.f32 %v4779, %v4780
    %v4782 = vand.u32 %v4781, 4294901760
    %4783 = vmatpush1.msra.mxu0 %v4782
    %4784 = vmatprep.subr.mxu0 0.0
    %v4785 = vand.u32 %v3689, 4294901760
    %v4786 = vsub.f32 %v3689, %v4785
    %v4787 = vand.u32 %v4786, 4294901760
    %v4788 = vsub.f32 %v4786, %v4787
    %v4789 = vand.u32 %v4788, 4294901760
    %4790 = vmatpush1.msra.mxu0 %v4789
    %4791 = vmatprep.subr.mxu0 0.0
    %v4792 = vand.u32 %v3688, 4294901760
    %v4793 = vsub.f32 %v3688, %v4792
    %v4794 = vand.u32 %v4793, 4294901760
    %v4795 = vsub.f32 %v4793, %v4794
    %v4796 = vand.u32 %v4795, 4294901760
    %4797 = vmatpush1.msra.mxu0 %v4796
    %4798 = vmatprep.subr.mxu0 0.0
    %v4799 = vand.u32 %v3687, 4294901760
    %v4800 = vsub.f32 %v3687, %v4799
    %v4801 = vand.u32 %v4800, 4294901760
    %v4802 = vsub.f32 %v4800, %v4801
    %v4803 = vand.u32 %v4802, 4294901760
    %4804 = vmatpush1.msra.mxu0 %v4803
    %4805 = vmatprep.subr.mxu0 0.0
    %v4806 = vand.u32 %v3686, 4294901760
    %v4807 = vsub.f32 %v3686, %v4806
    %v4808 = vand.u32 %v4807, 4294901760
    %v4809 = vsub.f32 %v4807, %v4808
    %v4810 = vand.u32 %v4809, 4294901760
    %4811 = vmatpush1.msra.mxu0 %v4810
    %4812 = vmatprep.subr.mxu0 0.0
    %v4813 = vand.u32 %v3685, 4294901760
    %v4814 = vsub.f32 %v3685, %v4813
    %v4815 = vand.u32 %v4814, 4294901760
    %v4816 = vsub.f32 %v4814, %v4815
    %v4817 = vand.u32 %v4816, 4294901760
    %4818 = vmatpush1.msra.mxu0 %v4817
    %4819 = vmatprep.subr.mxu0 0.0
    %v4820 = vand.u32 %v3684, 4294901760
    %v4821 = vsub.f32 %v3684, %v4820
    %v4822 = vand.u32 %v4821, 4294901760
    %v4823 = vsub.f32 %v4821, %v4822
    %v4824 = vand.u32 %v4823, 4294901760
    %4825 = vmatpush1.msra.mxu0 %v4824
    %4826 = vmatprep.subr.mxu0 0.0
    %v4827 = vand.u32 %v3683, 4294901760
    %v4828 = vsub.f32 %v3683, %v4827
    %v4829 = vand.u32 %v4828, 4294901760
    %v4830 = vsub.f32 %v4828, %v4829
    %v4831 = vand.u32 %v4830, 4294901760
    %4832 = vmatpush1.msra.mxu0 %v4831
    %4833 = vmatprep.subr.mxu0 0.0
    %v4834 = vand.u32 %v3682, 4294901760
    %v4835 = vsub.f32 %v3682, %v4834
    %v4836 = vand.u32 %v4835, 4294901760
    %v4837 = vsub.f32 %v4835, %v4836
    %v4838 = vand.u32 %v4837, 4294901760
    %4839 = vmatpush1.msra.mxu0 %v4838
    %4840 = vmatprep.subr.mxu0 0.0
    %v4841 = vand.u32 %v3681, 4294901760
    %v4842 = vsub.f32 %v3681, %v4841
    %v4843 = vand.u32 %v4842, 4294901760
    %v4844 = vsub.f32 %v4842, %v4843
    %v4845 = vand.u32 %v4844, 4294901760
    %4846 = vmatpush1.msra.mxu0 %v4845
    %4847 = vmatprep.subr.mxu0 0.0
    %v4848 = vand.u32 %v3680, 4294901760
    %v4849 = vsub.f32 %v3680, %v4848
    %v4850 = vand.u32 %v4849, 4294901760
    %v4851 = vsub.f32 %v4849, %v4850
    %v4852 = vand.u32 %v4851, 4294901760
    %4853 = vmatpush1.msra.mxu0 %v4852
    %4854 = vmatprep.subr.mxu0 0.0
    %v4855 = vand.u32 %v3679, 4294901760
    %v4856 = vsub.f32 %v3679, %v4855
    %v4857 = vand.u32 %v4856, 4294901760
    %v4858 = vsub.f32 %v4856, %v4857
    %v4859 = vand.u32 %v4858, 4294901760
    %4860 = vmatpush1.msra.mxu0 %v4859
    %4861 = vmatprep.subr.mxu0 0.0
    %v4862 = vand.u32 %v3710, 4294901760
    %v4863 = vsub.f32 %v3710, %v4862
    %v4864 = vand.u32 %v4863, 4294901760
    %v4865 = vsub.f32 %v4863, %v4864
    %v4866 = vand.u32 %v4865, 4294901760
    %4867 = vmatpush2.msra.mxu0 %v4866
    %4868 = vmatprep.subr.mxu0 0.0
    %v4869 = vand.u32 %v3709, 4294901760
    %v4870 = vsub.f32 %v3709, %v4869
    %v4871 = vand.u32 %v4870, 4294901760
    %v4872 = vsub.f32 %v4870, %v4871
    %v4873 = vand.u32 %v4872, 4294901760
    %4874 = vmatpush2.msra.mxu0 %v4873
    %4875 = vmatprep.subr.mxu0 0.0
    %v4876 = vand.u32 %v3708, 4294901760
    %v4877 = vsub.f32 %v3708, %v4876
    %v4878 = vand.u32 %v4877, 4294901760
    %v4879 = vsub.f32 %v4877, %v4878
    %v4880 = vand.u32 %v4879, 4294901760
    %4881 = vmatpush2.msra.mxu0 %v4880
    %4882 = vmatprep.subr.mxu0 0.0
    %v4883 = vand.u32 %v3707, 4294901760
    %v4884 = vsub.f32 %v3707, %v4883
    %v4885 = vand.u32 %v4884, 4294901760
    %v4886 = vsub.f32 %v4884, %v4885
    %v4887 = vand.u32 %v4886, 4294901760
    %4888 = vmatpush2.msra.mxu0 %v4887
    %4889 = vmatprep.subr.mxu0 0.0
    %v4890 = vand.u32 %v3706, 4294901760
    %v4891 = vsub.f32 %v3706, %v4890
    %v4892 = vand.u32 %v4891, 4294901760
    %v4893 = vsub.f32 %v4891, %v4892
    %v4894 = vand.u32 %v4893, 4294901760
    %4895 = vmatpush2.msra.mxu0 %v4894
    %4896 = vmatprep.subr.mxu0 0.0
    %v4897 = vand.u32 %v3705, 4294901760
    %v4898 = vsub.f32 %v3705, %v4897
    %v4899 = vand.u32 %v4898, 4294901760
    %v4900 = vsub.f32 %v4898, %v4899
    %v4901 = vand.u32 %v4900, 4294901760
    %4902 = vmatpush2.msra.mxu0 %v4901
    %4903 = vmatprep.subr.mxu0 0.0
    %v4904 = vand.u32 %v3704, 4294901760
    %v4905 = vsub.f32 %v3704, %v4904
    %v4906 = vand.u32 %v4905, 4294901760
    %v4907 = vsub.f32 %v4905, %v4906
    %v4908 = vand.u32 %v4907, 4294901760
    %4909 = vmatpush2.msra.mxu0 %v4908
    %4910 = vmatprep.subr.mxu0 0.0
    %v4911 = vand.u32 %v3703, 4294901760
    %v4912 = vsub.f32 %v3703, %v4911
    %v4913 = vand.u32 %v4912, 4294901760
    %v4914 = vsub.f32 %v4912, %v4913
    %v4915 = vand.u32 %v4914, 4294901760
    %4916 = vmatpush2.msra.mxu0 %v4915
    %4917 = vmatprep.subr.mxu0 0.0
    %v4918 = vand.u32 %v3702, 4294901760
    %v4919 = vsub.f32 %v3702, %v4918
    %v4920 = vand.u32 %v4919, 4294901760
    %v4921 = vsub.f32 %v4919, %v4920
    %v4922 = vand.u32 %v4921, 4294901760
    %4923 = vmatpush2.msra.mxu0 %v4922
    %4924 = vmatprep.subr.mxu0 0.0
    %v4925 = vand.u32 %v3701, 4294901760
    %v4926 = vsub.f32 %v3701, %v4925
    %v4927 = vand.u32 %v4926, 4294901760
    %v4928 = vsub.f32 %v4926, %v4927
    %v4929 = vand.u32 %v4928, 4294901760
    %4930 = vmatpush2.msra.mxu0 %v4929
    %4931 = vmatprep.subr.mxu0 0.0
    %v4932 = vand.u32 %v3700, 4294901760
    %v4933 = vsub.f32 %v3700, %v4932
    %v4934 = vand.u32 %v4933, 4294901760
    %v4935 = vsub.f32 %v4933, %v4934
    %v4936 = vand.u32 %v4935, 4294901760
    %4937 = vmatpush2.msra.mxu0 %v4936
    %4938 = vmatprep.subr.mxu0 0.0
    %v4939 = vand.u32 %v3699, 4294901760
    %v4940 = vsub.f32 %v3699, %v4939
    %v4941 = vand.u32 %v4940, 4294901760
    %v4942 = vsub.f32 %v4940, %v4941
    %v4943 = vand.u32 %v4942, 4294901760
    %4944 = vmatpush2.msra.mxu0 %v4943
    %4945 = vmatprep.subr.mxu0 0.0
    %v4946 = vand.u32 %v3698, 4294901760
    %v4947 = vsub.f32 %v3698, %v4946
    %v4948 = vand.u32 %v4947, 4294901760
    %v4949 = vsub.f32 %v4947, %v4948
    %v4950 = vand.u32 %v4949, 4294901760
    %4951 = vmatpush2.msra.mxu0 %v4950
    %4952 = vmatprep.subr.mxu0 0.0
    %v4953 = vand.u32 %v3697, 4294901760
    %v4954 = vsub.f32 %v3697, %v4953
    %v4955 = vand.u32 %v4954, 4294901760
    %v4956 = vsub.f32 %v4954, %v4955
    %v4957 = vand.u32 %v4956, 4294901760
    %4958 = vmatpush2.msra.mxu0 %v4957
    %4959 = vmatprep.subr.mxu0 0.0
    %v4960 = vand.u32 %v3696, 4294901760
    %v4961 = vsub.f32 %v3696, %v4960
    %v4962 = vand.u32 %v4961, 4294901760
    %v4963 = vsub.f32 %v4961, %v4962
    %v4964 = vand.u32 %v4963, 4294901760
    %4965 = vmatpush2.msra.mxu0 %v4964
    %4966 = vmatprep.subr.mxu0 0.0
    %v4967 = vand.u32 %v3695, 4294901760
    %v4968 = vsub.f32 %v3695, %v4967
    %v4969 = vand.u32 %v4968, 4294901760
    %v4970 = vsub.f32 %v4968, %v4969
    %v4971 = vand.u32 %v4970, 4294901760
    %4972 = vmatpush2.msra.mxu0 %v4971
    %v4973 = vand.u32 %v3642, 4294901760
    %4974 = vmatprep.mubr.f32.mxu0 %v4973
    %v4975 = vand.u32 %v3641, 4294901760
    %4976 = vmatmul.mubr.f32.gmra.mxu0 %v4975
    %v4977 = vpop.f32.mrf.mxu0
    %v4978 = vadd.f32 %v4746, %v4977
    %v4979 = vpop.f32.mrf.mxu0
    %4980 = vdwg.mxu0
    %4981 = vmatprep.subr.mxu0 0.0
    %v4982 = vand.u32 %v3694, 4294901760
    %v4983 = vsub.f32 %v3694, %v4982
    %4984 = vmatpush1.msra.mxu0 %v4983
    %4985 = vmatprep.subr.mxu0 0.0
    %v4986 = vand.u32 %v3693, 4294901760
    %v4987 = vsub.f32 %v3693, %v4986
    %4988 = vmatpush1.msra.mxu0 %v4987
    %4989 = vmatprep.subr.mxu0 0.0
    %v4990 = vand.u32 %v3692, 4294901760
    %v4991 = vsub.f32 %v3692, %v4990
    %4992 = vmatpush1.msra.mxu0 %v4991
    %4993 = vmatprep.subr.mxu0 0.0
    %v4994 = vand.u32 %v3691, 4294901760
    %v4995 = vsub.f32 %v3691, %v4994
    %4996 = vmatpush1.msra.mxu0 %v4995
    %4997 = vmatprep.subr.mxu0 0.0
    %v4998 = vand.u32 %v3690, 4294901760
    %v4999 = vsub.f32 %v3690, %v4998
    %5000 = vmatpush1.msra.mxu0 %v4999
    %5001 = vmatprep.subr.mxu0 0.0
    %v5002 = vand.u32 %v3689, 4294901760
    %v5003 = vsub.f32 %v3689, %v5002
    %5004 = vmatpush1.msra.mxu0 %v5003
    %5005 = vmatprep.subr.mxu0 0.0
    %v5006 = vand.u32 %v3688, 4294901760
    %v5007 = vsub.f32 %v3688, %v5006
    %5008 = vmatpush1.msra.mxu0 %v5007
    %5009 = vmatprep.subr.mxu0 0.0
    %v5010 = vand.u32 %v3687, 4294901760
    %v5011 = vsub.f32 %v3687, %v5010
    %5012 = vmatpush1.msra.mxu0 %v5011
    %5013 = vmatprep.subr.mxu0 0.0
    %v5014 = vand.u32 %v3686, 4294901760
    %v5015 = vsub.f32 %v3686, %v5014
    %5016 = vmatpush1.msra.mxu0 %v5015
    %5017 = vmatprep.subr.mxu0 0.0
    %v5018 = vand.u32 %v3685, 4294901760
    %v5019 = vsub.f32 %v3685, %v5018
    %5020 = vmatpush1.msra.mxu0 %v5019
    %5021 = vmatprep.subr.mxu0 0.0
    %v5022 = vand.u32 %v3684, 4294901760
    %v5023 = vsub.f32 %v3684, %v5022
    %5024 = vmatpush1.msra.mxu0 %v5023
    %5025 = vmatprep.subr.mxu0 0.0
    %v5026 = vand.u32 %v3683, 4294901760
    %v5027 = vsub.f32 %v3683, %v5026
    %5028 = vmatpush1.msra.mxu0 %v5027
    %5029 = vmatprep.subr.mxu0 0.0
    %v5030 = vand.u32 %v3682, 4294901760
    %v5031 = vsub.f32 %v3682, %v5030
    %5032 = vmatpush1.msra.mxu0 %v5031
    %5033 = vmatprep.subr.mxu0 0.0
    %v5034 = vand.u32 %v3681, 4294901760
    %v5035 = vsub.f32 %v3681, %v5034
    %5036 = vmatpush1.msra.mxu0 %v5035
    %5037 = vmatprep.subr.mxu0 0.0
    %v5038 = vand.u32 %v3680, 4294901760
    %v5039 = vsub.f32 %v3680, %v5038
    %5040 = vmatpush1.msra.mxu0 %v5039
    %5041 = vmatprep.subr.mxu0 0.0
    %v5042 = vand.u32 %v3679, 4294901760
    %v5043 = vsub.f32 %v3679, %v5042
    %5044 = vmatpush1.msra.mxu0 %v5043
    %5045 = vmatprep.subr.mxu0 0.0
    %v5046 = vand.u32 %v3710, 4294901760
    %v5047 = vsub.f32 %v3710, %v5046
    %5048 = vmatpush2.msra.mxu0 %v5047
    %5049 = vmatprep.subr.mxu0 0.0
    %v5050 = vand.u32 %v3709, 4294901760
    %v5051 = vsub.f32 %v3709, %v5050
    %5052 = vmatpush2.msra.mxu0 %v5051
    %5053 = vmatprep.subr.mxu0 0.0
    %v5054 = vand.u32 %v3708, 4294901760
    %v5055 = vsub.f32 %v3708, %v5054
    %5056 = vmatpush2.msra.mxu0 %v5055
    %5057 = vmatprep.subr.mxu0 0.0
    %v5058 = vand.u32 %v3707, 4294901760
    %v5059 = vsub.f32 %v3707, %v5058
    %5060 = vmatpush2.msra.mxu0 %v5059
    %5061 = vmatprep.subr.mxu0 0.0
    %v5062 = vand.u32 %v3706, 4294901760
    %v5063 = vsub.f32 %v3706, %v5062
    %5064 = vmatpush2.msra.mxu0 %v5063
    %5065 = vmatprep.subr.mxu0 0.0
    %v5066 = vand.u32 %v3705, 4294901760
    %v5067 = vsub.f32 %v3705, %v5066
    %5068 = vmatpush2.msra.mxu0 %v5067
    %5069 = vmatprep.subr.mxu0 0.0
    %v5070 = vand.u32 %v3704, 4294901760
    %v5071 = vsub.f32 %v3704, %v5070
    %5072 = vmatpush2.msra.mxu0 %v5071
    %5073 = vmatprep.subr.mxu0 0.0
    %v5074 = vand.u32 %v3703, 4294901760
    %v5075 = vsub.f32 %v3703, %v5074
    %5076 = vmatpush2.msra.mxu0 %v5075
    %5077 = vmatprep.subr.mxu0 0.0
    %v5078 = vand.u32 %v3702, 4294901760
    %v5079 = vsub.f32 %v3702, %v5078
    %5080 = vmatpush2.msra.mxu0 %v5079
    %5081 = vmatprep.subr.mxu0 0.0
    %v5082 = vand.u32 %v3701, 4294901760
    %v5083 = vsub.f32 %v3701, %v5082
    %5084 = vmatpush2.msra.mxu0 %v5083
    %5085 = vmatprep.subr.mxu0 0.0
    %v5086 = vand.u32 %v3700, 4294901760
    %v5087 = vsub.f32 %v3700, %v5086
    %5088 = vmatpush2.msra.mxu0 %v5087
    %5089 = vmatprep.subr.mxu0 0.0
    %v5090 = vand.u32 %v3699, 4294901760
    %v5091 = vsub.f32 %v3699, %v5090
    %5092 = vmatpush2.msra.mxu0 %v5091
    %5093 = vmatprep.subr.mxu0 0.0
    %v5094 = vand.u32 %v3698, 4294901760
    %v5095 = vsub.f32 %v3698, %v5094
    %5096 = vmatpush2.msra.mxu0 %v5095
    %5097 = vmatprep.subr.mxu0 0.0
    %v5098 = vand.u32 %v3697, 4294901760
    %v5099 = vsub.f32 %v3697, %v5098
    %5100 = vmatpush2.msra.mxu0 %v5099
    %5101 = vmatprep.subr.mxu0 0.0
    %v5102 = vand.u32 %v3696, 4294901760
    %v5103 = vsub.f32 %v3696, %v5102
    %5104 = vmatpush2.msra.mxu0 %v5103
    %5105 = vmatprep.subr.mxu0 0.0
    %v5106 = vand.u32 %v3695, 4294901760
    %v5107 = vsub.f32 %v3695, %v5106
    %5108 = vmatpush2.msra.mxu0 %v5107
    %v5109 = vand.u32 %v3642, 4294901760
    %v5110 = vsub.f32 %v3642, %v5109
    %5111 = vmatprep.mubr.f32.mxu0 %v5110
    %v5112 = vand.u32 %v3641, 4294901760
    %v5113 = vsub.f32 %v3641, %v5112
    %5114 = vmatmul.mubr.f32.gmra.mxu0 %v5113
    %v5115 = vpop.f32.mrf.mxu0
    %v5116 = vadd.f32 %v4978, %v5115
    %v5117 = vpop.f32.mrf.mxu0
    %5118 = vdwg.mxu0
    %5119 = vmatprep.subr.mxu0 0.0
    %v5120 = vand.u32 %v3694, 4294901760
    %5121 = vmatpush1.msra.mxu0 %v5120
    %5122 = vmatprep.subr.mxu0 0.0
    %v5123 = vand.u32 %v3693, 4294901760
    %5124 = vmatpush1.msra.mxu0 %v5123
    %5125 = vmatprep.subr.mxu0 0.0
    %v5126 = vand.u32 %v3692, 4294901760
    %5127 = vmatpush1.msra.mxu0 %v5126
    %5128 = vmatprep.subr.mxu0 0.0
    %v5129 = vand.u32 %v3691, 4294901760
    %5130 = vmatpush1.msra.mxu0 %v5129
    %5131 = vmatprep.subr.mxu0 0.0
    %v5132 = vand.u32 %v3690, 4294901760
    %5133 = vmatpush1.msra.mxu0 %v5132
    %5134 = vmatprep.subr.mxu0 0.0
    %v5135 = vand.u32 %v3689, 4294901760
    %5136 = vmatpush1.msra.mxu0 %v5135
    %5137 = vmatprep.subr.mxu0 0.0
    %v5138 = vand.u32 %v3688, 4294901760
    %5139 = vmatpush1.msra.mxu0 %v5138
    %5140 = vmatprep.subr.mxu0 0.0
    %v5141 = vand.u32 %v3687, 4294901760
    %5142 = vmatpush1.msra.mxu0 %v5141
    %5143 = vmatprep.subr.mxu0 0.0
    %v5144 = vand.u32 %v3686, 4294901760
    %5145 = vmatpush1.msra.mxu0 %v5144
    %5146 = vmatprep.subr.mxu0 0.0
    %v5147 = vand.u32 %v3685, 4294901760
    %5148 = vmatpush1.msra.mxu0 %v5147
    %5149 = vmatprep.subr.mxu0 0.0
    %v5150 = vand.u32 %v3684, 4294901760
    %5151 = vmatpush1.msra.mxu0 %v5150
    %5152 = vmatprep.subr.mxu0 0.0
    %v5153 = vand.u32 %v3683, 4294901760
    %5154 = vmatpush1.msra.mxu0 %v5153
    %5155 = vmatprep.subr.mxu0 0.0
    %v5156 = vand.u32 %v3682, 4294901760
    %5157 = vmatpush1.msra.mxu0 %v5156
    %5158 = vmatprep.subr.mxu0 0.0
    %v5159 = vand.u32 %v3681, 4294901760
    %5160 = vmatpush1.msra.mxu0 %v5159
    %5161 = vmatprep.subr.mxu0 0.0
    %v5162 = vand.u32 %v3680, 4294901760
    %5163 = vmatpush1.msra.mxu0 %v5162
    %5164 = vmatprep.subr.mxu0 0.0
    %v5165 = vand.u32 %v3679, 4294901760
    %5166 = vmatpush1.msra.mxu0 %v5165
    %5167 = vmatprep.subr.mxu0 0.0
    %v5168 = vand.u32 %v3710, 4294901760
    %5169 = vmatpush2.msra.mxu0 %v5168
    %5170 = vmatprep.subr.mxu0 0.0
    %v5171 = vand.u32 %v3709, 4294901760
    %5172 = vmatpush2.msra.mxu0 %v5171
    %5173 = vmatprep.subr.mxu0 0.0
    %v5174 = vand.u32 %v3708, 4294901760
    %5175 = vmatpush2.msra.mxu0 %v5174
    %5176 = vmatprep.subr.mxu0 0.0
    %v5177 = vand.u32 %v3707, 4294901760
    %5178 = vmatpush2.msra.mxu0 %v5177
    %5179 = vmatprep.subr.mxu0 0.0
    %v5180 = vand.u32 %v3706, 4294901760
    %5181 = vmatpush2.msra.mxu0 %v5180
    %5182 = vmatprep.subr.mxu0 0.0
    %v5183 = vand.u32 %v3705, 4294901760
    %5184 = vmatpush2.msra.mxu0 %v5183
    %5185 = vmatprep.subr.mxu0 0.0
    %v5186 = vand.u32 %v3704, 4294901760
    %5187 = vmatpush2.msra.mxu0 %v5186
    %5188 = vmatprep.subr.mxu0 0.0
    %v5189 = vand.u32 %v3703, 4294901760
    %5190 = vmatpush2.msra.mxu0 %v5189
    %5191 = vmatprep.subr.mxu0 0.0
    %v5192 = vand.u32 %v3702, 4294901760
    %5193 = vmatpush2.msra.mxu0 %v5192
    %5194 = vmatprep.subr.mxu0 0.0
    %v5195 = vand.u32 %v3701, 4294901760
    %5196 = vmatpush2.msra.mxu0 %v5195
    %5197 = vmatprep.subr.mxu0 0.0
    %v5198 = vand.u32 %v3700, 4294901760
    %5199 = vmatpush2.msra.mxu0 %v5198
    %5200 = vmatprep.subr.mxu0 0.0
    %v5201 = vand.u32 %v3699, 4294901760
    %5202 = vmatpush2.msra.mxu0 %v5201
    %5203 = vmatprep.subr.mxu0 0.0
    %v5204 = vand.u32 %v3698, 4294901760
    %5205 = vmatpush2.msra.mxu0 %v5204
    %5206 = vmatprep.subr.mxu0 0.0
    %v5207 = vand.u32 %v3697, 4294901760
    %5208 = vmatpush2.msra.mxu0 %v5207
    %5209 = vmatprep.subr.mxu0 0.0
    %v5210 = vand.u32 %v3696, 4294901760
    %5211 = vmatpush2.msra.mxu0 %v5210
    %5212 = vmatprep.subr.mxu0 0.0
    %v5213 = vand.u32 %v3695, 4294901760
    %5214 = vmatpush2.msra.mxu0 %v5213
    %v5215 = vand.u32 %v3642, 4294901760
    %v5216 = vsub.f32 %v3642, %v5215
    %v5217 = vand.u32 %v5216, 4294901760
    %5218 = vmatprep.mubr.f32.mxu0 %v5217
    %v5219 = vand.u32 %v3641, 4294901760
    %v5220 = vsub.f32 %v3641, %v5219
    %v5221 = vand.u32 %v5220, 4294901760
    %5222 = vmatmul.mubr.f32.gmra.mxu0 %v5221
    %v5223 = vpop.f32.mrf.mxu0
    %v5224 = vadd.f32 %v5116, %v5223
    %v5225 = vpop.f32.mrf.mxu0
    %5226 = vdwg.mxu0
    %5227 = vmatprep.subr.mxu0 0.0
    %v5228 = vand.u32 %v3694, 4294901760
    %v5229 = vsub.f32 %v3694, %v5228
    %v5230 = vand.u32 %v5229, 4294901760
    %5231 = vmatpush1.msra.mxu0 %v5230
    %5232 = vmatprep.subr.mxu0 0.0
    %v5233 = vand.u32 %v3693, 4294901760
    %v5234 = vsub.f32 %v3693, %v5233
    %v5235 = vand.u32 %v5234, 4294901760
    %5236 = vmatpush1.msra.mxu0 %v5235
    %5237 = vmatprep.subr.mxu0 0.0
    %v5238 = vand.u32 %v3692, 4294901760
    %v5239 = vsub.f32 %v3692, %v5238
    %v5240 = vand.u32 %v5239, 4294901760
    %5241 = vmatpush1.msra.mxu0 %v5240
    %5242 = vmatprep.subr.mxu0 0.0
    %v5243 = vand.u32 %v3691, 4294901760
    %v5244 = vsub.f32 %v3691, %v5243
    %v5245 = vand.u32 %v5244, 4294901760
    %5246 = vmatpush1.msra.mxu0 %v5245
    %5247 = vmatprep.subr.mxu0 0.0
    %v5248 = vand.u32 %v3690, 4294901760
    %v5249 = vsub.f32 %v3690, %v5248
    %v5250 = vand.u32 %v5249, 4294901760
    %5251 = vmatpush1.msra.mxu0 %v5250
    %5252 = vmatprep.subr.mxu0 0.0
    %v5253 = vand.u32 %v3689, 4294901760
    %v5254 = vsub.f32 %v3689, %v5253
    %v5255 = vand.u32 %v5254, 4294901760
    %5256 = vmatpush1.msra.mxu0 %v5255
    %5257 = vmatprep.subr.mxu0 0.0
    %v5258 = vand.u32 %v3688, 4294901760
    %v5259 = vsub.f32 %v3688, %v5258
    %v5260 = vand.u32 %v5259, 4294901760
    %5261 = vmatpush1.msra.mxu0 %v5260
    %5262 = vmatprep.subr.mxu0 0.0
    %v5263 = vand.u32 %v3687, 4294901760
    %v5264 = vsub.f32 %v3687, %v5263
    %v5265 = vand.u32 %v5264, 4294901760
    %5266 = vmatpush1.msra.mxu0 %v5265
    %5267 = vmatprep.subr.mxu0 0.0
    %v5268 = vand.u32 %v3686, 4294901760
    %v5269 = vsub.f32 %v3686, %v5268
    %v5270 = vand.u32 %v5269, 4294901760
    %5271 = vmatpush1.msra.mxu0 %v5270
    %5272 = vmatprep.subr.mxu0 0.0
    %v5273 = vand.u32 %v3685, 4294901760
    %v5274 = vsub.f32 %v3685, %v5273
    %v5275 = vand.u32 %v5274, 4294901760
    %5276 = vmatpush1.msra.mxu0 %v5275
    %5277 = vmatprep.subr.mxu0 0.0
    %v5278 = vand.u32 %v3684, 4294901760
    %v5279 = vsub.f32 %v3684, %v5278
    %v5280 = vand.u32 %v5279, 4294901760
    %5281 = vmatpush1.msra.mxu0 %v5280
    %5282 = vmatprep.subr.mxu0 0.0
    %v5283 = vand.u32 %v3683, 4294901760
    %v5284 = vsub.f32 %v3683, %v5283
    %v5285 = vand.u32 %v5284, 4294901760
    %5286 = vmatpush1.msra.mxu0 %v5285
    %5287 = vmatprep.subr.mxu0 0.0
    %v5288 = vand.u32 %v3682, 4294901760
    %v5289 = vsub.f32 %v3682, %v5288
    %v5290 = vand.u32 %v5289, 4294901760
    %5291 = vmatpush1.msra.mxu0 %v5290
    %5292 = vmatprep.subr.mxu0 0.0
    %v5293 = vand.u32 %v3681, 4294901760
    %v5294 = vsub.f32 %v3681, %v5293
    %v5295 = vand.u32 %v5294, 4294901760
    %5296 = vmatpush1.msra.mxu0 %v5295
    %5297 = vmatprep.subr.mxu0 0.0
    %v5298 = vand.u32 %v3680, 4294901760
    %v5299 = vsub.f32 %v3680, %v5298
    %v5300 = vand.u32 %v5299, 4294901760
    %5301 = vmatpush1.msra.mxu0 %v5300
    %5302 = vmatprep.subr.mxu0 0.0
    %v5303 = vand.u32 %v3679, 4294901760
    %v5304 = vsub.f32 %v3679, %v5303
    %v5305 = vand.u32 %v5304, 4294901760
    %5306 = vmatpush1.msra.mxu0 %v5305
    %5307 = vmatprep.subr.mxu0 0.0
    %v5308 = vand.u32 %v3710, 4294901760
    %v5309 = vsub.f32 %v3710, %v5308
    %v5310 = vand.u32 %v5309, 4294901760
    %5311 = vmatpush2.msra.mxu0 %v5310
    %5312 = vmatprep.subr.mxu0 0.0
    %v5313 = vand.u32 %v3709, 4294901760
    %v5314 = vsub.f32 %v3709, %v5313
    %v5315 = vand.u32 %v5314, 4294901760
    %5316 = vmatpush2.msra.mxu0 %v5315
    %5317 = vmatprep.subr.mxu0 0.0
    %v5318 = vand.u32 %v3708, 4294901760
    %v5319 = vsub.f32 %v3708, %v5318
    %v5320 = vand.u32 %v5319, 4294901760
    %5321 = vmatpush2.msra.mxu0 %v5320
    %5322 = vmatprep.subr.mxu0 0.0
    %v5323 = vand.u32 %v3707, 4294901760
    %v5324 = vsub.f32 %v3707, %v5323
    %v5325 = vand.u32 %v5324, 4294901760
    %5326 = vmatpush2.msra.mxu0 %v5325
    %5327 = vmatprep.subr.mxu0 0.0
    %v5328 = vand.u32 %v3706, 4294901760
    %v5329 = vsub.f32 %v3706, %v5328
    %v5330 = vand.u32 %v5329, 4294901760
    %5331 = vmatpush2.msra.mxu0 %v5330
    %5332 = vmatprep.subr.mxu0 0.0
    %v5333 = vand.u32 %v3705, 4294901760
    %v5334 = vsub.f32 %v3705, %v5333
    %v5335 = vand.u32 %v5334, 4294901760
    %5336 = vmatpush2.msra.mxu0 %v5335
    %5337 = vmatprep.subr.mxu0 0.0
    %v5338 = vand.u32 %v3704, 4294901760
    %v5339 = vsub.f32 %v3704, %v5338
    %v5340 = vand.u32 %v5339, 4294901760
    %5341 = vmatpush2.msra.mxu0 %v5340
    %5342 = vmatprep.subr.mxu0 0.0
    %v5343 = vand.u32 %v3703, 4294901760
    %v5344 = vsub.f32 %v3703, %v5343
    %v5345 = vand.u32 %v5344, 4294901760
    %5346 = vmatpush2.msra.mxu0 %v5345
    %5347 = vmatprep.subr.mxu0 0.0
    %v5348 = vand.u32 %v3702, 4294901760
    %v5349 = vsub.f32 %v3702, %v5348
    %v5350 = vand.u32 %v5349, 4294901760
    %5351 = vmatpush2.msra.mxu0 %v5350
    %5352 = vmatprep.subr.mxu0 0.0
    %v5353 = vand.u32 %v3701, 4294901760
    %v5354 = vsub.f32 %v3701, %v5353
    %v5355 = vand.u32 %v5354, 4294901760
    %5356 = vmatpush2.msra.mxu0 %v5355
    %5357 = vmatprep.subr.mxu0 0.0
    %v5358 = vand.u32 %v3700, 4294901760
    %v5359 = vsub.f32 %v3700, %v5358
    %v5360 = vand.u32 %v5359, 4294901760
    %5361 = vmatpush2.msra.mxu0 %v5360
    %5362 = vmatprep.subr.mxu0 0.0
    %v5363 = vand.u32 %v3699, 4294901760
    %v5364 = vsub.f32 %v3699, %v5363
    %v5365 = vand.u32 %v5364, 4294901760
    %5366 = vmatpush2.msra.mxu0 %v5365
    %5367 = vmatprep.subr.mxu0 0.0
    %v5368 = vand.u32 %v3698, 4294901760
    %v5369 = vsub.f32 %v3698, %v5368
    %v5370 = vand.u32 %v5369, 4294901760
    %5371 = vmatpush2.msra.mxu0 %v5370
    %5372 = vmatprep.subr.mxu0 0.0
    %v5373 = vand.u32 %v3697, 4294901760
    %v5374 = vsub.f32 %v3697, %v5373
    %v5375 = vand.u32 %v5374, 4294901760
    %5376 = vmatpush2.msra.mxu0 %v5375
    %5377 = vmatprep.subr.mxu0 0.0
    %v5378 = vand.u32 %v3696, 4294901760
    %v5379 = vsub.f32 %v3696, %v5378
    %v5380 = vand.u32 %v5379, 4294901760
    %5381 = vmatpush2.msra.mxu0 %v5380
    %5382 = vmatprep.subr.mxu0 0.0
    %v5383 = vand.u32 %v3695, 4294901760
    %v5384 = vsub.f32 %v3695, %v5383
    %v5385 = vand.u32 %v5384, 4294901760
    %5386 = vmatpush2.msra.mxu0 %v5385
    %v5387 = vand.u32 %v3642, 4294901760
    %5388 = vmatprep.mubr.f32.mxu0 %v5387
    %v5389 = vand.u32 %v3641, 4294901760
    %5390 = vmatmul.mubr.f32.gmra.mxu0 %v5389
    %v5391 = vpop.f32.mrf.mxu0
    %v5392 = vadd.f32 %v5224, %v5391
    %v5393 = vpop.f32.mrf.mxu0
    %5394 = vdwg.mxu0
    %5395 = vmatprep.subr.mxu0 0.0
    %v5396 = vand.u32 %v3694, 4294901760
    %5397 = vmatpush1.msra.mxu0 %v5396
    %5398 = vmatprep.subr.mxu0 0.0
    %v5399 = vand.u32 %v3693, 4294901760
    %5400 = vmatpush1.msra.mxu0 %v5399
    %5401 = vmatprep.subr.mxu0 0.0
    %v5402 = vand.u32 %v3692, 4294901760
    %5403 = vmatpush1.msra.mxu0 %v5402
    %5404 = vmatprep.subr.mxu0 0.0
    %v5405 = vand.u32 %v3691, 4294901760
    %5406 = vmatpush1.msra.mxu0 %v5405
    %5407 = vmatprep.subr.mxu0 0.0
    %v5408 = vand.u32 %v3690, 4294901760
    %5409 = vmatpush1.msra.mxu0 %v5408
    %5410 = vmatprep.subr.mxu0 0.0
    %v5411 = vand.u32 %v3689, 4294901760
    %5412 = vmatpush1.msra.mxu0 %v5411
    %5413 = vmatprep.subr.mxu0 0.0
    %v5414 = vand.u32 %v3688, 4294901760
    %5415 = vmatpush1.msra.mxu0 %v5414
    %5416 = vmatprep.subr.mxu0 0.0
    %v5417 = vand.u32 %v3687, 4294901760
    %5418 = vmatpush1.msra.mxu0 %v5417
    %5419 = vmatprep.subr.mxu0 0.0
    %v5420 = vand.u32 %v3686, 4294901760
    %5421 = vmatpush1.msra.mxu0 %v5420
    %5422 = vmatprep.subr.mxu0 0.0
    %v5423 = vand.u32 %v3685, 4294901760
    %5424 = vmatpush1.msra.mxu0 %v5423
    %5425 = vmatprep.subr.mxu0 0.0
    %v5426 = vand.u32 %v3684, 4294901760
    %5427 = vmatpush1.msra.mxu0 %v5426
    %5428 = vmatprep.subr.mxu0 0.0
    %v5429 = vand.u32 %v3683, 4294901760
    %5430 = vmatpush1.msra.mxu0 %v5429
    %5431 = vmatprep.subr.mxu0 0.0
    %v5432 = vand.u32 %v3682, 4294901760
    %5433 = vmatpush1.msra.mxu0 %v5432
    %5434 = vmatprep.subr.mxu0 0.0
    %v5435 = vand.u32 %v3681, 4294901760
    %5436 = vmatpush1.msra.mxu0 %v5435
    %5437 = vmatprep.subr.mxu0 0.0
    %v5438 = vand.u32 %v3680, 4294901760
    %5439 = vmatpush1.msra.mxu0 %v5438
    %5440 = vmatprep.subr.mxu0 0.0
    %v5441 = vand.u32 %v3679, 4294901760
    %5442 = vmatpush1.msra.mxu0 %v5441
    %5443 = vmatprep.subr.mxu0 0.0
    %v5444 = vand.u32 %v3710, 4294901760
    %5445 = vmatpush2.msra.mxu0 %v5444
    %5446 = vmatprep.subr.mxu0 0.0
    %v5447 = vand.u32 %v3709, 4294901760
    %5448 = vmatpush2.msra.mxu0 %v5447
    %5449 = vmatprep.subr.mxu0 0.0
    %v5450 = vand.u32 %v3708, 4294901760
    %5451 = vmatpush2.msra.mxu0 %v5450
    %5452 = vmatprep.subr.mxu0 0.0
    %v5453 = vand.u32 %v3707, 4294901760
    %5454 = vmatpush2.msra.mxu0 %v5453
    %5455 = vmatprep.subr.mxu0 0.0
    %v5456 = vand.u32 %v3706, 4294901760
    %5457 = vmatpush2.msra.mxu0 %v5456
    %5458 = vmatprep.subr.mxu0 0.0
    %v5459 = vand.u32 %v3705, 4294901760
    %5460 = vmatpush2.msra.mxu0 %v5459
    %5461 = vmatprep.subr.mxu0 0.0
    %v5462 = vand.u32 %v3704, 4294901760
    %5463 = vmatpush2.msra.mxu0 %v5462
    %5464 = vmatprep.subr.mxu0 0.0
    %v5465 = vand.u32 %v3703, 4294901760
    %5466 = vmatpush2.msra.mxu0 %v5465
    %5467 = vmatprep.subr.mxu0 0.0
    %v5468 = vand.u32 %v3702, 4294901760
    %5469 = vmatpush2.msra.mxu0 %v5468
    %5470 = vmatprep.subr.mxu0 0.0
    %v5471 = vand.u32 %v3701, 4294901760
    %5472 = vmatpush2.msra.mxu0 %v5471
    %5473 = vmatprep.subr.mxu0 0.0
    %v5474 = vand.u32 %v3700, 4294901760
    %5475 = vmatpush2.msra.mxu0 %v5474
    %5476 = vmatprep.subr.mxu0 0.0
    %v5477 = vand.u32 %v3699, 4294901760
    %5478 = vmatpush2.msra.mxu0 %v5477
    %5479 = vmatprep.subr.mxu0 0.0
    %v5480 = vand.u32 %v3698, 4294901760
    %5481 = vmatpush2.msra.mxu0 %v5480
    %5482 = vmatprep.subr.mxu0 0.0
    %v5483 = vand.u32 %v3697, 4294901760
    %5484 = vmatpush2.msra.mxu0 %v5483
    %5485 = vmatprep.subr.mxu0 0.0
    %v5486 = vand.u32 %v3696, 4294901760
    %5487 = vmatpush2.msra.mxu0 %v5486
    %5488 = vmatprep.subr.mxu0 0.0
    %v5489 = vand.u32 %v3695, 4294901760
    %5490 = vmatpush2.msra.mxu0 %v5489
    %v5491 = vand.u32 %v3642, 4294901760
    %5492 = vmatprep.mubr.f32.mxu0 %v5491
    %v5493 = vand.u32 %v3641, 4294901760
    %5494 = vmatmul.mubr.f32.gmra.mxu0 %v5493
    %v5495 = vpop.f32.mrf.mxu0
    %v5496 = vadd.f32 %v5392, %v5495
    %v5497 = vpop.f32.mrf.mxu0
    %5498 = vdwg.mxu0
    %5499 = vmatprep.subr.mxu0 0.0
    %v5500 = vand.u32 %v3726, 4294901760
    %5501 = vmatpush1.msra.mxu0 %v5500
    %5502 = vmatprep.subr.mxu0 0.0
    %v5503 = vand.u32 %v3725, 4294901760
    %5504 = vmatpush1.msra.mxu0 %v5503
    %5505 = vmatprep.subr.mxu0 0.0
    %v5506 = vand.u32 %v3724, 4294901760
    %5507 = vmatpush1.msra.mxu0 %v5506
    %5508 = vmatprep.subr.mxu0 0.0
    %v5509 = vand.u32 %v3723, 4294901760
    %5510 = vmatpush1.msra.mxu0 %v5509
    %5511 = vmatprep.subr.mxu0 0.0
    %v5512 = vand.u32 %v3722, 4294901760
    %5513 = vmatpush1.msra.mxu0 %v5512
    %5514 = vmatprep.subr.mxu0 0.0
    %v5515 = vand.u32 %v3721, 4294901760
    %5516 = vmatpush1.msra.mxu0 %v5515
    %5517 = vmatprep.subr.mxu0 0.0
    %v5518 = vand.u32 %v3720, 4294901760
    %5519 = vmatpush1.msra.mxu0 %v5518
    %5520 = vmatprep.subr.mxu0 0.0
    %v5521 = vand.u32 %v3719, 4294901760
    %5522 = vmatpush1.msra.mxu0 %v5521
    %5523 = vmatprep.subr.mxu0 0.0
    %v5524 = vand.u32 %v3718, 4294901760
    %5525 = vmatpush1.msra.mxu0 %v5524
    %5526 = vmatprep.subr.mxu0 0.0
    %v5527 = vand.u32 %v3717, 4294901760
    %5528 = vmatpush1.msra.mxu0 %v5527
    %5529 = vmatprep.subr.mxu0 0.0
    %v5530 = vand.u32 %v3716, 4294901760
    %5531 = vmatpush1.msra.mxu0 %v5530
    %5532 = vmatprep.subr.mxu0 0.0
    %v5533 = vand.u32 %v3715, 4294901760
    %5534 = vmatpush1.msra.mxu0 %v5533
    %5535 = vmatprep.subr.mxu0 0.0
    %v5536 = vand.u32 %v3714, 4294901760
    %5537 = vmatpush1.msra.mxu0 %v5536
    %5538 = vmatprep.subr.mxu0 0.0
    %v5539 = vand.u32 %v3713, 4294901760
    %5540 = vmatpush1.msra.mxu0 %v5539
    %5541 = vmatprep.subr.mxu0 0.0
    %v5542 = vand.u32 %v3712, 4294901760
    %5543 = vmatpush1.msra.mxu0 %v5542
    %5544 = vmatprep.subr.mxu0 0.0
    %v5545 = vand.u32 %v3711, 4294901760
    %5546 = vmatpush1.msra.mxu0 %v5545
    %5547 = vmatprep.subr.mxu0 0.0
    %v5548 = vand.u32 %v3742, 4294901760
    %5549 = vmatpush2.msra.mxu0 %v5548
    %5550 = vmatprep.subr.mxu0 0.0
    %v5551 = vand.u32 %v3741, 4294901760
    %5552 = vmatpush2.msra.mxu0 %v5551
    %5553 = vmatprep.subr.mxu0 0.0
    %v5554 = vand.u32 %v3740, 4294901760
    %5555 = vmatpush2.msra.mxu0 %v5554
    %5556 = vmatprep.subr.mxu0 0.0
    %v5557 = vand.u32 %v3739, 4294901760
    %5558 = vmatpush2.msra.mxu0 %v5557
    %5559 = vmatprep.subr.mxu0 0.0
    %v5560 = vand.u32 %v3738, 4294901760
    %5561 = vmatpush2.msra.mxu0 %v5560
    %5562 = vmatprep.subr.mxu0 0.0
    %v5563 = vand.u32 %v3737, 4294901760
    %5564 = vmatpush2.msra.mxu0 %v5563
    %5565 = vmatprep.subr.mxu0 0.0
    %v5566 = vand.u32 %v3736, 4294901760
    %5567 = vmatpush2.msra.mxu0 %v5566
    %5568 = vmatprep.subr.mxu0 0.0
    %v5569 = vand.u32 %v3735, 4294901760
    %5570 = vmatpush2.msra.mxu0 %v5569
    %5571 = vmatprep.subr.mxu0 0.0
    %v5572 = vand.u32 %v3734, 4294901760
    %5573 = vmatpush2.msra.mxu0 %v5572
    %5574 = vmatprep.subr.mxu0 0.0
    %v5575 = vand.u32 %v3733, 4294901760
    %5576 = vmatpush2.msra.mxu0 %v5575
    %5577 = vmatprep.subr.mxu0 0.0
    %v5578 = vand.u32 %v3732, 4294901760
    %5579 = vmatpush2.msra.mxu0 %v5578
    %5580 = vmatprep.subr.mxu0 0.0
    %v5581 = vand.u32 %v3731, 4294901760
    %5582 = vmatpush2.msra.mxu0 %v5581
    %5583 = vmatprep.subr.mxu0 0.0
    %v5584 = vand.u32 %v3730, 4294901760
    %5585 = vmatpush2.msra.mxu0 %v5584
    %5586 = vmatprep.subr.mxu0 0.0
    %v5587 = vand.u32 %v3729, 4294901760
    %5588 = vmatpush2.msra.mxu0 %v5587
    %5589 = vmatprep.subr.mxu0 0.0
    %v5590 = vand.u32 %v3728, 4294901760
    %5591 = vmatpush2.msra.mxu0 %v5590
    %5592 = vmatprep.subr.mxu0 0.0
    %v5593 = vand.u32 %v3727, 4294901760
    %5594 = vmatpush2.msra.mxu0 %v5593
    %v5595 = vand.u32 %v3644, 4294901760
    %v5596 = vsub.f32 %v3644, %v5595
    %v5597 = vand.u32 %v5596, 4294901760
    %v5598 = vsub.f32 %v5596, %v5597
    %v5599 = vand.u32 %v5598, 4294901760
    %5600 = vmatprep.mubr.f32.mxu0 %v5599
    %v5601 = vand.u32 %v3643, 4294901760
    %v5602 = vsub.f32 %v3643, %v5601
    %v5603 = vand.u32 %v5602, 4294901760
    %v5604 = vsub.f32 %v5602, %v5603
    %v5605 = vand.u32 %v5604, 4294901760
    %5606 = vmatmul.mubr.f32.gmra.mxu0 %v5605
    %v5607 = vpop.f32.mrf.mxu0
    %v5608 = vadd.f32 %v5496, %v5607
    %v5609 = vpop.f32.mrf.mxu0
    %5610 = vdwg.mxu0
    %5611 = vmatprep.subr.mxu0 0.0
    %v5612 = vand.u32 %v3726, 4294901760
    %v5613 = vsub.f32 %v3726, %v5612
    %v5614 = vand.u32 %v5613, 4294901760
    %v5615 = vsub.f32 %v5613, %v5614
    %v5616 = vand.u32 %v5615, 4294901760
    %5617 = vmatpush1.msra.mxu0 %v5616
    %5618 = vmatprep.subr.mxu0 0.0
    %v5619 = vand.u32 %v3725, 4294901760
    %v5620 = vsub.f32 %v3725, %v5619
    %v5621 = vand.u32 %v5620, 4294901760
    %v5622 = vsub.f32 %v5620, %v5621
    %v5623 = vand.u32 %v5622, 4294901760
    %5624 = vmatpush1.msra.mxu0 %v5623
    %5625 = vmatprep.subr.mxu0 0.0
    %v5626 = vand.u32 %v3724, 4294901760
    %v5627 = vsub.f32 %v3724, %v5626
    %v5628 = vand.u32 %v5627, 4294901760
    %v5629 = vsub.f32 %v5627, %v5628
    %v5630 = vand.u32 %v5629, 4294901760
    %5631 = vmatpush1.msra.mxu0 %v5630
    %5632 = vmatprep.subr.mxu0 0.0
    %v5633 = vand.u32 %v3723, 4294901760
    %v5634 = vsub.f32 %v3723, %v5633
    %v5635 = vand.u32 %v5634, 4294901760
    %v5636 = vsub.f32 %v5634, %v5635
    %v5637 = vand.u32 %v5636, 4294901760
    %5638 = vmatpush1.msra.mxu0 %v5637
    %5639 = vmatprep.subr.mxu0 0.0
    %v5640 = vand.u32 %v3722, 4294901760
    %v5641 = vsub.f32 %v3722, %v5640
    %v5642 = vand.u32 %v5641, 4294901760
    %v5643 = vsub.f32 %v5641, %v5642
    %v5644 = vand.u32 %v5643, 4294901760
    %5645 = vmatpush1.msra.mxu0 %v5644
    %5646 = vmatprep.subr.mxu0 0.0
    %v5647 = vand.u32 %v3721, 4294901760
    %v5648 = vsub.f32 %v3721, %v5647
    %v5649 = vand.u32 %v5648, 4294901760
    %v5650 = vsub.f32 %v5648, %v5649
    %v5651 = vand.u32 %v5650, 4294901760
    %5652 = vmatpush1.msra.mxu0 %v5651
    %5653 = vmatprep.subr.mxu0 0.0
    %v5654 = vand.u32 %v3720, 4294901760
    %v5655 = vsub.f32 %v3720, %v5654
    %v5656 = vand.u32 %v5655, 4294901760
    %v5657 = vsub.f32 %v5655, %v5656
    %v5658 = vand.u32 %v5657, 4294901760
    %5659 = vmatpush1.msra.mxu0 %v5658
    %5660 = vmatprep.subr.mxu0 0.0
    %v5661 = vand.u32 %v3719, 4294901760
    %v5662 = vsub.f32 %v3719, %v5661
    %v5663 = vand.u32 %v5662, 4294901760
    %v5664 = vsub.f32 %v5662, %v5663
    %v5665 = vand.u32 %v5664, 4294901760
    %5666 = vmatpush1.msra.mxu0 %v5665
    %5667 = vmatprep.subr.mxu0 0.0
    %v5668 = vand.u32 %v3718, 4294901760
    %v5669 = vsub.f32 %v3718, %v5668
    %v5670 = vand.u32 %v5669, 4294901760
    %v5671 = vsub.f32 %v5669, %v5670
    %v5672 = vand.u32 %v5671, 4294901760
    %5673 = vmatpush1.msra.mxu0 %v5672
    %5674 = vmatprep.subr.mxu0 0.0
    %v5675 = vand.u32 %v3717, 4294901760
    %v5676 = vsub.f32 %v3717, %v5675
    %v5677 = vand.u32 %v5676, 4294901760
    %v5678 = vsub.f32 %v5676, %v5677
    %v5679 = vand.u32 %v5678, 4294901760
    %5680 = vmatpush1.msra.mxu0 %v5679
    %5681 = vmatprep.subr.mxu0 0.0
    %v5682 = vand.u32 %v3716, 4294901760
    %v5683 = vsub.f32 %v3716, %v5682
    %v5684 = vand.u32 %v5683, 4294901760
    %v5685 = vsub.f32 %v5683, %v5684
    %v5686 = vand.u32 %v5685, 4294901760
    %5687 = vmatpush1.msra.mxu0 %v5686
    %5688 = vmatprep.subr.mxu0 0.0
    %v5689 = vand.u32 %v3715, 4294901760
    %v5690 = vsub.f32 %v3715, %v5689
    %v5691 = vand.u32 %v5690, 4294901760
    %v5692 = vsub.f32 %v5690, %v5691
    %v5693 = vand.u32 %v5692, 4294901760
    %5694 = vmatpush1.msra.mxu0 %v5693
    %5695 = vmatprep.subr.mxu0 0.0
    %v5696 = vand.u32 %v3714, 4294901760
    %v5697 = vsub.f32 %v3714, %v5696
    %v5698 = vand.u32 %v5697, 4294901760
    %v5699 = vsub.f32 %v5697, %v5698
    %v5700 = vand.u32 %v5699, 4294901760
    %5701 = vmatpush1.msra.mxu0 %v5700
    %5702 = vmatprep.subr.mxu0 0.0
    %v5703 = vand.u32 %v3713, 4294901760
    %v5704 = vsub.f32 %v3713, %v5703
    %v5705 = vand.u32 %v5704, 4294901760
    %v5706 = vsub.f32 %v5704, %v5705
    %v5707 = vand.u32 %v5706, 4294901760
    %5708 = vmatpush1.msra.mxu0 %v5707
    %5709 = vmatprep.subr.mxu0 0.0
    %v5710 = vand.u32 %v3712, 4294901760
    %v5711 = vsub.f32 %v3712, %v5710
    %v5712 = vand.u32 %v5711, 4294901760
    %v5713 = vsub.f32 %v5711, %v5712
    %v5714 = vand.u32 %v5713, 4294901760
    %5715 = vmatpush1.msra.mxu0 %v5714
    %5716 = vmatprep.subr.mxu0 0.0
    %v5717 = vand.u32 %v3711, 4294901760
    %v5718 = vsub.f32 %v3711, %v5717
    %v5719 = vand.u32 %v5718, 4294901760
    %v5720 = vsub.f32 %v5718, %v5719
    %v5721 = vand.u32 %v5720, 4294901760
    %5722 = vmatpush1.msra.mxu0 %v5721
    %5723 = vmatprep.subr.mxu0 0.0
    %v5724 = vand.u32 %v3742, 4294901760
    %v5725 = vsub.f32 %v3742, %v5724
    %v5726 = vand.u32 %v5725, 4294901760
    %v5727 = vsub.f32 %v5725, %v5726
    %v5728 = vand.u32 %v5727, 4294901760
    %5729 = vmatpush2.msra.mxu0 %v5728
    %5730 = vmatprep.subr.mxu0 0.0
    %v5731 = vand.u32 %v3741, 4294901760
    %v5732 = vsub.f32 %v3741, %v5731
    %v5733 = vand.u32 %v5732, 4294901760
    %v5734 = vsub.f32 %v5732, %v5733
    %v5735 = vand.u32 %v5734, 4294901760
    %5736 = vmatpush2.msra.mxu0 %v5735
    %5737 = vmatprep.subr.mxu0 0.0
    %v5738 = vand.u32 %v3740, 4294901760
    %v5739 = vsub.f32 %v3740, %v5738
    %v5740 = vand.u32 %v5739, 4294901760
    %v5741 = vsub.f32 %v5739, %v5740
    %v5742 = vand.u32 %v5741, 4294901760
    %5743 = vmatpush2.msra.mxu0 %v5742
    %5744 = vmatprep.subr.mxu0 0.0
    %v5745 = vand.u32 %v3739, 4294901760
    %v5746 = vsub.f32 %v3739, %v5745
    %v5747 = vand.u32 %v5746, 4294901760
    %v5748 = vsub.f32 %v5746, %v5747
    %v5749 = vand.u32 %v5748, 4294901760
    %5750 = vmatpush2.msra.mxu0 %v5749
    %5751 = vmatprep.subr.mxu0 0.0
    %v5752 = vand.u32 %v3738, 4294901760
    %v5753 = vsub.f32 %v3738, %v5752
    %v5754 = vand.u32 %v5753, 4294901760
    %v5755 = vsub.f32 %v5753, %v5754
    %v5756 = vand.u32 %v5755, 4294901760
    %5757 = vmatpush2.msra.mxu0 %v5756
    %5758 = vmatprep.subr.mxu0 0.0
    %v5759 = vand.u32 %v3737, 4294901760
    %v5760 = vsub.f32 %v3737, %v5759
    %v5761 = vand.u32 %v5760, 4294901760
    %v5762 = vsub.f32 %v5760, %v5761
    %v5763 = vand.u32 %v5762, 4294901760
    %5764 = vmatpush2.msra.mxu0 %v5763
    %5765 = vmatprep.subr.mxu0 0.0
    %v5766 = vand.u32 %v3736, 4294901760
    %v5767 = vsub.f32 %v3736, %v5766
    %v5768 = vand.u32 %v5767, 4294901760
    %v5769 = vsub.f32 %v5767, %v5768
    %v5770 = vand.u32 %v5769, 4294901760
    %5771 = vmatpush2.msra.mxu0 %v5770
    %5772 = vmatprep.subr.mxu0 0.0
    %v5773 = vand.u32 %v3735, 4294901760
    %v5774 = vsub.f32 %v3735, %v5773
    %v5775 = vand.u32 %v5774, 4294901760
    %v5776 = vsub.f32 %v5774, %v5775
    %v5777 = vand.u32 %v5776, 4294901760
    %5778 = vmatpush2.msra.mxu0 %v5777
    %5779 = vmatprep.subr.mxu0 0.0
    %v5780 = vand.u32 %v3734, 4294901760
    %v5781 = vsub.f32 %v3734, %v5780
    %v5782 = vand.u32 %v5781, 4294901760
    %v5783 = vsub.f32 %v5781, %v5782
    %v5784 = vand.u32 %v5783, 4294901760
    %5785 = vmatpush2.msra.mxu0 %v5784
    %5786 = vmatprep.subr.mxu0 0.0
    %v5787 = vand.u32 %v3733, 4294901760
    %v5788 = vsub.f32 %v3733, %v5787
    %v5789 = vand.u32 %v5788, 4294901760
    %v5790 = vsub.f32 %v5788, %v5789
    %v5791 = vand.u32 %v5790, 4294901760
    %5792 = vmatpush2.msra.mxu0 %v5791
    %5793 = vmatprep.subr.mxu0 0.0
    %v5794 = vand.u32 %v3732, 4294901760
    %v5795 = vsub.f32 %v3732, %v5794
    %v5796 = vand.u32 %v5795, 4294901760
    %v5797 = vsub.f32 %v5795, %v5796
    %v5798 = vand.u32 %v5797, 4294901760
    %5799 = vmatpush2.msra.mxu0 %v5798
    %5800 = vmatprep.subr.mxu0 0.0
    %v5801 = vand.u32 %v3731, 4294901760
    %v5802 = vsub.f32 %v3731, %v5801
    %v5803 = vand.u32 %v5802, 4294901760
    %v5804 = vsub.f32 %v5802, %v5803
    %v5805 = vand.u32 %v5804, 4294901760
    %5806 = vmatpush2.msra.mxu0 %v5805
    %5807 = vmatprep.subr.mxu0 0.0
    %v5808 = vand.u32 %v3730, 4294901760
    %v5809 = vsub.f32 %v3730, %v5808
    %v5810 = vand.u32 %v5809, 4294901760
    %v5811 = vsub.f32 %v5809, %v5810
    %v5812 = vand.u32 %v5811, 4294901760
    %5813 = vmatpush2.msra.mxu0 %v5812
    %5814 = vmatprep.subr.mxu0 0.0
    %v5815 = vand.u32 %v3729, 4294901760
    %v5816 = vsub.f32 %v3729, %v5815
    %v5817 = vand.u32 %v5816, 4294901760
    %v5818 = vsub.f32 %v5816, %v5817
    %v5819 = vand.u32 %v5818, 4294901760
    %5820 = vmatpush2.msra.mxu0 %v5819
    %5821 = vmatprep.subr.mxu0 0.0
    %v5822 = vand.u32 %v3728, 4294901760
    %v5823 = vsub.f32 %v3728, %v5822
    %v5824 = vand.u32 %v5823, 4294901760
    %v5825 = vsub.f32 %v5823, %v5824
    %v5826 = vand.u32 %v5825, 4294901760
    %5827 = vmatpush2.msra.mxu0 %v5826
    %5828 = vmatprep.subr.mxu0 0.0
    %v5829 = vand.u32 %v3727, 4294901760
    %v5830 = vsub.f32 %v3727, %v5829
    %v5831 = vand.u32 %v5830, 4294901760
    %v5832 = vsub.f32 %v5830, %v5831
    %v5833 = vand.u32 %v5832, 4294901760
    %5834 = vmatpush2.msra.mxu0 %v5833
    %v5835 = vand.u32 %v3644, 4294901760
    %5836 = vmatprep.mubr.f32.mxu0 %v5835
    %v5837 = vand.u32 %v3643, 4294901760
    %5838 = vmatmul.mubr.f32.gmra.mxu0 %v5837
    %v5839 = vpop.f32.mrf.mxu0
    %v5840 = vadd.f32 %v5608, %v5839
    %v5841 = vpop.f32.mrf.mxu0
    %5842 = vdwg.mxu0
    %5843 = vmatprep.subr.mxu0 0.0
    %v5844 = vand.u32 %v3726, 4294901760
    %v5845 = vsub.f32 %v3726, %v5844
    %5846 = vmatpush1.msra.mxu0 %v5845
    %5847 = vmatprep.subr.mxu0 0.0
    %v5848 = vand.u32 %v3725, 4294901760
    %v5849 = vsub.f32 %v3725, %v5848
    %5850 = vmatpush1.msra.mxu0 %v5849
    %5851 = vmatprep.subr.mxu0 0.0
    %v5852 = vand.u32 %v3724, 4294901760
    %v5853 = vsub.f32 %v3724, %v5852
    %5854 = vmatpush1.msra.mxu0 %v5853
    %5855 = vmatprep.subr.mxu0 0.0
    %v5856 = vand.u32 %v3723, 4294901760
    %v5857 = vsub.f32 %v3723, %v5856
    %5858 = vmatpush1.msra.mxu0 %v5857
    %5859 = vmatprep.subr.mxu0 0.0
    %v5860 = vand.u32 %v3722, 4294901760
    %v5861 = vsub.f32 %v3722, %v5860
    %5862 = vmatpush1.msra.mxu0 %v5861
    %5863 = vmatprep.subr.mxu0 0.0
    %v5864 = vand.u32 %v3721, 4294901760
    %v5865 = vsub.f32 %v3721, %v5864
    %5866 = vmatpush1.msra.mxu0 %v5865
    %5867 = vmatprep.subr.mxu0 0.0
    %v5868 = vand.u32 %v3720, 4294901760
    %v5869 = vsub.f32 %v3720, %v5868
    %5870 = vmatpush1.msra.mxu0 %v5869
    %5871 = vmatprep.subr.mxu0 0.0
    %v5872 = vand.u32 %v3719, 4294901760
    %v5873 = vsub.f32 %v3719, %v5872
    %5874 = vmatpush1.msra.mxu0 %v5873
    %5875 = vmatprep.subr.mxu0 0.0
    %v5876 = vand.u32 %v3718, 4294901760
    %v5877 = vsub.f32 %v3718, %v5876
    %5878 = vmatpush1.msra.mxu0 %v5877
    %5879 = vmatprep.subr.mxu0 0.0
    %v5880 = vand.u32 %v3717, 4294901760
    %v5881 = vsub.f32 %v3717, %v5880
    %5882 = vmatpush1.msra.mxu0 %v5881
    %5883 = vmatprep.subr.mxu0 0.0
    %v5884 = vand.u32 %v3716, 4294901760
    %v5885 = vsub.f32 %v3716, %v5884
    %5886 = vmatpush1.msra.mxu0 %v5885
    %5887 = vmatprep.subr.mxu0 0.0
    %v5888 = vand.u32 %v3715, 4294901760
    %v5889 = vsub.f32 %v3715, %v5888
    %5890 = vmatpush1.msra.mxu0 %v5889
    %5891 = vmatprep.subr.mxu0 0.0
    %v5892 = vand.u32 %v3714, 4294901760
    %v5893 = vsub.f32 %v3714, %v5892
    %5894 = vmatpush1.msra.mxu0 %v5893
    %5895 = vmatprep.subr.mxu0 0.0
    %v5896 = vand.u32 %v3713, 4294901760
    %v5897 = vsub.f32 %v3713, %v5896
    %5898 = vmatpush1.msra.mxu0 %v5897
    %5899 = vmatprep.subr.mxu0 0.0
    %v5900 = vand.u32 %v3712, 4294901760
    %v5901 = vsub.f32 %v3712, %v5900
    %5902 = vmatpush1.msra.mxu0 %v5901
    %5903 = vmatprep.subr.mxu0 0.0
    %v5904 = vand.u32 %v3711, 4294901760
    %v5905 = vsub.f32 %v3711, %v5904
    %5906 = vmatpush1.msra.mxu0 %v5905
    %5907 = vmatprep.subr.mxu0 0.0
    %v5908 = vand.u32 %v3742, 4294901760
    %v5909 = vsub.f32 %v3742, %v5908
    %5910 = vmatpush2.msra.mxu0 %v5909
    %5911 = vmatprep.subr.mxu0 0.0
    %v5912 = vand.u32 %v3741, 4294901760
    %v5913 = vsub.f32 %v3741, %v5912
    %5914 = vmatpush2.msra.mxu0 %v5913
    %5915 = vmatprep.subr.mxu0 0.0
    %v5916 = vand.u32 %v3740, 4294901760
    %v5917 = vsub.f32 %v3740, %v5916
    %5918 = vmatpush2.msra.mxu0 %v5917
    %5919 = vmatprep.subr.mxu0 0.0
    %v5920 = vand.u32 %v3739, 4294901760
    %v5921 = vsub.f32 %v3739, %v5920
    %5922 = vmatpush2.msra.mxu0 %v5921
    %5923 = vmatprep.subr.mxu0 0.0
    %v5924 = vand.u32 %v3738, 4294901760
    %v5925 = vsub.f32 %v3738, %v5924
    %5926 = vmatpush2.msra.mxu0 %v5925
    %5927 = vmatprep.subr.mxu0 0.0
    %v5928 = vand.u32 %v3737, 4294901760
    %v5929 = vsub.f32 %v3737, %v5928
    %5930 = vmatpush2.msra.mxu0 %v5929
    %5931 = vmatprep.subr.mxu0 0.0
    %v5932 = vand.u32 %v3736, 4294901760
    %v5933 = vsub.f32 %v3736, %v5932
    %5934 = vmatpush2.msra.mxu0 %v5933
    %5935 = vmatprep.subr.mxu0 0.0
    %v5936 = vand.u32 %v3735, 4294901760
    %v5937 = vsub.f32 %v3735, %v5936
    %5938 = vmatpush2.msra.mxu0 %v5937
    %5939 = vmatprep.subr.mxu0 0.0
    %v5940 = vand.u32 %v3734, 4294901760
    %v5941 = vsub.f32 %v3734, %v5940
    %5942 = vmatpush2.msra.mxu0 %v5941
    %5943 = vmatprep.subr.mxu0 0.0
    %v5944 = vand.u32 %v3733, 4294901760
    %v5945 = vsub.f32 %v3733, %v5944
    %5946 = vmatpush2.msra.mxu0 %v5945
    %5947 = vmatprep.subr.mxu0 0.0
    %v5948 = vand.u32 %v3732, 4294901760
    %v5949 = vsub.f32 %v3732, %v5948
    %5950 = vmatpush2.msra.mxu0 %v5949
    %5951 = vmatprep.subr.mxu0 0.0
    %v5952 = vand.u32 %v3731, 4294901760
    %v5953 = vsub.f32 %v3731, %v5952
    %5954 = vmatpush2.msra.mxu0 %v5953
    %5955 = vmatprep.subr.mxu0 0.0
    %v5956 = vand.u32 %v3730, 4294901760
    %v5957 = vsub.f32 %v3730, %v5956
    %5958 = vmatpush2.msra.mxu0 %v5957
    %5959 = vmatprep.subr.mxu0 0.0
    %v5960 = vand.u32 %v3729, 4294901760
    %v5961 = vsub.f32 %v3729, %v5960
    %5962 = vmatpush2.msra.mxu0 %v5961
    %5963 = vmatprep.subr.mxu0 0.0
    %v5964 = vand.u32 %v3728, 4294901760
    %v5965 = vsub.f32 %v3728, %v5964
    %5966 = vmatpush2.msra.mxu0 %v5965
    %5967 = vmatprep.subr.mxu0 0.0
    %v5968 = vand.u32 %v3727, 4294901760
    %v5969 = vsub.f32 %v3727, %v5968
    %5970 = vmatpush2.msra.mxu0 %v5969
    %v5971 = vand.u32 %v3644, 4294901760
    %v5972 = vsub.f32 %v3644, %v5971
    %5973 = vmatprep.mubr.f32.mxu0 %v5972
    %v5974 = vand.u32 %v3643, 4294901760
    %v5975 = vsub.f32 %v3643, %v5974
    %5976 = vmatmul.mubr.f32.gmra.mxu0 %v5975
    %v5977 = vpop.f32.mrf.mxu0
    %v5978 = vadd.f32 %v5840, %v5977
    %v5979 = vpop.f32.mrf.mxu0
    %5980 = vdwg.mxu0
    %5981 = vmatprep.subr.mxu0 0.0
    %v5982 = vand.u32 %v3726, 4294901760
    %5983 = vmatpush1.msra.mxu0 %v5982
    %5984 = vmatprep.subr.mxu0 0.0
    %v5985 = vand.u32 %v3725, 4294901760
    %5986 = vmatpush1.msra.mxu0 %v5985
    %5987 = vmatprep.subr.mxu0 0.0
    %v5988 = vand.u32 %v3724, 4294901760
    %5989 = vmatpush1.msra.mxu0 %v5988
    %5990 = vmatprep.subr.mxu0 0.0
    %v5991 = vand.u32 %v3723, 4294901760
    %5992 = vmatpush1.msra.mxu0 %v5991
    %5993 = vmatprep.subr.mxu0 0.0
    %v5994 = vand.u32 %v3722, 4294901760
    %5995 = vmatpush1.msra.mxu0 %v5994
    %5996 = vmatprep.subr.mxu0 0.0
    %v5997 = vand.u32 %v3721, 4294901760
    %5998 = vmatpush1.msra.mxu0 %v5997
    %5999 = vmatprep.subr.mxu0 0.0
    %v6000 = vand.u32 %v3720, 4294901760
    %6001 = vmatpush1.msra.mxu0 %v6000
    %6002 = vmatprep.subr.mxu0 0.0
    %v6003 = vand.u32 %v3719, 4294901760
    %6004 = vmatpush1.msra.mxu0 %v6003
    %6005 = vmatprep.subr.mxu0 0.0
    %v6006 = vand.u32 %v3718, 4294901760
    %6007 = vmatpush1.msra.mxu0 %v6006
    %6008 = vmatprep.subr.mxu0 0.0
    %v6009 = vand.u32 %v3717, 4294901760
    %6010 = vmatpush1.msra.mxu0 %v6009
    %6011 = vmatprep.subr.mxu0 0.0
    %v6012 = vand.u32 %v3716, 4294901760
    %6013 = vmatpush1.msra.mxu0 %v6012
    %6014 = vmatprep.subr.mxu0 0.0
    %v6015 = vand.u32 %v3715, 4294901760
    %6016 = vmatpush1.msra.mxu0 %v6015
    %6017 = vmatprep.subr.mxu0 0.0
    %v6018 = vand.u32 %v3714, 4294901760
    %6019 = vmatpush1.msra.mxu0 %v6018
    %6020 = vmatprep.subr.mxu0 0.0
    %v6021 = vand.u32 %v3713, 4294901760
    %6022 = vmatpush1.msra.mxu0 %v6021
    %6023 = vmatprep.subr.mxu0 0.0
    %v6024 = vand.u32 %v3712, 4294901760
    %6025 = vmatpush1.msra.mxu0 %v6024
    %6026 = vmatprep.subr.mxu0 0.0
    %v6027 = vand.u32 %v3711, 4294901760
    %6028 = vmatpush1.msra.mxu0 %v6027
    %6029 = vmatprep.subr.mxu0 0.0
    %v6030 = vand.u32 %v3742, 4294901760
    %6031 = vmatpush2.msra.mxu0 %v6030
    %6032 = vmatprep.subr.mxu0 0.0
    %v6033 = vand.u32 %v3741, 4294901760
    %6034 = vmatpush2.msra.mxu0 %v6033
    %6035 = vmatprep.subr.mxu0 0.0
    %v6036 = vand.u32 %v3740, 4294901760
    %6037 = vmatpush2.msra.mxu0 %v6036
    %6038 = vmatprep.subr.mxu0 0.0
    %v6039 = vand.u32 %v3739, 4294901760
    %6040 = vmatpush2.msra.mxu0 %v6039
    %6041 = vmatprep.subr.mxu0 0.0
    %v6042 = vand.u32 %v3738, 4294901760
    %6043 = vmatpush2.msra.mxu0 %v6042
    %6044 = vmatprep.subr.mxu0 0.0
    %v6045 = vand.u32 %v3737, 4294901760
    %6046 = vmatpush2.msra.mxu0 %v6045
    %6047 = vmatprep.subr.mxu0 0.0
    %v6048 = vand.u32 %v3736, 4294901760
    %6049 = vmatpush2.msra.mxu0 %v6048
    %6050 = vmatprep.subr.mxu0 0.0
    %v6051 = vand.u32 %v3735, 4294901760
    %6052 = vmatpush2.msra.mxu0 %v6051
    %6053 = vmatprep.subr.mxu0 0.0
    %v6054 = vand.u32 %v3734, 4294901760
    %6055 = vmatpush2.msra.mxu0 %v6054
    %6056 = vmatprep.subr.mxu0 0.0
    %v6057 = vand.u32 %v3733, 4294901760
    %6058 = vmatpush2.msra.mxu0 %v6057
    %6059 = vmatprep.subr.mxu0 0.0
    %v6060 = vand.u32 %v3732, 4294901760
    %6061 = vmatpush2.msra.mxu0 %v6060
    %6062 = vmatprep.subr.mxu0 0.0
    %v6063 = vand.u32 %v3731, 4294901760
    %6064 = vmatpush2.msra.mxu0 %v6063
    %6065 = vmatprep.subr.mxu0 0.0
    %v6066 = vand.u32 %v3730, 4294901760
    %6067 = vmatpush2.msra.mxu0 %v6066
    %6068 = vmatprep.subr.mxu0 0.0
    %v6069 = vand.u32 %v3729, 4294901760
    %6070 = vmatpush2.msra.mxu0 %v6069
    %6071 = vmatprep.subr.mxu0 0.0
    %v6072 = vand.u32 %v3728, 4294901760
    %6073 = vmatpush2.msra.mxu0 %v6072
    %6074 = vmatprep.subr.mxu0 0.0
    %v6075 = vand.u32 %v3727, 4294901760
    %6076 = vmatpush2.msra.mxu0 %v6075
    %v6077 = vand.u32 %v3644, 4294901760
    %v6078 = vsub.f32 %v3644, %v6077
    %v6079 = vand.u32 %v6078, 4294901760
    %6080 = vmatprep.mubr.f32.mxu0 %v6079
    %v6081 = vand.u32 %v3643, 4294901760
    %v6082 = vsub.f32 %v3643, %v6081
    %v6083 = vand.u32 %v6082, 4294901760
    %6084 = vmatmul.mubr.f32.gmra.mxu0 %v6083
    %v6085 = vpop.f32.mrf.mxu0
    %v6086 = vadd.f32 %v5978, %v6085
    %v6087 = vpop.f32.mrf.mxu0
    %6088 = vdwg.mxu0
    %6089 = vmatprep.subr.mxu0 0.0
    %v6090 = vand.u32 %v3726, 4294901760
    %v6091 = vsub.f32 %v3726, %v6090
    %v6092 = vand.u32 %v6091, 4294901760
    %6093 = vmatpush1.msra.mxu0 %v6092
    %6094 = vmatprep.subr.mxu0 0.0
    %v6095 = vand.u32 %v3725, 4294901760
    %v6096 = vsub.f32 %v3725, %v6095
    %v6097 = vand.u32 %v6096, 4294901760
    %6098 = vmatpush1.msra.mxu0 %v6097
    %6099 = vmatprep.subr.mxu0 0.0
    %v6100 = vand.u32 %v3724, 4294901760
    %v6101 = vsub.f32 %v3724, %v6100
    %v6102 = vand.u32 %v6101, 4294901760
    %6103 = vmatpush1.msra.mxu0 %v6102
    %6104 = vmatprep.subr.mxu0 0.0
    %v6105 = vand.u32 %v3723, 4294901760
    %v6106 = vsub.f32 %v3723, %v6105
    %v6107 = vand.u32 %v6106, 4294901760
    %6108 = vmatpush1.msra.mxu0 %v6107
    %6109 = vmatprep.subr.mxu0 0.0
    %v6110 = vand.u32 %v3722, 4294901760
    %v6111 = vsub.f32 %v3722, %v6110
    %v6112 = vand.u32 %v6111, 4294901760
    %6113 = vmatpush1.msra.mxu0 %v6112
    %6114 = vmatprep.subr.mxu0 0.0
    %v6115 = vand.u32 %v3721, 4294901760
    %v6116 = vsub.f32 %v3721, %v6115
    %v6117 = vand.u32 %v6116, 4294901760
    %6118 = vmatpush1.msra.mxu0 %v6117
    %6119 = vmatprep.subr.mxu0 0.0
    %v6120 = vand.u32 %v3720, 4294901760
    %v6121 = vsub.f32 %v3720, %v6120
    %v6122 = vand.u32 %v6121, 4294901760
    %6123 = vmatpush1.msra.mxu0 %v6122
    %6124 = vmatprep.subr.mxu0 0.0
    %v6125 = vand.u32 %v3719, 4294901760
    %v6126 = vsub.f32 %v3719, %v6125
    %v6127 = vand.u32 %v6126, 4294901760
    %6128 = vmatpush1.msra.mxu0 %v6127
    %6129 = vmatprep.subr.mxu0 0.0
    %v6130 = vand.u32 %v3718, 4294901760
    %v6131 = vsub.f32 %v3718, %v6130
    %v6132 = vand.u32 %v6131, 4294901760
    %6133 = vmatpush1.msra.mxu0 %v6132
    %6134 = vmatprep.subr.mxu0 0.0
    %v6135 = vand.u32 %v3717, 4294901760
    %v6136 = vsub.f32 %v3717, %v6135
    %v6137 = vand.u32 %v6136, 4294901760
    %6138 = vmatpush1.msra.mxu0 %v6137
    %6139 = vmatprep.subr.mxu0 0.0
    %v6140 = vand.u32 %v3716, 4294901760
    %v6141 = vsub.f32 %v3716, %v6140
    %v6142 = vand.u32 %v6141, 4294901760
    %6143 = vmatpush1.msra.mxu0 %v6142
    %6144 = vmatprep.subr.mxu0 0.0
    %v6145 = vand.u32 %v3715, 4294901760
    %v6146 = vsub.f32 %v3715, %v6145
    %v6147 = vand.u32 %v6146, 4294901760
    %6148 = vmatpush1.msra.mxu0 %v6147
    %6149 = vmatprep.subr.mxu0 0.0
    %v6150 = vand.u32 %v3714, 4294901760
    %v6151 = vsub.f32 %v3714, %v6150
    %v6152 = vand.u32 %v6151, 4294901760
    %6153 = vmatpush1.msra.mxu0 %v6152
    %6154 = vmatprep.subr.mxu0 0.0
    %v6155 = vand.u32 %v3713, 4294901760
    %v6156 = vsub.f32 %v3713, %v6155
    %v6157 = vand.u32 %v6156, 4294901760
    %6158 = vmatpush1.msra.mxu0 %v6157
    %6159 = vmatprep.subr.mxu0 0.0
    %v6160 = vand.u32 %v3712, 4294901760
    %v6161 = vsub.f32 %v3712, %v6160
    %v6162 = vand.u32 %v6161, 4294901760
    %6163 = vmatpush1.msra.mxu0 %v6162
    %6164 = vmatprep.subr.mxu0 0.0
    %v6165 = vand.u32 %v3711, 4294901760
    %v6166 = vsub.f32 %v3711, %v6165
    %v6167 = vand.u32 %v6166, 4294901760
    %6168 = vmatpush1.msra.mxu0 %v6167
    %6169 = vmatprep.subr.mxu0 0.0
    %v6170 = vand.u32 %v3742, 4294901760
    %v6171 = vsub.f32 %v3742, %v6170
    %v6172 = vand.u32 %v6171, 4294901760
    %6173 = vmatpush2.msra.mxu0 %v6172
    %6174 = vmatprep.subr.mxu0 0.0
    %v6175 = vand.u32 %v3741, 4294901760
    %v6176 = vsub.f32 %v3741, %v6175
    %v6177 = vand.u32 %v6176, 4294901760
    %6178 = vmatpush2.msra.mxu0 %v6177
    %6179 = vmatprep.subr.mxu0 0.0
    %v6180 = vand.u32 %v3740, 4294901760
    %v6181 = vsub.f32 %v3740, %v6180
    %v6182 = vand.u32 %v6181, 4294901760
    %6183 = vmatpush2.msra.mxu0 %v6182
    %6184 = vmatprep.subr.mxu0 0.0
    %v6185 = vand.u32 %v3739, 4294901760
    %v6186 = vsub.f32 %v3739, %v6185
    %v6187 = vand.u32 %v6186, 4294901760
    %6188 = vmatpush2.msra.mxu0 %v6187
    %6189 = vmatprep.subr.mxu0 0.0
    %v6190 = vand.u32 %v3738, 4294901760
    %v6191 = vsub.f32 %v3738, %v6190
    %v6192 = vand.u32 %v6191, 4294901760
    %6193 = vmatpush2.msra.mxu0 %v6192
    %6194 = vmatprep.subr.mxu0 0.0
    %v6195 = vand.u32 %v3737, 4294901760
    %v6196 = vsub.f32 %v3737, %v6195
    %v6197 = vand.u32 %v6196, 4294901760
    %6198 = vmatpush2.msra.mxu0 %v6197
    %6199 = vmatprep.subr.mxu0 0.0
    %v6200 = vand.u32 %v3736, 4294901760
    %v6201 = vsub.f32 %v3736, %v6200
    %v6202 = vand.u32 %v6201, 4294901760
    %6203 = vmatpush2.msra.mxu0 %v6202
    %6204 = vmatprep.subr.mxu0 0.0
    %v6205 = vand.u32 %v3735, 4294901760
    %v6206 = vsub.f32 %v3735, %v6205
    %v6207 = vand.u32 %v6206, 4294901760
    %6208 = vmatpush2.msra.mxu0 %v6207
    %6209 = vmatprep.subr.mxu0 0.0
    %v6210 = vand.u32 %v3734, 4294901760
    %v6211 = vsub.f32 %v3734, %v6210
    %v6212 = vand.u32 %v6211, 4294901760
    %6213 = vmatpush2.msra.mxu0 %v6212
    %6214 = vmatprep.subr.mxu0 0.0
    %v6215 = vand.u32 %v3733, 4294901760
    %v6216 = vsub.f32 %v3733, %v6215
    %v6217 = vand.u32 %v6216, 4294901760
    %6218 = vmatpush2.msra.mxu0 %v6217
    %6219 = vmatprep.subr.mxu0 0.0
    %v6220 = vand.u32 %v3732, 4294901760
    %v6221 = vsub.f32 %v3732, %v6220
    %v6222 = vand.u32 %v6221, 4294901760
    %6223 = vmatpush2.msra.mxu0 %v6222
    %6224 = vmatprep.subr.mxu0 0.0
    %v6225 = vand.u32 %v3731, 4294901760
    %v6226 = vsub.f32 %v3731, %v6225
    %v6227 = vand.u32 %v6226, 4294901760
    %6228 = vmatpush2.msra.mxu0 %v6227
    %6229 = vmatprep.subr.mxu0 0.0
    %v6230 = vand.u32 %v3730, 4294901760
    %v6231 = vsub.f32 %v3730, %v6230
    %v6232 = vand.u32 %v6231, 4294901760
    %6233 = vmatpush2.msra.mxu0 %v6232
    %6234 = vmatprep.subr.mxu0 0.0
    %v6235 = vand.u32 %v3729, 4294901760
    %v6236 = vsub.f32 %v3729, %v6235
    %v6237 = vand.u32 %v6236, 4294901760
    %6238 = vmatpush2.msra.mxu0 %v6237
    %6239 = vmatprep.subr.mxu0 0.0
    %v6240 = vand.u32 %v3728, 4294901760
    %v6241 = vsub.f32 %v3728, %v6240
    %v6242 = vand.u32 %v6241, 4294901760
    %6243 = vmatpush2.msra.mxu0 %v6242
    %6244 = vmatprep.subr.mxu0 0.0
    %v6245 = vand.u32 %v3727, 4294901760
    %v6246 = vsub.f32 %v3727, %v6245
    %v6247 = vand.u32 %v6246, 4294901760
    %6248 = vmatpush2.msra.mxu0 %v6247
    %v6249 = vand.u32 %v3644, 4294901760
    %6250 = vmatprep.mubr.f32.mxu0 %v6249
    %v6251 = vand.u32 %v3643, 4294901760
    %6252 = vmatmul.mubr.f32.gmra.mxu0 %v6251
    %v6253 = vpop.f32.mrf.mxu0
    %v6254 = vadd.f32 %v6086, %v6253
    %v6255 = vpop.f32.mrf.mxu0
    %6256 = vdwg.mxu0
    %6257 = vmatprep.subr.mxu0 0.0
    %v6258 = vand.u32 %v3726, 4294901760
    %6259 = vmatpush1.msra.mxu0 %v6258
    %6260 = vmatprep.subr.mxu0 0.0
    %v6261 = vand.u32 %v3725, 4294901760
    %6262 = vmatpush1.msra.mxu0 %v6261
    %6263 = vmatprep.subr.mxu0 0.0
    %v6264 = vand.u32 %v3724, 4294901760
    %6265 = vmatpush1.msra.mxu0 %v6264
    %6266 = vmatprep.subr.mxu0 0.0
    %v6267 = vand.u32 %v3723, 4294901760
    %6268 = vmatpush1.msra.mxu0 %v6267
    %6269 = vmatprep.subr.mxu0 0.0
    %v6270 = vand.u32 %v3722, 4294901760
    %6271 = vmatpush1.msra.mxu0 %v6270
    %6272 = vmatprep.subr.mxu0 0.0
    %v6273 = vand.u32 %v3721, 4294901760
    %6274 = vmatpush1.msra.mxu0 %v6273
    %6275 = vmatprep.subr.mxu0 0.0
    %v6276 = vand.u32 %v3720, 4294901760
    %6277 = vmatpush1.msra.mxu0 %v6276
    %6278 = vmatprep.subr.mxu0 0.0
    %v6279 = vand.u32 %v3719, 4294901760
    %6280 = vmatpush1.msra.mxu0 %v6279
    %6281 = vmatprep.subr.mxu0 0.0
    %v6282 = vand.u32 %v3718, 4294901760
    %6283 = vmatpush1.msra.mxu0 %v6282
    %6284 = vmatprep.subr.mxu0 0.0
    %v6285 = vand.u32 %v3717, 4294901760
    %6286 = vmatpush1.msra.mxu0 %v6285
    %6287 = vmatprep.subr.mxu0 0.0
    %v6288 = vand.u32 %v3716, 4294901760
    %6289 = vmatpush1.msra.mxu0 %v6288
    %6290 = vmatprep.subr.mxu0 0.0
    %v6291 = vand.u32 %v3715, 4294901760
    %6292 = vmatpush1.msra.mxu0 %v6291
    %6293 = vmatprep.subr.mxu0 0.0
    %v6294 = vand.u32 %v3714, 4294901760
    %6295 = vmatpush1.msra.mxu0 %v6294
    %6296 = vmatprep.subr.mxu0 0.0
    %v6297 = vand.u32 %v3713, 4294901760
    %6298 = vmatpush1.msra.mxu0 %v6297
    %6299 = vmatprep.subr.mxu0 0.0
    %v6300 = vand.u32 %v3712, 4294901760
    %6301 = vmatpush1.msra.mxu0 %v6300
    %6302 = vmatprep.subr.mxu0 0.0
    %v6303 = vand.u32 %v3711, 4294901760
    %6304 = vmatpush1.msra.mxu0 %v6303
    %6305 = vmatprep.subr.mxu0 0.0
    %v6306 = vand.u32 %v3742, 4294901760
    %6307 = vmatpush2.msra.mxu0 %v6306
    %6308 = vmatprep.subr.mxu0 0.0
    %v6309 = vand.u32 %v3741, 4294901760
    %6310 = vmatpush2.msra.mxu0 %v6309
    %6311 = vmatprep.subr.mxu0 0.0
    %v6312 = vand.u32 %v3740, 4294901760
    %6313 = vmatpush2.msra.mxu0 %v6312
    %6314 = vmatprep.subr.mxu0 0.0
    %v6315 = vand.u32 %v3739, 4294901760
    %6316 = vmatpush2.msra.mxu0 %v6315
    %6317 = vmatprep.subr.mxu0 0.0
    %v6318 = vand.u32 %v3738, 4294901760
    %6319 = vmatpush2.msra.mxu0 %v6318
    %6320 = vmatprep.subr.mxu0 0.0
    %v6321 = vand.u32 %v3737, 4294901760
    %6322 = vmatpush2.msra.mxu0 %v6321
    %6323 = vmatprep.subr.mxu0 0.0
    %v6324 = vand.u32 %v3736, 4294901760
    %6325 = vmatpush2.msra.mxu0 %v6324
    %6326 = vmatprep.subr.mxu0 0.0
    %v6327 = vand.u32 %v3735, 4294901760
    %6328 = vmatpush2.msra.mxu0 %v6327
    %6329 = vmatprep.subr.mxu0 0.0
    %v6330 = vand.u32 %v3734, 4294901760
    %6331 = vmatpush2.msra.mxu0 %v6330
    %6332 = vmatprep.subr.mxu0 0.0
    %v6333 = vand.u32 %v3733, 4294901760
    %6334 = vmatpush2.msra.mxu0 %v6333
    %6335 = vmatprep.subr.mxu0 0.0
    %v6336 = vand.u32 %v3732, 4294901760
    %6337 = vmatpush2.msra.mxu0 %v6336
    %6338 = vmatprep.subr.mxu0 0.0
    %v6339 = vand.u32 %v3731, 4294901760
    %6340 = vmatpush2.msra.mxu0 %v6339
    %6341 = vmatprep.subr.mxu0 0.0
    %v6342 = vand.u32 %v3730, 4294901760
    %6343 = vmatpush2.msra.mxu0 %v6342
    %6344 = vmatprep.subr.mxu0 0.0
    %v6345 = vand.u32 %v3729, 4294901760
    %6346 = vmatpush2.msra.mxu0 %v6345
    %6347 = vmatprep.subr.mxu0 0.0
    %v6348 = vand.u32 %v3728, 4294901760
    %6349 = vmatpush2.msra.mxu0 %v6348
    %6350 = vmatprep.subr.mxu0 0.0
    %v6351 = vand.u32 %v3727, 4294901760
    %6352 = vmatpush2.msra.mxu0 %v6351
    %v6353 = vand.u32 %v3644, 4294901760
    %6354 = vmatprep.mubr.f32.mxu0 %v6353
    %v6355 = vand.u32 %v3643, 4294901760
    %6356 = vmatmul.mubr.f32.gmra.mxu0 %v6355
    %v6357 = vpop.f32.mrf.mxu0
    %v6358 = vadd.f32 %v6254, %v6357
    %v6359 = vpop.f32.mrf.mxu0
    %6360 = vdwg.mxu0
    %6361 = vmatprep.subr.mxu0 0.0
    %v6362 = vand.u32 %v3758, 4294901760
    %6363 = vmatpush1.msra.mxu0 %v6362
    %6364 = vmatprep.subr.mxu0 0.0
    %v6365 = vand.u32 %v3757, 4294901760
    %6366 = vmatpush1.msra.mxu0 %v6365
    %6367 = vmatprep.subr.mxu0 0.0
    %v6368 = vand.u32 %v3756, 4294901760
    %6369 = vmatpush1.msra.mxu0 %v6368
    %6370 = vmatprep.subr.mxu0 0.0
    %v6371 = vand.u32 %v3755, 4294901760
    %6372 = vmatpush1.msra.mxu0 %v6371
    %6373 = vmatprep.subr.mxu0 0.0
    %v6374 = vand.u32 %v3754, 4294901760
    %6375 = vmatpush1.msra.mxu0 %v6374
    %6376 = vmatprep.subr.mxu0 0.0
    %v6377 = vand.u32 %v3753, 4294901760
    %6378 = vmatpush1.msra.mxu0 %v6377
    %6379 = vmatprep.subr.mxu0 0.0
    %v6380 = vand.u32 %v3752, 4294901760
    %6381 = vmatpush1.msra.mxu0 %v6380
    %6382 = vmatprep.subr.mxu0 0.0
    %v6383 = vand.u32 %v3751, 4294901760
    %6384 = vmatpush1.msra.mxu0 %v6383
    %6385 = vmatprep.subr.mxu0 0.0
    %v6386 = vand.u32 %v3750, 4294901760
    %6387 = vmatpush1.msra.mxu0 %v6386
    %6388 = vmatprep.subr.mxu0 0.0
    %v6389 = vand.u32 %v3749, 4294901760
    %6390 = vmatpush1.msra.mxu0 %v6389
    %6391 = vmatprep.subr.mxu0 0.0
    %v6392 = vand.u32 %v3748, 4294901760
    %6393 = vmatpush1.msra.mxu0 %v6392
    %6394 = vmatprep.subr.mxu0 0.0
    %v6395 = vand.u32 %v3747, 4294901760
    %6396 = vmatpush1.msra.mxu0 %v6395
    %6397 = vmatprep.subr.mxu0 0.0
    %v6398 = vand.u32 %v3746, 4294901760
    %6399 = vmatpush1.msra.mxu0 %v6398
    %6400 = vmatprep.subr.mxu0 0.0
    %v6401 = vand.u32 %v3745, 4294901760
    %6402 = vmatpush1.msra.mxu0 %v6401
    %6403 = vmatprep.subr.mxu0 0.0
    %v6404 = vand.u32 %v3744, 4294901760
    %6405 = vmatpush1.msra.mxu0 %v6404
    %6406 = vmatprep.subr.mxu0 0.0
    %v6407 = vand.u32 %v3743, 4294901760
    %6408 = vmatpush1.msra.mxu0 %v6407
    %6409 = vmatprep.subr.mxu0 0.0
    %v6410 = vand.u32 %v3774, 4294901760
    %6411 = vmatpush2.msra.mxu0 %v6410
    %6412 = vmatprep.subr.mxu0 0.0
    %v6413 = vand.u32 %v3773, 4294901760
    %6414 = vmatpush2.msra.mxu0 %v6413
    %6415 = vmatprep.subr.mxu0 0.0
    %v6416 = vand.u32 %v3772, 4294901760
    %6417 = vmatpush2.msra.mxu0 %v6416
    %6418 = vmatprep.subr.mxu0 0.0
    %v6419 = vand.u32 %v3771, 4294901760
    %6420 = vmatpush2.msra.mxu0 %v6419
    %6421 = vmatprep.subr.mxu0 0.0
    %v6422 = vand.u32 %v3770, 4294901760
    %6423 = vmatpush2.msra.mxu0 %v6422
    %6424 = vmatprep.subr.mxu0 0.0
    %v6425 = vand.u32 %v3769, 4294901760
    %6426 = vmatpush2.msra.mxu0 %v6425
    %6427 = vmatprep.subr.mxu0 0.0
    %v6428 = vand.u32 %v3768, 4294901760
    %6429 = vmatpush2.msra.mxu0 %v6428
    %6430 = vmatprep.subr.mxu0 0.0
    %v6431 = vand.u32 %v3767, 4294901760
    %6432 = vmatpush2.msra.mxu0 %v6431
    %6433 = vmatprep.subr.mxu0 0.0
    %v6434 = vand.u32 %v3766, 4294901760
    %6435 = vmatpush2.msra.mxu0 %v6434
    %6436 = vmatprep.subr.mxu0 0.0
    %v6437 = vand.u32 %v3765, 4294901760
    %6438 = vmatpush2.msra.mxu0 %v6437
    %6439 = vmatprep.subr.mxu0 0.0
    %v6440 = vand.u32 %v3764, 4294901760
    %6441 = vmatpush2.msra.mxu0 %v6440
    %6442 = vmatprep.subr.mxu0 0.0
    %v6443 = vand.u32 %v3763, 4294901760
    %6444 = vmatpush2.msra.mxu0 %v6443
    %6445 = vmatprep.subr.mxu0 0.0
    %v6446 = vand.u32 %v3762, 4294901760
    %6447 = vmatpush2.msra.mxu0 %v6446
    %6448 = vmatprep.subr.mxu0 0.0
    %v6449 = vand.u32 %v3761, 4294901760
    %6450 = vmatpush2.msra.mxu0 %v6449
    %6451 = vmatprep.subr.mxu0 0.0
    %v6452 = vand.u32 %v3760, 4294901760
    %6453 = vmatpush2.msra.mxu0 %v6452
    %6454 = vmatprep.subr.mxu0 0.0
    %v6455 = vand.u32 %v3759, 4294901760
    %6456 = vmatpush2.msra.mxu0 %v6455
    %v6457 = vand.u32 %v3646, 4294901760
    %v6458 = vsub.f32 %v3646, %v6457
    %v6459 = vand.u32 %v6458, 4294901760
    %v6460 = vsub.f32 %v6458, %v6459
    %v6461 = vand.u32 %v6460, 4294901760
    %6462 = vmatprep.mubr.f32.mxu0 %v6461
    %v6463 = vand.u32 %v3645, 4294901760
    %v6464 = vsub.f32 %v3645, %v6463
    %v6465 = vand.u32 %v6464, 4294901760
    %v6466 = vsub.f32 %v6464, %v6465
    %v6467 = vand.u32 %v6466, 4294901760
    %6468 = vmatmul.mubr.f32.gmra.mxu0 %v6467
    %v6469 = vpop.f32.mrf.mxu0
    %v6470 = vadd.f32 %v6358, %v6469
    %v6471 = vpop.f32.mrf.mxu0
    %6472 = vdwg.mxu0
    %6473 = vmatprep.subr.mxu0 0.0
    %v6474 = vand.u32 %v3758, 4294901760
    %v6475 = vsub.f32 %v3758, %v6474
    %v6476 = vand.u32 %v6475, 4294901760
    %v6477 = vsub.f32 %v6475, %v6476
    %v6478 = vand.u32 %v6477, 4294901760
    %6479 = vmatpush1.msra.mxu0 %v6478
    %6480 = vmatprep.subr.mxu0 0.0
    %v6481 = vand.u32 %v3757, 4294901760
    %v6482 = vsub.f32 %v3757, %v6481
    %v6483 = vand.u32 %v6482, 4294901760
    %v6484 = vsub.f32 %v6482, %v6483
    %v6485 = vand.u32 %v6484, 4294901760
    %6486 = vmatpush1.msra.mxu0 %v6485
    %6487 = vmatprep.subr.mxu0 0.0
    %v6488 = vand.u32 %v3756, 4294901760
    %v6489 = vsub.f32 %v3756, %v6488
    %v6490 = vand.u32 %v6489, 4294901760
    %v6491 = vsub.f32 %v6489, %v6490
    %v6492 = vand.u32 %v6491, 4294901760
    %6493 = vmatpush1.msra.mxu0 %v6492
    %6494 = vmatprep.subr.mxu0 0.0
    %v6495 = vand.u32 %v3755, 4294901760
    %v6496 = vsub.f32 %v3755, %v6495
    %v6497 = vand.u32 %v6496, 4294901760
    %v6498 = vsub.f32 %v6496, %v6497
    %v6499 = vand.u32 %v6498, 4294901760
    %6500 = vmatpush1.msra.mxu0 %v6499
    %6501 = vmatprep.subr.mxu0 0.0
    %v6502 = vand.u32 %v3754, 4294901760
    %v6503 = vsub.f32 %v3754, %v6502
    %v6504 = vand.u32 %v6503, 4294901760
    %v6505 = vsub.f32 %v6503, %v6504
    %v6506 = vand.u32 %v6505, 4294901760
    %6507 = vmatpush1.msra.mxu0 %v6506
    %6508 = vmatprep.subr.mxu0 0.0
    %v6509 = vand.u32 %v3753, 4294901760
    %v6510 = vsub.f32 %v3753, %v6509
    %v6511 = vand.u32 %v6510, 4294901760
    %v6512 = vsub.f32 %v6510, %v6511
    %v6513 = vand.u32 %v6512, 4294901760
    %6514 = vmatpush1.msra.mxu0 %v6513
    %6515 = vmatprep.subr.mxu0 0.0
    %v6516 = vand.u32 %v3752, 4294901760
    %v6517 = vsub.f32 %v3752, %v6516
    %v6518 = vand.u32 %v6517, 4294901760
    %v6519 = vsub.f32 %v6517, %v6518
    %v6520 = vand.u32 %v6519, 4294901760
    %6521 = vmatpush1.msra.mxu0 %v6520
    %6522 = vmatprep.subr.mxu0 0.0
    %v6523 = vand.u32 %v3751, 4294901760
    %v6524 = vsub.f32 %v3751, %v6523
    %v6525 = vand.u32 %v6524, 4294901760
    %v6526 = vsub.f32 %v6524, %v6525
    %v6527 = vand.u32 %v6526, 4294901760
    %6528 = vmatpush1.msra.mxu0 %v6527
    %6529 = vmatprep.subr.mxu0 0.0
    %v6530 = vand.u32 %v3750, 4294901760
    %v6531 = vsub.f32 %v3750, %v6530
    %v6532 = vand.u32 %v6531, 4294901760
    %v6533 = vsub.f32 %v6531, %v6532
    %v6534 = vand.u32 %v6533, 4294901760
    %6535 = vmatpush1.msra.mxu0 %v6534
    %6536 = vmatprep.subr.mxu0 0.0
    %v6537 = vand.u32 %v3749, 4294901760
    %v6538 = vsub.f32 %v3749, %v6537
    %v6539 = vand.u32 %v6538, 4294901760
    %v6540 = vsub.f32 %v6538, %v6539
    %v6541 = vand.u32 %v6540, 4294901760
    %6542 = vmatpush1.msra.mxu0 %v6541
    %6543 = vmatprep.subr.mxu0 0.0
    %v6544 = vand.u32 %v3748, 4294901760
    %v6545 = vsub.f32 %v3748, %v6544
    %v6546 = vand.u32 %v6545, 4294901760
    %v6547 = vsub.f32 %v6545, %v6546
    %v6548 = vand.u32 %v6547, 4294901760
    %6549 = vmatpush1.msra.mxu0 %v6548
    %6550 = vmatprep.subr.mxu0 0.0
    %v6551 = vand.u32 %v3747, 4294901760
    %v6552 = vsub.f32 %v3747, %v6551
    %v6553 = vand.u32 %v6552, 4294901760
    %v6554 = vsub.f32 %v6552, %v6553
    %v6555 = vand.u32 %v6554, 4294901760
    %6556 = vmatpush1.msra.mxu0 %v6555
    %6557 = vmatprep.subr.mxu0 0.0
    %v6558 = vand.u32 %v3746, 4294901760
    %v6559 = vsub.f32 %v3746, %v6558
    %v6560 = vand.u32 %v6559, 4294901760
    %v6561 = vsub.f32 %v6559, %v6560
    %v6562 = vand.u32 %v6561, 4294901760
    %6563 = vmatpush1.msra.mxu0 %v6562
    %6564 = vmatprep.subr.mxu0 0.0
    %v6565 = vand.u32 %v3745, 4294901760
    %v6566 = vsub.f32 %v3745, %v6565
    %v6567 = vand.u32 %v6566, 4294901760
    %v6568 = vsub.f32 %v6566, %v6567
    %v6569 = vand.u32 %v6568, 4294901760
    %6570 = vmatpush1.msra.mxu0 %v6569
    %6571 = vmatprep.subr.mxu0 0.0
    %v6572 = vand.u32 %v3744, 4294901760
    %v6573 = vsub.f32 %v3744, %v6572
    %v6574 = vand.u32 %v6573, 4294901760
    %v6575 = vsub.f32 %v6573, %v6574
    %v6576 = vand.u32 %v6575, 4294901760
    %6577 = vmatpush1.msra.mxu0 %v6576
    %6578 = vmatprep.subr.mxu0 0.0
    %v6579 = vand.u32 %v3743, 4294901760
    %v6580 = vsub.f32 %v3743, %v6579
    %v6581 = vand.u32 %v6580, 4294901760
    %v6582 = vsub.f32 %v6580, %v6581
    %v6583 = vand.u32 %v6582, 4294901760
    %6584 = vmatpush1.msra.mxu0 %v6583
    %6585 = vmatprep.subr.mxu0 0.0
    %v6586 = vand.u32 %v3774, 4294901760
    %v6587 = vsub.f32 %v3774, %v6586
    %v6588 = vand.u32 %v6587, 4294901760
    %v6589 = vsub.f32 %v6587, %v6588
    %v6590 = vand.u32 %v6589, 4294901760
    %6591 = vmatpush2.msra.mxu0 %v6590
    %6592 = vmatprep.subr.mxu0 0.0
    %v6593 = vand.u32 %v3773, 4294901760
    %v6594 = vsub.f32 %v3773, %v6593
    %v6595 = vand.u32 %v6594, 4294901760
    %v6596 = vsub.f32 %v6594, %v6595
    %v6597 = vand.u32 %v6596, 4294901760
    %6598 = vmatpush2.msra.mxu0 %v6597
    %6599 = vmatprep.subr.mxu0 0.0
    %v6600 = vand.u32 %v3772, 4294901760
    %v6601 = vsub.f32 %v3772, %v6600
    %v6602 = vand.u32 %v6601, 4294901760
    %v6603 = vsub.f32 %v6601, %v6602
    %v6604 = vand.u32 %v6603, 4294901760
    %6605 = vmatpush2.msra.mxu0 %v6604
    %6606 = vmatprep.subr.mxu0 0.0
    %v6607 = vand.u32 %v3771, 4294901760
    %v6608 = vsub.f32 %v3771, %v6607
    %v6609 = vand.u32 %v6608, 4294901760
    %v6610 = vsub.f32 %v6608, %v6609
    %v6611 = vand.u32 %v6610, 4294901760
    %6612 = vmatpush2.msra.mxu0 %v6611
    %6613 = vmatprep.subr.mxu0 0.0
    %v6614 = vand.u32 %v3770, 4294901760
    %v6615 = vsub.f32 %v3770, %v6614
    %v6616 = vand.u32 %v6615, 4294901760
    %v6617 = vsub.f32 %v6615, %v6616
    %v6618 = vand.u32 %v6617, 4294901760
    %6619 = vmatpush2.msra.mxu0 %v6618
    %6620 = vmatprep.subr.mxu0 0.0
    %v6621 = vand.u32 %v3769, 4294901760
    %v6622 = vsub.f32 %v3769, %v6621
    %v6623 = vand.u32 %v6622, 4294901760
    %v6624 = vsub.f32 %v6622, %v6623
    %v6625 = vand.u32 %v6624, 4294901760
    %6626 = vmatpush2.msra.mxu0 %v6625
    %6627 = vmatprep.subr.mxu0 0.0
    %v6628 = vand.u32 %v3768, 4294901760
    %v6629 = vsub.f32 %v3768, %v6628
    %v6630 = vand.u32 %v6629, 4294901760
    %v6631 = vsub.f32 %v6629, %v6630
    %v6632 = vand.u32 %v6631, 4294901760
    %6633 = vmatpush2.msra.mxu0 %v6632
    %6634 = vmatprep.subr.mxu0 0.0
    %v6635 = vand.u32 %v3767, 4294901760
    %v6636 = vsub.f32 %v3767, %v6635
    %v6637 = vand.u32 %v6636, 4294901760
    %v6638 = vsub.f32 %v6636, %v6637
    %v6639 = vand.u32 %v6638, 4294901760
    %6640 = vmatpush2.msra.mxu0 %v6639
    %6641 = vmatprep.subr.mxu0 0.0
    %v6642 = vand.u32 %v3766, 4294901760
    %v6643 = vsub.f32 %v3766, %v6642
    %v6644 = vand.u32 %v6643, 4294901760
    %v6645 = vsub.f32 %v6643, %v6644
    %v6646 = vand.u32 %v6645, 4294901760
    %6647 = vmatpush2.msra.mxu0 %v6646
    %6648 = vmatprep.subr.mxu0 0.0
    %v6649 = vand.u32 %v3765, 4294901760
    %v6650 = vsub.f32 %v3765, %v6649
    %v6651 = vand.u32 %v6650, 4294901760
    %v6652 = vsub.f32 %v6650, %v6651
    %v6653 = vand.u32 %v6652, 4294901760
    %6654 = vmatpush2.msra.mxu0 %v6653
    %6655 = vmatprep.subr.mxu0 0.0
    %v6656 = vand.u32 %v3764, 4294901760
    %v6657 = vsub.f32 %v3764, %v6656
    %v6658 = vand.u32 %v6657, 4294901760
    %v6659 = vsub.f32 %v6657, %v6658
    %v6660 = vand.u32 %v6659, 4294901760
    %6661 = vmatpush2.msra.mxu0 %v6660
    %6662 = vmatprep.subr.mxu0 0.0
    %v6663 = vand.u32 %v3763, 4294901760
    %v6664 = vsub.f32 %v3763, %v6663
    %v6665 = vand.u32 %v6664, 4294901760
    %v6666 = vsub.f32 %v6664, %v6665
    %v6667 = vand.u32 %v6666, 4294901760
    %6668 = vmatpush2.msra.mxu0 %v6667
    %6669 = vmatprep.subr.mxu0 0.0
    %v6670 = vand.u32 %v3762, 4294901760
    %v6671 = vsub.f32 %v3762, %v6670
    %v6672 = vand.u32 %v6671, 4294901760
    %v6673 = vsub.f32 %v6671, %v6672
    %v6674 = vand.u32 %v6673, 4294901760
    %6675 = vmatpush2.msra.mxu0 %v6674
    %6676 = vmatprep.subr.mxu0 0.0
    %v6677 = vand.u32 %v3761, 4294901760
    %v6678 = vsub.f32 %v3761, %v6677
    %v6679 = vand.u32 %v6678, 4294901760
    %v6680 = vsub.f32 %v6678, %v6679
    %v6681 = vand.u32 %v6680, 4294901760
    %6682 = vmatpush2.msra.mxu0 %v6681
    %6683 = vmatprep.subr.mxu0 0.0
    %v6684 = vand.u32 %v3760, 4294901760
    %v6685 = vsub.f32 %v3760, %v6684
    %v6686 = vand.u32 %v6685, 4294901760
    %v6687 = vsub.f32 %v6685, %v6686
    %v6688 = vand.u32 %v6687, 4294901760
    %6689 = vmatpush2.msra.mxu0 %v6688
    %6690 = vmatprep.subr.mxu0 0.0
    %v6691 = vand.u32 %v3759, 4294901760
    %v6692 = vsub.f32 %v3759, %v6691
    %v6693 = vand.u32 %v6692, 4294901760
    %v6694 = vsub.f32 %v6692, %v6693
    %v6695 = vand.u32 %v6694, 4294901760
    %6696 = vmatpush2.msra.mxu0 %v6695
    %v6697 = vand.u32 %v3646, 4294901760
    %6698 = vmatprep.mubr.f32.mxu0 %v6697
    %v6699 = vand.u32 %v3645, 4294901760
    %6700 = vmatmul.mubr.f32.gmra.mxu0 %v6699
    %v6701 = vpop.f32.mrf.mxu0
    %v6702 = vadd.f32 %v6470, %v6701
    %v6703 = vpop.f32.mrf.mxu0
    %6704 = vdwg.mxu0
    %6705 = vmatprep.subr.mxu0 0.0
    %v6706 = vand.u32 %v3758, 4294901760
    %v6707 = vsub.f32 %v3758, %v6706
    %6708 = vmatpush1.msra.mxu0 %v6707
    %6709 = vmatprep.subr.mxu0 0.0
    %v6710 = vand.u32 %v3757, 4294901760
    %v6711 = vsub.f32 %v3757, %v6710
    %6712 = vmatpush1.msra.mxu0 %v6711
    %6713 = vmatprep.subr.mxu0 0.0
    %v6714 = vand.u32 %v3756, 4294901760
    %v6715 = vsub.f32 %v3756, %v6714
    %6716 = vmatpush1.msra.mxu0 %v6715
    %6717 = vmatprep.subr.mxu0 0.0
    %v6718 = vand.u32 %v3755, 4294901760
    %v6719 = vsub.f32 %v3755, %v6718
    %6720 = vmatpush1.msra.mxu0 %v6719
    %6721 = vmatprep.subr.mxu0 0.0
    %v6722 = vand.u32 %v3754, 4294901760
    %v6723 = vsub.f32 %v3754, %v6722
    %6724 = vmatpush1.msra.mxu0 %v6723
    %6725 = vmatprep.subr.mxu0 0.0
    %v6726 = vand.u32 %v3753, 4294901760
    %v6727 = vsub.f32 %v3753, %v6726
    %6728 = vmatpush1.msra.mxu0 %v6727
    %6729 = vmatprep.subr.mxu0 0.0
    %v6730 = vand.u32 %v3752, 4294901760
    %v6731 = vsub.f32 %v3752, %v6730
    %6732 = vmatpush1.msra.mxu0 %v6731
    %6733 = vmatprep.subr.mxu0 0.0
    %v6734 = vand.u32 %v3751, 4294901760
    %v6735 = vsub.f32 %v3751, %v6734
    %6736 = vmatpush1.msra.mxu0 %v6735
    %6737 = vmatprep.subr.mxu0 0.0
    %v6738 = vand.u32 %v3750, 4294901760
    %v6739 = vsub.f32 %v3750, %v6738
    %6740 = vmatpush1.msra.mxu0 %v6739
    %6741 = vmatprep.subr.mxu0 0.0
    %v6742 = vand.u32 %v3749, 4294901760
    %v6743 = vsub.f32 %v3749, %v6742
    %6744 = vmatpush1.msra.mxu0 %v6743
    %6745 = vmatprep.subr.mxu0 0.0
    %v6746 = vand.u32 %v3748, 4294901760
    %v6747 = vsub.f32 %v3748, %v6746
    %6748 = vmatpush1.msra.mxu0 %v6747
    %6749 = vmatprep.subr.mxu0 0.0
    %v6750 = vand.u32 %v3747, 4294901760
    %v6751 = vsub.f32 %v3747, %v6750
    %6752 = vmatpush1.msra.mxu0 %v6751
    %6753 = vmatprep.subr.mxu0 0.0
    %v6754 = vand.u32 %v3746, 4294901760
    %v6755 = vsub.f32 %v3746, %v6754
    %6756 = vmatpush1.msra.mxu0 %v6755
    %6757 = vmatprep.subr.mxu0 0.0
    %v6758 = vand.u32 %v3745, 4294901760
    %v6759 = vsub.f32 %v3745, %v6758
    %6760 = vmatpush1.msra.mxu0 %v6759
    %6761 = vmatprep.subr.mxu0 0.0
    %v6762 = vand.u32 %v3744, 4294901760
    %v6763 = vsub.f32 %v3744, %v6762
    %6764 = vmatpush1.msra.mxu0 %v6763
    %6765 = vmatprep.subr.mxu0 0.0
    %v6766 = vand.u32 %v3743, 4294901760
    %v6767 = vsub.f32 %v3743, %v6766
    %6768 = vmatpush1.msra.mxu0 %v6767
    %6769 = vmatprep.subr.mxu0 0.0
    %v6770 = vand.u32 %v3774, 4294901760
    %v6771 = vsub.f32 %v3774, %v6770
    %6772 = vmatpush2.msra.mxu0 %v6771
    %6773 = vmatprep.subr.mxu0 0.0
    %v6774 = vand.u32 %v3773, 4294901760
    %v6775 = vsub.f32 %v3773, %v6774
    %6776 = vmatpush2.msra.mxu0 %v6775
    %6777 = vmatprep.subr.mxu0 0.0
    %v6778 = vand.u32 %v3772, 4294901760
    %v6779 = vsub.f32 %v3772, %v6778
    %6780 = vmatpush2.msra.mxu0 %v6779
    %6781 = vmatprep.subr.mxu0 0.0
    %v6782 = vand.u32 %v3771, 4294901760
    %v6783 = vsub.f32 %v3771, %v6782
    %6784 = vmatpush2.msra.mxu0 %v6783
    %6785 = vmatprep.subr.mxu0 0.0
    %v6786 = vand.u32 %v3770, 4294901760
    %v6787 = vsub.f32 %v3770, %v6786
    %6788 = vmatpush2.msra.mxu0 %v6787
    %6789 = vmatprep.subr.mxu0 0.0
    %v6790 = vand.u32 %v3769, 4294901760
    %v6791 = vsub.f32 %v3769, %v6790
    %6792 = vmatpush2.msra.mxu0 %v6791
    %6793 = vmatprep.subr.mxu0 0.0
    %v6794 = vand.u32 %v3768, 4294901760
    %v6795 = vsub.f32 %v3768, %v6794
    %6796 = vmatpush2.msra.mxu0 %v6795
    %6797 = vmatprep.subr.mxu0 0.0
    %v6798 = vand.u32 %v3767, 4294901760
    %v6799 = vsub.f32 %v3767, %v6798
    %6800 = vmatpush2.msra.mxu0 %v6799
    %6801 = vmatprep.subr.mxu0 0.0
    %v6802 = vand.u32 %v3766, 4294901760
    %v6803 = vsub.f32 %v3766, %v6802
    %6804 = vmatpush2.msra.mxu0 %v6803
    %6805 = vmatprep.subr.mxu0 0.0
    %v6806 = vand.u32 %v3765, 4294901760
    %v6807 = vsub.f32 %v3765, %v6806
    %6808 = vmatpush2.msra.mxu0 %v6807
    %6809 = vmatprep.subr.mxu0 0.0
    %v6810 = vand.u32 %v3764, 4294901760
    %v6811 = vsub.f32 %v3764, %v6810
    %6812 = vmatpush2.msra.mxu0 %v6811
    %6813 = vmatprep.subr.mxu0 0.0
    %v6814 = vand.u32 %v3763, 4294901760
    %v6815 = vsub.f32 %v3763, %v6814
    %6816 = vmatpush2.msra.mxu0 %v6815
    %6817 = vmatprep.subr.mxu0 0.0
    %v6818 = vand.u32 %v3762, 4294901760
    %v6819 = vsub.f32 %v3762, %v6818
    %6820 = vmatpush2.msra.mxu0 %v6819
    %6821 = vmatprep.subr.mxu0 0.0
    %v6822 = vand.u32 %v3761, 4294901760
    %v6823 = vsub.f32 %v3761, %v6822
    %6824 = vmatpush2.msra.mxu0 %v6823
    %6825 = vmatprep.subr.mxu0 0.0
    %v6826 = vand.u32 %v3760, 4294901760
    %v6827 = vsub.f32 %v3760, %v6826
    %6828 = vmatpush2.msra.mxu0 %v6827
    %6829 = vmatprep.subr.mxu0 0.0
    %v6830 = vand.u32 %v3759, 4294901760
    %v6831 = vsub.f32 %v3759, %v6830
    %6832 = vmatpush2.msra.mxu0 %v6831
    %v6833 = vand.u32 %v3646, 4294901760
    %v6834 = vsub.f32 %v3646, %v6833
    %6835 = vmatprep.mubr.f32.mxu0 %v6834
    %v6836 = vand.u32 %v3645, 4294901760
    %v6837 = vsub.f32 %v3645, %v6836
    %6838 = vmatmul.mubr.f32.gmra.mxu0 %v6837
    %v6839 = vpop.f32.mrf.mxu0
    %v6840 = vadd.f32 %v6702, %v6839
    %v6841 = vpop.f32.mrf.mxu0
    %6842 = vdwg.mxu0
    %6843 = vmatprep.subr.mxu0 0.0
    %v6844 = vand.u32 %v3758, 4294901760
    %6845 = vmatpush1.msra.mxu0 %v6844
    %6846 = vmatprep.subr.mxu0 0.0
    %v6847 = vand.u32 %v3757, 4294901760
    %6848 = vmatpush1.msra.mxu0 %v6847
    %6849 = vmatprep.subr.mxu0 0.0
    %v6850 = vand.u32 %v3756, 4294901760
    %6851 = vmatpush1.msra.mxu0 %v6850
    %6852 = vmatprep.subr.mxu0 0.0
    %v6853 = vand.u32 %v3755, 4294901760
    %6854 = vmatpush1.msra.mxu0 %v6853
    %6855 = vmatprep.subr.mxu0 0.0
    %v6856 = vand.u32 %v3754, 4294901760
    %6857 = vmatpush1.msra.mxu0 %v6856
    %6858 = vmatprep.subr.mxu0 0.0
    %v6859 = vand.u32 %v3753, 4294901760
    %6860 = vmatpush1.msra.mxu0 %v6859
    %6861 = vmatprep.subr.mxu0 0.0
    %v6862 = vand.u32 %v3752, 4294901760
    %6863 = vmatpush1.msra.mxu0 %v6862
    %6864 = vmatprep.subr.mxu0 0.0
    %v6865 = vand.u32 %v3751, 4294901760
    %6866 = vmatpush1.msra.mxu0 %v6865
    %6867 = vmatprep.subr.mxu0 0.0
    %v6868 = vand.u32 %v3750, 4294901760
    %6869 = vmatpush1.msra.mxu0 %v6868
    %6870 = vmatprep.subr.mxu0 0.0
    %v6871 = vand.u32 %v3749, 4294901760
    %6872 = vmatpush1.msra.mxu0 %v6871
    %6873 = vmatprep.subr.mxu0 0.0
    %v6874 = vand.u32 %v3748, 4294901760
    %6875 = vmatpush1.msra.mxu0 %v6874
    %6876 = vmatprep.subr.mxu0 0.0
    %v6877 = vand.u32 %v3747, 4294901760
    %6878 = vmatpush1.msra.mxu0 %v6877
    %6879 = vmatprep.subr.mxu0 0.0
    %v6880 = vand.u32 %v3746, 4294901760
    %6881 = vmatpush1.msra.mxu0 %v6880
    %6882 = vmatprep.subr.mxu0 0.0
    %v6883 = vand.u32 %v3745, 4294901760
    %6884 = vmatpush1.msra.mxu0 %v6883
    %6885 = vmatprep.subr.mxu0 0.0
    %v6886 = vand.u32 %v3744, 4294901760
    %6887 = vmatpush1.msra.mxu0 %v6886
    %6888 = vmatprep.subr.mxu0 0.0
    %v6889 = vand.u32 %v3743, 4294901760
    %6890 = vmatpush1.msra.mxu0 %v6889
    %6891 = vmatprep.subr.mxu0 0.0
    %v6892 = vand.u32 %v3774, 4294901760
    %6893 = vmatpush2.msra.mxu0 %v6892
    %6894 = vmatprep.subr.mxu0 0.0
    %v6895 = vand.u32 %v3773, 4294901760
    %6896 = vmatpush2.msra.mxu0 %v6895
    %6897 = vmatprep.subr.mxu0 0.0
    %v6898 = vand.u32 %v3772, 4294901760
    %6899 = vmatpush2.msra.mxu0 %v6898
    %6900 = vmatprep.subr.mxu0 0.0
    %v6901 = vand.u32 %v3771, 4294901760
    %6902 = vmatpush2.msra.mxu0 %v6901
    %6903 = vmatprep.subr.mxu0 0.0
    %v6904 = vand.u32 %v3770, 4294901760
    %6905 = vmatpush2.msra.mxu0 %v6904
    %6906 = vmatprep.subr.mxu0 0.0
    %v6907 = vand.u32 %v3769, 4294901760
    %6908 = vmatpush2.msra.mxu0 %v6907
    %6909 = vmatprep.subr.mxu0 0.0
    %v6910 = vand.u32 %v3768, 4294901760
    %6911 = vmatpush2.msra.mxu0 %v6910
    %6912 = vmatprep.subr.mxu0 0.0
    %v6913 = vand.u32 %v3767, 4294901760
    %6914 = vmatpush2.msra.mxu0 %v6913
    %6915 = vmatprep.subr.mxu0 0.0
    %v6916 = vand.u32 %v3766, 4294901760
    %6917 = vmatpush2.msra.mxu0 %v6916
    %6918 = vmatprep.subr.mxu0 0.0
    %v6919 = vand.u32 %v3765, 4294901760
    %6920 = vmatpush2.msra.mxu0 %v6919
    %6921 = vmatprep.subr.mxu0 0.0
    %v6922 = vand.u32 %v3764, 4294901760
    %6923 = vmatpush2.msra.mxu0 %v6922
    %6924 = vmatprep.subr.mxu0 0.0
    %v6925 = vand.u32 %v3763, 4294901760
    %6926 = vmatpush2.msra.mxu0 %v6925
    %6927 = vmatprep.subr.mxu0 0.0
    %v6928 = vand.u32 %v3762, 4294901760
    %6929 = vmatpush2.msra.mxu0 %v6928
    %6930 = vmatprep.subr.mxu0 0.0
    %v6931 = vand.u32 %v3761, 4294901760
    %6932 = vmatpush2.msra.mxu0 %v6931
    %6933 = vmatprep.subr.mxu0 0.0
    %v6934 = vand.u32 %v3760, 4294901760
    %6935 = vmatpush2.msra.mxu0 %v6934
    %6936 = vmatprep.subr.mxu0 0.0
    %v6937 = vand.u32 %v3759, 4294901760
    %6938 = vmatpush2.msra.mxu0 %v6937
    %v6939 = vand.u32 %v3646, 4294901760
    %v6940 = vsub.f32 %v3646, %v6939
    %v6941 = vand.u32 %v6940, 4294901760
    %6942 = vmatprep.mubr.f32.mxu0 %v6941
    %v6943 = vand.u32 %v3645, 4294901760
    %v6944 = vsub.f32 %v3645, %v6943
    %v6945 = vand.u32 %v6944, 4294901760
    %6946 = vmatmul.mubr.f32.gmra.mxu0 %v6945
    %v6947 = vpop.f32.mrf.mxu0
    %v6948 = vadd.f32 %v6840, %v6947
    %v6949 = vpop.f32.mrf.mxu0
    %6950 = vdwg.mxu0
    %6951 = vmatprep.subr.mxu0 0.0
    %v6952 = vand.u32 %v3758, 4294901760
    %v6953 = vsub.f32 %v3758, %v6952
    %v6954 = vand.u32 %v6953, 4294901760
    %6955 = vmatpush1.msra.mxu0 %v6954
    %6956 = vmatprep.subr.mxu0 0.0
    %v6957 = vand.u32 %v3757, 4294901760
    %v6958 = vsub.f32 %v3757, %v6957
    %v6959 = vand.u32 %v6958, 4294901760
    %6960 = vmatpush1.msra.mxu0 %v6959
    %6961 = vmatprep.subr.mxu0 0.0
    %v6962 = vand.u32 %v3756, 4294901760
    %v6963 = vsub.f32 %v3756, %v6962
    %v6964 = vand.u32 %v6963, 4294901760
    %6965 = vmatpush1.msra.mxu0 %v6964
    %6966 = vmatprep.subr.mxu0 0.0
    %v6967 = vand.u32 %v3755, 4294901760
    %v6968 = vsub.f32 %v3755, %v6967
    %v6969 = vand.u32 %v6968, 4294901760
    %6970 = vmatpush1.msra.mxu0 %v6969
    %6971 = vmatprep.subr.mxu0 0.0
    %v6972 = vand.u32 %v3754, 4294901760
    %v6973 = vsub.f32 %v3754, %v6972
    %v6974 = vand.u32 %v6973, 4294901760
    %6975 = vmatpush1.msra.mxu0 %v6974
    %6976 = vmatprep.subr.mxu0 0.0
    %v6977 = vand.u32 %v3753, 4294901760
    %v6978 = vsub.f32 %v3753, %v6977
    %v6979 = vand.u32 %v6978, 4294901760
    %6980 = vmatpush1.msra.mxu0 %v6979
    %6981 = vmatprep.subr.mxu0 0.0
    %v6982 = vand.u32 %v3752, 4294901760
    %v6983 = vsub.f32 %v3752, %v6982
    %v6984 = vand.u32 %v6983, 4294901760
    %6985 = vmatpush1.msra.mxu0 %v6984
    %6986 = vmatprep.subr.mxu0 0.0
    %v6987 = vand.u32 %v3751, 4294901760
    %v6988 = vsub.f32 %v3751, %v6987
    %v6989 = vand.u32 %v6988, 4294901760
    %6990 = vmatpush1.msra.mxu0 %v6989
    %6991 = vmatprep.subr.mxu0 0.0
    %v6992 = vand.u32 %v3750, 4294901760
    %v6993 = vsub.f32 %v3750, %v6992
    %v6994 = vand.u32 %v6993, 4294901760
    %6995 = vmatpush1.msra.mxu0 %v6994
    %6996 = vmatprep.subr.mxu0 0.0
    %v6997 = vand.u32 %v3749, 4294901760
    %v6998 = vsub.f32 %v3749, %v6997
    %v6999 = vand.u32 %v6998, 4294901760
    %7000 = vmatpush1.msra.mxu0 %v6999
    %7001 = vmatprep.subr.mxu0 0.0
    %v7002 = vand.u32 %v3748, 4294901760
    %v7003 = vsub.f32 %v3748, %v7002
    %v7004 = vand.u32 %v7003, 4294901760
    %7005 = vmatpush1.msra.mxu0 %v7004
    %7006 = vmatprep.subr.mxu0 0.0
    %v7007 = vand.u32 %v3747, 4294901760
    %v7008 = vsub.f32 %v3747, %v7007
    %v7009 = vand.u32 %v7008, 4294901760
    %7010 = vmatpush1.msra.mxu0 %v7009
    %7011 = vmatprep.subr.mxu0 0.0
    %v7012 = vand.u32 %v3746, 4294901760
    %v7013 = vsub.f32 %v3746, %v7012
    %v7014 = vand.u32 %v7013, 4294901760
    %7015 = vmatpush1.msra.mxu0 %v7014
    %7016 = vmatprep.subr.mxu0 0.0
    %v7017 = vand.u32 %v3745, 4294901760
    %v7018 = vsub.f32 %v3745, %v7017
    %v7019 = vand.u32 %v7018, 4294901760
    %7020 = vmatpush1.msra.mxu0 %v7019
    %7021 = vmatprep.subr.mxu0 0.0
    %v7022 = vand.u32 %v3744, 4294901760
    %v7023 = vsub.f32 %v3744, %v7022
    %v7024 = vand.u32 %v7023, 4294901760
    %7025 = vmatpush1.msra.mxu0 %v7024
    %7026 = vmatprep.subr.mxu0 0.0
    %v7027 = vand.u32 %v3743, 4294901760
    %v7028 = vsub.f32 %v3743, %v7027
    %v7029 = vand.u32 %v7028, 4294901760
    %7030 = vmatpush1.msra.mxu0 %v7029
    %7031 = vmatprep.subr.mxu0 0.0
    %v7032 = vand.u32 %v3774, 4294901760
    %v7033 = vsub.f32 %v3774, %v7032
    %v7034 = vand.u32 %v7033, 4294901760
    %7035 = vmatpush2.msra.mxu0 %v7034
    %7036 = vmatprep.subr.mxu0 0.0
    %v7037 = vand.u32 %v3773, 4294901760
    %v7038 = vsub.f32 %v3773, %v7037
    %v7039 = vand.u32 %v7038, 4294901760
    %7040 = vmatpush2.msra.mxu0 %v7039
    %7041 = vmatprep.subr.mxu0 0.0
    %v7042 = vand.u32 %v3772, 4294901760
    %v7043 = vsub.f32 %v3772, %v7042
    %v7044 = vand.u32 %v7043, 4294901760
    %7045 = vmatpush2.msra.mxu0 %v7044
    %7046 = vmatprep.subr.mxu0 0.0
    %v7047 = vand.u32 %v3771, 4294901760
    %v7048 = vsub.f32 %v3771, %v7047
    %v7049 = vand.u32 %v7048, 4294901760
    %7050 = vmatpush2.msra.mxu0 %v7049
    %7051 = vmatprep.subr.mxu0 0.0
    %v7052 = vand.u32 %v3770, 4294901760
    %v7053 = vsub.f32 %v3770, %v7052
    %v7054 = vand.u32 %v7053, 4294901760
    %7055 = vmatpush2.msra.mxu0 %v7054
    %7056 = vmatprep.subr.mxu0 0.0
    %v7057 = vand.u32 %v3769, 4294901760
    %v7058 = vsub.f32 %v3769, %v7057
    %v7059 = vand.u32 %v7058, 4294901760
    %7060 = vmatpush2.msra.mxu0 %v7059
    %7061 = vmatprep.subr.mxu0 0.0
    %v7062 = vand.u32 %v3768, 4294901760
    %v7063 = vsub.f32 %v3768, %v7062
    %v7064 = vand.u32 %v7063, 4294901760
    %7065 = vmatpush2.msra.mxu0 %v7064
    %7066 = vmatprep.subr.mxu0 0.0
    %v7067 = vand.u32 %v3767, 4294901760
    %v7068 = vsub.f32 %v3767, %v7067
    %v7069 = vand.u32 %v7068, 4294901760
    %7070 = vmatpush2.msra.mxu0 %v7069
    %7071 = vmatprep.subr.mxu0 0.0
    %v7072 = vand.u32 %v3766, 4294901760
    %v7073 = vsub.f32 %v3766, %v7072
    %v7074 = vand.u32 %v7073, 4294901760
    %7075 = vmatpush2.msra.mxu0 %v7074
    %7076 = vmatprep.subr.mxu0 0.0
    %v7077 = vand.u32 %v3765, 4294901760
    %v7078 = vsub.f32 %v3765, %v7077
    %v7079 = vand.u32 %v7078, 4294901760
    %7080 = vmatpush2.msra.mxu0 %v7079
    %7081 = vmatprep.subr.mxu0 0.0
    %v7082 = vand.u32 %v3764, 4294901760
    %v7083 = vsub.f32 %v3764, %v7082
    %v7084 = vand.u32 %v7083, 4294901760
    %7085 = vmatpush2.msra.mxu0 %v7084
    %7086 = vmatprep.subr.mxu0 0.0
    %v7087 = vand.u32 %v3763, 4294901760
    %v7088 = vsub.f32 %v3763, %v7087
    %v7089 = vand.u32 %v7088, 4294901760
    %7090 = vmatpush2.msra.mxu0 %v7089
    %7091 = vmatprep.subr.mxu0 0.0
    %v7092 = vand.u32 %v3762, 4294901760
    %v7093 = vsub.f32 %v3762, %v7092
    %v7094 = vand.u32 %v7093, 4294901760
    %7095 = vmatpush2.msra.mxu0 %v7094
    %7096 = vmatprep.subr.mxu0 0.0
    %v7097 = vand.u32 %v3761, 4294901760
    %v7098 = vsub.f32 %v3761, %v7097
    %v7099 = vand.u32 %v7098, 4294901760
    %7100 = vmatpush2.msra.mxu0 %v7099
    %7101 = vmatprep.subr.mxu0 0.0
    %v7102 = vand.u32 %v3760, 4294901760
    %v7103 = vsub.f32 %v3760, %v7102
    %v7104 = vand.u32 %v7103, 4294901760
    %7105 = vmatpush2.msra.mxu0 %v7104
    %7106 = vmatprep.subr.mxu0 0.0
    %v7107 = vand.u32 %v3759, 4294901760
    %v7108 = vsub.f32 %v3759, %v7107
    %v7109 = vand.u32 %v7108, 4294901760
    %7110 = vmatpush2.msra.mxu0 %v7109
    %v7111 = vand.u32 %v3646, 4294901760
    %7112 = vmatprep.mubr.f32.mxu0 %v7111
    %v7113 = vand.u32 %v3645, 4294901760
    %7114 = vmatmul.mubr.f32.gmra.mxu0 %v7113
    %v7115 = vpop.f32.mrf.mxu0
    %v7116 = vadd.f32 %v6948, %v7115
    %v7117 = vpop.f32.mrf.mxu0
    %7118 = vdwg.mxu0
    %7119 = vmatprep.subr.mxu0 0.0
    %v7120 = vand.u32 %v3758, 4294901760
    %7121 = vmatpush1.msra.mxu0 %v7120
    %7122 = vmatprep.subr.mxu0 0.0
    %v7123 = vand.u32 %v3757, 4294901760
    %7124 = vmatpush1.msra.mxu0 %v7123
    %7125 = vmatprep.subr.mxu0 0.0
    %v7126 = vand.u32 %v3756, 4294901760
    %7127 = vmatpush1.msra.mxu0 %v7126
    %7128 = vmatprep.subr.mxu0 0.0
    %v7129 = vand.u32 %v3755, 4294901760
    %7130 = vmatpush1.msra.mxu0 %v7129
    %7131 = vmatprep.subr.mxu0 0.0
    %v7132 = vand.u32 %v3754, 4294901760
    %7133 = vmatpush1.msra.mxu0 %v7132
    %7134 = vmatprep.subr.mxu0 0.0
    %v7135 = vand.u32 %v3753, 4294901760
    %7136 = vmatpush1.msra.mxu0 %v7135
    %7137 = vmatprep.subr.mxu0 0.0
    %v7138 = vand.u32 %v3752, 4294901760
    %7139 = vmatpush1.msra.mxu0 %v7138
    %7140 = vmatprep.subr.mxu0 0.0
    %v7141 = vand.u32 %v3751, 4294901760
    %7142 = vmatpush1.msra.mxu0 %v7141
    %7143 = vmatprep.subr.mxu0 0.0
    %v7144 = vand.u32 %v3750, 4294901760
    %7145 = vmatpush1.msra.mxu0 %v7144
    %7146 = vmatprep.subr.mxu0 0.0
    %v7147 = vand.u32 %v3749, 4294901760
    %7148 = vmatpush1.msra.mxu0 %v7147
    %7149 = vmatprep.subr.mxu0 0.0
    %v7150 = vand.u32 %v3748, 4294901760
    %7151 = vmatpush1.msra.mxu0 %v7150
    %7152 = vmatprep.subr.mxu0 0.0
    %v7153 = vand.u32 %v3747, 4294901760
    %7154 = vmatpush1.msra.mxu0 %v7153
    %7155 = vmatprep.subr.mxu0 0.0
    %v7156 = vand.u32 %v3746, 4294901760
    %7157 = vmatpush1.msra.mxu0 %v7156
    %7158 = vmatprep.subr.mxu0 0.0
    %v7159 = vand.u32 %v3745, 4294901760
    %7160 = vmatpush1.msra.mxu0 %v7159
    %7161 = vmatprep.subr.mxu0 0.0
    %v7162 = vand.u32 %v3744, 4294901760
    %7163 = vmatpush1.msra.mxu0 %v7162
    %7164 = vmatprep.subr.mxu0 0.0
    %v7165 = vand.u32 %v3743, 4294901760
    %7166 = vmatpush1.msra.mxu0 %v7165
    %7167 = vmatprep.subr.mxu0 0.0
    %v7168 = vand.u32 %v3774, 4294901760
    %7169 = vmatpush2.msra.mxu0 %v7168
    %7170 = vmatprep.subr.mxu0 0.0
    %v7171 = vand.u32 %v3773, 4294901760
    %7172 = vmatpush2.msra.mxu0 %v7171
    %7173 = vmatprep.subr.mxu0 0.0
    %v7174 = vand.u32 %v3772, 4294901760
    %7175 = vmatpush2.msra.mxu0 %v7174
    %7176 = vmatprep.subr.mxu0 0.0
    %v7177 = vand.u32 %v3771, 4294901760
    %7178 = vmatpush2.msra.mxu0 %v7177
    %7179 = vmatprep.subr.mxu0 0.0
    %v7180 = vand.u32 %v3770, 4294901760
    %7181 = vmatpush2.msra.mxu0 %v7180
    %7182 = vmatprep.subr.mxu0 0.0
    %v7183 = vand.u32 %v3769, 4294901760
    %7184 = vmatpush2.msra.mxu0 %v7183
    %7185 = vmatprep.subr.mxu0 0.0
    %v7186 = vand.u32 %v3768, 4294901760
    %7187 = vmatpush2.msra.mxu0 %v7186
    %7188 = vmatprep.subr.mxu0 0.0
    %v7189 = vand.u32 %v3767, 4294901760
    %7190 = vmatpush2.msra.mxu0 %v7189
    %7191 = vmatprep.subr.mxu0 0.0
    %v7192 = vand.u32 %v3766, 4294901760
    %7193 = vmatpush2.msra.mxu0 %v7192
    %7194 = vmatprep.subr.mxu0 0.0
    %v7195 = vand.u32 %v3765, 4294901760
    %7196 = vmatpush2.msra.mxu0 %v7195
    %7197 = vmatprep.subr.mxu0 0.0
    %v7198 = vand.u32 %v3764, 4294901760
    %7199 = vmatpush2.msra.mxu0 %v7198
    %7200 = vmatprep.subr.mxu0 0.0
    %v7201 = vand.u32 %v3763, 4294901760
    %7202 = vmatpush2.msra.mxu0 %v7201
    %7203 = vmatprep.subr.mxu0 0.0
    %v7204 = vand.u32 %v3762, 4294901760
    %7205 = vmatpush2.msra.mxu0 %v7204
    %7206 = vmatprep.subr.mxu0 0.0
    %v7207 = vand.u32 %v3761, 4294901760
    %7208 = vmatpush2.msra.mxu0 %v7207
    %7209 = vmatprep.subr.mxu0 0.0
    %v7210 = vand.u32 %v3760, 4294901760
    %7211 = vmatpush2.msra.mxu0 %v7210
    %7212 = vmatprep.subr.mxu0 0.0
    %v7213 = vand.u32 %v3759, 4294901760
    %7214 = vmatpush2.msra.mxu0 %v7213
    %v7215 = vand.u32 %v3646, 4294901760
    %7216 = vmatprep.mubr.f32.mxu0 %v7215
    %v7217 = vand.u32 %v3645, 4294901760
    %7218 = vmatmul.mubr.f32.gmra.mxu0 %v7217
    %v7219 = vpop.f32.mrf.mxu0
    %v7220 = vadd.f32 %v7116, %v7219
    %v7221 = vpop.f32.mrf.mxu0
    %7222 = vdwg.mxu0
    %v7223 = vrsqrt.pop %v7220
    %v7224 = vld [vmem:[%s4] sm:$0xff]
    %v7225 = vld [vmem:[%s4 + $0x8] sm:$0xff]
    %v7226 = vld [vmem:[%s4 + $0x10] sm:$0xff]
    %v7227 = vld [vmem:[%s4 + $0x18] sm:$0xff]
    %v7228 = vld [vmem:[%s4 + $0x20] sm:$0xff]
    %v7229 = vld [vmem:[%s4 + $0x28] sm:$0xff]
    %v7230 = vld [vmem:[%s4 + $0x30] sm:$0xff]
    %v7231 = vld [vmem:[%s4 + $0x38] sm:$0xff]
    %v7232 = vld [vmem:[%s4 + $0x40] sm:$0xff]
    %v7233 = vld [vmem:[%s4 + $0x48] sm:$0xff]
    %v7234 = vld [vmem:[%s4 + $0x50] sm:$0xff]
    %v7235 = vld [vmem:[%s4 + $0x58] sm:$0xff]
    %v7236 = vld [vmem:[%s4 + $0x60] sm:$0xff]
    %v7237 = vld [vmem:[%s4 + $0x68] sm:$0xff]
    %v7238 = vld [vmem:[%s4 + $0x70] sm:$0xff]
    %v7239 = vld [vmem:[%s4 + $0x78] sm:$0xff]
    %v7240 = vld [vmem:[%s4 + $0x80] sm:$0xff]
    %v7241 = vld [vmem:[%s4 + $0x88] sm:$0xff]
    %v7242 = vld [vmem:[%s4 + $0x90] sm:$0xff]
    %v7243 = vld [vmem:[%s4 + $0x98] sm:$0xff]
    %v7244 = vld [vmem:[%s4 + $0xa0] sm:$0xff]
    %v7245 = vld [vmem:[%s4 + $0xa8] sm:$0xff]
    %v7246 = vld [vmem:[%s4 + $0xb0] sm:$0xff]
    %v7247 = vld [vmem:[%s4 + $0xb8] sm:$0xff]
    %v7248 = vld [vmem:[%s4 + $0xc0] sm:$0xff]
    %v7249 = vld [vmem:[%s4 + $0xc8] sm:$0xff]
    %v7250 = vld [vmem:[%s4 + $0xd0] sm:$0xff]
    %v7251 = vld [vmem:[%s4 + $0xd8] sm:$0xff]
    %v7252 = vld [vmem:[%s4 + $0xe0] sm:$0xff]
    %v7253 = vld [vmem:[%s4 + $0xe8] sm:$0xff]
    %v7254 = vld [vmem:[%s4 + $0xf0] sm:$0xff]
    %v7255 = vld [vmem:[%s4 + $0xf8] sm:$0xff]
    %vm7256 = vcmask 261120
    %v7258 = vsel %vm7256, %v7223, 0
    %7260 = vmatprep.subr.mxu0 0.0
    %7261 = vmatpush1.msra.mxu0 0.0
    %7262 = vmatprep.subr.mxu0 0.0
    %7263 = vmatpush1.msra.mxu0 0.0
    %7264 = vmatprep.subr.mxu0 0.0
    %7265 = vmatpush1.msra.mxu0 0.0
    %7266 = vmatprep.subr.mxu0 0.0
    %7267 = vmatpush1.msra.mxu0 0.0
    %7268 = vmatprep.subr.mxu0 0.0
    %7269 = vmatpush1.msra.mxu0 0.0
    %7270 = vmatprep.subr.mxu0 0.0
    %7271 = vmatpush1.msra.mxu0 0.0
    %7272 = vmatprep.subr.mxu0 0.0
    %7273 = vmatpush1.msra.mxu0 0.0
    %7274 = vmatprep.subr.mxu0 0.0
    %7275 = vmatpush1.msra.mxu0 0.0
    %7276 = vmatprep.subr.mxu0 0.0
    %7277 = vmatpush1.msra.mxu0 0.0
    %7278 = vmatprep.subr.mxu0 0.0
    %7279 = vmatpush1.msra.mxu0 0.0
    %7280 = vmatprep.subr.mxu0 0.0
    %7281 = vmatpush1.msra.mxu0 0.0
    %7282 = vmatprep.subr.mxu0 0.0
    %7283 = vmatpush1.msra.mxu0 0.0
    %v7284 = vand.u32 %v7249, 4294901760
    %7285 = vmatprep.subr.mxu0 %v7284
    %v7286 = vand.u32 %v7248, 4294901760
    %7287 = vmatpush1.msra.mxu0 %v7286
    %v7288 = vand.u32 %v7241, 4294901760
    %7289 = vmatprep.subr.mxu0 %v7288
    %v7290 = vand.u32 %v7240, 4294901760
    %7291 = vmatpush1.msra.mxu0 %v7290
    %v7292 = vand.u32 %v7233, 4294901760
    %7293 = vmatprep.subr.mxu0 %v7292
    %v7294 = vand.u32 %v7232, 4294901760
    %7295 = vmatpush1.msra.mxu0 %v7294
    %v7296 = vand.u32 %v7225, 4294901760
    %7297 = vmatprep.subr.mxu0 %v7296
    %v7298 = vand.u32 %v7224, 4294901760
    %7299 = vmatpush1.msra.mxu0 %v7298
    %7300 = vmatprep.subr.mxu0 0.0
    %7301 = vmatpush2.msra.mxu0 0.0
    %7302 = vmatprep.subr.mxu0 0.0
    %7303 = vmatpush2.msra.mxu0 0.0
    %7304 = vmatprep.subr.mxu0 0.0
    %7305 = vmatpush2.msra.mxu0 0.0
    %7306 = vmatprep.subr.mxu0 0.0
    %7307 = vmatpush2.msra.mxu0 0.0
    %7308 = vmatprep.subr.mxu0 0.0
    %7309 = vmatpush2.msra.mxu0 0.0
    %7310 = vmatprep.subr.mxu0 0.0
    %7311 = vmatpush2.msra.mxu0 0.0
    %7312 = vmatprep.subr.mxu0 0.0
    %7313 = vmatpush2.msra.mxu0 0.0
    %7314 = vmatprep.subr.mxu0 0.0
    %7315 = vmatpush2.msra.mxu0 0.0
    %7316 = vmatprep.subr.mxu0 0.0
    %7317 = vmatpush2.msra.mxu0 0.0
    %7318 = vmatprep.subr.mxu0 0.0
    %7319 = vmatpush2.msra.mxu0 0.0
    %7320 = vmatprep.subr.mxu0 0.0
    %7321 = vmatpush2.msra.mxu0 0.0
    %7322 = vmatprep.subr.mxu0 0.0
    %7323 = vmatpush2.msra.mxu0 0.0
    %7324 = vmatprep.subr.mxu0 0.0
    %7325 = vmatpush2.msra.mxu0 0.0
    %7326 = vmatprep.subr.mxu0 0.0
    %7327 = vmatpush2.msra.mxu0 0.0
    %7328 = vmatprep.subr.mxu0 0.0
    %7329 = vmatpush2.msra.mxu0 0.0
    %7330 = vmatprep.subr.mxu0 0.0
    %7331 = vmatpush2.msra.mxu0 0.0
    %7332 = vmatprep.mubr.f32.mxu0 0.0
    %v7333 = vand.u32 %v7258, 4294901760
    %v7334 = vsub.f32 %v7258, %v7333
    %v7335 = vand.u32 %v7334, 4294901760
    %v7336 = vsub.f32 %v7334, %v7335
    %v7337 = vand.u32 %v7336, 4294901760
    %7338 = vmatmul.mubr.f32.gmra.mxu0 %v7337
    %v7339 = vpop.f32.mrf.mxu0
    %v7340 = vadd.f32 0.0, %v7339
    %v7341 = vpop.f32.mrf.mxu0
    %v7342 = vadd.f32 0.0, %v7341
    %7343 = vdwg.mxu0
    %7344 = vmatprep.subr.mxu0 0.0
    %7345 = vmatpush1.msra.mxu0 0.0
    %7346 = vmatprep.subr.mxu0 0.0
    %7347 = vmatpush1.msra.mxu0 0.0
    %7348 = vmatprep.subr.mxu0 0.0
    %7349 = vmatpush1.msra.mxu0 0.0
    %7350 = vmatprep.subr.mxu0 0.0
    %7351 = vmatpush1.msra.mxu0 0.0
    %7352 = vmatprep.subr.mxu0 0.0
    %7353 = vmatpush1.msra.mxu0 0.0
    %7354 = vmatprep.subr.mxu0 0.0
    %7355 = vmatpush1.msra.mxu0 0.0
    %7356 = vmatprep.subr.mxu0 0.0
    %7357 = vmatpush1.msra.mxu0 0.0
    %7358 = vmatprep.subr.mxu0 0.0
    %7359 = vmatpush1.msra.mxu0 0.0
    %7360 = vmatprep.subr.mxu0 0.0
    %7361 = vmatpush1.msra.mxu0 0.0
    %7362 = vmatprep.subr.mxu0 0.0
    %7363 = vmatpush1.msra.mxu0 0.0
    %7364 = vmatprep.subr.mxu0 0.0
    %7365 = vmatpush1.msra.mxu0 0.0
    %7366 = vmatprep.subr.mxu0 0.0
    %7367 = vmatpush1.msra.mxu0 0.0
    %v7368 = vand.u32 %v7249, 4294901760
    %v7369 = vsub.f32 %v7249, %v7368
    %v7370 = vand.u32 %v7369, 4294901760
    %v7371 = vsub.f32 %v7369, %v7370
    %v7372 = vand.u32 %v7371, 4294901760
    %7373 = vmatprep.subr.mxu0 %v7372
    %v7374 = vand.u32 %v7248, 4294901760
    %v7375 = vsub.f32 %v7248, %v7374
    %v7376 = vand.u32 %v7375, 4294901760
    %v7377 = vsub.f32 %v7375, %v7376
    %v7378 = vand.u32 %v7377, 4294901760
    %7379 = vmatpush1.msra.mxu0 %v7378
    %v7380 = vand.u32 %v7241, 4294901760
    %v7381 = vsub.f32 %v7241, %v7380
    %v7382 = vand.u32 %v7381, 4294901760
    %v7383 = vsub.f32 %v7381, %v7382
    %v7384 = vand.u32 %v7383, 4294901760
    %7385 = vmatprep.subr.mxu0 %v7384
    %v7386 = vand.u32 %v7240, 4294901760
    %v7387 = vsub.f32 %v7240, %v7386
    %v7388 = vand.u32 %v7387, 4294901760
    %v7389 = vsub.f32 %v7387, %v7388
    %v7390 = vand.u32 %v7389, 4294901760
    %7391 = vmatpush1.msra.mxu0 %v7390
    %v7392 = vand.u32 %v7233, 4294901760
    %v7393 = vsub.f32 %v7233, %v7392
    %v7394 = vand.u32 %v7393, 4294901760
    %v7395 = vsub.f32 %v7393, %v7394
    %v7396 = vand.u32 %v7395, 4294901760
    %7397 = vmatprep.subr.mxu0 %v7396
    %v7398 = vand.u32 %v7232, 4294901760
    %v7399 = vsub.f32 %v7232, %v7398
    %v7400 = vand.u32 %v7399, 4294901760
    %v7401 = vsub.f32 %v7399, %v7400
    %v7402 = vand.u32 %v7401, 4294901760
    %7403 = vmatpush1.msra.mxu0 %v7402
    %v7404 = vand.u32 %v7225, 4294901760
    %v7405 = vsub.f32 %v7225, %v7404
    %v7406 = vand.u32 %v7405, 4294901760
    %v7407 = vsub.f32 %v7405, %v7406
    %v7408 = vand.u32 %v7407, 4294901760
    %7409 = vmatprep.subr.mxu0 %v7408
    %v7410 = vand.u32 %v7224, 4294901760
    %v7411 = vsub.f32 %v7224, %v7410
    %v7412 = vand.u32 %v7411, 4294901760
    %v7413 = vsub.f32 %v7411, %v7412
    %v7414 = vand.u32 %v7413, 4294901760
    %7415 = vmatpush1.msra.mxu0 %v7414
    %7416 = vmatprep.subr.mxu0 0.0
    %7417 = vmatpush2.msra.mxu0 0.0
    %7418 = vmatprep.subr.mxu0 0.0
    %7419 = vmatpush2.msra.mxu0 0.0
    %7420 = vmatprep.subr.mxu0 0.0
    %7421 = vmatpush2.msra.mxu0 0.0
    %7422 = vmatprep.subr.mxu0 0.0
    %7423 = vmatpush2.msra.mxu0 0.0
    %7424 = vmatprep.subr.mxu0 0.0
    %7425 = vmatpush2.msra.mxu0 0.0
    %7426 = vmatprep.subr.mxu0 0.0
    %7427 = vmatpush2.msra.mxu0 0.0
    %7428 = vmatprep.subr.mxu0 0.0
    %7429 = vmatpush2.msra.mxu0 0.0
    %7430 = vmatprep.subr.mxu0 0.0
    %7431 = vmatpush2.msra.mxu0 0.0
    %7432 = vmatprep.subr.mxu0 0.0
    %7433 = vmatpush2.msra.mxu0 0.0
    %7434 = vmatprep.subr.mxu0 0.0
    %7435 = vmatpush2.msra.mxu0 0.0
    %7436 = vmatprep.subr.mxu0 0.0
    %7437 = vmatpush2.msra.mxu0 0.0
    %7438 = vmatprep.subr.mxu0 0.0
    %7439 = vmatpush2.msra.mxu0 0.0
    %7440 = vmatprep.subr.mxu0 0.0
    %7441 = vmatpush2.msra.mxu0 0.0
    %7442 = vmatprep.subr.mxu0 0.0
    %7443 = vmatpush2.msra.mxu0 0.0
    %7444 = vmatprep.subr.mxu0 0.0
    %7445 = vmatpush2.msra.mxu0 0.0
    %7446 = vmatprep.subr.mxu0 0.0
    %7447 = vmatpush2.msra.mxu0 0.0
    %7448 = vmatprep.mubr.f32.mxu0 0.0
    %v7449 = vand.u32 %v7258, 4294901760
    %7450 = vmatmul.mubr.f32.gmra.mxu0 %v7449
    %v7451 = vpop.f32.mrf.mxu0
    %v7452 = vadd.f32 %v7340, %v7451
    %v7453 = vpop.f32.mrf.mxu0
    %v7454 = vadd.f32 %v7342, %v7453
    %7455 = vdwg.mxu0
    %7456 = vmatprep.subr.mxu0 0.0
    %7457 = vmatpush1.msra.mxu0 0.0
    %7458 = vmatprep.subr.mxu0 0.0
    %7459 = vmatpush1.msra.mxu0 0.0
    %7460 = vmatprep.subr.mxu0 0.0
    %7461 = vmatpush1.msra.mxu0 0.0
    %7462 = vmatprep.subr.mxu0 0.0
    %7463 = vmatpush1.msra.mxu0 0.0
    %7464 = vmatprep.subr.mxu0 0.0
    %7465 = vmatpush1.msra.mxu0 0.0
    %7466 = vmatprep.subr.mxu0 0.0
    %7467 = vmatpush1.msra.mxu0 0.0
    %7468 = vmatprep.subr.mxu0 0.0
    %7469 = vmatpush1.msra.mxu0 0.0
    %7470 = vmatprep.subr.mxu0 0.0
    %7471 = vmatpush1.msra.mxu0 0.0
    %7472 = vmatprep.subr.mxu0 0.0
    %7473 = vmatpush1.msra.mxu0 0.0
    %7474 = vmatprep.subr.mxu0 0.0
    %7475 = vmatpush1.msra.mxu0 0.0
    %7476 = vmatprep.subr.mxu0 0.0
    %7477 = vmatpush1.msra.mxu0 0.0
    %7478 = vmatprep.subr.mxu0 0.0
    %7479 = vmatpush1.msra.mxu0 0.0
    %v7480 = vand.u32 %v7249, 4294901760
    %v7481 = vsub.f32 %v7249, %v7480
    %7482 = vmatprep.subr.mxu0 %v7481
    %v7483 = vand.u32 %v7248, 4294901760
    %v7484 = vsub.f32 %v7248, %v7483
    %7485 = vmatpush1.msra.mxu0 %v7484
    %v7486 = vand.u32 %v7241, 4294901760
    %v7487 = vsub.f32 %v7241, %v7486
    %7488 = vmatprep.subr.mxu0 %v7487
    %v7489 = vand.u32 %v7240, 4294901760
    %v7490 = vsub.f32 %v7240, %v7489
    %7491 = vmatpush1.msra.mxu0 %v7490
    %v7492 = vand.u32 %v7233, 4294901760
    %v7493 = vsub.f32 %v7233, %v7492
    %7494 = vmatprep.subr.mxu0 %v7493
    %v7495 = vand.u32 %v7232, 4294901760
    %v7496 = vsub.f32 %v7232, %v7495
    %7497 = vmatpush1.msra.mxu0 %v7496
    %v7498 = vand.u32 %v7225, 4294901760
    %v7499 = vsub.f32 %v7225, %v7498
    %7500 = vmatprep.subr.mxu0 %v7499
    %v7501 = vand.u32 %v7224, 4294901760
    %v7502 = vsub.f32 %v7224, %v7501
    %7503 = vmatpush1.msra.mxu0 %v7502
    %7504 = vmatprep.subr.mxu0 0.0
    %7505 = vmatpush2.msra.mxu0 0.0
    %7506 = vmatprep.subr.mxu0 0.0
    %7507 = vmatpush2.msra.mxu0 0.0
    %7508 = vmatprep.subr.mxu0 0.0
    %7509 = vmatpush2.msra.mxu0 0.0
    %7510 = vmatprep.subr.mxu0 0.0
    %7511 = vmatpush2.msra.mxu0 0.0
    %7512 = vmatprep.subr.mxu0 0.0
    %7513 = vmatpush2.msra.mxu0 0.0
    %7514 = vmatprep.subr.mxu0 0.0
    %7515 = vmatpush2.msra.mxu0 0.0
    %7516 = vmatprep.subr.mxu0 0.0
    %7517 = vmatpush2.msra.mxu0 0.0
    %7518 = vmatprep.subr.mxu0 0.0
    %7519 = vmatpush2.msra.mxu0 0.0
    %7520 = vmatprep.subr.mxu0 0.0
    %7521 = vmatpush2.msra.mxu0 0.0
    %7522 = vmatprep.subr.mxu0 0.0
    %7523 = vmatpush2.msra.mxu0 0.0
    %7524 = vmatprep.subr.mxu0 0.0
    %7525 = vmatpush2.msra.mxu0 0.0
    %7526 = vmatprep.subr.mxu0 0.0
    %7527 = vmatpush2.msra.mxu0 0.0
    %7528 = vmatprep.subr.mxu0 0.0
    %7529 = vmatpush2.msra.mxu0 0.0
    %7530 = vmatprep.subr.mxu0 0.0
    %7531 = vmatpush2.msra.mxu0 0.0
    %7532 = vmatprep.subr.mxu0 0.0
    %7533 = vmatpush2.msra.mxu0 0.0
    %7534 = vmatprep.subr.mxu0 0.0
    %7535 = vmatpush2.msra.mxu0 0.0
    %7536 = vmatprep.mubr.f32.mxu0 0.0
    %v7537 = vand.u32 %v7258, 4294901760
    %v7538 = vsub.f32 %v7258, %v7537
    %7539 = vmatmul.mubr.f32.gmra.mxu0 %v7538
    %v7540 = vpop.f32.mrf.mxu0
    %v7541 = vadd.f32 %v7452, %v7540
    %v7542 = vpop.f32.mrf.mxu0
    %v7543 = vadd.f32 %v7454, %v7542
    %7544 = vdwg.mxu0
    %7545 = vmatprep.subr.mxu0 0.0
    %7546 = vmatpush1.msra.mxu0 0.0
    %7547 = vmatprep.subr.mxu0 0.0
    %7548 = vmatpush1.msra.mxu0 0.0
    %7549 = vmatprep.subr.mxu0 0.0
    %7550 = vmatpush1.msra.mxu0 0.0
    %7551 = vmatprep.subr.mxu0 0.0
    %7552 = vmatpush1.msra.mxu0 0.0
    %7553 = vmatprep.subr.mxu0 0.0
    %7554 = vmatpush1.msra.mxu0 0.0
    %7555 = vmatprep.subr.mxu0 0.0
    %7556 = vmatpush1.msra.mxu0 0.0
    %7557 = vmatprep.subr.mxu0 0.0
    %7558 = vmatpush1.msra.mxu0 0.0
    %7559 = vmatprep.subr.mxu0 0.0
    %7560 = vmatpush1.msra.mxu0 0.0
    %7561 = vmatprep.subr.mxu0 0.0
    %7562 = vmatpush1.msra.mxu0 0.0
    %7563 = vmatprep.subr.mxu0 0.0
    %7564 = vmatpush1.msra.mxu0 0.0
    %7565 = vmatprep.subr.mxu0 0.0
    %7566 = vmatpush1.msra.mxu0 0.0
    %7567 = vmatprep.subr.mxu0 0.0
    %7568 = vmatpush1.msra.mxu0 0.0
    %v7569 = vand.u32 %v7249, 4294901760
    %7570 = vmatprep.subr.mxu0 %v7569
    %v7571 = vand.u32 %v7248, 4294901760
    %7572 = vmatpush1.msra.mxu0 %v7571
    %v7573 = vand.u32 %v7241, 4294901760
    %7574 = vmatprep.subr.mxu0 %v7573
    %v7575 = vand.u32 %v7240, 4294901760
    %7576 = vmatpush1.msra.mxu0 %v7575
    %v7577 = vand.u32 %v7233, 4294901760
    %7578 = vmatprep.subr.mxu0 %v7577
    %v7579 = vand.u32 %v7232, 4294901760
    %7580 = vmatpush1.msra.mxu0 %v7579
    %v7581 = vand.u32 %v7225, 4294901760
    %7582 = vmatprep.subr.mxu0 %v7581
    %v7583 = vand.u32 %v7224, 4294901760
    %7584 = vmatpush1.msra.mxu0 %v7583
    %7585 = vmatprep.subr.mxu0 0.0
    %7586 = vmatpush2.msra.mxu0 0.0
    %7587 = vmatprep.subr.mxu0 0.0
    %7588 = vmatpush2.msra.mxu0 0.0
    %7589 = vmatprep.subr.mxu0 0.0
    %7590 = vmatpush2.msra.mxu0 0.0
    %7591 = vmatprep.subr.mxu0 0.0
    %7592 = vmatpush2.msra.mxu0 0.0
    %7593 = vmatprep.subr.mxu0 0.0
    %7594 = vmatpush2.msra.mxu0 0.0
    %7595 = vmatprep.subr.mxu0 0.0
    %7596 = vmatpush2.msra.mxu0 0.0
    %7597 = vmatprep.subr.mxu0 0.0
    %7598 = vmatpush2.msra.mxu0 0.0
    %7599 = vmatprep.subr.mxu0 0.0
    %7600 = vmatpush2.msra.mxu0 0.0
    %7601 = vmatprep.subr.mxu0 0.0
    %7602 = vmatpush2.msra.mxu0 0.0
    %7603 = vmatprep.subr.mxu0 0.0
    %7604 = vmatpush2.msra.mxu0 0.0
    %7605 = vmatprep.subr.mxu0 0.0
    %7606 = vmatpush2.msra.mxu0 0.0
    %7607 = vmatprep.subr.mxu0 0.0
    %7608 = vmatpush2.msra.mxu0 0.0
    %7609 = vmatprep.subr.mxu0 0.0
    %7610 = vmatpush2.msra.mxu0 0.0
    %7611 = vmatprep.subr.mxu0 0.0
    %7612 = vmatpush2.msra.mxu0 0.0
    %7613 = vmatprep.subr.mxu0 0.0
    %7614 = vmatpush2.msra.mxu0 0.0
    %7615 = vmatprep.subr.mxu0 0.0
    %7616 = vmatpush2.msra.mxu0 0.0
    %7617 = vmatprep.mubr.f32.mxu0 0.0
    %v7618 = vand.u32 %v7258, 4294901760
    %v7619 = vsub.f32 %v7258, %v7618
    %v7620 = vand.u32 %v7619, 4294901760
    %7621 = vmatmul.mubr.f32.gmra.mxu0 %v7620
    %v7622 = vpop.f32.mrf.mxu0
    %v7623 = vadd.f32 %v7541, %v7622
    %v7624 = vpop.f32.mrf.mxu0
    %v7625 = vadd.f32 %v7543, %v7624
    %7626 = vdwg.mxu0
    %7627 = vmatprep.subr.mxu0 0.0
    %7628 = vmatpush1.msra.mxu0 0.0
    %7629 = vmatprep.subr.mxu0 0.0
    %7630 = vmatpush1.msra.mxu0 0.0
    %7631 = vmatprep.subr.mxu0 0.0
    %7632 = vmatpush1.msra.mxu0 0.0
    %7633 = vmatprep.subr.mxu0 0.0
    %7634 = vmatpush1.msra.mxu0 0.0
    %7635 = vmatprep.subr.mxu0 0.0
    %7636 = vmatpush1.msra.mxu0 0.0
    %7637 = vmatprep.subr.mxu0 0.0
    %7638 = vmatpush1.msra.mxu0 0.0
    %7639 = vmatprep.subr.mxu0 0.0
    %7640 = vmatpush1.msra.mxu0 0.0
    %7641 = vmatprep.subr.mxu0 0.0
    %7642 = vmatpush1.msra.mxu0 0.0
    %7643 = vmatprep.subr.mxu0 0.0
    %7644 = vmatpush1.msra.mxu0 0.0
    %7645 = vmatprep.subr.mxu0 0.0
    %7646 = vmatpush1.msra.mxu0 0.0
    %7647 = vmatprep.subr.mxu0 0.0
    %7648 = vmatpush1.msra.mxu0 0.0
    %7649 = vmatprep.subr.mxu0 0.0
    %7650 = vmatpush1.msra.mxu0 0.0
    %v7651 = vand.u32 %v7249, 4294901760
    %v7652 = vsub.f32 %v7249, %v7651
    %v7653 = vand.u32 %v7652, 4294901760
    %7654 = vmatprep.subr.mxu0 %v7653
    %v7655 = vand.u32 %v7248, 4294901760
    %v7656 = vsub.f32 %v7248, %v7655
    %v7657 = vand.u32 %v7656, 4294901760
    %7658 = vmatpush1.msra.mxu0 %v7657
    %v7659 = vand.u32 %v7241, 4294901760
    %v7660 = vsub.f32 %v7241, %v7659
    %v7661 = vand.u32 %v7660, 4294901760
    %7662 = vmatprep.subr.mxu0 %v7661
    %v7663 = vand.u32 %v7240, 4294901760
    %v7664 = vsub.f32 %v7240, %v7663
    %v7665 = vand.u32 %v7664, 4294901760
    %7666 = vmatpush1.msra.mxu0 %v7665
    %v7667 = vand.u32 %v7233, 4294901760
    %v7668 = vsub.f32 %v7233, %v7667
    %v7669 = vand.u32 %v7668, 4294901760
    %7670 = vmatprep.subr.mxu0 %v7669
    %v7671 = vand.u32 %v7232, 4294901760
    %v7672 = vsub.f32 %v7232, %v7671
    %v7673 = vand.u32 %v7672, 4294901760
    %7674 = vmatpush1.msra.mxu0 %v7673
    %v7675 = vand.u32 %v7225, 4294901760
    %v7676 = vsub.f32 %v7225, %v7675
    %v7677 = vand.u32 %v7676, 4294901760
    %7678 = vmatprep.subr.mxu0 %v7677
    %v7679 = vand.u32 %v7224, 4294901760
    %v7680 = vsub.f32 %v7224, %v7679
    %v7681 = vand.u32 %v7680, 4294901760
    %7682 = vmatpush1.msra.mxu0 %v7681
    %7683 = vmatprep.subr.mxu0 0.0
    %7684 = vmatpush2.msra.mxu0 0.0
    %7685 = vmatprep.subr.mxu0 0.0
    %7686 = vmatpush2.msra.mxu0 0.0
    %7687 = vmatprep.subr.mxu0 0.0
    %7688 = vmatpush2.msra.mxu0 0.0
    %7689 = vmatprep.subr.mxu0 0.0
    %7690 = vmatpush2.msra.mxu0 0.0
    %7691 = vmatprep.subr.mxu0 0.0
    %7692 = vmatpush2.msra.mxu0 0.0
    %7693 = vmatprep.subr.mxu0 0.0
    %7694 = vmatpush2.msra.mxu0 0.0
    %7695 = vmatprep.subr.mxu0 0.0
    %7696 = vmatpush2.msra.mxu0 0.0
    %7697 = vmatprep.subr.mxu0 0.0
    %7698 = vmatpush2.msra.mxu0 0.0
    %7699 = vmatprep.subr.mxu0 0.0
    %7700 = vmatpush2.msra.mxu0 0.0
    %7701 = vmatprep.subr.mxu0 0.0
    %7702 = vmatpush2.msra.mxu0 0.0
    %7703 = vmatprep.subr.mxu0 0.0
    %7704 = vmatpush2.msra.mxu0 0.0
    %7705 = vmatprep.subr.mxu0 0.0
    %7706 = vmatpush2.msra.mxu0 0.0
    %7707 = vmatprep.subr.mxu0 0.0
    %7708 = vmatpush2.msra.mxu0 0.0
    %7709 = vmatprep.subr.mxu0 0.0
    %7710 = vmatpush2.msra.mxu0 0.0
    %7711 = vmatprep.subr.mxu0 0.0
    %7712 = vmatpush2.msra.mxu0 0.0
    %7713 = vmatprep.subr.mxu0 0.0
    %7714 = vmatpush2.msra.mxu0 0.0
    %7715 = vmatprep.mubr.f32.mxu0 0.0
    %v7716 = vand.u32 %v7258, 4294901760
    %7717 = vmatmul.mubr.f32.gmra.mxu0 %v7716
    %v7718 = vpop.f32.mrf.mxu0
    %v7719 = vadd.f32 %v7623, %v7718
    %v7720 = vpop.f32.mrf.mxu0
    %v7721 = vadd.f32 %v7625, %v7720
    %7722 = vdwg.mxu0
    %7723 = vmatprep.subr.mxu0 0.0
    %7724 = vmatpush1.msra.mxu0 0.0
    %7725 = vmatprep.subr.mxu0 0.0
    %7726 = vmatpush1.msra.mxu0 0.0
    %7727 = vmatprep.subr.mxu0 0.0
    %7728 = vmatpush1.msra.mxu0 0.0
    %7729 = vmatprep.subr.mxu0 0.0
    %7730 = vmatpush1.msra.mxu0 0.0
    %7731 = vmatprep.subr.mxu0 0.0
    %7732 = vmatpush1.msra.mxu0 0.0
    %7733 = vmatprep.subr.mxu0 0.0
    %7734 = vmatpush1.msra.mxu0 0.0
    %7735 = vmatprep.subr.mxu0 0.0
    %7736 = vmatpush1.msra.mxu0 0.0
    %7737 = vmatprep.subr.mxu0 0.0
    %7738 = vmatpush1.msra.mxu0 0.0
    %7739 = vmatprep.subr.mxu0 0.0
    %7740 = vmatpush1.msra.mxu0 0.0
    %7741 = vmatprep.subr.mxu0 0.0
    %7742 = vmatpush1.msra.mxu0 0.0
    %7743 = vmatprep.subr.mxu0 0.0
    %7744 = vmatpush1.msra.mxu0 0.0
    %7745 = vmatprep.subr.mxu0 0.0
    %7746 = vmatpush1.msra.mxu0 0.0
    %v7747 = vand.u32 %v7249, 4294901760
    %7748 = vmatprep.subr.mxu0 %v7747
    %v7749 = vand.u32 %v7248, 4294901760
    %7750 = vmatpush1.msra.mxu0 %v7749
    %v7751 = vand.u32 %v7241, 4294901760
    %7752 = vmatprep.subr.mxu0 %v7751
    %v7753 = vand.u32 %v7240, 4294901760
    %7754 = vmatpush1.msra.mxu0 %v7753
    %v7755 = vand.u32 %v7233, 4294901760
    %7756 = vmatprep.subr.mxu0 %v7755
    %v7757 = vand.u32 %v7232, 4294901760
    %7758 = vmatpush1.msra.mxu0 %v7757
    %v7759 = vand.u32 %v7225, 4294901760
    %7760 = vmatprep.subr.mxu0 %v7759
    %v7761 = vand.u32 %v7224, 4294901760
    %7762 = vmatpush1.msra.mxu0 %v7761
    %7763 = vmatprep.subr.mxu0 0.0
    %7764 = vmatpush2.msra.mxu0 0.0
    %7765 = vmatprep.subr.mxu0 0.0
    %7766 = vmatpush2.msra.mxu0 0.0
    %7767 = vmatprep.subr.mxu0 0.0
    %7768 = vmatpush2.msra.mxu0 0.0
    %7769 = vmatprep.subr.mxu0 0.0
    %7770 = vmatpush2.msra.mxu0 0.0
    %7771 = vmatprep.subr.mxu0 0.0
    %7772 = vmatpush2.msra.mxu0 0.0
    %7773 = vmatprep.subr.mxu0 0.0
    %7774 = vmatpush2.msra.mxu0 0.0
    %7775 = vmatprep.subr.mxu0 0.0
    %7776 = vmatpush2.msra.mxu0 0.0
    %7777 = vmatprep.subr.mxu0 0.0
    %7778 = vmatpush2.msra.mxu0 0.0
    %7779 = vmatprep.subr.mxu0 0.0
    %7780 = vmatpush2.msra.mxu0 0.0
    %7781 = vmatprep.subr.mxu0 0.0
    %7782 = vmatpush2.msra.mxu0 0.0
    %7783 = vmatprep.subr.mxu0 0.0
    %7784 = vmatpush2.msra.mxu0 0.0
    %7785 = vmatprep.subr.mxu0 0.0
    %7786 = vmatpush2.msra.mxu0 0.0
    %7787 = vmatprep.subr.mxu0 0.0
    %7788 = vmatpush2.msra.mxu0 0.0
    %7789 = vmatprep.subr.mxu0 0.0
    %7790 = vmatpush2.msra.mxu0 0.0
    %7791 = vmatprep.subr.mxu0 0.0
    %7792 = vmatpush2.msra.mxu0 0.0
    %7793 = vmatprep.subr.mxu0 0.0
    %7794 = vmatpush2.msra.mxu0 0.0
    %7795 = vmatprep.mubr.f32.mxu0 0.0
    %v7796 = vand.u32 %v7258, 4294901760
    %7797 = vmatmul.mubr.f32.gmra.mxu0 %v7796
    %v7798 = vpop.f32.mrf.mxu0
    %v7799 = vadd.f32 %v7719, %v7798
    %v7800 = vpop.f32.mrf.mxu0
    %v7801 = vadd.f32 %v7721, %v7800
    %7802 = vdwg.mxu0
    %7803 = vmatprep.subr.mxu0 0.0
    %7804 = vmatpush1.msra.mxu0 0.0
    %7805 = vmatprep.subr.mxu0 0.0
    %7806 = vmatpush1.msra.mxu0 0.0
    %7807 = vmatprep.subr.mxu0 0.0
    %7808 = vmatpush1.msra.mxu0 0.0
    %7809 = vmatprep.subr.mxu0 0.0
    %7810 = vmatpush1.msra.mxu0 0.0
    %7811 = vmatprep.subr.mxu0 0.0
    %7812 = vmatpush1.msra.mxu0 0.0
    %7813 = vmatprep.subr.mxu0 0.0
    %7814 = vmatpush1.msra.mxu0 0.0
    %7815 = vmatprep.subr.mxu0 0.0
    %7816 = vmatpush1.msra.mxu0 0.0
    %7817 = vmatprep.subr.mxu0 0.0
    %7818 = vmatpush1.msra.mxu0 0.0
    %7819 = vmatprep.subr.mxu0 0.0
    %7820 = vmatpush1.msra.mxu0 0.0
    %7821 = vmatprep.subr.mxu0 0.0
    %7822 = vmatpush1.msra.mxu0 0.0
    %7823 = vmatprep.subr.mxu0 0.0
    %7824 = vmatpush1.msra.mxu0 0.0
    %7825 = vmatprep.subr.mxu0 0.0
    %7826 = vmatpush1.msra.mxu0 0.0
    %v7827 = vand.u32 %v7251, 4294901760
    %7828 = vmatprep.subr.mxu0 %v7827
    %v7829 = vand.u32 %v7250, 4294901760
    %7830 = vmatpush1.msra.mxu0 %v7829
    %v7831 = vand.u32 %v7243, 4294901760
    %7832 = vmatprep.subr.mxu0 %v7831
    %v7833 = vand.u32 %v7242, 4294901760
    %7834 = vmatpush1.msra.mxu0 %v7833
    %v7835 = vand.u32 %v7235, 4294901760
    %7836 = vmatprep.subr.mxu0 %v7835
    %v7837 = vand.u32 %v7234, 4294901760
    %7838 = vmatpush1.msra.mxu0 %v7837
    %v7839 = vand.u32 %v7227, 4294901760
    %7840 = vmatprep.subr.mxu0 %v7839
    %v7841 = vand.u32 %v7226, 4294901760
    %7842 = vmatpush1.msra.mxu0 %v7841
    %7843 = vmatprep.subr.mxu0 0.0
    %7844 = vmatpush2.msra.mxu0 0.0
    %7845 = vmatprep.subr.mxu0 0.0
    %7846 = vmatpush2.msra.mxu0 0.0
    %7847 = vmatprep.subr.mxu0 0.0
    %7848 = vmatpush2.msra.mxu0 0.0
    %7849 = vmatprep.subr.mxu0 0.0
    %7850 = vmatpush2.msra.mxu0 0.0
    %7851 = vmatprep.subr.mxu0 0.0
    %7852 = vmatpush2.msra.mxu0 0.0
    %7853 = vmatprep.subr.mxu0 0.0
    %7854 = vmatpush2.msra.mxu0 0.0
    %7855 = vmatprep.subr.mxu0 0.0
    %7856 = vmatpush2.msra.mxu0 0.0
    %7857 = vmatprep.subr.mxu0 0.0
    %7858 = vmatpush2.msra.mxu0 0.0
    %7859 = vmatprep.subr.mxu0 0.0
    %7860 = vmatpush2.msra.mxu0 0.0
    %7861 = vmatprep.subr.mxu0 0.0
    %7862 = vmatpush2.msra.mxu0 0.0
    %7863 = vmatprep.subr.mxu0 0.0
    %7864 = vmatpush2.msra.mxu0 0.0
    %7865 = vmatprep.subr.mxu0 0.0
    %7866 = vmatpush2.msra.mxu0 0.0
    %7867 = vmatprep.subr.mxu0 0.0
    %7868 = vmatpush2.msra.mxu0 0.0
    %7869 = vmatprep.subr.mxu0 0.0
    %7870 = vmatpush2.msra.mxu0 0.0
    %7871 = vmatprep.subr.mxu0 0.0
    %7872 = vmatpush2.msra.mxu0 0.0
    %7873 = vmatprep.subr.mxu0 0.0
    %7874 = vmatpush2.msra.mxu0 0.0
    %7875 = vmatprep.mubr.f32.mxu0 0.0
    %v7876 = vand.u32 %v7258, 4294901760
    %v7877 = vsub.f32 %v7258, %v7876
    %v7878 = vand.u32 %v7877, 4294901760
    %v7879 = vsub.f32 %v7877, %v7878
    %v7880 = vand.u32 %v7879, 4294901760
    %7881 = vmatmul.mubr.f32.gmra.mxu0 %v7880
    %v7882 = vpop.f32.mrf.mxu0
    %v7883 = vadd.f32 0.0, %v7882
    %v7884 = vpop.f32.mrf.mxu0
    %v7885 = vadd.f32 0.0, %v7884
    %7886 = vdwg.mxu0
    %7887 = vmatprep.subr.mxu0 0.0
    %7888 = vmatpush1.msra.mxu0 0.0
    %7889 = vmatprep.subr.mxu0 0.0
    %7890 = vmatpush1.msra.mxu0 0.0
    %7891 = vmatprep.subr.mxu0 0.0
    %7892 = vmatpush1.msra.mxu0 0.0
    %7893 = vmatprep.subr.mxu0 0.0
    %7894 = vmatpush1.msra.mxu0 0.0
    %7895 = vmatprep.subr.mxu0 0.0
    %7896 = vmatpush1.msra.mxu0 0.0
    %7897 = vmatprep.subr.mxu0 0.0
    %7898 = vmatpush1.msra.mxu0 0.0
    %7899 = vmatprep.subr.mxu0 0.0
    %7900 = vmatpush1.msra.mxu0 0.0
    %7901 = vmatprep.subr.mxu0 0.0
    %7902 = vmatpush1.msra.mxu0 0.0
    %7903 = vmatprep.subr.mxu0 0.0
    %7904 = vmatpush1.msra.mxu0 0.0
    %7905 = vmatprep.subr.mxu0 0.0
    %7906 = vmatpush1.msra.mxu0 0.0
    %7907 = vmatprep.subr.mxu0 0.0
    %7908 = vmatpush1.msra.mxu0 0.0
    %7909 = vmatprep.subr.mxu0 0.0
    %7910 = vmatpush1.msra.mxu0 0.0
    %v7911 = vand.u32 %v7251, 4294901760
    %v7912 = vsub.f32 %v7251, %v7911
    %v7913 = vand.u32 %v7912, 4294901760
    %v7914 = vsub.f32 %v7912, %v7913
    %v7915 = vand.u32 %v7914, 4294901760
    %7916 = vmatprep.subr.mxu0 %v7915
    %v7917 = vand.u32 %v7250, 4294901760
    %v7918 = vsub.f32 %v7250, %v7917
    %v7919 = vand.u32 %v7918, 4294901760
    %v7920 = vsub.f32 %v7918, %v7919
    %v7921 = vand.u32 %v7920, 4294901760
    %7922 = vmatpush1.msra.mxu0 %v7921
    %v7923 = vand.u32 %v7243, 4294901760
    %v7924 = vsub.f32 %v7243, %v7923
    %v7925 = vand.u32 %v7924, 4294901760
    %v7926 = vsub.f32 %v7924, %v7925
    %v7927 = vand.u32 %v7926, 4294901760
    %7928 = vmatprep.subr.mxu0 %v7927
    %v7929 = vand.u32 %v7242, 4294901760
    %v7930 = vsub.f32 %v7242, %v7929
    %v7931 = vand.u32 %v7930, 4294901760
    %v7932 = vsub.f32 %v7930, %v7931
    %v7933 = vand.u32 %v7932, 4294901760
    %7934 = vmatpush1.msra.mxu0 %v7933
    %v7935 = vand.u32 %v7235, 4294901760
    %v7936 = vsub.f32 %v7235, %v7935
    %v7937 = vand.u32 %v7936, 4294901760
    %v7938 = vsub.f32 %v7936, %v7937
    %v7939 = vand.u32 %v7938, 4294901760
    %7940 = vmatprep.subr.mxu0 %v7939
    %v7941 = vand.u32 %v7234, 4294901760
    %v7942 = vsub.f32 %v7234, %v7941
    %v7943 = vand.u32 %v7942, 4294901760
    %v7944 = vsub.f32 %v7942, %v7943
    %v7945 = vand.u32 %v7944, 4294901760
    %7946 = vmatpush1.msra.mxu0 %v7945
    %v7947 = vand.u32 %v7227, 4294901760
    %v7948 = vsub.f32 %v7227, %v7947
    %v7949 = vand.u32 %v7948, 4294901760
    %v7950 = vsub.f32 %v7948, %v7949
    %v7951 = vand.u32 %v7950, 4294901760
    %7952 = vmatprep.subr.mxu0 %v7951
    %v7953 = vand.u32 %v7226, 4294901760
    %v7954 = vsub.f32 %v7226, %v7953
    %v7955 = vand.u32 %v7954, 4294901760
    %v7956 = vsub.f32 %v7954, %v7955
    %v7957 = vand.u32 %v7956, 4294901760
    %7958 = vmatpush1.msra.mxu0 %v7957
    %7959 = vmatprep.subr.mxu0 0.0
    %7960 = vmatpush2.msra.mxu0 0.0
    %7961 = vmatprep.subr.mxu0 0.0
    %7962 = vmatpush2.msra.mxu0 0.0
    %7963 = vmatprep.subr.mxu0 0.0
    %7964 = vmatpush2.msra.mxu0 0.0
    %7965 = vmatprep.subr.mxu0 0.0
    %7966 = vmatpush2.msra.mxu0 0.0
    %7967 = vmatprep.subr.mxu0 0.0
    %7968 = vmatpush2.msra.mxu0 0.0
    %7969 = vmatprep.subr.mxu0 0.0
    %7970 = vmatpush2.msra.mxu0 0.0
    %7971 = vmatprep.subr.mxu0 0.0
    %7972 = vmatpush2.msra.mxu0 0.0
    %7973 = vmatprep.subr.mxu0 0.0
    %7974 = vmatpush2.msra.mxu0 0.0
    %7975 = vmatprep.subr.mxu0 0.0
    %7976 = vmatpush2.msra.mxu0 0.0
    %7977 = vmatprep.subr.mxu0 0.0
    %7978 = vmatpush2.msra.mxu0 0.0
    %7979 = vmatprep.subr.mxu0 0.0
    %7980 = vmatpush2.msra.mxu0 0.0
    %7981 = vmatprep.subr.mxu0 0.0
    %7982 = vmatpush2.msra.mxu0 0.0
    %7983 = vmatprep.subr.mxu0 0.0
    %7984 = vmatpush2.msra.mxu0 0.0
    %7985 = vmatprep.subr.mxu0 0.0
    %7986 = vmatpush2.msra.mxu0 0.0
    %7987 = vmatprep.subr.mxu0 0.0
    %7988 = vmatpush2.msra.mxu0 0.0
    %7989 = vmatprep.subr.mxu0 0.0
    %7990 = vmatpush2.msra.mxu0 0.0
    %7991 = vmatprep.mubr.f32.mxu0 0.0
    %v7992 = vand.u32 %v7258, 4294901760
    %7993 = vmatmul.mubr.f32.gmra.mxu0 %v7992
    %v7994 = vpop.f32.mrf.mxu0
    %v7995 = vadd.f32 %v7883, %v7994
    %v7996 = vpop.f32.mrf.mxu0
    %v7997 = vadd.f32 %v7885, %v7996
    %7998 = vdwg.mxu0
    %7999 = vmatprep.subr.mxu0 0.0
    %8000 = vmatpush1.msra.mxu0 0.0
    %8001 = vmatprep.subr.mxu0 0.0
    %8002 = vmatpush1.msra.mxu0 0.0
    %8003 = vmatprep.subr.mxu0 0.0
    %8004 = vmatpush1.msra.mxu0 0.0
    %8005 = vmatprep.subr.mxu0 0.0
    %8006 = vmatpush1.msra.mxu0 0.0
    %8007 = vmatprep.subr.mxu0 0.0
    %8008 = vmatpush1.msra.mxu0 0.0
    %8009 = vmatprep.subr.mxu0 0.0
    %8010 = vmatpush1.msra.mxu0 0.0
    %8011 = vmatprep.subr.mxu0 0.0
    %8012 = vmatpush1.msra.mxu0 0.0
    %8013 = vmatprep.subr.mxu0 0.0
    %8014 = vmatpush1.msra.mxu0 0.0
    %8015 = vmatprep.subr.mxu0 0.0
    %8016 = vmatpush1.msra.mxu0 0.0
    %8017 = vmatprep.subr.mxu0 0.0
    %8018 = vmatpush1.msra.mxu0 0.0
    %8019 = vmatprep.subr.mxu0 0.0
    %8020 = vmatpush1.msra.mxu0 0.0
    %8021 = vmatprep.subr.mxu0 0.0
    %8022 = vmatpush1.msra.mxu0 0.0
    %v8023 = vand.u32 %v7251, 4294901760
    %v8024 = vsub.f32 %v7251, %v8023
    %8025 = vmatprep.subr.mxu0 %v8024
    %v8026 = vand.u32 %v7250, 4294901760
    %v8027 = vsub.f32 %v7250, %v8026
    %8028 = vmatpush1.msra.mxu0 %v8027
    %v8029 = vand.u32 %v7243, 4294901760
    %v8030 = vsub.f32 %v7243, %v8029
    %8031 = vmatprep.subr.mxu0 %v8030
    %v8032 = vand.u32 %v7242, 4294901760
    %v8033 = vsub.f32 %v7242, %v8032
    %8034 = vmatpush1.msra.mxu0 %v8033
    %v8035 = vand.u32 %v7235, 4294901760
    %v8036 = vsub.f32 %v7235, %v8035
    %8037 = vmatprep.subr.mxu0 %v8036
    %v8038 = vand.u32 %v7234, 4294901760
    %v8039 = vsub.f32 %v7234, %v8038
    %8040 = vmatpush1.msra.mxu0 %v8039
    %v8041 = vand.u32 %v7227, 4294901760
    %v8042 = vsub.f32 %v7227, %v8041
    %8043 = vmatprep.subr.mxu0 %v8042
    %v8044 = vand.u32 %v7226, 4294901760
    %v8045 = vsub.f32 %v7226, %v8044
    %8046 = vmatpush1.msra.mxu0 %v8045
    %8047 = vmatprep.subr.mxu0 0.0
    %8048 = vmatpush2.msra.mxu0 0.0
    %8049 = vmatprep.subr.mxu0 0.0
    %8050 = vmatpush2.msra.mxu0 0.0
    %8051 = vmatprep.subr.mxu0 0.0
    %8052 = vmatpush2.msra.mxu0 0.0
    %8053 = vmatprep.subr.mxu0 0.0
    %8054 = vmatpush2.msra.mxu0 0.0
    %8055 = vmatprep.subr.mxu0 0.0
    %8056 = vmatpush2.msra.mxu0 0.0
    %8057 = vmatprep.subr.mxu0 0.0
    %8058 = vmatpush2.msra.mxu0 0.0
    %8059 = vmatprep.subr.mxu0 0.0
    %8060 = vmatpush2.msra.mxu0 0.0
    %8061 = vmatprep.subr.mxu0 0.0
    %8062 = vmatpush2.msra.mxu0 0.0
    %8063 = vmatprep.subr.mxu0 0.0
    %8064 = vmatpush2.msra.mxu0 0.0
    %8065 = vmatprep.subr.mxu0 0.0
    %8066 = vmatpush2.msra.mxu0 0.0
    %8067 = vmatprep.subr.mxu0 0.0
    %8068 = vmatpush2.msra.mxu0 0.0
    %8069 = vmatprep.subr.mxu0 0.0
    %8070 = vmatpush2.msra.mxu0 0.0
    %8071 = vmatprep.subr.mxu0 0.0
    %8072 = vmatpush2.msra.mxu0 0.0
    %8073 = vmatprep.subr.mxu0 0.0
    %8074 = vmatpush2.msra.mxu0 0.0
    %8075 = vmatprep.subr.mxu0 0.0
    %8076 = vmatpush2.msra.mxu0 0.0
    %8077 = vmatprep.subr.mxu0 0.0
    %8078 = vmatpush2.msra.mxu0 0.0
    %8079 = vmatprep.mubr.f32.mxu0 0.0
    %v8080 = vand.u32 %v7258, 4294901760
    %v8081 = vsub.f32 %v7258, %v8080
    %8082 = vmatmul.mubr.f32.gmra.mxu0 %v8081
    %v8083 = vpop.f32.mrf.mxu0
    %v8084 = vadd.f32 %v7995, %v8083
    %v8085 = vpop.f32.mrf.mxu0
    %v8086 = vadd.f32 %v7997, %v8085
    %8087 = vdwg.mxu0
    %8088 = vmatprep.subr.mxu0 0.0
    %8089 = vmatpush1.msra.mxu0 0.0
    %8090 = vmatprep.subr.mxu0 0.0
    %8091 = vmatpush1.msra.mxu0 0.0
    %8092 = vmatprep.subr.mxu0 0.0
    %8093 = vmatpush1.msra.mxu0 0.0
    %8094 = vmatprep.subr.mxu0 0.0
    %8095 = vmatpush1.msra.mxu0 0.0
    %8096 = vmatprep.subr.mxu0 0.0
    %8097 = vmatpush1.msra.mxu0 0.0
    %8098 = vmatprep.subr.mxu0 0.0
    %8099 = vmatpush1.msra.mxu0 0.0
    %8100 = vmatprep.subr.mxu0 0.0
    %8101 = vmatpush1.msra.mxu0 0.0
    %8102 = vmatprep.subr.mxu0 0.0
    %8103 = vmatpush1.msra.mxu0 0.0
    %8104 = vmatprep.subr.mxu0 0.0
    %8105 = vmatpush1.msra.mxu0 0.0
    %8106 = vmatprep.subr.mxu0 0.0
    %8107 = vmatpush1.msra.mxu0 0.0
    %8108 = vmatprep.subr.mxu0 0.0
    %8109 = vmatpush1.msra.mxu0 0.0
    %8110 = vmatprep.subr.mxu0 0.0
    %8111 = vmatpush1.msra.mxu0 0.0
    %v8112 = vand.u32 %v7251, 4294901760
    %8113 = vmatprep.subr.mxu0 %v8112
    %v8114 = vand.u32 %v7250, 4294901760
    %8115 = vmatpush1.msra.mxu0 %v8114
    %v8116 = vand.u32 %v7243, 4294901760
    %8117 = vmatprep.subr.mxu0 %v8116
    %v8118 = vand.u32 %v7242, 4294901760
    %8119 = vmatpush1.msra.mxu0 %v8118
    %v8120 = vand.u32 %v7235, 4294901760
    %8121 = vmatprep.subr.mxu0 %v8120
    %v8122 = vand.u32 %v7234, 4294901760
    %8123 = vmatpush1.msra.mxu0 %v8122
    %v8124 = vand.u32 %v7227, 4294901760
    %8125 = vmatprep.subr.mxu0 %v8124
    %v8126 = vand.u32 %v7226, 4294901760
    %8127 = vmatpush1.msra.mxu0 %v8126
    %8128 = vmatprep.subr.mxu0 0.0
    %8129 = vmatpush2.msra.mxu0 0.0
    %8130 = vmatprep.subr.mxu0 0.0
    %8131 = vmatpush2.msra.mxu0 0.0
    %8132 = vmatprep.subr.mxu0 0.0
    %8133 = vmatpush2.msra.mxu0 0.0
    %8134 = vmatprep.subr.mxu0 0.0
    %8135 = vmatpush2.msra.mxu0 0.0
    %8136 = vmatprep.subr.mxu0 0.0
    %8137 = vmatpush2.msra.mxu0 0.0
    %8138 = vmatprep.subr.mxu0 0.0
    %8139 = vmatpush2.msra.mxu0 0.0
    %8140 = vmatprep.subr.mxu0 0.0
    %8141 = vmatpush2.msra.mxu0 0.0
    %8142 = vmatprep.subr.mxu0 0.0
    %8143 = vmatpush2.msra.mxu0 0.0
    %8144 = vmatprep.subr.mxu0 0.0
    %8145 = vmatpush2.msra.mxu0 0.0
    %8146 = vmatprep.subr.mxu0 0.0
    %8147 = vmatpush2.msra.mxu0 0.0
    %8148 = vmatprep.subr.mxu0 0.0
    %8149 = vmatpush2.msra.mxu0 0.0
    %8150 = vmatprep.subr.mxu0 0.0
    %8151 = vmatpush2.msra.mxu0 0.0
    %8152 = vmatprep.subr.mxu0 0.0
    %8153 = vmatpush2.msra.mxu0 0.0
    %8154 = vmatprep.subr.mxu0 0.0
    %8155 = vmatpush2.msra.mxu0 0.0
    %8156 = vmatprep.subr.mxu0 0.0
    %8157 = vmatpush2.msra.mxu0 0.0
    %8158 = vmatprep.subr.mxu0 0.0
    %8159 = vmatpush2.msra.mxu0 0.0
    %8160 = vmatprep.mubr.f32.mxu0 0.0
    %v8161 = vand.u32 %v7258, 4294901760
    %v8162 = vsub.f32 %v7258, %v8161
    %v8163 = vand.u32 %v8162, 4294901760
    %8164 = vmatmul.mubr.f32.gmra.mxu0 %v8163
    %v8165 = vpop.f32.mrf.mxu0
    %v8166 = vadd.f32 %v8084, %v8165
    %v8167 = vpop.f32.mrf.mxu0
    %v8168 = vadd.f32 %v8086, %v8167
    %8169 = vdwg.mxu0
    %8170 = vmatprep.subr.mxu0 0.0
    %8171 = vmatpush1.msra.mxu0 0.0
    %8172 = vmatprep.subr.mxu0 0.0
    %8173 = vmatpush1.msra.mxu0 0.0
    %8174 = vmatprep.subr.mxu0 0.0
    %8175 = vmatpush1.msra.mxu0 0.0
    %8176 = vmatprep.subr.mxu0 0.0
    %8177 = vmatpush1.msra.mxu0 0.0
    %8178 = vmatprep.subr.mxu0 0.0
    %8179 = vmatpush1.msra.mxu0 0.0
    %8180 = vmatprep.subr.mxu0 0.0
    %8181 = vmatpush1.msra.mxu0 0.0
    %8182 = vmatprep.subr.mxu0 0.0
    %8183 = vmatpush1.msra.mxu0 0.0
    %8184 = vmatprep.subr.mxu0 0.0
    %8185 = vmatpush1.msra.mxu0 0.0
    %8186 = vmatprep.subr.mxu0 0.0
    %8187 = vmatpush1.msra.mxu0 0.0
    %8188 = vmatprep.subr.mxu0 0.0
    %8189 = vmatpush1.msra.mxu0 0.0
    %8190 = vmatprep.subr.mxu0 0.0
    %8191 = vmatpush1.msra.mxu0 0.0
    %8192 = vmatprep.subr.mxu0 0.0
    %8193 = vmatpush1.msra.mxu0 0.0
    %v8194 = vand.u32 %v7251, 4294901760
    %v8195 = vsub.f32 %v7251, %v8194
    %v8196 = vand.u32 %v8195, 4294901760
    %8197 = vmatprep.subr.mxu0 %v8196
    %v8198 = vand.u32 %v7250, 4294901760
    %v8199 = vsub.f32 %v7250, %v8198
    %v8200 = vand.u32 %v8199, 4294901760
    %8201 = vmatpush1.msra.mxu0 %v8200
    %v8202 = vand.u32 %v7243, 4294901760
    %v8203 = vsub.f32 %v7243, %v8202
    %v8204 = vand.u32 %v8203, 4294901760
    %8205 = vmatprep.subr.mxu0 %v8204
    %v8206 = vand.u32 %v7242, 4294901760
    %v8207 = vsub.f32 %v7242, %v8206
    %v8208 = vand.u32 %v8207, 4294901760
    %8209 = vmatpush1.msra.mxu0 %v8208
    %v8210 = vand.u32 %v7235, 4294901760
    %v8211 = vsub.f32 %v7235, %v8210
    %v8212 = vand.u32 %v8211, 4294901760
    %8213 = vmatprep.subr.mxu0 %v8212
    %v8214 = vand.u32 %v7234, 4294901760
    %v8215 = vsub.f32 %v7234, %v8214
    %v8216 = vand.u32 %v8215, 4294901760
    %8217 = vmatpush1.msra.mxu0 %v8216
    %v8218 = vand.u32 %v7227, 4294901760
    %v8219 = vsub.f32 %v7227, %v8218
    %v8220 = vand.u32 %v8219, 4294901760
    %8221 = vmatprep.subr.mxu0 %v8220
    %v8222 = vand.u32 %v7226, 4294901760
    %v8223 = vsub.f32 %v7226, %v8222
    %v8224 = vand.u32 %v8223, 4294901760
    %8225 = vmatpush1.msra.mxu0 %v8224
    %8226 = vmatprep.subr.mxu0 0.0
    %8227 = vmatpush2.msra.mxu0 0.0
    %8228 = vmatprep.subr.mxu0 0.0
    %8229 = vmatpush2.msra.mxu0 0.0
    %8230 = vmatprep.subr.mxu0 0.0
    %8231 = vmatpush2.msra.mxu0 0.0
    %8232 = vmatprep.subr.mxu0 0.0
    %8233 = vmatpush2.msra.mxu0 0.0
    %8234 = vmatprep.subr.mxu0 0.0
    %8235 = vmatpush2.msra.mxu0 0.0
    %8236 = vmatprep.subr.mxu0 0.0
    %8237 = vmatpush2.msra.mxu0 0.0
    %8238 = vmatprep.subr.mxu0 0.0
    %8239 = vmatpush2.msra.mxu0 0.0
    %8240 = vmatprep.subr.mxu0 0.0
    %8241 = vmatpush2.msra.mxu0 0.0
    %8242 = vmatprep.subr.mxu0 0.0
    %8243 = vmatpush2.msra.mxu0 0.0
    %8244 = vmatprep.subr.mxu0 0.0
    %8245 = vmatpush2.msra.mxu0 0.0
    %8246 = vmatprep.subr.mxu0 0.0
    %8247 = vmatpush2.msra.mxu0 0.0
    %8248 = vmatprep.subr.mxu0 0.0
    %8249 = vmatpush2.msra.mxu0 0.0
    %8250 = vmatprep.subr.mxu0 0.0
    %8251 = vmatpush2.msra.mxu0 0.0
    %8252 = vmatprep.subr.mxu0 0.0
    %8253 = vmatpush2.msra.mxu0 0.0
    %8254 = vmatprep.subr.mxu0 0.0
    %8255 = vmatpush2.msra.mxu0 0.0
    %8256 = vmatprep.subr.mxu0 0.0
    %8257 = vmatpush2.msra.mxu0 0.0
    %8258 = vmatprep.mubr.f32.mxu0 0.0
    %v8259 = vand.u32 %v7258, 4294901760
    %8260 = vmatmul.mubr.f32.gmra.mxu0 %v8259
    %v8261 = vpop.f32.mrf.mxu0
    %v8262 = vadd.f32 %v8166, %v8261
    %v8263 = vpop.f32.mrf.mxu0
    %v8264 = vadd.f32 %v8168, %v8263
    %8265 = vdwg.mxu0
    %8266 = vmatprep.subr.mxu0 0.0
    %8267 = vmatpush1.msra.mxu0 0.0
    %8268 = vmatprep.subr.mxu0 0.0
    %8269 = vmatpush1.msra.mxu0 0.0
    %8270 = vmatprep.subr.mxu0 0.0
    %8271 = vmatpush1.msra.mxu0 0.0
    %8272 = vmatprep.subr.mxu0 0.0
    %8273 = vmatpush1.msra.mxu0 0.0
    %8274 = vmatprep.subr.mxu0 0.0
    %8275 = vmatpush1.msra.mxu0 0.0
    %8276 = vmatprep.subr.mxu0 0.0
    %8277 = vmatpush1.msra.mxu0 0.0
    %8278 = vmatprep.subr.mxu0 0.0
    %8279 = vmatpush1.msra.mxu0 0.0
    %8280 = vmatprep.subr.mxu0 0.0
    %8281 = vmatpush1.msra.mxu0 0.0
    %8282 = vmatprep.subr.mxu0 0.0
    %8283 = vmatpush1.msra.mxu0 0.0
    %8284 = vmatprep.subr.mxu0 0.0
    %8285 = vmatpush1.msra.mxu0 0.0
    %8286 = vmatprep.subr.mxu0 0.0
    %8287 = vmatpush1.msra.mxu0 0.0
    %8288 = vmatprep.subr.mxu0 0.0
    %8289 = vmatpush1.msra.mxu0 0.0
    %v8290 = vand.u32 %v7251, 4294901760
    %8291 = vmatprep.subr.mxu0 %v8290
    %v8292 = vand.u32 %v7250, 4294901760
    %8293 = vmatpush1.msra.mxu0 %v8292
    %v8294 = vand.u32 %v7243, 4294901760
    %8295 = vmatprep.subr.mxu0 %v8294
    %v8296 = vand.u32 %v7242, 4294901760
    %8297 = vmatpush1.msra.mxu0 %v8296
    %v8298 = vand.u32 %v7235, 4294901760
    %8299 = vmatprep.subr.mxu0 %v8298
    %v8300 = vand.u32 %v7234, 4294901760
    %8301 = vmatpush1.msra.mxu0 %v8300
    %v8302 = vand.u32 %v7227, 4294901760
    %8303 = vmatprep.subr.mxu0 %v8302
    %v8304 = vand.u32 %v7226, 4294901760
    %8305 = vmatpush1.msra.mxu0 %v8304
    %8306 = vmatprep.subr.mxu0 0.0
    %8307 = vmatpush2.msra.mxu0 0.0
    %8308 = vmatprep.subr.mxu0 0.0
    %8309 = vmatpush2.msra.mxu0 0.0
    %8310 = vmatprep.subr.mxu0 0.0
    %8311 = vmatpush2.msra.mxu0 0.0
    %8312 = vmatprep.subr.mxu0 0.0
    %8313 = vmatpush2.msra.mxu0 0.0
    %8314 = vmatprep.subr.mxu0 0.0
    %8315 = vmatpush2.msra.mxu0 0.0
    %8316 = vmatprep.subr.mxu0 0.0
    %8317 = vmatpush2.msra.mxu0 0.0
    %8318 = vmatprep.subr.mxu0 0.0
    %8319 = vmatpush2.msra.mxu0 0.0
    %8320 = vmatprep.subr.mxu0 0.0
    %8321 = vmatpush2.msra.mxu0 0.0
    %8322 = vmatprep.subr.mxu0 0.0
    %8323 = vmatpush2.msra.mxu0 0.0
    %8324 = vmatprep.subr.mxu0 0.0
    %8325 = vmatpush2.msra.mxu0 0.0
    %8326 = vmatprep.subr.mxu0 0.0
    %8327 = vmatpush2.msra.mxu0 0.0
    %8328 = vmatprep.subr.mxu0 0.0
    %8329 = vmatpush2.msra.mxu0 0.0
    %8330 = vmatprep.subr.mxu0 0.0
    %8331 = vmatpush2.msra.mxu0 0.0
    %8332 = vmatprep.subr.mxu0 0.0
    %8333 = vmatpush2.msra.mxu0 0.0
    %8334 = vmatprep.subr.mxu0 0.0
    %8335 = vmatpush2.msra.mxu0 0.0
    %8336 = vmatprep.subr.mxu0 0.0
    %8337 = vmatpush2.msra.mxu0 0.0
    %8338 = vmatprep.mubr.f32.mxu0 0.0
    %v8339 = vand.u32 %v7258, 4294901760
    %8340 = vmatmul.mubr.f32.gmra.mxu0 %v8339
    %v8341 = vpop.f32.mrf.mxu0
    %v8342 = vadd.f32 %v8262, %v8341
    %v8343 = vpop.f32.mrf.mxu0
    %v8344 = vadd.f32 %v8264, %v8343
    %8345 = vdwg.mxu0
    %8346 = vmatprep.subr.mxu0 0.0
    %8347 = vmatpush1.msra.mxu0 0.0
    %8348 = vmatprep.subr.mxu0 0.0
    %8349 = vmatpush1.msra.mxu0 0.0
    %8350 = vmatprep.subr.mxu0 0.0
    %8351 = vmatpush1.msra.mxu0 0.0
    %8352 = vmatprep.subr.mxu0 0.0
    %8353 = vmatpush1.msra.mxu0 0.0
    %8354 = vmatprep.subr.mxu0 0.0
    %8355 = vmatpush1.msra.mxu0 0.0
    %8356 = vmatprep.subr.mxu0 0.0
    %8357 = vmatpush1.msra.mxu0 0.0
    %8358 = vmatprep.subr.mxu0 0.0
    %8359 = vmatpush1.msra.mxu0 0.0
    %8360 = vmatprep.subr.mxu0 0.0
    %8361 = vmatpush1.msra.mxu0 0.0
    %8362 = vmatprep.subr.mxu0 0.0
    %8363 = vmatpush1.msra.mxu0 0.0
    %8364 = vmatprep.subr.mxu0 0.0
    %8365 = vmatpush1.msra.mxu0 0.0
    %8366 = vmatprep.subr.mxu0 0.0
    %8367 = vmatpush1.msra.mxu0 0.0
    %8368 = vmatprep.subr.mxu0 0.0
    %8369 = vmatpush1.msra.mxu0 0.0
    %v8370 = vand.u32 %v7253, 4294901760
    %8371 = vmatprep.subr.mxu0 %v8370
    %v8372 = vand.u32 %v7252, 4294901760
    %8373 = vmatpush1.msra.mxu0 %v8372
    %v8374 = vand.u32 %v7245, 4294901760
    %8375 = vmatprep.subr.mxu0 %v8374
    %v8376 = vand.u32 %v7244, 4294901760
    %8377 = vmatpush1.msra.mxu0 %v8376
    %v8378 = vand.u32 %v7237, 4294901760
    %8379 = vmatprep.subr.mxu0 %v8378
    %v8380 = vand.u32 %v7236, 4294901760
    %8381 = vmatpush1.msra.mxu0 %v8380
    %v8382 = vand.u32 %v7229, 4294901760
    %8383 = vmatprep.subr.mxu0 %v8382
    %v8384 = vand.u32 %v7228, 4294901760
    %8385 = vmatpush1.msra.mxu0 %v8384
    %8386 = vmatprep.subr.mxu0 0.0
    %8387 = vmatpush2.msra.mxu0 0.0
    %8388 = vmatprep.subr.mxu0 0.0
    %8389 = vmatpush2.msra.mxu0 0.0
    %8390 = vmatprep.subr.mxu0 0.0
    %8391 = vmatpush2.msra.mxu0 0.0
    %8392 = vmatprep.subr.mxu0 0.0
    %8393 = vmatpush2.msra.mxu0 0.0
    %8394 = vmatprep.subr.mxu0 0.0
    %8395 = vmatpush2.msra.mxu0 0.0
    %8396 = vmatprep.subr.mxu0 0.0
    %8397 = vmatpush2.msra.mxu0 0.0
    %8398 = vmatprep.subr.mxu0 0.0
    %8399 = vmatpush2.msra.mxu0 0.0
    %8400 = vmatprep.subr.mxu0 0.0
    %8401 = vmatpush2.msra.mxu0 0.0
    %8402 = vmatprep.subr.mxu0 0.0
    %8403 = vmatpush2.msra.mxu0 0.0
    %8404 = vmatprep.subr.mxu0 0.0
    %8405 = vmatpush2.msra.mxu0 0.0
    %8406 = vmatprep.subr.mxu0 0.0
    %8407 = vmatpush2.msra.mxu0 0.0
    %8408 = vmatprep.subr.mxu0 0.0
    %8409 = vmatpush2.msra.mxu0 0.0
    %8410 = vmatprep.subr.mxu0 0.0
    %8411 = vmatpush2.msra.mxu0 0.0
    %8412 = vmatprep.subr.mxu0 0.0
    %8413 = vmatpush2.msra.mxu0 0.0
    %8414 = vmatprep.subr.mxu0 0.0
    %8415 = vmatpush2.msra.mxu0 0.0
    %8416 = vmatprep.subr.mxu0 0.0
    %8417 = vmatpush2.msra.mxu0 0.0
    %8418 = vmatprep.mubr.f32.mxu0 0.0
    %v8419 = vand.u32 %v7258, 4294901760
    %v8420 = vsub.f32 %v7258, %v8419
    %v8421 = vand.u32 %v8420, 4294901760
    %v8422 = vsub.f32 %v8420, %v8421
    %v8423 = vand.u32 %v8422, 4294901760
    %8424 = vmatmul.mubr.f32.gmra.mxu0 %v8423
    %v8425 = vpop.f32.mrf.mxu0
    %v8426 = vadd.f32 0.0, %v8425
    %v8427 = vpop.f32.mrf.mxu0
    %v8428 = vadd.f32 0.0, %v8427
    %8429 = vdwg.mxu0
    %8430 = vmatprep.subr.mxu0 0.0
    %8431 = vmatpush1.msra.mxu0 0.0
    %8432 = vmatprep.subr.mxu0 0.0
    %8433 = vmatpush1.msra.mxu0 0.0
    %8434 = vmatprep.subr.mxu0 0.0
    %8435 = vmatpush1.msra.mxu0 0.0
    %8436 = vmatprep.subr.mxu0 0.0
    %8437 = vmatpush1.msra.mxu0 0.0
    %8438 = vmatprep.subr.mxu0 0.0
    %8439 = vmatpush1.msra.mxu0 0.0
    %8440 = vmatprep.subr.mxu0 0.0
    %8441 = vmatpush1.msra.mxu0 0.0
    %8442 = vmatprep.subr.mxu0 0.0
    %8443 = vmatpush1.msra.mxu0 0.0
    %8444 = vmatprep.subr.mxu0 0.0
    %8445 = vmatpush1.msra.mxu0 0.0
    %8446 = vmatprep.subr.mxu0 0.0
    %8447 = vmatpush1.msra.mxu0 0.0
    %8448 = vmatprep.subr.mxu0 0.0
    %8449 = vmatpush1.msra.mxu0 0.0
    %8450 = vmatprep.subr.mxu0 0.0
    %8451 = vmatpush1.msra.mxu0 0.0
    %8452 = vmatprep.subr.mxu0 0.0
    %8453 = vmatpush1.msra.mxu0 0.0
    %v8454 = vand.u32 %v7253, 4294901760
    %v8455 = vsub.f32 %v7253, %v8454
    %v8456 = vand.u32 %v8455, 4294901760
    %v8457 = vsub.f32 %v8455, %v8456
    %v8458 = vand.u32 %v8457, 4294901760
    %8459 = vmatprep.subr.mxu0 %v8458
    %v8460 = vand.u32 %v7252, 4294901760
    %v8461 = vsub.f32 %v7252, %v8460
    %v8462 = vand.u32 %v8461, 4294901760
    %v8463 = vsub.f32 %v8461, %v8462
    %v8464 = vand.u32 %v8463, 4294901760
    %8465 = vmatpush1.msra.mxu0 %v8464
    %v8466 = vand.u32 %v7245, 4294901760
    %v8467 = vsub.f32 %v7245, %v8466
    %v8468 = vand.u32 %v8467, 4294901760
    %v8469 = vsub.f32 %v8467, %v8468
    %v8470 = vand.u32 %v8469, 4294901760
    %8471 = vmatprep.subr.mxu0 %v8470
    %v8472 = vand.u32 %v7244, 4294901760
    %v8473 = vsub.f32 %v7244, %v8472
    %v8474 = vand.u32 %v8473, 4294901760
    %v8475 = vsub.f32 %v8473, %v8474
    %v8476 = vand.u32 %v8475, 4294901760
    %8477 = vmatpush1.msra.mxu0 %v8476
    %v8478 = vand.u32 %v7237, 4294901760
    %v8479 = vsub.f32 %v7237, %v8478
    %v8480 = vand.u32 %v8479, 4294901760
    %v8481 = vsub.f32 %v8479, %v8480
    %v8482 = vand.u32 %v8481, 4294901760
    %8483 = vmatprep.subr.mxu0 %v8482
    %v8484 = vand.u32 %v7236, 4294901760
    %v8485 = vsub.f32 %v7236, %v8484
    %v8486 = vand.u32 %v8485, 4294901760
    %v8487 = vsub.f32 %v8485, %v8486
    %v8488 = vand.u32 %v8487, 4294901760
    %8489 = vmatpush1.msra.mxu0 %v8488
    %v8490 = vand.u32 %v7229, 4294901760
    %v8491 = vsub.f32 %v7229, %v8490
    %v8492 = vand.u32 %v8491, 4294901760
    %v8493 = vsub.f32 %v8491, %v8492
    %v8494 = vand.u32 %v8493, 4294901760
    %8495 = vmatprep.subr.mxu0 %v8494
    %v8496 = vand.u32 %v7228, 4294901760
    %v8497 = vsub.f32 %v7228, %v8496
    %v8498 = vand.u32 %v8497, 4294901760
    %v8499 = vsub.f32 %v8497, %v8498
    %v8500 = vand.u32 %v8499, 4294901760
    %8501 = vmatpush1.msra.mxu0 %v8500
    %8502 = vmatprep.subr.mxu0 0.0
    %8503 = vmatpush2.msra.mxu0 0.0
    %8504 = vmatprep.subr.mxu0 0.0
    %8505 = vmatpush2.msra.mxu0 0.0
    %8506 = vmatprep.subr.mxu0 0.0
    %8507 = vmatpush2.msra.mxu0 0.0
    %8508 = vmatprep.subr.mxu0 0.0
    %8509 = vmatpush2.msra.mxu0 0.0
    %8510 = vmatprep.subr.mxu0 0.0
    %8511 = vmatpush2.msra.mxu0 0.0
    %8512 = vmatprep.subr.mxu0 0.0
    %8513 = vmatpush2.msra.mxu0 0.0
    %8514 = vmatprep.subr.mxu0 0.0
    %8515 = vmatpush2.msra.mxu0 0.0
    %8516 = vmatprep.subr.mxu0 0.0
    %8517 = vmatpush2.msra.mxu0 0.0
    %8518 = vmatprep.subr.mxu0 0.0
    %8519 = vmatpush2.msra.mxu0 0.0
    %8520 = vmatprep.subr.mxu0 0.0
    %8521 = vmatpush2.msra.mxu0 0.0
    %8522 = vmatprep.subr.mxu0 0.0
    %8523 = vmatpush2.msra.mxu0 0.0
    %8524 = vmatprep.subr.mxu0 0.0
    %8525 = vmatpush2.msra.mxu0 0.0
    %8526 = vmatprep.subr.mxu0 0.0
    %8527 = vmatpush2.msra.mxu0 0.0
    %8528 = vmatprep.subr.mxu0 0.0
    %8529 = vmatpush2.msra.mxu0 0.0
    %8530 = vmatprep.subr.mxu0 0.0
    %8531 = vmatpush2.msra.mxu0 0.0
    %8532 = vmatprep.subr.mxu0 0.0
    %8533 = vmatpush2.msra.mxu0 0.0
    %8534 = vmatprep.mubr.f32.mxu0 0.0
    %v8535 = vand.u32 %v7258, 4294901760
    %8536 = vmatmul.mubr.f32.gmra.mxu0 %v8535
    %v8537 = vpop.f32.mrf.mxu0
    %v8538 = vadd.f32 %v8426, %v8537
    %v8539 = vpop.f32.mrf.mxu0
    %v8540 = vadd.f32 %v8428, %v8539
    %8541 = vdwg.mxu0
    %8542 = vmatprep.subr.mxu0 0.0
    %8543 = vmatpush1.msra.mxu0 0.0
    %8544 = vmatprep.subr.mxu0 0.0
    %8545 = vmatpush1.msra.mxu0 0.0
    %8546 = vmatprep.subr.mxu0 0.0
    %8547 = vmatpush1.msra.mxu0 0.0
    %8548 = vmatprep.subr.mxu0 0.0
    %8549 = vmatpush1.msra.mxu0 0.0
    %8550 = vmatprep.subr.mxu0 0.0
    %8551 = vmatpush1.msra.mxu0 0.0
    %8552 = vmatprep.subr.mxu0 0.0
    %8553 = vmatpush1.msra.mxu0 0.0
    %8554 = vmatprep.subr.mxu0 0.0
    %8555 = vmatpush1.msra.mxu0 0.0
    %8556 = vmatprep.subr.mxu0 0.0
    %8557 = vmatpush1.msra.mxu0 0.0
    %8558 = vmatprep.subr.mxu0 0.0
    %8559 = vmatpush1.msra.mxu0 0.0
    %8560 = vmatprep.subr.mxu0 0.0
    %8561 = vmatpush1.msra.mxu0 0.0
    %8562 = vmatprep.subr.mxu0 0.0
    %8563 = vmatpush1.msra.mxu0 0.0
    %8564 = vmatprep.subr.mxu0 0.0
    %8565 = vmatpush1.msra.mxu0 0.0
    %v8566 = vand.u32 %v7253, 4294901760
    %v8567 = vsub.f32 %v7253, %v8566
    %8568 = vmatprep.subr.mxu0 %v8567
    %v8569 = vand.u32 %v7252, 4294901760
    %v8570 = vsub.f32 %v7252, %v8569
    %8571 = vmatpush1.msra.mxu0 %v8570
    %v8572 = vand.u32 %v7245, 4294901760
    %v8573 = vsub.f32 %v7245, %v8572
    %8574 = vmatprep.subr.mxu0 %v8573
    %v8575 = vand.u32 %v7244, 4294901760
    %v8576 = vsub.f32 %v7244, %v8575
    %8577 = vmatpush1.msra.mxu0 %v8576
    %v8578 = vand.u32 %v7237, 4294901760
    %v8579 = vsub.f32 %v7237, %v8578
    %8580 = vmatprep.subr.mxu0 %v8579
    %v8581 = vand.u32 %v7236, 4294901760
    %v8582 = vsub.f32 %v7236, %v8581
    %8583 = vmatpush1.msra.mxu0 %v8582
    %v8584 = vand.u32 %v7229, 4294901760
    %v8585 = vsub.f32 %v7229, %v8584
    %8586 = vmatprep.subr.mxu0 %v8585
    %v8587 = vand.u32 %v7228, 4294901760
    %v8588 = vsub.f32 %v7228, %v8587
    %8589 = vmatpush1.msra.mxu0 %v8588
    %8590 = vmatprep.subr.mxu0 0.0
    %8591 = vmatpush2.msra.mxu0 0.0
    %8592 = vmatprep.subr.mxu0 0.0
    %8593 = vmatpush2.msra.mxu0 0.0
    %8594 = vmatprep.subr.mxu0 0.0
    %8595 = vmatpush2.msra.mxu0 0.0
    %8596 = vmatprep.subr.mxu0 0.0
    %8597 = vmatpush2.msra.mxu0 0.0
    %8598 = vmatprep.subr.mxu0 0.0
    %8599 = vmatpush2.msra.mxu0 0.0
    %8600 = vmatprep.subr.mxu0 0.0
    %8601 = vmatpush2.msra.mxu0 0.0
    %8602 = vmatprep.subr.mxu0 0.0
    %8603 = vmatpush2.msra.mxu0 0.0
    %8604 = vmatprep.subr.mxu0 0.0
    %8605 = vmatpush2.msra.mxu0 0.0
    %8606 = vmatprep.subr.mxu0 0.0
    %8607 = vmatpush2.msra.mxu0 0.0
    %8608 = vmatprep.subr.mxu0 0.0
    %8609 = vmatpush2.msra.mxu0 0.0
    %8610 = vmatprep.subr.mxu0 0.0
    %8611 = vmatpush2.msra.mxu0 0.0
    %8612 = vmatprep.subr.mxu0 0.0
    %8613 = vmatpush2.msra.mxu0 0.0
    %8614 = vmatprep.subr.mxu0 0.0
    %8615 = vmatpush2.msra.mxu0 0.0
    %8616 = vmatprep.subr.mxu0 0.0
    %8617 = vmatpush2.msra.mxu0 0.0
    %8618 = vmatprep.subr.mxu0 0.0
    %8619 = vmatpush2.msra.mxu0 0.0
    %8620 = vmatprep.subr.mxu0 0.0
    %8621 = vmatpush2.msra.mxu0 0.0
    %8622 = vmatprep.mubr.f32.mxu0 0.0
    %v8623 = vand.u32 %v7258, 4294901760
    %v8624 = vsub.f32 %v7258, %v8623
    %8625 = vmatmul.mubr.f32.gmra.mxu0 %v8624
    %v8626 = vpop.f32.mrf.mxu0
    %v8627 = vadd.f32 %v8538, %v8626
    %v8628 = vpop.f32.mrf.mxu0
    %v8629 = vadd.f32 %v8540, %v8628
    %8630 = vdwg.mxu0
    %8631 = vmatprep.subr.mxu0 0.0
    %8632 = vmatpush1.msra.mxu0 0.0
    %8633 = vmatprep.subr.mxu0 0.0
    %8634 = vmatpush1.msra.mxu0 0.0
    %8635 = vmatprep.subr.mxu0 0.0
    %8636 = vmatpush1.msra.mxu0 0.0
    %8637 = vmatprep.subr.mxu0 0.0
    %8638 = vmatpush1.msra.mxu0 0.0
    %8639 = vmatprep.subr.mxu0 0.0
    %8640 = vmatpush1.msra.mxu0 0.0
    %8641 = vmatprep.subr.mxu0 0.0
    %8642 = vmatpush1.msra.mxu0 0.0
    %8643 = vmatprep.subr.mxu0 0.0
    %8644 = vmatpush1.msra.mxu0 0.0
    %8645 = vmatprep.subr.mxu0 0.0
    %8646 = vmatpush1.msra.mxu0 0.0
    %8647 = vmatprep.subr.mxu0 0.0
    %8648 = vmatpush1.msra.mxu0 0.0
    %8649 = vmatprep.subr.mxu0 0.0
    %8650 = vmatpush1.msra.mxu0 0.0
    %8651 = vmatprep.subr.mxu0 0.0
    %8652 = vmatpush1.msra.mxu0 0.0
    %8653 = vmatprep.subr.mxu0 0.0
    %8654 = vmatpush1.msra.mxu0 0.0
    %v8655 = vand.u32 %v7253, 4294901760
    %8656 = vmatprep.subr.mxu0 %v8655
    %v8657 = vand.u32 %v7252, 4294901760
    %8658 = vmatpush1.msra.mxu0 %v8657
    %v8659 = vand.u32 %v7245, 4294901760
    %8660 = vmatprep.subr.mxu0 %v8659
    %v8661 = vand.u32 %v7244, 4294901760
    %8662 = vmatpush1.msra.mxu0 %v8661
    %v8663 = vand.u32 %v7237, 4294901760
    %8664 = vmatprep.subr.mxu0 %v8663
    %v8665 = vand.u32 %v7236, 4294901760
    %8666 = vmatpush1.msra.mxu0 %v8665
    %v8667 = vand.u32 %v7229, 4294901760
    %8668 = vmatprep.subr.mxu0 %v8667
    %v8669 = vand.u32 %v7228, 4294901760
    %8670 = vmatpush1.msra.mxu0 %v8669
    %8671 = vmatprep.subr.mxu0 0.0
    %8672 = vmatpush2.msra.mxu0 0.0
    %8673 = vmatprep.subr.mxu0 0.0
    %8674 = vmatpush2.msra.mxu0 0.0
    %8675 = vmatprep.subr.mxu0 0.0
    %8676 = vmatpush2.msra.mxu0 0.0
    %8677 = vmatprep.subr.mxu0 0.0
    %8678 = vmatpush2.msra.mxu0 0.0
    %8679 = vmatprep.subr.mxu0 0.0
    %8680 = vmatpush2.msra.mxu0 0.0
    %8681 = vmatprep.subr.mxu0 0.0
    %8682 = vmatpush2.msra.mxu0 0.0
    %8683 = vmatprep.subr.mxu0 0.0
    %8684 = vmatpush2.msra.mxu0 0.0
    %8685 = vmatprep.subr.mxu0 0.0
    %8686 = vmatpush2.msra.mxu0 0.0
    %8687 = vmatprep.subr.mxu0 0.0
    %8688 = vmatpush2.msra.mxu0 0.0
    %8689 = vmatprep.subr.mxu0 0.0
    %8690 = vmatpush2.msra.mxu0 0.0
    %8691 = vmatprep.subr.mxu0 0.0
    %8692 = vmatpush2.msra.mxu0 0.0
    %8693 = vmatprep.subr.mxu0 0.0
    %8694 = vmatpush2.msra.mxu0 0.0
    %8695 = vmatprep.subr.mxu0 0.0
    %8696 = vmatpush2.msra.mxu0 0.0
    %8697 = vmatprep.subr.mxu0 0.0
    %8698 = vmatpush2.msra.mxu0 0.0
    %8699 = vmatprep.subr.mxu0 0.0
    %8700 = vmatpush2.msra.mxu0 0.0
    %8701 = vmatprep.subr.mxu0 0.0
    %8702 = vmatpush2.msra.mxu0 0.0
    %8703 = vmatprep.mubr.f32.mxu0 0.0
    %v8704 = vand.u32 %v7258, 4294901760
    %v8705 = vsub.f32 %v7258, %v8704
    %v8706 = vand.u32 %v8705, 4294901760
    %8707 = vmatmul.mubr.f32.gmra.mxu0 %v8706
    %v8708 = vpop.f32.mrf.mxu0
    %v8709 = vadd.f32 %v8627, %v8708
    %v8710 = vpop.f32.mrf.mxu0
    %v8711 = vadd.f32 %v8629, %v8710
    %8712 = vdwg.mxu0
    %8713 = vmatprep.subr.mxu0 0.0
    %8714 = vmatpush1.msra.mxu0 0.0
    %8715 = vmatprep.subr.mxu0 0.0
    %8716 = vmatpush1.msra.mxu0 0.0
    %8717 = vmatprep.subr.mxu0 0.0
    %8718 = vmatpush1.msra.mxu0 0.0
    %8719 = vmatprep.subr.mxu0 0.0
    %8720 = vmatpush1.msra.mxu0 0.0
    %8721 = vmatprep.subr.mxu0 0.0
    %8722 = vmatpush1.msra.mxu0 0.0
    %8723 = vmatprep.subr.mxu0 0.0
    %8724 = vmatpush1.msra.mxu0 0.0
    %8725 = vmatprep.subr.mxu0 0.0
    %8726 = vmatpush1.msra.mxu0 0.0
    %8727 = vmatprep.subr.mxu0 0.0
    %8728 = vmatpush1.msra.mxu0 0.0
    %8729 = vmatprep.subr.mxu0 0.0
    %8730 = vmatpush1.msra.mxu0 0.0
    %8731 = vmatprep.subr.mxu0 0.0
    %8732 = vmatpush1.msra.mxu0 0.0
    %8733 = vmatprep.subr.mxu0 0.0
    %8734 = vmatpush1.msra.mxu0 0.0
    %8735 = vmatprep.subr.mxu0 0.0
    %8736 = vmatpush1.msra.mxu0 0.0
    %v8737 = vand.u32 %v7253, 4294901760
    %v8738 = vsub.f32 %v7253, %v8737
    %v8739 = vand.u32 %v8738, 4294901760
    %8740 = vmatprep.subr.mxu0 %v8739
    %v8741 = vand.u32 %v7252, 4294901760
    %v8742 = vsub.f32 %v7252, %v8741
    %v8743 = vand.u32 %v8742, 4294901760
    %8744 = vmatpush1.msra.mxu0 %v8743
    %v8745 = vand.u32 %v7245, 4294901760
    %v8746 = vsub.f32 %v7245, %v8745
    %v8747 = vand.u32 %v8746, 4294901760
    %8748 = vmatprep.subr.mxu0 %v8747
    %v8749 = vand.u32 %v7244, 4294901760
    %v8750 = vsub.f32 %v7244, %v8749
    %v8751 = vand.u32 %v8750, 4294901760
    %8752 = vmatpush1.msra.mxu0 %v8751
    %v8753 = vand.u32 %v7237, 4294901760
    %v8754 = vsub.f32 %v7237, %v8753
    %v8755 = vand.u32 %v8754, 4294901760
    %8756 = vmatprep.subr.mxu0 %v8755
    %v8757 = vand.u32 %v7236, 4294901760
    %v8758 = vsub.f32 %v7236, %v8757
    %v8759 = vand.u32 %v8758, 4294901760
    %8760 = vmatpush1.msra.mxu0 %v8759
    %v8761 = vand.u32 %v7229, 4294901760
    %v8762 = vsub.f32 %v7229, %v8761
    %v8763 = vand.u32 %v8762, 4294901760
    %8764 = vmatprep.subr.mxu0 %v8763
    %v8765 = vand.u32 %v7228, 4294901760
    %v8766 = vsub.f32 %v7228, %v8765
    %v8767 = vand.u32 %v8766, 4294901760
    %8768 = vmatpush1.msra.mxu0 %v8767
    %8769 = vmatprep.subr.mxu0 0.0
    %8770 = vmatpush2.msra.mxu0 0.0
    %8771 = vmatprep.subr.mxu0 0.0
    %8772 = vmatpush2.msra.mxu0 0.0
    %8773 = vmatprep.subr.mxu0 0.0
    %8774 = vmatpush2.msra.mxu0 0.0
    %8775 = vmatprep.subr.mxu0 0.0
    %8776 = vmatpush2.msra.mxu0 0.0
    %8777 = vmatprep.subr.mxu0 0.0
    %8778 = vmatpush2.msra.mxu0 0.0
    %8779 = vmatprep.subr.mxu0 0.0
    %8780 = vmatpush2.msra.mxu0 0.0
    %8781 = vmatprep.subr.mxu0 0.0
    %8782 = vmatpush2.msra.mxu0 0.0
    %8783 = vmatprep.subr.mxu0 0.0
    %8784 = vmatpush2.msra.mxu0 0.0
    %8785 = vmatprep.subr.mxu0 0.0
    %8786 = vmatpush2.msra.mxu0 0.0
    %8787 = vmatprep.subr.mxu0 0.0
    %8788 = vmatpush2.msra.mxu0 0.0
    %8789 = vmatprep.subr.mxu0 0.0
    %8790 = vmatpush2.msra.mxu0 0.0
    %8791 = vmatprep.subr.mxu0 0.0
    %8792 = vmatpush2.msra.mxu0 0.0
    %8793 = vmatprep.subr.mxu0 0.0
    %8794 = vmatpush2.msra.mxu0 0.0
    %8795 = vmatprep.subr.mxu0 0.0
    %8796 = vmatpush2.msra.mxu0 0.0
    %8797 = vmatprep.subr.mxu0 0.0
    %8798 = vmatpush2.msra.mxu0 0.0
    %8799 = vmatprep.subr.mxu0 0.0
    %8800 = vmatpush2.msra.mxu0 0.0
    %8801 = vmatprep.mubr.f32.mxu0 0.0
    %v8802 = vand.u32 %v7258, 4294901760
    %8803 = vmatmul.mubr.f32.gmra.mxu0 %v8802
    %v8804 = vpop.f32.mrf.mxu0
    %v8805 = vadd.f32 %v8709, %v8804
    %v8806 = vpop.f32.mrf.mxu0
    %v8807 = vadd.f32 %v8711, %v8806
    %8808 = vdwg.mxu0
    %8809 = vmatprep.subr.mxu0 0.0
    %8810 = vmatpush1.msra.mxu0 0.0
    %8811 = vmatprep.subr.mxu0 0.0
    %8812 = vmatpush1.msra.mxu0 0.0
    %8813 = vmatprep.subr.mxu0 0.0
    %8814 = vmatpush1.msra.mxu0 0.0
    %8815 = vmatprep.subr.mxu0 0.0
    %8816 = vmatpush1.msra.mxu0 0.0
    %8817 = vmatprep.subr.mxu0 0.0
    %8818 = vmatpush1.msra.mxu0 0.0
    %8819 = vmatprep.subr.mxu0 0.0
    %8820 = vmatpush1.msra.mxu0 0.0
    %8821 = vmatprep.subr.mxu0 0.0
    %8822 = vmatpush1.msra.mxu0 0.0
    %8823 = vmatprep.subr.mxu0 0.0
    %8824 = vmatpush1.msra.mxu0 0.0
    %8825 = vmatprep.subr.mxu0 0.0
    %8826 = vmatpush1.msra.mxu0 0.0
    %8827 = vmatprep.subr.mxu0 0.0
    %8828 = vmatpush1.msra.mxu0 0.0
    %8829 = vmatprep.subr.mxu0 0.0
    %8830 = vmatpush1.msra.mxu0 0.0
    %8831 = vmatprep.subr.mxu0 0.0
    %8832 = vmatpush1.msra.mxu0 0.0
    %v8833 = vand.u32 %v7253, 4294901760
    %8834 = vmatprep.subr.mxu0 %v8833
    %v8835 = vand.u32 %v7252, 4294901760
    %8836 = vmatpush1.msra.mxu0 %v8835
    %v8837 = vand.u32 %v7245, 4294901760
    %8838 = vmatprep.subr.mxu0 %v8837
    %v8839 = vand.u32 %v7244, 4294901760
    %8840 = vmatpush1.msra.mxu0 %v8839
    %v8841 = vand.u32 %v7237, 4294901760
    %8842 = vmatprep.subr.mxu0 %v8841
    %v8843 = vand.u32 %v7236, 4294901760
    %8844 = vmatpush1.msra.mxu0 %v8843
    %v8845 = vand.u32 %v7229, 4294901760
    %8846 = vmatprep.subr.mxu0 %v8845
    %v8847 = vand.u32 %v7228, 4294901760
    %8848 = vmatpush1.msra.mxu0 %v8847
    %8849 = vmatprep.subr.mxu0 0.0
    %8850 = vmatpush2.msra.mxu0 0.0
    %8851 = vmatprep.subr.mxu0 0.0
    %8852 = vmatpush2.msra.mxu0 0.0
    %8853 = vmatprep.subr.mxu0 0.0
    %8854 = vmatpush2.msra.mxu0 0.0
    %8855 = vmatprep.subr.mxu0 0.0
    %8856 = vmatpush2.msra.mxu0 0.0
    %8857 = vmatprep.subr.mxu0 0.0
    %8858 = vmatpush2.msra.mxu0 0.0
    %8859 = vmatprep.subr.mxu0 0.0
    %8860 = vmatpush2.msra.mxu0 0.0
    %8861 = vmatprep.subr.mxu0 0.0
    %8862 = vmatpush2.msra.mxu0 0.0
    %8863 = vmatprep.subr.mxu0 0.0
    %8864 = vmatpush2.msra.mxu0 0.0
    %8865 = vmatprep.subr.mxu0 0.0
    %8866 = vmatpush2.msra.mxu0 0.0
    %8867 = vmatprep.subr.mxu0 0.0
    %8868 = vmatpush2.msra.mxu0 0.0
    %8869 = vmatprep.subr.mxu0 0.0
    %8870 = vmatpush2.msra.mxu0 0.0
    %8871 = vmatprep.subr.mxu0 0.0
    %8872 = vmatpush2.msra.mxu0 0.0
    %8873 = vmatprep.subr.mxu0 0.0
    %8874 = vmatpush2.msra.mxu0 0.0
    %8875 = vmatprep.subr.mxu0 0.0
    %8876 = vmatpush2.msra.mxu0 0.0
    %8877 = vmatprep.subr.mxu0 0.0
    %8878 = vmatpush2.msra.mxu0 0.0
    %8879 = vmatprep.subr.mxu0 0.0
    %8880 = vmatpush2.msra.mxu0 0.0
    %8881 = vmatprep.mubr.f32.mxu0 0.0
    %v8882 = vand.u32 %v7258, 4294901760
    %8883 = vmatmul.mubr.f32.gmra.mxu0 %v8882
    %v8884 = vpop.f32.mrf.mxu0
    %v8885 = vadd.f32 %v8805, %v8884
    %v8886 = vpop.f32.mrf.mxu0
    %v8887 = vadd.f32 %v8807, %v8886
    %8888 = vdwg.mxu0
    %8889 = vmatprep.subr.mxu0 0.0
    %8890 = vmatpush1.msra.mxu0 0.0
    %8891 = vmatprep.subr.mxu0 0.0
    %8892 = vmatpush1.msra.mxu0 0.0
    %8893 = vmatprep.subr.mxu0 0.0
    %8894 = vmatpush1.msra.mxu0 0.0
    %8895 = vmatprep.subr.mxu0 0.0
    %8896 = vmatpush1.msra.mxu0 0.0
    %8897 = vmatprep.subr.mxu0 0.0
    %8898 = vmatpush1.msra.mxu0 0.0
    %8899 = vmatprep.subr.mxu0 0.0
    %8900 = vmatpush1.msra.mxu0 0.0
    %8901 = vmatprep.subr.mxu0 0.0
    %8902 = vmatpush1.msra.mxu0 0.0
    %8903 = vmatprep.subr.mxu0 0.0
    %8904 = vmatpush1.msra.mxu0 0.0
    %8905 = vmatprep.subr.mxu0 0.0
    %8906 = vmatpush1.msra.mxu0 0.0
    %8907 = vmatprep.subr.mxu0 0.0
    %8908 = vmatpush1.msra.mxu0 0.0
    %8909 = vmatprep.subr.mxu0 0.0
    %8910 = vmatpush1.msra.mxu0 0.0
    %8911 = vmatprep.subr.mxu0 0.0
    %8912 = vmatpush1.msra.mxu0 0.0
    %v8913 = vand.u32 %v7255, 4294901760
    %8914 = vmatprep.subr.mxu0 %v8913
    %v8915 = vand.u32 %v7254, 4294901760
    %8916 = vmatpush1.msra.mxu0 %v8915
    %v8917 = vand.u32 %v7247, 4294901760
    %8918 = vmatprep.subr.mxu0 %v8917
    %v8919 = vand.u32 %v7246, 4294901760
    %8920 = vmatpush1.msra.mxu0 %v8919
    %v8921 = vand.u32 %v7239, 4294901760
    %8922 = vmatprep.subr.mxu0 %v8921
    %v8923 = vand.u32 %v7238, 4294901760
    %8924 = vmatpush1.msra.mxu0 %v8923
    %v8925 = vand.u32 %v7231, 4294901760
    %8926 = vmatprep.subr.mxu0 %v8925
    %v8927 = vand.u32 %v7230, 4294901760
    %8928 = vmatpush1.msra.mxu0 %v8927
    %8929 = vmatprep.subr.mxu0 0.0
    %8930 = vmatpush2.msra.mxu0 0.0
    %8931 = vmatprep.subr.mxu0 0.0
    %8932 = vmatpush2.msra.mxu0 0.0
    %8933 = vmatprep.subr.mxu0 0.0
    %8934 = vmatpush2.msra.mxu0 0.0
    %8935 = vmatprep.subr.mxu0 0.0
    %8936 = vmatpush2.msra.mxu0 0.0
    %8937 = vmatprep.subr.mxu0 0.0
    %8938 = vmatpush2.msra.mxu0 0.0
    %8939 = vmatprep.subr.mxu0 0.0
    %8940 = vmatpush2.msra.mxu0 0.0
    %8941 = vmatprep.subr.mxu0 0.0
    %8942 = vmatpush2.msra.mxu0 0.0
    %8943 = vmatprep.subr.mxu0 0.0
    %8944 = vmatpush2.msra.mxu0 0.0
    %8945 = vmatprep.subr.mxu0 0.0
    %8946 = vmatpush2.msra.mxu0 0.0
    %8947 = vmatprep.subr.mxu0 0.0
    %8948 = vmatpush2.msra.mxu0 0.0
    %8949 = vmatprep.subr.mxu0 0.0
    %8950 = vmatpush2.msra.mxu0 0.0
    %8951 = vmatprep.subr.mxu0 0.0
    %8952 = vmatpush2.msra.mxu0 0.0
    %8953 = vmatprep.subr.mxu0 0.0
    %8954 = vmatpush2.msra.mxu0 0.0
    %8955 = vmatprep.subr.mxu0 0.0
    %8956 = vmatpush2.msra.mxu0 0.0
    %8957 = vmatprep.subr.mxu0 0.0
    %8958 = vmatpush2.msra.mxu0 0.0
    %8959 = vmatprep.subr.mxu0 0.0
    %8960 = vmatpush2.msra.mxu0 0.0
    %8961 = vmatprep.mubr.f32.mxu0 0.0
    %v8962 = vand.u32 %v7258, 4294901760
    %v8963 = vsub.f32 %v7258, %v8962
    %v8964 = vand.u32 %v8963, 4294901760
    %v8965 = vsub.f32 %v8963, %v8964
    %v8966 = vand.u32 %v8965, 4294901760
    %8967 = vmatmul.mubr.f32.gmra.mxu0 %v8966
    %v8968 = vpop.f32.mrf.mxu0
    %v8969 = vadd.f32 0.0, %v8968
    %v8970 = vpop.f32.mrf.mxu0
    %v8971 = vadd.f32 0.0, %v8970
    %8972 = vdwg.mxu0
    %8973 = vmatprep.subr.mxu0 0.0
    %8974 = vmatpush1.msra.mxu0 0.0
    %8975 = vmatprep.subr.mxu0 0.0
    %8976 = vmatpush1.msra.mxu0 0.0
    %8977 = vmatprep.subr.mxu0 0.0
    %8978 = vmatpush1.msra.mxu0 0.0
    %8979 = vmatprep.subr.mxu0 0.0
    %8980 = vmatpush1.msra.mxu0 0.0
    %8981 = vmatprep.subr.mxu0 0.0
    %8982 = vmatpush1.msra.mxu0 0.0
    %8983 = vmatprep.subr.mxu0 0.0
    %8984 = vmatpush1.msra.mxu0 0.0
    %8985 = vmatprep.subr.mxu0 0.0
    %8986 = vmatpush1.msra.mxu0 0.0
    %8987 = vmatprep.subr.mxu0 0.0
    %8988 = vmatpush1.msra.mxu0 0.0
    %8989 = vmatprep.subr.mxu0 0.0
    %8990 = vmatpush1.msra.mxu0 0.0
    %8991 = vmatprep.subr.mxu0 0.0
    %8992 = vmatpush1.msra.mxu0 0.0
    %8993 = vmatprep.subr.mxu0 0.0
    %8994 = vmatpush1.msra.mxu0 0.0
    %8995 = vmatprep.subr.mxu0 0.0
    %8996 = vmatpush1.msra.mxu0 0.0
    %v8997 = vand.u32 %v7255, 4294901760
    %v8998 = vsub.f32 %v7255, %v8997
    %v8999 = vand.u32 %v8998, 4294901760
    %v9000 = vsub.f32 %v8998, %v8999
    %v9001 = vand.u32 %v9000, 4294901760
    %9002 = vmatprep.subr.mxu0 %v9001
    %v9003 = vand.u32 %v7254, 4294901760
    %v9004 = vsub.f32 %v7254, %v9003
    %v9005 = vand.u32 %v9004, 4294901760
    %v9006 = vsub.f32 %v9004, %v9005
    %v9007 = vand.u32 %v9006, 4294901760
    %9008 = vmatpush1.msra.mxu0 %v9007
    %v9009 = vand.u32 %v7247, 4294901760
    %v9010 = vsub.f32 %v7247, %v9009
    %v9011 = vand.u32 %v9010, 4294901760
    %v9012 = vsub.f32 %v9010, %v9011
    %v9013 = vand.u32 %v9012, 4294901760
    %9014 = vmatprep.subr.mxu0 %v9013
    %v9015 = vand.u32 %v7246, 4294901760
    %v9016 = vsub.f32 %v7246, %v9015
    %v9017 = vand.u32 %v9016, 4294901760
    %v9018 = vsub.f32 %v9016, %v9017
    %v9019 = vand.u32 %v9018, 4294901760
    %9020 = vmatpush1.msra.mxu0 %v9019
    %v9021 = vand.u32 %v7239, 4294901760
    %v9022 = vsub.f32 %v7239, %v9021
    %v9023 = vand.u32 %v9022, 4294901760
    %v9024 = vsub.f32 %v9022, %v9023
    %v9025 = vand.u32 %v9024, 4294901760
    %9026 = vmatprep.subr.mxu0 %v9025
    %v9027 = vand.u32 %v7238, 4294901760
    %v9028 = vsub.f32 %v7238, %v9027
    %v9029 = vand.u32 %v9028, 4294901760
    %v9030 = vsub.f32 %v9028, %v9029
    %v9031 = vand.u32 %v9030, 4294901760
    %9032 = vmatpush1.msra.mxu0 %v9031
    %v9033 = vand.u32 %v7231, 4294901760
    %v9034 = vsub.f32 %v7231, %v9033
    %v9035 = vand.u32 %v9034, 4294901760
    %v9036 = vsub.f32 %v9034, %v9035
    %v9037 = vand.u32 %v9036, 4294901760
    %9038 = vmatprep.subr.mxu0 %v9037
    %v9039 = vand.u32 %v7230, 4294901760
    %v9040 = vsub.f32 %v7230, %v9039
    %v9041 = vand.u32 %v9040, 4294901760
    %v9042 = vsub.f32 %v9040, %v9041
    %v9043 = vand.u32 %v9042, 4294901760
    %9044 = vmatpush1.msra.mxu0 %v9043
    %9045 = vmatprep.subr.mxu0 0.0
    %9046 = vmatpush2.msra.mxu0 0.0
    %9047 = vmatprep.subr.mxu0 0.0
    %9048 = vmatpush2.msra.mxu0 0.0
    %9049 = vmatprep.subr.mxu0 0.0
    %9050 = vmatpush2.msra.mxu0 0.0
    %9051 = vmatprep.subr.mxu0 0.0
    %9052 = vmatpush2.msra.mxu0 0.0
    %9053 = vmatprep.subr.mxu0 0.0
    %9054 = vmatpush2.msra.mxu0 0.0
    %9055 = vmatprep.subr.mxu0 0.0
    %9056 = vmatpush2.msra.mxu0 0.0
    %9057 = vmatprep.subr.mxu0 0.0
    %9058 = vmatpush2.msra.mxu0 0.0
    %9059 = vmatprep.subr.mxu0 0.0
    %9060 = vmatpush2.msra.mxu0 0.0
    %9061 = vmatprep.subr.mxu0 0.0
    %9062 = vmatpush2.msra.mxu0 0.0
    %9063 = vmatprep.subr.mxu0 0.0
    %9064 = vmatpush2.msra.mxu0 0.0
    %9065 = vmatprep.subr.mxu0 0.0
    %9066 = vmatpush2.msra.mxu0 0.0
    %9067 = vmatprep.subr.mxu0 0.0
    %9068 = vmatpush2.msra.mxu0 0.0
    %9069 = vmatprep.subr.mxu0 0.0
    %9070 = vmatpush2.msra.mxu0 0.0
    %9071 = vmatprep.subr.mxu0 0.0
    %9072 = vmatpush2.msra.mxu0 0.0
    %9073 = vmatprep.subr.mxu0 0.0
    %9074 = vmatpush2.msra.mxu0 0.0
    %9075 = vmatprep.subr.mxu0 0.0
    %9076 = vmatpush2.msra.mxu0 0.0
    %9077 = vmatprep.mubr.f32.mxu0 0.0
    %v9078 = vand.u32 %v7258, 4294901760
    %9079 = vmatmul.mubr.f32.gmra.mxu0 %v9078
    %v9080 = vpop.f32.mrf.mxu0
    %v9081 = vadd.f32 %v8969, %v9080
    %v9082 = vpop.f32.mrf.mxu0
    %v9083 = vadd.f32 %v8971, %v9082
    %9084 = vdwg.mxu0
    %9085 = vmatprep.subr.mxu0 0.0
    %9086 = vmatpush1.msra.mxu0 0.0
    %9087 = vmatprep.subr.mxu0 0.0
    %9088 = vmatpush1.msra.mxu0 0.0
    %9089 = vmatprep.subr.mxu0 0.0
    %9090 = vmatpush1.msra.mxu0 0.0
    %9091 = vmatprep.subr.mxu0 0.0
    %9092 = vmatpush1.msra.mxu0 0.0
    %9093 = vmatprep.subr.mxu0 0.0
    %9094 = vmatpush1.msra.mxu0 0.0
    %9095 = vmatprep.subr.mxu0 0.0
    %9096 = vmatpush1.msra.mxu0 0.0
    %9097 = vmatprep.subr.mxu0 0.0
    %9098 = vmatpush1.msra.mxu0 0.0
    %9099 = vmatprep.subr.mxu0 0.0
    %9100 = vmatpush1.msra.mxu0 0.0
    %9101 = vmatprep.subr.mxu0 0.0
    %9102 = vmatpush1.msra.mxu0 0.0
    %9103 = vmatprep.subr.mxu0 0.0
    %9104 = vmatpush1.msra.mxu0 0.0
    %9105 = vmatprep.subr.mxu0 0.0
    %9106 = vmatpush1.msra.mxu0 0.0
    %9107 = vmatprep.subr.mxu0 0.0
    %9108 = vmatpush1.msra.mxu0 0.0
    %v9109 = vand.u32 %v7255, 4294901760
    %v9110 = vsub.f32 %v7255, %v9109
    %9111 = vmatprep.subr.mxu0 %v9110
    %v9112 = vand.u32 %v7254, 4294901760
    %v9113 = vsub.f32 %v7254, %v9112
    %9114 = vmatpush1.msra.mxu0 %v9113
    %v9115 = vand.u32 %v7247, 4294901760
    %v9116 = vsub.f32 %v7247, %v9115
    %9117 = vmatprep.subr.mxu0 %v9116
    %v9118 = vand.u32 %v7246, 4294901760
    %v9119 = vsub.f32 %v7246, %v9118
    %9120 = vmatpush1.msra.mxu0 %v9119
    %v9121 = vand.u32 %v7239, 4294901760
    %v9122 = vsub.f32 %v7239, %v9121
    %9123 = vmatprep.subr.mxu0 %v9122
    %v9124 = vand.u32 %v7238, 4294901760
    %v9125 = vsub.f32 %v7238, %v9124
    %9126 = vmatpush1.msra.mxu0 %v9125
    %v9127 = vand.u32 %v7231, 4294901760
    %v9128 = vsub.f32 %v7231, %v9127
    %9129 = vmatprep.subr.mxu0 %v9128
    %v9130 = vand.u32 %v7230, 4294901760
    %v9131 = vsub.f32 %v7230, %v9130
    %9132 = vmatpush1.msra.mxu0 %v9131
    %9133 = vmatprep.subr.mxu0 0.0
    %9134 = vmatpush2.msra.mxu0 0.0
    %9135 = vmatprep.subr.mxu0 0.0
    %9136 = vmatpush2.msra.mxu0 0.0
    %9137 = vmatprep.subr.mxu0 0.0
    %9138 = vmatpush2.msra.mxu0 0.0
    %9139 = vmatprep.subr.mxu0 0.0
    %9140 = vmatpush2.msra.mxu0 0.0
    %9141 = vmatprep.subr.mxu0 0.0
    %9142 = vmatpush2.msra.mxu0 0.0
    %9143 = vmatprep.subr.mxu0 0.0
    %9144 = vmatpush2.msra.mxu0 0.0
    %9145 = vmatprep.subr.mxu0 0.0
    %9146 = vmatpush2.msra.mxu0 0.0
    %9147 = vmatprep.subr.mxu0 0.0
    %9148 = vmatpush2.msra.mxu0 0.0
    %9149 = vmatprep.subr.mxu0 0.0
    %9150 = vmatpush2.msra.mxu0 0.0
    %9151 = vmatprep.subr.mxu0 0.0
    %9152 = vmatpush2.msra.mxu0 0.0
    %9153 = vmatprep.subr.mxu0 0.0
    %9154 = vmatpush2.msra.mxu0 0.0
    %9155 = vmatprep.subr.mxu0 0.0
    %9156 = vmatpush2.msra.mxu0 0.0
    %9157 = vmatprep.subr.mxu0 0.0
    %9158 = vmatpush2.msra.mxu0 0.0
    %9159 = vmatprep.subr.mxu0 0.0
    %9160 = vmatpush2.msra.mxu0 0.0
    %9161 = vmatprep.subr.mxu0 0.0
    %9162 = vmatpush2.msra.mxu0 0.0
    %9163 = vmatprep.subr.mxu0 0.0
    %9164 = vmatpush2.msra.mxu0 0.0
    %9165 = vmatprep.mubr.f32.mxu0 0.0
    %v9166 = vand.u32 %v7258, 4294901760
    %v9167 = vsub.f32 %v7258, %v9166
    %9168 = vmatmul.mubr.f32.gmra.mxu0 %v9167
    %v9169 = vpop.f32.mrf.mxu0
    %v9170 = vadd.f32 %v9081, %v9169
    %v9171 = vpop.f32.mrf.mxu0
    %v9172 = vadd.f32 %v9083, %v9171
    %9173 = vdwg.mxu0
    %9174 = vmatprep.subr.mxu0 0.0
    %9175 = vmatpush1.msra.mxu0 0.0
    %9176 = vmatprep.subr.mxu0 0.0
    %9177 = vmatpush1.msra.mxu0 0.0
    %9178 = vmatprep.subr.mxu0 0.0
    %9179 = vmatpush1.msra.mxu0 0.0
    %9180 = vmatprep.subr.mxu0 0.0
    %9181 = vmatpush1.msra.mxu0 0.0
    %9182 = vmatprep.subr.mxu0 0.0
    %9183 = vmatpush1.msra.mxu0 0.0
    %9184 = vmatprep.subr.mxu0 0.0
    %9185 = vmatpush1.msra.mxu0 0.0
    %9186 = vmatprep.subr.mxu0 0.0
    %9187 = vmatpush1.msra.mxu0 0.0
    %9188 = vmatprep.subr.mxu0 0.0
    %9189 = vmatpush1.msra.mxu0 0.0
    %9190 = vmatprep.subr.mxu0 0.0
    %9191 = vmatpush1.msra.mxu0 0.0
    %9192 = vmatprep.subr.mxu0 0.0
    %9193 = vmatpush1.msra.mxu0 0.0
    %9194 = vmatprep.subr.mxu0 0.0
    %9195 = vmatpush1.msra.mxu0 0.0
    %9196 = vmatprep.subr.mxu0 0.0
    %9197 = vmatpush1.msra.mxu0 0.0
    %v9198 = vand.u32 %v7255, 4294901760
    %9199 = vmatprep.subr.mxu0 %v9198
    %v9200 = vand.u32 %v7254, 4294901760
    %9201 = vmatpush1.msra.mxu0 %v9200
    %v9202 = vand.u32 %v7247, 4294901760
    %9203 = vmatprep.subr.mxu0 %v9202
    %v9204 = vand.u32 %v7246, 4294901760
    %9205 = vmatpush1.msra.mxu0 %v9204
    %v9206 = vand.u32 %v7239, 4294901760
    %9207 = vmatprep.subr.mxu0 %v9206
    %v9208 = vand.u32 %v7238, 4294901760
    %9209 = vmatpush1.msra.mxu0 %v9208
    %v9210 = vand.u32 %v7231, 4294901760
    %9211 = vmatprep.subr.mxu0 %v9210
    %v9212 = vand.u32 %v7230, 4294901760
    %9213 = vmatpush1.msra.mxu0 %v9212
    %9214 = vmatprep.subr.mxu0 0.0
    %9215 = vmatpush2.msra.mxu0 0.0
    %9216 = vmatprep.subr.mxu0 0.0
    %9217 = vmatpush2.msra.mxu0 0.0
    %9218 = vmatprep.subr.mxu0 0.0
    %9219 = vmatpush2.msra.mxu0 0.0
    %9220 = vmatprep.subr.mxu0 0.0
    %9221 = vmatpush2.msra.mxu0 0.0
    %9222 = vmatprep.subr.mxu0 0.0
    %9223 = vmatpush2.msra.mxu0 0.0
    %9224 = vmatprep.subr.mxu0 0.0
    %9225 = vmatpush2.msra.mxu0 0.0
    %9226 = vmatprep.subr.mxu0 0.0
    %9227 = vmatpush2.msra.mxu0 0.0
    %9228 = vmatprep.subr.mxu0 0.0
    %9229 = vmatpush2.msra.mxu0 0.0
    %9230 = vmatprep.subr.mxu0 0.0
    %9231 = vmatpush2.msra.mxu0 0.0
    %9232 = vmatprep.subr.mxu0 0.0
    %9233 = vmatpush2.msra.mxu0 0.0
    %9234 = vmatprep.subr.mxu0 0.0
    %9235 = vmatpush2.msra.mxu0 0.0
    %9236 = vmatprep.subr.mxu0 0.0
    %9237 = vmatpush2.msra.mxu0 0.0
    %9238 = vmatprep.subr.mxu0 0.0
    %9239 = vmatpush2.msra.mxu0 0.0
    %9240 = vmatprep.subr.mxu0 0.0
    %9241 = vmatpush2.msra.mxu0 0.0
    %9242 = vmatprep.subr.mxu0 0.0
    %9243 = vmatpush2.msra.mxu0 0.0
    %9244 = vmatprep.subr.mxu0 0.0
    %9245 = vmatpush2.msra.mxu0 0.0
    %9246 = vmatprep.mubr.f32.mxu0 0.0
    %v9247 = vand.u32 %v7258, 4294901760
    %v9248 = vsub.f32 %v7258, %v9247
    %v9249 = vand.u32 %v9248, 4294901760
    %9250 = vmatmul.mubr.f32.gmra.mxu0 %v9249
    %v9251 = vpop.f32.mrf.mxu0
    %v9252 = vadd.f32 %v9170, %v9251
    %v9253 = vpop.f32.mrf.mxu0
    %v9254 = vadd.f32 %v9172, %v9253
    %9255 = vdwg.mxu0
    %9256 = vmatprep.subr.mxu0 0.0
    %9257 = vmatpush1.msra.mxu0 0.0
    %9258 = vmatprep.subr.mxu0 0.0
    %9259 = vmatpush1.msra.mxu0 0.0
    %9260 = vmatprep.subr.mxu0 0.0
    %9261 = vmatpush1.msra.mxu0 0.0
    %9262 = vmatprep.subr.mxu0 0.0
    %9263 = vmatpush1.msra.mxu0 0.0
    %9264 = vmatprep.subr.mxu0 0.0
    %9265 = vmatpush1.msra.mxu0 0.0
    %9266 = vmatprep.subr.mxu0 0.0
    %9267 = vmatpush1.msra.mxu0 0.0
    %9268 = vmatprep.subr.mxu0 0.0
    %9269 = vmatpush1.msra.mxu0 0.0
    %9270 = vmatprep.subr.mxu0 0.0
    %9271 = vmatpush1.msra.mxu0 0.0
    %9272 = vmatprep.subr.mxu0 0.0
    %9273 = vmatpush1.msra.mxu0 0.0
    %9274 = vmatprep.subr.mxu0 0.0
    %9275 = vmatpush1.msra.mxu0 0.0
    %9276 = vmatprep.subr.mxu0 0.0
    %9277 = vmatpush1.msra.mxu0 0.0
    %9278 = vmatprep.subr.mxu0 0.0
    %9279 = vmatpush1.msra.mxu0 0.0
    %v9280 = vand.u32 %v7255, 4294901760
    %v9281 = vsub.f32 %v7255, %v9280
    %v9282 = vand.u32 %v9281, 4294901760
    %9283 = vmatprep.subr.mxu0 %v9282
    %v9284 = vand.u32 %v7254, 4294901760
    %v9285 = vsub.f32 %v7254, %v9284
    %v9286 = vand.u32 %v9285, 4294901760
    %9287 = vmatpush1.msra.mxu0 %v9286
    %v9288 = vand.u32 %v7247, 4294901760
    %v9289 = vsub.f32 %v7247, %v9288
    %v9290 = vand.u32 %v9289, 4294901760
    %9291 = vmatprep.subr.mxu0 %v9290
    %v9292 = vand.u32 %v7246, 4294901760
    %v9293 = vsub.f32 %v7246, %v9292
    %v9294 = vand.u32 %v9293, 4294901760
    %9295 = vmatpush1.msra.mxu0 %v9294
    %v9296 = vand.u32 %v7239, 4294901760
    %v9297 = vsub.f32 %v7239, %v9296
    %v9298 = vand.u32 %v9297, 4294901760
    %9299 = vmatprep.subr.mxu0 %v9298
    %v9300 = vand.u32 %v7238, 4294901760
    %v9301 = vsub.f32 %v7238, %v9300
    %v9302 = vand.u32 %v9301, 4294901760
    %9303 = vmatpush1.msra.mxu0 %v9302
    %v9304 = vand.u32 %v7231, 4294901760
    %v9305 = vsub.f32 %v7231, %v9304
    %v9306 = vand.u32 %v9305, 4294901760
    %9307 = vmatprep.subr.mxu0 %v9306
    %v9308 = vand.u32 %v7230, 4294901760
    %v9309 = vsub.f32 %v7230, %v9308
    %v9310 = vand.u32 %v9309, 4294901760
    %9311 = vmatpush1.msra.mxu0 %v9310
    %9312 = vmatprep.subr.mxu0 0.0
    %9313 = vmatpush2.msra.mxu0 0.0
    %9314 = vmatprep.subr.mxu0 0.0
    %9315 = vmatpush2.msra.mxu0 0.0
    %9316 = vmatprep.subr.mxu0 0.0
    %9317 = vmatpush2.msra.mxu0 0.0
    %9318 = vmatprep.subr.mxu0 0.0
    %9319 = vmatpush2.msra.mxu0 0.0
    %9320 = vmatprep.subr.mxu0 0.0
    %9321 = vmatpush2.msra.mxu0 0.0
    %9322 = vmatprep.subr.mxu0 0.0
    %9323 = vmatpush2.msra.mxu0 0.0
    %9324 = vmatprep.subr.mxu0 0.0
    %9325 = vmatpush2.msra.mxu0 0.0
    %9326 = vmatprep.subr.mxu0 0.0
    %9327 = vmatpush2.msra.mxu0 0.0
    %9328 = vmatprep.subr.mxu0 0.0
    %9329 = vmatpush2.msra.mxu0 0.0
    %9330 = vmatprep.subr.mxu0 0.0
    %9331 = vmatpush2.msra.mxu0 0.0
    %9332 = vmatprep.subr.mxu0 0.0
    %9333 = vmatpush2.msra.mxu0 0.0
    %9334 = vmatprep.subr.mxu0 0.0
    %9335 = vmatpush2.msra.mxu0 0.0
    %9336 = vmatprep.subr.mxu0 0.0
    %9337 = vmatpush2.msra.mxu0 0.0
    %9338 = vmatprep.subr.mxu0 0.0
    %9339 = vmatpush2.msra.mxu0 0.0
    %9340 = vmatprep.subr.mxu0 0.0
    %9341 = vmatpush2.msra.mxu0 0.0
    %9342 = vmatprep.subr.mxu0 0.0
    %9343 = vmatpush2.msra.mxu0 0.0
    %9344 = vmatprep.mubr.f32.mxu0 0.0
    %v9345 = vand.u32 %v7258, 4294901760
    %9346 = vmatmul.mubr.f32.gmra.mxu0 %v9345
    %v9347 = vpop.f32.mrf.mxu0
    %v9348 = vadd.f32 %v9252, %v9347
    %v9349 = vpop.f32.mrf.mxu0
    %v9350 = vadd.f32 %v9254, %v9349
    %9351 = vdwg.mxu0
    %9352 = vmatprep.subr.mxu0 0.0
    %9353 = vmatpush1.msra.mxu0 0.0
    %9354 = vmatprep.subr.mxu0 0.0
    %9355 = vmatpush1.msra.mxu0 0.0
    %9356 = vmatprep.subr.mxu0 0.0
    %9357 = vmatpush1.msra.mxu0 0.0
    %9358 = vmatprep.subr.mxu0 0.0
    %9359 = vmatpush1.msra.mxu0 0.0
    %9360 = vmatprep.subr.mxu0 0.0
    %9361 = vmatpush1.msra.mxu0 0.0
    %9362 = vmatprep.subr.mxu0 0.0
    %9363 = vmatpush1.msra.mxu0 0.0
    %9364 = vmatprep.subr.mxu0 0.0
    %9365 = vmatpush1.msra.mxu0 0.0
    %9366 = vmatprep.subr.mxu0 0.0
    %9367 = vmatpush1.msra.mxu0 0.0
    %9368 = vmatprep.subr.mxu0 0.0
    %9369 = vmatpush1.msra.mxu0 0.0
    %9370 = vmatprep.subr.mxu0 0.0
    %9371 = vmatpush1.msra.mxu0 0.0
    %9372 = vmatprep.subr.mxu0 0.0
    %9373 = vmatpush1.msra.mxu0 0.0
    %9374 = vmatprep.subr.mxu0 0.0
    %9375 = vmatpush1.msra.mxu0 0.0
    %v9376 = vand.u32 %v7255, 4294901760
    %9377 = vmatprep.subr.mxu0 %v9376
    %v9378 = vand.u32 %v7254, 4294901760
    %9379 = vmatpush1.msra.mxu0 %v9378
    %v9380 = vand.u32 %v7247, 4294901760
    %9381 = vmatprep.subr.mxu0 %v9380
    %v9382 = vand.u32 %v7246, 4294901760
    %9383 = vmatpush1.msra.mxu0 %v9382
    %v9384 = vand.u32 %v7239, 4294901760
    %9385 = vmatprep.subr.mxu0 %v9384
    %v9386 = vand.u32 %v7238, 4294901760
    %9387 = vmatpush1.msra.mxu0 %v9386
    %v9388 = vand.u32 %v7231, 4294901760
    %9389 = vmatprep.subr.mxu0 %v9388
    %v9390 = vand.u32 %v7230, 4294901760
    %9391 = vmatpush1.msra.mxu0 %v9390
    %9392 = vmatprep.subr.mxu0 0.0
    %9393 = vmatpush2.msra.mxu0 0.0
    %9394 = vmatprep.subr.mxu0 0.0
    %9395 = vmatpush2.msra.mxu0 0.0
    %9396 = vmatprep.subr.mxu0 0.0
    %9397 = vmatpush2.msra.mxu0 0.0
    %9398 = vmatprep.subr.mxu0 0.0
    %9399 = vmatpush2.msra.mxu0 0.0
    %9400 = vmatprep.subr.mxu0 0.0
    %9401 = vmatpush2.msra.mxu0 0.0
    %9402 = vmatprep.subr.mxu0 0.0
    %9403 = vmatpush2.msra.mxu0 0.0
    %9404 = vmatprep.subr.mxu0 0.0
    %9405 = vmatpush2.msra.mxu0 0.0
    %9406 = vmatprep.subr.mxu0 0.0
    %9407 = vmatpush2.msra.mxu0 0.0
    %9408 = vmatprep.subr.mxu0 0.0
    %9409 = vmatpush2.msra.mxu0 0.0
    %9410 = vmatprep.subr.mxu0 0.0
    %9411 = vmatpush2.msra.mxu0 0.0
    %9412 = vmatprep.subr.mxu0 0.0
    %9413 = vmatpush2.msra.mxu0 0.0
    %9414 = vmatprep.subr.mxu0 0.0
    %9415 = vmatpush2.msra.mxu0 0.0
    %9416 = vmatprep.subr.mxu0 0.0
    %9417 = vmatpush2.msra.mxu0 0.0
    %9418 = vmatprep.subr.mxu0 0.0
    %9419 = vmatpush2.msra.mxu0 0.0
    %9420 = vmatprep.subr.mxu0 0.0
    %9421 = vmatpush2.msra.mxu0 0.0
    %9422 = vmatprep.subr.mxu0 0.0
    %9423 = vmatpush2.msra.mxu0 0.0
    %9424 = vmatprep.mubr.f32.mxu0 0.0
    %v9425 = vand.u32 %v7258, 4294901760
    %9426 = vmatmul.mubr.f32.gmra.mxu0 %v9425
    %v9427 = vpop.f32.mrf.mxu0
    %v9428 = vadd.f32 %v9348, %v9427
    %v9429 = vpop.f32.mrf.mxu0
    %v9430 = vadd.f32 %v9350, %v9429
    %9431 = vdwg.mxu0
    %v9432 = vmul.f32 %v1070, %v7799
    %v9433 = vmul.f32 %v1072, %v7801
    %v9434 = vmul.f32 %v1925, %v8342
    %v9435 = vmul.f32 %v1927, %v8344
    %v9436 = vmul.f32 %v2780, %v8885
    %v9437 = vmul.f32 %v2782, %v8887
    %v9438 = vmul.f32 %v3635, %v9428
    %v9439 = vmul.f32 %v3637, %v9430
    %v9440 = vld [vmem:[#allocation5] sm:$0xff]
    %v9442 = vlaneseq
    %v9443 = vshrl.u32 %v9442, 7
    %v9444 = vsub.s32 0, %v9443
    %v9445 = vrot.slane %v9440, %v9444
    %v9446 = vlaneseq
    %v9447 = vshrl.u32 %v9446, 7
    %v9448 = vsub.s32 1, %v9447
    %v9449 = vrot.slane %v9440, %v9448
    %v9450 = vlaneseq
    %v9451 = vshrl.u32 %v9450, 7
    %v9452 = vsub.s32 2, %v9451
    %v9453 = vrot.slane %v9440, %v9452
    %v9454 = vlaneseq
    %v9455 = vshrl.u32 %v9454, 7
    %v9456 = vsub.s32 3, %v9455
    %v9457 = vrot.slane %v9440, %v9456
    %v9458 = vlaneseq
    %v9459 = vshrl.u32 %v9458, 7
    %v9460 = vsub.s32 4, %v9459
    %v9461 = vrot.slane %v9440, %v9460
    %v9462 = vlaneseq
    %v9463 = vshrl.u32 %v9462, 7
    %v9464 = vsub.s32 5, %v9463
    %v9465 = vrot.slane %v9440, %v9464
    %v9466 = vlaneseq
    %v9467 = vshrl.u32 %v9466, 7
    %v9468 = vsub.s32 6, %v9467
    %v9469 = vrot.slane %v9440, %v9468
    %v9470 = vlaneseq
    %v9471 = vshrl.u32 %v9470, 7
    %v9472 = vsub.s32 7, %v9471
    %v9473 = vrot.slane %v9440, %v9472
    %v9482 = vadd.f32 %v9432, %v9445
    %v9483 = vadd.f32 %v9433, %v9449
    %v9484 = vadd.f32 %v9434, %v9453
    %v9485 = vadd.f32 %v9435, %v9457
    %v9486 = vadd.f32 %v9436, %v9461
    %v9487 = vadd.f32 %v9437, %v9465
    %v9488 = vadd.f32 %v9438, %v9469
    %v9489 = vadd.f32 %v9439, %v9473
    %v9498 = vcombine.low %v9482, %v9483
    %v9499 = vcombine.low %v9484, %v9485
    %v9500 = vcombine.low %v9486, %v9487
    %v9501 = vcombine.low %v9488, %v9489
    %v9503 = vunpack.c.l.s4 1966171168
    %v9504 = vunpack.c.0.s8 %v9503
    %v9505 = vlaneseq
    %v9506 = vshrl.u32 %v9505, 7
    %v9507 = vsub.s32 %v9504, %v9506
    %v9508 = vrot.slane %v9498, %v9507
    %v9510 = vunpack.c.l.s4 1966171168
    %v9511 = vunpack.c.0.s8 %v9510
    %v9512 = vlaneseq
    %v9513 = vshrl.u32 %v9512, 7
    %v9514 = vsub.s32 %v9511, %v9513
    %v9515 = vrot.slane %v9499, %v9514
    %v9517 = vunpack.c.l.s4 1966171168
    %v9518 = vunpack.c.0.s8 %v9517
    %v9519 = vlaneseq
    %v9520 = vshrl.u32 %v9519, 7
    %v9521 = vsub.s32 %v9518, %v9520
    %v9522 = vrot.slane %v9500, %v9521
    %v9524 = vunpack.c.l.s4 1966171168
    %v9525 = vunpack.c.0.s8 %v9524
    %v9526 = vlaneseq
    %v9527 = vshrl.u32 %v9526, 7
    %v9528 = vsub.s32 %v9525, %v9527
    %v9529 = vrot.slane %v9501, %v9528
    %v9530 = vcombine.low %v9508, %v9515
    %v9531 = vcombine.low %v9522, %v9529
    %v9533 = vunpack.c.l.s4 1966171168
    %v9534 = vunpack.c.0.s8 %v9533
    %v9535 = vlaneseq
    %v9536 = vshrl.u32 %v9535, 7
    %v9537 = vsub.s32 %v9534, %v9536
    %v9538 = vrot.slane %v9530, %v9537
    %v9540 = vunpack.c.l.s4 1966171168
    %v9541 = vunpack.c.0.s8 %v9540
    %v9542 = vlaneseq
    %v9543 = vshrl.u32 %v9542, 7
    %v9544 = vsub.s32 %v9541, %v9543
    %v9545 = vrot.slane %v9531, %v9544
    %v9546 = vcombine.low %v9538, %v9545
    %9548 = vst [vmem:[#allocation7] sm:$0xff] %v9546
    // Predicated region
    $region34: #{tpu_custom_call.1} parent=1 // pred_check
      _
    $region35: #{tpu_custom_call.1} parent=1 // pred_check_branch
      %9550 = sbr.rel (0) target = $region37
    $region36: #{tpu_custom_call.1} parent=1 // pred_region
      %s9552 = ssub.s32 128, 128
      %9553 = vsyncadd [#allocation4], %s9552
      %s9555 = sshll.u32 [#allocation7], 4
      %s9556 = int_to_ptr.vmem [resolvable:$true] %s9555
      %9558 = dma.vmem_to_hbm [thread:$0]  %s9556, 128, %s6, [#allocation4]
    $region37: #{tpu_custom_call.1} parent=1 // pred_fallthru
      _
    // Predicated region
    $region38: #{tpu_custom_call.1} parent=1 // pred_check
      _
    $region39: #{tpu_custom_call.1} parent=1 // pred_check_branch
      %9560 = sbr.rel (0) target = $region41
    $region40: #{tpu_custom_call.1} parent=1 // pred_region
      %9561 = dma.done [#allocation4], 128
    $region41: #{tpu_custom_call.1} parent=1 // pred_fallthru
      _
    %9562 = vsyncpa [#allocation3], 1
    %9563 = vsyncpa [#allocation6], 1
    %9564 = vsyncpa [#allocation4], 1

</llo_original>
